<compile_context>
chip_gen: v7x
topology: tpu7x:2x2x1
jax: 0.10.0
libtpu: 0.0.40
codegen_flags: <defaults>
</compile_context>

<pallas_src>
import math

import jax
import jax.numpy as jnp
from jax import lax
from jax.experimental import pallas as pl
from jax.experimental.pallas import tpu as pltpu

E_DIM = 200          # embed_dim
H_DIM = 150          # hidden_dim
G_DIM = 3 * H_DIM    # fused GRU gate width (r | z | n)
N_CHARGE = 62
SOS_TOKEN = 2
EOS_TOKEN = 1
NUM_PROBLEMS = 2     # problem 0 = sc_gen, problem 1 = adc_gen


# --------------------------------------------------------------------------- GRU step
def _gru_step(gx, h, wh, bh):
    """Fused-gate GRU step (PyTorch nn.GRU semantics, gate order r, z, n).

    gx: [B, 3H]   precomputed x@Wx + bi (hoisted out of the loop)
    h : [B, H]    previous hidden
    wh: [H, 3H]   fused hidden weights
    bh: [1, 3H]   fused hidden biases
    """
    H = H_DIM
    gh = jnp.dot(h, wh, preferred_element_type=jnp.float32) + bh
    r = jax.nn.sigmoid(gx[:, 0:H] + gh[:, 0:H])
    z = jax.nn.sigmoid(gx[:, H:2 * H] + gh[:, H:2 * H])
    n = jnp.tanh(gx[:, 2 * H:3 * H] + r * gh[:, 2 * H:3 * H])
    return (1.0 - z) * n + z * h


# --------------------------------------------------------------------------- fused kernel
def seq2seq_kernel(enc_x_ref, dec_x_ref,
                   enc_wx_ref, enc_wh_ref, enc_bi_ref, enc_bh_ref,
                   dec_wx_ref, dec_wh_ref, dec_bi_ref, dec_bh_ref,
                   ww1_ref, ww2_ref, bw_ref, wp_ref, bp_ref,
                   logits_ref, cwot_ref, enc_out_ref,
                   h_scr, egates_scr, dgates_scr, hdec_scr):
    """One grid step = one full seq2seq (encoder GRU + decoder GRU + attention + heads)."""
    S, B, _ = enc_out_ref.shape       # enc_out_ref: [S, B, H]
    T = hdec_scr.shape[0]             # hdec_scr:    [T, B, H]
    f32 = jnp.float32

    # ---- hoisted, batched input-gate projections (all time steps in one matmul each) ----
    egates_scr[...] = (jnp.dot(enc_x_ref[...], enc_wx_ref[...],
                               preferred_element_type=f32) + enc_bi_ref[...])
    dgates_scr[...] = (jnp.dot(dec_x_ref[...], dec_wx_ref[...],
                               preferred_element_type=f32) + dec_bi_ref[...])

    # ---- encoder GRU recurrence (serial; only h@Wh + gate elementwise per step) ----
    h_scr[...] = jnp.zeros_like(h_scr)

    def enc_body(s, carry):
        gx = egates_scr[pl.ds(s * B, B), :]                      # [B, 3H], time-major rows
        h_new = _gru_step(gx, h_scr[...], enc_wh_ref[...], enc_bh_ref[...])
        h_scr[...] = h_new
        enc_out_ref[s] = h_new
        return carry

    lax.fori_loop(0, S, enc_body, 0, unroll=True)

    # ---- decoder GRU recurrence, initial hidden = encoder final hidden ----
    def dec_body(t, carry):
        gx = dgates_scr[pl.ds(t * B, B), :]
        h_new = _gru_step(gx, h_scr[...], dec_wh_ref[...], dec_bh_ref[...])
        h_scr[...] = h_new
        hdec_scr[t] = h_new
        return carry

    lax.fori_loop(0, T, dec_body, 0, unroll=True)

    # ---- batched epilogue: dot-attention + concat-linear + tanh + vocab projection.
    #      With teacher forcing, attention never feeds the recurrence, so it is fully
    #      hoisted out of the serial loop and done with MXU matmuls over all T steps.
    #      B is tiny & static -> plain unrolled per-batch 2-D matmuls (robust layouts).
    for b in range(B):
        hb = hdec_scr[:, b, :]                                   # [T, H]
        eb = enc_out_ref[:, b, :]                                # [S, H]
        scores = lax.dot_general(hb, eb, (((1,), (1,)), ((), ())),
                                 preferred_element_type=f32)     # [T, S]
        attn = jax.nn.softmax(scores, axis=-1)
        ctx = jnp.dot(attn, eb, preferred_element_type=f32)      # [T, H]
        cwot = (jnp.dot(hb, ww1_ref[...], preferred_element_type=f32)
                + jnp.dot(ctx, ww2_ref[...], preferred_element_type=f32)
                + bw_ref[...])                                   # [T, H]   (pre-tanh)
        co = jnp.tanh(cwot)
        logits = jnp.dot(co, wp_ref[...], preferred_element_type=f32) + bp_ref[...]
        cwot_ref[b] = cwot
        logits_ref[b] = logits


def _build_seq2seq_call(S, T, B, V):
    P = NUM_PROBLEMS
    i3 = lambda p: (p, 0, 0)
    i4 = lambda p: (p, 0, 0, 0)
    grid_spec = pltpu.PrefetchScalarGridSpec(
        num_scalar_prefetch=0,
        grid=(P,),
        in_specs=[
            pl.BlockSpec((None, S * B, E_DIM), i3),    # enc_x  (time-major rows)
            pl.BlockSpec((None, T * B, E_DIM), i3),    # dec_x
            pl.BlockSpec((None, E_DIM, G_DIM), i3),    # enc_wx
            pl.BlockSpec((None, H_DIM, G_DIM), i3),    # enc_wh
            pl.BlockSpec((None, 1, G_DIM), i3),        # enc_bi
            pl.BlockSpec((None, 1, G_DIM), i3),        # enc_bh
            pl.BlockSpec((None, E_DIM, G_DIM), i3),    # dec_wx
            pl.BlockSpec((None, H_DIM, G_DIM), i3),    # dec_wh
            pl.BlockSpec((None, 1, G_DIM), i3),        # dec_bi
            pl.BlockSpec((None, 1, G_DIM), i3),        # dec_bh
            pl.BlockSpec((None, H_DIM, H_DIM), i3),    # ww1
            pl.BlockSpec((None, H_DIM, H_DIM), i3),    # ww2
            pl.BlockSpec((None, 1, H_DIM), i3),        # bw
            pl.BlockSpec((None, H_DIM, V), i3),        # wp
            pl.BlockSpec((None, 1, V), i3),            # bp
        ],
        out_specs=[
            pl.BlockSpec((None, B, T, V), i4),         # logits      (batch-major)
            pl.BlockSpec((None, B, T, H_DIM), i4),     # concat_wo_tanh
            pl.BlockSpec((None, S, B, H_DIM), i4),     # encoder outputs (time-major)
        ],
        scratch_shapes=[
            pltpu.VMEM((B, H_DIM), jnp.float32),           # carried hidden
            pltpu.VMEM((S * B, G_DIM), jnp.float32),       # encoder input gates
            pltpu.VMEM((T * B, G_DIM), jnp.float32),       # decoder input gates
            pltpu.VMEM((T, B, H_DIM), jnp.float32),        # decoder hidden states
        ],
    )
    return pl.pallas_call(
        seq2seq_kernel,
        out_shape=(
            jax.ShapeDtypeStruct((P, B, T, V), jnp.float32),
            jax.ShapeDtypeStruct((P, B, T, H_DIM), jnp.float32),
            jax.ShapeDtypeStruct((P, S, B, H_DIM), jnp.float32),
        ),
        grid_spec=grid_spec,
        # sc / adc problems are fully independent -> 2 TensorCores on v7x.
        compiler_params=pltpu.CompilerParams(dimension_semantics=("parallel",)),
    )


# --------------------------------------------------------------------------- model glue
def gen_forward(params, sc_source, adc_source, sc_target, adc_target):
    """Gen.forward (training path).  Returns (loss_sc, loss_adc, charge_out)."""
    B, S = sc_source.shape
    _, T = sc_target.shape
    P = NUM_PROBLEMS
    V = params["wp"].shape[-1]

    # Stack the two independent problems (requires matching seq lengths, as here).
    src = jnp.stack([sc_source, adc_source], axis=0)     # [P, B, S]
    tgt = jnp.stack([sc_target, adc_target], axis=0)     # [P, B, T]

    # Embedding gathers (glue) + teacher-forced decoder inputs: [SOS, tgt[:-1]].
    enc_embs = jax.vmap(lambda tab, ids: tab[ids])(params["enc_embed"], src)       # [P,B,S,E]
    dec_tokens = jnp.concatenate(
        [jnp.full((P, B, 1), SOS_TOKEN, dtype=tgt.dtype), tgt[:, :, :-1]], axis=2)
    dec_embs = jax.vmap(lambda tab, ids: tab[ids])(params["dec_embed"], dec_tokens)  # [P,B,T,E]

    # Time-major, flattened [time*batch, E] rows for the hoisted gate projections.
    enc_x = jnp.transpose(enc_embs, (0, 2, 1, 3)).reshape(P, S * B, E_DIM)
    dec_x = jnp.transpose(dec_embs, (0, 2, 1, 3)).reshape(P, T * B, E_DIM)

    logits, cwot, enc_outs = _build_seq2seq_call(S, T, B, V)(
        enc_x, dec_x,
        params["enc_wx"], params["enc_wh"], params["enc_bi"], params["enc_bh"],
        params["dec_wx"], params["dec_wh"], params["dec_bi"], params["dec_bh"],
        params["ww1"], params["ww2"], params["bw"], params["wp"], params["bp"])

    # Per-step F.cross_entropy(preds, tgts[:, i], ignore_index=EOS) summed over steps.
    logp = jax.nn.log_softmax(logits, axis=-1)                                 # [P,B,T,V]
    nll = -jnp.take_along_axis(logp, tgt[..., None], axis=-1)[..., 0]          # [P,B,T]
    mask = (tgt != EOS_TOKEN).astype(jnp.float32)
    cnt = jnp.sum(mask, axis=1)                                                # [P,T]
    per_step = jnp.where(cnt > 0,
                         jnp.sum(nll * mask, axis=1) / jnp.maximum(cnt, 1.0),
                         0.0)
    losses = jnp.sum(per_step, axis=-1)                                        # [P]
    loss_sc, loss_adc = losses[0], losses[1]

    # Charge head (ADC branch only): [B,2H]@[2H,62] is far below pallas_call
    # break-even, so it stays in plain JAX (perf-review item).
    enc_mean = jnp.mean(enc_outs[1], axis=0)        # mean over source steps -> [B, H]
    dec_mean = jnp.mean(cwot[1], axis=1)            # mean over target steps -> [B, H]
    charge_hidden = jnp.concatenate([enc_mean, dec_mean], axis=-1)             # [B, 2H]
    charge_out = charge_hidden @ params["w_charge"] + params["b_charge"]       # [B, 62]
    return loss_sc, loss_adc, charge_out


# --------------------------------------------------------------------------- params
def init_params(key, src_vocab, tgt_vocab):
    """All seq2seq parameters stacked on a leading problem axis (0 = sc, 1 = adc)."""
    P = NUM_PROBLEMS

    def u(k, shape, scale):
        return jax.random.uniform(k, shape, jnp.float32, -scale, scale)

    ks = list(jax.random.split(key, 18))
    sg = 1.0 / math.sqrt(H_DIM)          # nn.GRU init scale
    sw = 1.0 / math.sqrt(2 * H_DIM)      # Linear(2H -> H)
    sp = 1.0 / math.sqrt(H_DIM)          # Linear(H -> V)
    sc = 1.0 / math.sqrt(2 * H_DIM)      # charge_pred Linear(2H -> 62)
    return {
        "enc_embed": 0.1 * jax.random.normal(ks[0], (P, src_vocab, E_DIM), jnp.float32),
        "dec_embed": 0.1 * jax.random.normal(ks[1], (P, tgt_vocab, E_DIM), jnp.float32),
        # fused GRU weights, gate order (r | z | n)
        "enc_wx": u(ks[2], (P, E_DIM, G_DIM), sg),
        "enc_wh": u(ks[3], (P, H_DIM, G_DIM), sg),
        "enc_bi": u(ks[4], (P, 1, G_DIM), sg),
        "enc_bh": u(ks[5], (P, 1, G_DIM), sg),
        "dec_wx": u(ks[6], (P, E_DIM, G_DIM), sg),
        "dec_wh": u(ks[7], (P, H_DIM, G_DIM), sg),
        "dec_bi": u(ks[8], (P, 1, G_DIM), sg),
        "dec_bh": u(ks[9], (P, 1, G_DIM), sg),
        # attention concat-linear + vocab projection
        "ww1": u(ks[10], (P, H_DIM, H_DIM), sw),
        "ww2": u(ks[11], (P, H_DIM, H_DIM), sw),
        "bw": u(ks[12], (P, 1, H_DIM), sw),
        "wp": u(ks[13], (P, H_DIM, tgt_vocab), sp),
        "bp": u(ks[14], (P, 1, tgt_vocab), sp),
        # charge head (ADC only, not stacked)
        "w_charge": u(ks[15], (2 * H_DIM, N_CHARGE), sc),
        "b_charge": u(ks[16], (1, N_CHARGE), sc),
    }


# --------------------------------------------------------------------------- main
if __name__ == "__main__":
    SRC_VOCAB = 32
    TGT_VOCAB = 32
    B = 2          # batch
    S_SRC = 8      # source sequence length
    T_TGT = 6      # target sequence length

    root = jax.random.PRNGKey(0)
    kp, k1, k2, k3, k4 = jax.random.split(root, 5)
    params = init_params(kp, SRC_VOCAB, TGT_VOCAB)

    # token ids in [2, vocab) so no target equals the ignore_index (EOS=1)
    sc_source = jax.random.randint(k1, (B, S_SRC), 2, SRC_VOCAB, dtype=jnp.int32)
    adc_source = jax.random.randint(k2, (B, S_SRC), 2, SRC_VOCAB, dtype=jnp.int32)
    sc_target = jax.random.randint(k3, (B, T_TGT), 2, TGT_VOCAB, dtype=jnp.int32)
    adc_target = jax.random.randint(k4, (B, T_TGT), 2, TGT_VOCAB, dtype=jnp.int32)

    fwd = jax.jit(gen_forward)
    loss_sc, loss_adc, charge_out = fwd(
        params, sc_source, adc_source, sc_target, adc_target)
    jax.block_until_ready((loss_sc, loss_adc, charge_out))

    assert charge_out.shape == (B, N_CHARGE)
    assert bool(jnp.isfinite(loss_sc)) and bool(jnp.isfinite(loss_adc))
    assert bool(jnp.all(jnp.isfinite(charge_out)))
    print("KERNEL_OK")
</pallas_src>

<mosaic_0001>
module attributes {stable_mosaic.version = 11 : i64} {
  func.func @seq2seq_kernel(%arg0: i32, %arg1: memref<1x16x200xf32, #tpu.memory_space<vmem>>, %arg2: memref<1x12x200xf32, #tpu.memory_space<vmem>>, %arg3: memref<1x200x450xf32, #tpu.memory_space<vmem>>, %arg4: memref<1x150x450xf32, #tpu.memory_space<vmem>>, %arg5: memref<1x1x450xf32, #tpu.memory_space<vmem>>, %arg6: memref<1x1x450xf32, #tpu.memory_space<vmem>>, %arg7: memref<1x200x450xf32, #tpu.memory_space<vmem>>, %arg8: memref<1x150x450xf32, #tpu.memory_space<vmem>>, %arg9: memref<1x1x450xf32, #tpu.memory_space<vmem>>, %arg10: memref<1x1x450xf32, #tpu.memory_space<vmem>>, %arg11: memref<1x150x150xf32, #tpu.memory_space<vmem>>, %arg12: memref<1x150x150xf32, #tpu.memory_space<vmem>>, %arg13: memref<1x1x150xf32, #tpu.memory_space<vmem>>, %arg14: memref<1x150x32xf32, #tpu.memory_space<vmem>>, %arg15: memref<1x1x32xf32, #tpu.memory_space<vmem>>, %arg16: memref<1x2x6x32xf32, #tpu.memory_space<vmem>>, %arg17: memref<1x2x6x150xf32, #tpu.memory_space<vmem>>, %arg18: memref<1x8x2x150xf32, #tpu.memory_space<vmem>>, %arg19: memref<2x150xf32, #tpu.memory_space<vmem>>, %arg20: memref<16x450xf32, #tpu.memory_space<vmem>>, %arg21: memref<12x450xf32, #tpu.memory_space<vmem>>, %arg22: memref<6x2x150xf32, #tpu.memory_space<vmem>>) attributes {dimension_semantics = [#tpu.dimension_semantics<parallel>], iteration_bounds = array<i64: 2>, scalar_prefetch = 0 : i64, scratch_operands = 4 : i64, tpu.core_type = #tpu.core_type<tc>, window_params = [{transform_indices = @transform_0, window_bounds = array<i64: 1, 16, 200>}, {transform_indices = @transform_1, window_bounds = array<i64: 1, 12, 200>}, {transform_indices = @transform_2, window_bounds = array<i64: 1, 200, 450>}, {transform_indices = @transform_3, window_bounds = array<i64: 1, 150, 450>}, {transform_indices = @transform_4, window_bounds = array<i64: 1, 1, 450>}, {transform_indices = @transform_5, window_bounds = array<i64: 1, 1, 450>}, {transform_indices = @transform_6, window_bounds = array<i64: 1, 200, 450>}, {transform_indices = @transform_7, window_bounds = array<i64: 1, 150, 450>}, {transform_indices = @transform_8, window_bounds = array<i64: 1, 1, 450>}, {transform_indices = @transform_9, window_bounds = array<i64: 1, 1, 450>}, {transform_indices = @transform_10, window_bounds = array<i64: 1, 150, 150>}, {transform_indices = @transform_11, window_bounds = array<i64: 1, 150, 150>}, {transform_indices = @transform_12, window_bounds = array<i64: 1, 1, 150>}, {transform_indices = @transform_13, window_bounds = array<i64: 1, 150, 32>}, {transform_indices = @transform_14, window_bounds = array<i64: 1, 1, 32>}, {transform_indices = @transform_15, window_bounds = array<i64: 1, 2, 6, 32>}, {transform_indices = @transform_16, window_bounds = array<i64: 1, 2, 6, 150>}, {transform_indices = @transform_17, window_bounds = array<i64: 1, 8, 2, 150>}]} {
    %c0 = arith.constant 0 : index
    %c0_0 = arith.constant 0 : index
    %c0_1 = arith.constant 0 : index
    %0 = vector.load %arg1[%c0, %c0_0, %c0_1] : memref<1x16x200xf32, #tpu.memory_space<vmem>>, vector<1x16x200xf32>
    %1 = vector.shape_cast %0 : vector<1x16x200xf32> to vector<16x200xf32>
    %c0_2 = arith.constant 0 : index
    %c0_3 = arith.constant 0 : index
    %c0_4 = arith.constant 0 : index
    %2 = vector.load %arg3[%c0_2, %c0_3, %c0_4] : memref<1x200x450xf32, #tpu.memory_space<vmem>>, vector<1x200x450xf32>
    %3 = vector.shape_cast %2 : vector<1x200x450xf32> to vector<200x450xf32>
    %cst = arith.constant dense<0.000000e+00> : vector<16x450xf32>
    %4 = tpu.matmul %1, %3, %cst {dimension_numbers = #tpu.dot_dimension_numbers<[1], [0], [0], [1], [0, 0, 1, 1], [], []>} : vector<16x200xf32>, vector<200x450xf32>, vector<16x450xf32> -> vector<16x450xf32>
    %c0_5 = arith.constant 0 : index
    %c0_6 = arith.constant 0 : index
    %c0_7 = arith.constant 0 : index
    %5 = vector.load %arg5[%c0_5, %c0_6, %c0_7] : memref<1x1x450xf32, #tpu.memory_space<vmem>>, vector<1x1x450xf32>
    %6 = vector.shape_cast %5 : vector<1x1x450xf32> to vector<1x450xf32>
    %7 = vector.broadcast %6 : vector<1x450xf32> to vector<16x450xf32>
    %8 = arith.addf %4, %7 : vector<16x450xf32>
    %c0_8 = arith.constant 0 : index
    %c0_9 = arith.constant 0 : index
    %9 = vector.load %arg20[%c0_8, %c0_9] : memref<16x450xf32, #tpu.memory_space<vmem>>, vector<16x450xf32>
    tpu.vector_store %arg20[%c0_8, %c0_9], %8 {strides = array<i32>} : memref<16x450xf32, #tpu.memory_space<vmem>>, vector<16x450xf32>,
    %c0_10 = arith.constant 0 : index
    %c0_11 = arith.constant 0 : index
    %c0_12 = arith.constant 0 : index
    %10 = vector.load %arg2[%c0_10, %c0_11, %c0_12] : memref<1x12x200xf32, #tpu.memory_space<vmem>>, vector<1x12x200xf32>
    %11 = vector.shape_cast %10 : vector<1x12x200xf32> to vector<12x200xf32>
    %c0_13 = arith.constant 0 : index
    %c0_14 = arith.constant 0 : index
    %c0_15 = arith.constant 0 : index
    %12 = vector.load %arg7[%c0_13, %c0_14, %c0_15] : memref<1x200x450xf32, #tpu.memory_space<vmem>>, vector<1x200x450xf32>
    %13 = vector.shape_cast %12 : vector<1x200x450xf32> to vector<200x450xf32>
    %cst_16 = arith.constant dense<0.000000e+00> : vector<12x450xf32>
    %14 = tpu.matmul %11, %13, %cst_16 {dimension_numbers = #tpu.dot_dimension_numbers<[1], [0], [0], [1], [0, 0, 1, 1], [], []>} : vector<12x200xf32>, vector<200x450xf32>, vector<12x450xf32> -> vector<12x450xf32>
    %c0_17 = arith.constant 0 : index
    %c0_18 = arith.constant 0 : index
    %c0_19 = arith.constant 0 : index
    %15 = vector.load %arg9[%c0_17, %c0_18, %c0_19] : memref<1x1x450xf32, #tpu.memory_space<vmem>>, vector<1x1x450xf32>
    %16 = vector.shape_cast %15 : vector<1x1x450xf32> to vector<1x450xf32>
    %17 = vector.broadcast %16 : vector<1x450xf32> to vector<12x450xf32>
    %18 = arith.addf %14, %17 : vector<12x450xf32>
    %c0_20 = arith.constant 0 : index
    %c0_21 = arith.constant 0 : index
    %19 = vector.load %arg21[%c0_20, %c0_21] : memref<12x450xf32, #tpu.memory_space<vmem>>, vector<12x450xf32>
    tpu.vector_store %arg21[%c0_20, %c0_21], %18 {strides = array<i32>} : memref<12x450xf32, #tpu.memory_space<vmem>>, vector<12x450xf32>,
    %cst_22 = arith.constant 0.000000e+00 : f32
    %20 = vector.broadcast %cst_22 : f32 to vector<2x150xf32>
    %c0_23 = arith.constant 0 : index
    %c0_24 = arith.constant 0 : index
    %21 = vector.load %arg19[%c0_23, %c0_24] : memref<2x150xf32, #tpu.memory_space<vmem>>, vector<2x150xf32>
    tpu.vector_store %arg19[%c0_23, %c0_24], %20 {strides = array<i32>} : memref<2x150xf32, #tpu.memory_space<vmem>>, vector<2x150xf32>,
    %c0_i32 = arith.constant 0 : i32
    %c2_i32 = arith.constant 2 : i32
    %22 = arith.muli %c0_i32, %c2_i32 : i32
    %23 = arith.index_cast %22 : i32 to index
    %c0_25 = arith.constant 0 : index
    %24 = vector.load %arg20[%23, %c0_25] : memref<16x450xf32, #tpu.memory_space<vmem>>, vector<2x450xf32>
    %c0_26 = arith.constant 0 : index
    %c0_27 = arith.constant 0 : index
    %25 = vector.load %arg19[%c0_26, %c0_27] : memref<2x150xf32, #tpu.memory_space<vmem>>, vector<2x150xf32>
    %c0_28 = arith.constant 0 : index
    %c0_29 = arith.constant 0 : index
    %c0_30 = arith.constant 0 : index
    %26 = vector.load %arg4[%c0_28, %c0_29, %c0_30] : memref<1x150x450xf32, #tpu.memory_space<vmem>>, vector<1x150x450xf32>
    %27 = vector.shape_cast %26 : vector<1x150x450xf32> to vector<150x450xf32>
    %c0_31 = arith.constant 0 : index
    %c0_32 = arith.constant 0 : index
    %c0_33 = arith.constant 0 : index
    %28 = vector.load %arg6[%c0_31, %c0_32, %c0_33] : memref<1x1x450xf32, #tpu.memory_space<vmem>>, vector<1x1x450xf32>
    %29 = vector.shape_cast %28 : vector<1x1x450xf32> to vector<1x450xf32>
    %cst_34 = arith.constant dense<0.000000e+00> : vector<2x450xf32>
    %30 = tpu.matmul %25, %27, %cst_34 {dimension_numbers = #tpu.dot_dimension_numbers<[1], [0], [0], [1], [0, 0, 1, 1], [], []>} : vector<2x150xf32>, vector<150x450xf32>, vector<2x450xf32> -> vector<2x450xf32>
    %31 = vector.broadcast %29 : vector<1x450xf32> to vector<2x450xf32>
    %32 = arith.addf %30, %31 : vector<2x450xf32>
    %33 = vector.extract_strided_slice %24 {offsets = [0, 0], sizes = [2, 150], strides = [1, 1]} : vector<2x450xf32> to vector<2x150xf32>
    %34 = vector.extract_strided_slice %32 {offsets = [0, 0], sizes = [2, 150], strides = [1, 1]} : vector<2x450xf32> to vector<2x150xf32>
    %35 = arith.addf %33, %34 : vector<2x150xf32>
    %36 = arith.negf %35 : vector<2x150xf32>
    %37 = math.exp %36 : vector<2x150xf32>
    %cst_35 = arith.constant 1.000000e+00 : f32
    %38 = vector.broadcast %cst_35 : f32 to vector<2x150xf32>
    %39 = arith.addf %38, %37 : vector<2x150xf32>
    %40 = arith.divf %38, %39 : vector<2x150xf32>
    %41 = vector.extract_strided_slice %24 {offsets = [0, 150], sizes = [2, 150], strides = [1, 1]} : vector<2x450xf32> to vector<2x150xf32>
    %42 = vector.extract_strided_slice %32 {offsets = [0, 150], sizes = [2, 150], strides = [1, 1]} : vector<2x450xf32> to vector<2x150xf32>
    %43 = arith.addf %41, %42 : vector<2x150xf32>
    %44 = arith.negf %43 : vector<2x150xf32>
    %45 = math.exp %44 : vector<2x150xf32>
    %cst_36 = arith.constant 1.000000e+00 : f32
    %46 = vector.broadcast %cst_36 : f32 to vector<2x150xf32>
    %47 = arith.addf %46, %45 : vector<2x150xf32>
    %48 = arith.divf %46, %47 : vector<2x150xf32>
    %49 = vector.extract_strided_slice %24 {offsets = [0, 300], sizes = [2, 150], strides = [1, 1]} : vector<2x450xf32> to vector<2x150xf32>
    %50 = vector.extract_strided_slice %32 {offsets = [0, 300], sizes = [2, 150], strides = [1, 1]} : vector<2x450xf32> to vector<2x150xf32>
    %51 = arith.mulf %40, %50 : vector<2x150xf32>
    %52 = arith.addf %49, %51 : vector<2x150xf32>
    %53 = math.tanh %52 : vector<2x150xf32>
    %cst_37 = arith.constant 1.000000e+00 : f32
    %54 = vector.broadcast %cst_37 : f32 to vector<2x150xf32>
    %55 = arith.subf %54, %48 : vector<2x150xf32>
    %56 = arith.mulf %55, %53 : vector<2x150xf32>
    %57 = arith.mulf %48, %25 : vector<2x150xf32>
    %58 = arith.addf %56, %57 : vector<2x150xf32>
    %c0_38 = arith.constant 0 : index
    %c0_39 = arith.constant 0 : index
    %59 = vector.load %arg19[%c0_38, %c0_39] : memref<2x150xf32, #tpu.memory_space<vmem>>, vector<2x150xf32>
    tpu.vector_store %arg19[%c0_38, %c0_39], %58 {strides = array<i32>} : memref<2x150xf32, #tpu.memory_space<vmem>>, vector<2x150xf32>,
    %c0_40 = arith.constant 0 : index
    %60 = arith.index_cast %c0_i32 : i32 to index
    %c0_41 = arith.constant 0 : index
    %c0_42 = arith.constant 0 : index
    %61 = vector.load %arg18[%c0_40, %60, %c0_41, %c0_42] : memref<1x8x2x150xf32, #tpu.memory_space<vmem>>, vector<1x1x2x150xf32>
    %62 = vector.shape_cast %61 : vector<1x1x2x150xf32> to vector<2x150xf32>
    %63 = vector.shape_cast %58 : vector<2x150xf32> to vector<1x1x2x150xf32>
    tpu.vector_store %arg18[%c0_40, %60, %c0_41, %c0_42], %63 {strides = array<i32>} : memref<1x8x2x150xf32, #tpu.memory_space<vmem>>, vector<1x1x2x150xf32>,
    %c1_i32 = arith.constant 1 : i32
    %c2_i32_43 = arith.constant 2 : i32
    %64 = arith.muli %c1_i32, %c2_i32_43 : i32
    %65 = arith.index_cast %64 : i32 to index
    %c0_44 = arith.constant 0 : index
    %66 = vector.load %arg20[%65, %c0_44] : memref<16x450xf32, #tpu.memory_space<vmem>>, vector<2x450xf32>
    %c0_45 = arith.constant 0 : index
    %c0_46 = arith.constant 0 : index
    %67 = vector.load %arg19[%c0_45, %c0_46] : memref<2x150xf32, #tpu.memory_space<vmem>>, vector<2x150xf32>
    %c0_47 = arith.constant 0 : index
    %c0_48 = arith.constant 0 : index
    %c0_49 = arith.constant 0 : index
    %68 = vector.load %arg4[%c0_47, %c0_48, %c0_49] : memref<1x150x450xf32, #tpu.memory_space<vmem>>, vector<1x150x450xf32>
    %69 = vector.shape_cast %68 : vector<1x150x450xf32> to vector<150x450xf32>
    %c0_50 = arith.constant 0 : index
    %c0_51 = arith.constant 0 : index
    %c0_52 = arith.constant 0 : index
    %70 = vector.load %arg6[%c0_50, %c0_51, %c0_52] : memref<1x1x450xf32, #tpu.memory_space<vmem>>, vector<1x1x450xf32>
    %71 = vector.shape_cast %70 : vector<1x1x450xf32> to vector<1x450xf32>
    %cst_53 = arith.constant dense<0.000000e+00> : vector<2x450xf32>
    %72 = tpu.matmul %67, %69, %cst_53 {dimension_numbers = #tpu.dot_dimension_numbers<[1], [0], [0], [1], [0, 0, 1, 1], [], []>} : vector<2x150xf32>, vector<150x450xf32>, vector<2x450xf32> -> vector<2x450xf32>
    %73 = vector.broadcast %71 : vector<1x450xf32> to vector<2x450xf32>
    %74 = arith.addf %72, %73 : vector<2x450xf32>
    %75 = vector.extract_strided_slice %66 {offsets = [0, 0], sizes = [2, 150], strides = [1, 1]} : vector<2x450xf32> to vector<2x150xf32>
    %76 = vector.extract_strided_slice %74 {offsets = [0, 0], sizes = [2, 150], strides = [1, 1]} : vector<2x450xf32> to vector<2x150xf32>
    %77 = arith.addf %75, %76 : vector<2x150xf32>
    %78 = arith.negf %77 : vector<2x150xf32>
    %79 = math.exp %78 : vector<2x150xf32>
    %cst_54 = arith.constant 1.000000e+00 : f32
    %80 = vector.broadcast %cst_54 : f32 to vector<2x150xf32>
    %81 = arith.addf %80, %79 : vector<2x150xf32>
    %82 = arith.divf %80, %81 : vector<2x150xf32>
    %83 = vector.extract_strided_slice %66 {offsets = [0, 150], sizes = [2, 150], strides = [1, 1]} : vector<2x450xf32> to vector<2x150xf32>
    %84 = vector.extract_strided_slice %74 {offsets = [0, 150], sizes = [2, 150], strides = [1, 1]} : vector<2x450xf32> to vector<2x150xf32>
    %85 = arith.addf %83, %84 : vector<2x150xf32>
    %86 = arith.negf %85 : vector<2x150xf32>
    %87 = math.exp %86 : vector<2x150xf32>
    %cst_55 = arith.constant 1.000000e+00 : f32
    %88 = vector.broadcast %cst_55 : f32 to vector<2x150xf32>
    %89 = arith.addf %88, %87 : vector<2x150xf32>
    %90 = arith.divf %88, %89 : vector<2x150xf32>
    %91 = vector.extract_strided_slice %66 {offsets = [0, 300], sizes = [2, 150], strides = [1, 1]} : vector<2x450xf32> to vector<2x150xf32>
    %92 = vector.extract_strided_slice %74 {offsets = [0, 300], sizes = [2, 150], strides = [1, 1]} : vector<2x450xf32> to vector<2x150xf32>
    %93 = arith.mulf %82, %92 : vector<2x150xf32>
    %94 = arith.addf %91, %93 : vector<2x150xf32>
    %95 = math.tanh %94 : vector<2x150xf32>
    %cst_56 = arith.constant 1.000000e+00 : f32
    %96 = vector.broadcast %cst_56 : f32 to vector<2x150xf32>
    %97 = arith.subf %96, %90 : vector<2x150xf32>
    %98 = arith.mulf %97, %95 : vector<2x150xf32>
    %99 = arith.mulf %90, %67 : vector<2x150xf32>
    %100 = arith.addf %98, %99 : vector<2x150xf32>
    %c0_57 = arith.constant 0 : index
    %c0_58 = arith.constant 0 : index
    %101 = vector.load %arg19[%c0_57, %c0_58] : memref<2x150xf32, #tpu.memory_space<vmem>>, vector<2x150xf32>
    tpu.vector_store %arg19[%c0_57, %c0_58], %100 {strides = array<i32>} : memref<2x150xf32, #tpu.memory_space<vmem>>, vector<2x150xf32>,
    %c0_59 = arith.constant 0 : index
    %102 = arith.index_cast %c1_i32 : i32 to index
    %c0_60 = arith.constant 0 : index
    %c0_61 = arith.constant 0 : index
    %103 = vector.load %arg18[%c0_59, %102, %c0_60, %c0_61] : memref<1x8x2x150xf32, #tpu.memory_space<vmem>>, vector<1x1x2x150xf32>
    %104 = vector.shape_cast %103 : vector<1x1x2x150xf32> to vector<2x150xf32>
    %105 = vector.shape_cast %100 : vector<2x150xf32> to vector<1x1x2x150xf32>
    tpu.vector_store %arg18[%c0_59, %102, %c0_60, %c0_61], %105 {strides = array<i32>} : memref<1x8x2x150xf32, #tpu.memory_space<vmem>>, vector<1x1x2x150xf32>,
    %c2_i32_62 = arith.constant 2 : i32
    %c2_i32_63 = arith.constant 2 : i32
    %106 = arith.muli %c2_i32_62, %c2_i32_63 : i32
    %107 = arith.index_cast %106 : i32 to index
    %c0_64 = arith.constant 0 : index
    %108 = vector.load %arg20[%107, %c0_64] : memref<16x450xf32, #tpu.memory_space<vmem>>, vector<2x450xf32>
    %c0_65 = arith.constant 0 : index
    %c0_66 = arith.constant 0 : index
    %109 = vector.load %arg19[%c0_65, %c0_66] : memref<2x150xf32, #tpu.memory_space<vmem>>, vector<2x150xf32>
    %c0_67 = arith.constant 0 : index
    %c0_68 = arith.constant 0 : index
    %c0_69 = arith.constant 0 : index
    %110 = vector.load %arg4[%c0_67, %c0_68, %c0_69] : memref<1x150x450xf32, #tpu.memory_space<vmem>>, vector<1x150x450xf32>
    %111 = vector.shape_cast %110 : vector<1x150x450xf32> to vector<150x450xf32>
    %c0_70 = arith.constant 0 : index
    %c0_71 = arith.constant 0 : index
    %c0_72 = arith.constant 0 : index
    %112 = vector.load %arg6[%c0_70, %c0_71, %c0_72] : memref<1x1x450xf32, #tpu.memory_space<vmem>>, vector<1x1x450xf32>
    %113 = vector.shape_cast %112 : vector<1x1x450xf32> to vector<1x450xf32>
    %cst_73 = arith.constant dense<0.000000e+00> : vector<2x450xf32>
    %114 = tpu.matmul %109, %111, %cst_73 {dimension_numbers = #tpu.dot_dimension_numbers<[1], [0], [0], [1], [0, 0, 1, 1], [], []>} : vector<2x150xf32>, vector<150x450xf32>, vector<2x450xf32> -> vector<2x450xf32>
    %115 = vector.broadcast %113 : vector<1x450xf32> to vector<2x450xf32>
    %116 = arith.addf %114, %115 : vector<2x450xf32>
    %117 = vector.extract_strided_slice %108 {offsets = [0, 0], sizes = [2, 150], strides = [1, 1]} : vector<2x450xf32> to vector<2x150xf32>
    %118 = vector.extract_strided_slice %116 {offsets = [0, 0], sizes = [2, 150], strides = [1, 1]} : vector<2x450xf32> to vector<2x150xf32>
    %119 = arith.addf %117, %118 : vector<2x150xf32>
    %120 = arith.negf %119 : vector<2x150xf32>
    %121 = math.exp %120 : vector<2x150xf32>
    %cst_74 = arith.constant 1.000000e+00 : f32
    %122 = vector.broadcast %cst_74 : f32 to vector<2x150xf32>
    %123 = arith.addf %122, %121 : vector<2x150xf32>
    %124 = arith.divf %122, %123 : vector<2x150xf32>
    %125 = vector.extract_strided_slice %108 {offsets = [0, 150], sizes = [2, 150], strides = [1, 1]} : vector<2x450xf32> to vector<2x150xf32>
    %126 = vector.extract_strided_slice %116 {offsets = [0, 150], sizes = [2, 150], strides = [1, 1]} : vector<2x450xf32> to vector<2x150xf32>
    %127 = arith.addf %125, %126 : vector<2x150xf32>
    %128 = arith.negf %127 : vector<2x150xf32>
    %129 = math.exp %128 : vector<2x150xf32>
    %cst_75 = arith.constant 1.000000e+00 : f32
    %130 = vector.broadcast %cst_75 : f32 to vector<2x150xf32>
    %131 = arith.addf %130, %129 : vector<2x150xf32>
    %132 = arith.divf %130, %131 : vector<2x150xf32>
    %133 = vector.extract_strided_slice %108 {offsets = [0, 300], sizes = [2, 150], strides = [1, 1]} : vector<2x450xf32> to vector<2x150xf32>
    %134 = vector.extract_strided_slice %116 {offsets = [0, 300], sizes = [2, 150], strides = [1, 1]} : vector<2x450xf32> to vector<2x150xf32>
    %135 = arith.mulf %124, %134 : vector<2x150xf32>
    %136 = arith.addf %133, %135 : vector<2x150xf32>
    %137 = math.tanh %136 : vector<2x150xf32>
    %cst_76 = arith.constant 1.000000e+00 : f32
    %138 = vector.broadcast %cst_76 : f32 to vector<2x150xf32>
    %139 = arith.subf %138, %132 : vector<2x150xf32>
    %140 = arith.mulf %139, %137 : vector<2x150xf32>
    %141 = arith.mulf %132, %109 : vector<2x150xf32>
    %142 = arith.addf %140, %141 : vector<2x150xf32>
    %c0_77 = arith.constant 0 : index
    %c0_78 = arith.constant 0 : index
    %143 = vector.load %arg19[%c0_77, %c0_78] : memref<2x150xf32, #tpu.memory_space<vmem>>, vector<2x150xf32>
    tpu.vector_store %arg19[%c0_77, %c0_78], %142 {strides = array<i32>} : memref<2x150xf32, #tpu.memory_space<vmem>>, vector<2x150xf32>,
    %c0_79 = arith.constant 0 : index
    %144 = arith.index_cast %c2_i32_62 : i32 to index
    %c0_80 = arith.constant 0 : index
    %c0_81 = arith.constant 0 : index
    %145 = vector.load %arg18[%c0_79, %144, %c0_80, %c0_81] : memref<1x8x2x150xf32, #tpu.memory_space<vmem>>, vector<1x1x2x150xf32>
    %146 = vector.shape_cast %145 : vector<1x1x2x150xf32> to vector<2x150xf32>
    %147 = vector.shape_cast %142 : vector<2x150xf32> to vector<1x1x2x150xf32>
    tpu.vector_store %arg18[%c0_79, %144, %c0_80, %c0_81], %147 {strides = array<i32>} : memref<1x8x2x150xf32, #tpu.memory_space<vmem>>, vector<1x1x2x150xf32>,
    %c3_i32 = arith.constant 3 : i32
    %c2_i32_82 = arith.constant 2 : i32
    %148 = arith.muli %c3_i32, %c2_i32_82 : i32
    %149 = arith.index_cast %148 : i32 to index
    %c0_83 = arith.constant 0 : index
    %150 = vector.load %arg20[%149, %c0_83] : memref<16x450xf32, #tpu.memory_space<vmem>>, vector<2x450xf32>
    %c0_84 = arith.constant 0 : index
    %c0_85 = arith.constant 0 : index
    %151 = vector.load %arg19[%c0_84, %c0_85] : memref<2x150xf32, #tpu.memory_space<vmem>>, vector<2x150xf32>
    %c0_86 = arith.constant 0 : index
    %c0_87 = arith.constant 0 : index
    %c0_88 = arith.constant 0 : index
    %152 = vector.load %arg4[%c0_86, %c0_87, %c0_88] : memref<1x150x450xf32, #tpu.memory_space<vmem>>, vector<1x150x450xf32>
    %153 = vector.shape_cast %152 : vector<1x150x450xf32> to vector<150x450xf32>
    %c0_89 = arith.constant 0 : index
    %c0_90 = arith.constant 0 : index
    %c0_91 = arith.constant 0 : index
    %154 = vector.load %arg6[%c0_89, %c0_90, %c0_91] : memref<1x1x450xf32, #tpu.memory_space<vmem>>, vector<1x1x450xf32>
    %155 = vector.shape_cast %154 : vector<1x1x450xf32> to vector<1x450xf32>
    %cst_92 = arith.constant dense<0.000000e+00> : vector<2x450xf32>
    %156 = tpu.matmul %151, %153, %cst_92 {dimension_numbers = #tpu.dot_dimension_numbers<[1], [0], [0], [1], [0, 0, 1, 1], [], []>} : vector<2x150xf32>, vector<150x450xf32>, vector<2x450xf32> -> vector<2x450xf32>
    %157 = vector.broadcast %155 : vector<1x450xf32> to vector<2x450xf32>
    %158 = arith.addf %156, %157 : vector<2x450xf32>
    %159 = vector.extract_strided_slice %150 {offsets = [0, 0], sizes = [2, 150], strides = [1, 1]} : vector<2x450xf32> to vector<2x150xf32>
    %160 = vector.extract_strided_slice %158 {offsets = [0, 0], sizes = [2, 150], strides = [1, 1]} : vector<2x450xf32> to vector<2x150xf32>
    %161 = arith.addf %159, %160 : vector<2x150xf32>
    %162 = arith.negf %161 : vector<2x150xf32>
    %163 = math.exp %162 : vector<2x150xf32>
    %cst_93 = arith.constant 1.000000e+00 : f32
    %164 = vector.broadcast %cst_93 : f32 to vector<2x150xf32>
    %165 = arith.addf %164, %163 : vector<2x150xf32>
    %166 = arith.divf %164, %165 : vector<2x150xf32>
    %167 = vector.extract_strided_slice %150 {offsets = [0, 150], sizes = [2, 150], strides = [1, 1]} : vector<2x450xf32> to vector<2x150xf32>
    %168 = vector.extract_strided_slice %158 {offsets = [0, 150], sizes = [2, 150], strides = [1, 1]} : vector<2x450xf32> to vector<2x150xf32>
    %169 = arith.addf %167, %168 : vector<2x150xf32>
    %170 = arith.negf %169 : vector<2x150xf32>
    %171 = math.exp %170 : vector<2x150xf32>
    %cst_94 = arith.constant 1.000000e+00 : f32
    %172 = vector.broadcast %cst_94 : f32 to vector<2x150xf32>
    %173 = arith.addf %172, %171 : vector<2x150xf32>
    %174 = arith.divf %172, %173 : vector<2x150xf32>
    %175 = vector.extract_strided_slice %150 {offsets = [0, 300], sizes = [2, 150], strides = [1, 1]} : vector<2x450xf32> to vector<2x150xf32>
    %176 = vector.extract_strided_slice %158 {offsets = [0, 300], sizes = [2, 150], strides = [1, 1]} : vector<2x450xf32> to vector<2x150xf32>
    %177 = arith.mulf %166, %176 : vector<2x150xf32>
    %178 = arith.addf %175, %177 : vector<2x150xf32>
    %179 = math.tanh %178 : vector<2x150xf32>
    %cst_95 = arith.constant 1.000000e+00 : f32
    %180 = vector.broadcast %cst_95 : f32 to vector<2x150xf32>
    %181 = arith.subf %180, %174 : vector<2x150xf32>
    %182 = arith.mulf %181, %179 : vector<2x150xf32>
    %183 = arith.mulf %174, %151 : vector<2x150xf32>
    %184 = arith.addf %182, %183 : vector<2x150xf32>
    %c0_96 = arith.constant 0 : index
    %c0_97 = arith.constant 0 : index
    %185 = vector.load %arg19[%c0_96, %c0_97] : memref<2x150xf32, #tpu.memory_space<vmem>>, vector<2x150xf32>
    tpu.vector_store %arg19[%c0_96, %c0_97], %184 {strides = array<i32>} : memref<2x150xf32, #tpu.memory_space<vmem>>, vector<2x150xf32>,
    %c0_98 = arith.constant 0 : index
    %186 = arith.index_cast %c3_i32 : i32 to index
    %c0_99 = arith.constant 0 : index
    %c0_100 = arith.constant 0 : index
    %187 = vector.load %arg18[%c0_98, %186, %c0_99, %c0_100] : memref<1x8x2x150xf32, #tpu.memory_space<vmem>>, vector<1x1x2x150xf32>
    %188 = vector.shape_cast %187 : vector<1x1x2x150xf32> to vector<2x150xf32>
    %189 = vector.shape_cast %184 : vector<2x150xf32> to vector<1x1x2x150xf32>
    tpu.vector_store %arg18[%c0_98, %186, %c0_99, %c0_100], %189 {strides = array<i32>} : memref<1x8x2x150xf32, #tpu.memory_space<vmem>>, vector<1x1x2x150xf32>,
    %c4_i32 = arith.constant 4 : i32
    %c2_i32_101 = arith.constant 2 : i32
    %190 = arith.muli %c4_i32, %c2_i32_101 : i32
    %191 = arith.index_cast %190 : i32 to index
    %c0_102 = arith.constant 0 : index
    %192 = vector.load %arg20[%191, %c0_102] : memref<16x450xf32, #tpu.memory_space<vmem>>, vector<2x450xf32>
    %c0_103 = arith.constant 0 : index
    %c0_104 = arith.constant 0 : index
    %193 = vector.load %arg19[%c0_103, %c0_104] : memref<2x150xf32, #tpu.memory_space<vmem>>, vector<2x150xf32>
    %c0_105 = arith.constant 0 : index
    %c0_106 = arith.constant 0 : index
    %c0_107 = arith.constant 0 : index
    %194 = vector.load %arg4[%c0_105, %c0_106, %c0_107] : memref<1x150x450xf32, #tpu.memory_space<vmem>>, vector<1x150x450xf32>
    %195 = vector.shape_cast %194 : vector<1x150x450xf32> to vector<150x450xf32>
    %c0_108 = arith.constant 0 : index
    %c0_109 = arith.constant 0 : index
    %c0_110 = arith.constant 0 : index
    %196 = vector.load %arg6[%c0_108, %c0_109, %c0_110] : memref<1x1x450xf32, #tpu.memory_space<vmem>>, vector<1x1x450xf32>
    %197 = vector.shape_cast %196 : vector<1x1x450xf32> to vector<1x450xf32>
    %cst_111 = arith.constant dense<0.000000e+00> : vector<2x450xf32>
    %198 = tpu.matmul %193, %195, %cst_111 {dimension_numbers = #tpu.dot_dimension_numbers<[1], [0], [0], [1], [0, 0, 1, 1], [], []>} : vector<2x150xf32>, vector<150x450xf32>, vector<2x450xf32> -> vector<2x450xf32>
    %199 = vector.broadcast %197 : vector<1x450xf32> to vector<2x450xf32>
    %200 = arith.addf %198, %199 : vector<2x450xf32>
    %201 = vector.extract_strided_slice %192 {offsets = [0, 0], sizes = [2, 150], strides = [1, 1]} : vector<2x450xf32> to vector<2x150xf32>
    %202 = vector.extract_strided_slice %200 {offsets = [0, 0], sizes = [2, 150], strides = [1, 1]} : vector<2x450xf32> to vector<2x150xf32>
    %203 = arith.addf %201, %202 : vector<2x150xf32>
    %204 = arith.negf %203 : vector<2x150xf32>
    %205 = math.exp %204 : vector<2x150xf32>
    %cst_112 = arith.constant 1.000000e+00 : f32
    %206 = vector.broadcast %cst_112 : f32 to vector<2x150xf32>
    %207 = arith.addf %206, %205 : vector<2x150xf32>
    %208 = arith.divf %206, %207 : vector<2x150xf32>
    %209 = vector.extract_strided_slice %192 {offsets = [0, 150], sizes = [2, 150], strides = [1, 1]} : vector<2x450xf32> to vector<2x150xf32>
    %210 = vector.extract_strided_slice %200 {offsets = [0, 150], sizes = [2, 150], strides = [1, 1]} : vector<2x450xf32> to vector<2x150xf32>
    %211 = arith.addf %209, %210 : vector<2x150xf32>
    %212 = arith.negf %211 : vector<2x150xf32>
    %213 = math.exp %212 : vector<2x150xf32>
    %cst_113 = arith.constant 1.000000e+00 : f32
    %214 = vector.broadcast %cst_113 : f32 to vector<2x150xf32>
    %215 = arith.addf %214, %213 : vector<2x150xf32>
    %216 = arith.divf %214, %215 : vector<2x150xf32>
    %217 = vector.extract_strided_slice %192 {offsets = [0, 300], sizes = [2, 150], strides = [1, 1]} : vector<2x450xf32> to vector<2x150xf32>
    %218 = vector.extract_strided_slice %200 {offsets = [0, 300], sizes = [2, 150], strides = [1, 1]} : vector<2x450xf32> to vector<2x150xf32>
    %219 = arith.mulf %208, %218 : vector<2x150xf32>
    %220 = arith.addf %217, %219 : vector<2x150xf32>
    %221 = math.tanh %220 : vector<2x150xf32>
    %cst_114 = arith.constant 1.000000e+00 : f32
    %222 = vector.broadcast %cst_114 : f32 to vector<2x150xf32>
    %223 = arith.subf %222, %216 : vector<2x150xf32>
    %224 = arith.mulf %223, %221 : vector<2x150xf32>
    %225 = arith.mulf %216, %193 : vector<2x150xf32>
    %226 = arith.addf %224, %225 : vector<2x150xf32>
    %c0_115 = arith.constant 0 : index
    %c0_116 = arith.constant 0 : index
    %227 = vector.load %arg19[%c0_115, %c0_116] : memref<2x150xf32, #tpu.memory_space<vmem>>, vector<2x150xf32>
    tpu.vector_store %arg19[%c0_115, %c0_116], %226 {strides = array<i32>} : memref<2x150xf32, #tpu.memory_space<vmem>>, vector<2x150xf32>,
    %c0_117 = arith.constant 0 : index
    %228 = arith.index_cast %c4_i32 : i32 to index
    %c0_118 = arith.constant 0 : index
    %c0_119 = arith.constant 0 : index
    %229 = vector.load %arg18[%c0_117, %228, %c0_118, %c0_119] : memref<1x8x2x150xf32, #tpu.memory_space<vmem>>, vector<1x1x2x150xf32>
    %230 = vector.shape_cast %229 : vector<1x1x2x150xf32> to vector<2x150xf32>
    %231 = vector.shape_cast %226 : vector<2x150xf32> to vector<1x1x2x150xf32>
    tpu.vector_store %arg18[%c0_117, %228, %c0_118, %c0_119], %231 {strides = array<i32>} : memref<1x8x2x150xf32, #tpu.memory_space<vmem>>, vector<1x1x2x150xf32>,
    %c5_i32 = arith.constant 5 : i32
    %c2_i32_120 = arith.constant 2 : i32
    %232 = arith.muli %c5_i32, %c2_i32_120 : i32
    %233 = arith.index_cast %232 : i32 to index
    %c0_121 = arith.constant 0 : index
    %234 = vector.load %arg20[%233, %c0_121] : memref<16x450xf32, #tpu.memory_space<vmem>>, vector<2x450xf32>
    %c0_122 = arith.constant 0 : index
    %c0_123 = arith.constant 0 : index
    %235 = vector.load %arg19[%c0_122, %c0_123] : memref<2x150xf32, #tpu.memory_space<vmem>>, vector<2x150xf32>
    %c0_124 = arith.constant 0 : index
    %c0_125 = arith.constant 0 : index
    %c0_126 = arith.constant 0 : index
    %236 = vector.load %arg4[%c0_124, %c0_125, %c0_126] : memref<1x150x450xf32, #tpu.memory_space<vmem>>, vector<1x150x450xf32>
    %237 = vector.shape_cast %236 : vector<1x150x450xf32> to vector<150x450xf32>
    %c0_127 = arith.constant 0 : index
    %c0_128 = arith.constant 0 : index
    %c0_129 = arith.constant 0 : index
    %238 = vector.load %arg6[%c0_127, %c0_128, %c0_129] : memref<1x1x450xf32, #tpu.memory_space<vmem>>, vector<1x1x450xf32>
    %239 = vector.shape_cast %238 : vector<1x1x450xf32> to vector<1x450xf32>
    %cst_130 = arith.constant dense<0.000000e+00> : vector<2x450xf32>
    %240 = tpu.matmul %235, %237, %cst_130 {dimension_numbers = #tpu.dot_dimension_numbers<[1], [0], [0], [1], [0, 0, 1, 1], [], []>} : vector<2x150xf32>, vector<150x450xf32>, vector<2x450xf32> -> vector<2x450xf32>
    %241 = vector.broadcast %239 : vector<1x450xf32> to vector<2x450xf32>
    %242 = arith.addf %240, %241 : vector<2x450xf32>
    %243 = vector.extract_strided_slice %234 {offsets = [0, 0], sizes = [2, 150], strides = [1, 1]} : vector<2x450xf32> to vector<2x150xf32>
    %244 = vector.extract_strided_slice %242 {offsets = [0, 0], sizes = [2, 150], strides = [1, 1]} : vector<2x450xf32> to vector<2x150xf32>
    %245 = arith.addf %243, %244 : vector<2x150xf32>
    %246 = arith.negf %245 : vector<2x150xf32>
    %247 = math.exp %246 : vector<2x150xf32>
    %cst_131 = arith.constant 1.000000e+00 : f32
    %248 = vector.broadcast %cst_131 : f32 to vector<2x150xf32>
    %249 = arith.addf %248, %247 : vector<2x150xf32>
    %250 = arith.divf %248, %249 : vector<2x150xf32>
    %251 = vector.extract_strided_slice %234 {offsets = [0, 150], sizes = [2, 150], strides = [1, 1]} : vector<2x450xf32> to vector<2x150xf32>
    %252 = vector.extract_strided_slice %242 {offsets = [0, 150], sizes = [2, 150], strides = [1, 1]} : vector<2x450xf32> to vector<2x150xf32>
    %253 = arith.addf %251, %252 : vector<2x150xf32>
    %254 = arith.negf %253 : vector<2x150xf32>
    %255 = math.exp %254 : vector<2x150xf32>
    %cst_132 = arith.constant 1.000000e+00 : f32
    %256 = vector.broadcast %cst_132 : f32 to vector<2x150xf32>
    %257 = arith.addf %256, %255 : vector<2x150xf32>
    %258 = arith.divf %256, %257 : vector<2x150xf32>
    %259 = vector.extract_strided_slice %234 {offsets = [0, 300], sizes = [2, 150], strides = [1, 1]} : vector<2x450xf32> to vector<2x150xf32>
    %260 = vector.extract_strided_slice %242 {offsets = [0, 300], sizes = [2, 150], strides = [1, 1]} : vector<2x450xf32> to vector<2x150xf32>
    %261 = arith.mulf %250, %260 : vector<2x150xf32>
    %262 = arith.addf %259, %261 : vector<2x150xf32>
    %263 = math.tanh %262 : vector<2x150xf32>
    %cst_133 = arith.constant 1.000000e+00 : f32
    %264 = vector.broadcast %cst_133 : f32 to vector<2x150xf32>
    %265 = arith.subf %264, %258 : vector<2x150xf32>
    %266 = arith.mulf %265, %263 : vector<2x150xf32>
    %267 = arith.mulf %258, %235 : vector<2x150xf32>
    %268 = arith.addf %266, %267 : vector<2x150xf32>
    %c0_134 = arith.constant 0 : index
    %c0_135 = arith.constant 0 : index
    %269 = vector.load %arg19[%c0_134, %c0_135] : memref<2x150xf32, #tpu.memory_space<vmem>>, vector<2x150xf32>
    tpu.vector_store %arg19[%c0_134, %c0_135], %268 {strides = array<i32>} : memref<2x150xf32, #tpu.memory_space<vmem>>, vector<2x150xf32>,
    %c0_136 = arith.constant 0 : index
    %270 = arith.index_cast %c5_i32 : i32 to index
    %c0_137 = arith.constant 0 : index
    %c0_138 = arith.constant 0 : index
    %271 = vector.load %arg18[%c0_136, %270, %c0_137, %c0_138] : memref<1x8x2x150xf32, #tpu.memory_space<vmem>>, vector<1x1x2x150xf32>
    %272 = vector.shape_cast %271 : vector<1x1x2x150xf32> to vector<2x150xf32>
    %273 = vector.shape_cast %268 : vector<2x150xf32> to vector<1x1x2x150xf32>
    tpu.vector_store %arg18[%c0_136, %270, %c0_137, %c0_138], %273 {strides = array<i32>} : memref<1x8x2x150xf32, #tpu.memory_space<vmem>>, vector<1x1x2x150xf32>,
    %c6_i32 = arith.constant 6 : i32
    %c2_i32_139 = arith.constant 2 : i32
    %274 = arith.muli %c6_i32, %c2_i32_139 : i32
    %275 = arith.index_cast %274 : i32 to index
    %c0_140 = arith.constant 0 : index
    %276 = vector.load %arg20[%275, %c0_140] : memref<16x450xf32, #tpu.memory_space<vmem>>, vector<2x450xf32>
    %c0_141 = arith.constant 0 : index
    %c0_142 = arith.constant 0 : index
    %277 = vector.load %arg19[%c0_141, %c0_142] : memref<2x150xf32, #tpu.memory_space<vmem>>, vector<2x150xf32>
    %c0_143 = arith.constant 0 : index
    %c0_144 = arith.constant 0 : index
    %c0_145 = arith.constant 0 : index
    %278 = vector.load %arg4[%c0_143, %c0_144, %c0_145] : memref<1x150x450xf32, #tpu.memory_space<vmem>>, vector<1x150x450xf32>
    %279 = vector.shape_cast %278 : vector<1x150x450xf32> to vector<150x450xf32>
    %c0_146 = arith.constant 0 : index
    %c0_147 = arith.constant 0 : index
    %c0_148 = arith.constant 0 : index
    %280 = vector.load %arg6[%c0_146, %c0_147, %c0_148] : memref<1x1x450xf32, #tpu.memory_space<vmem>>, vector<1x1x450xf32>
    %281 = vector.shape_cast %280 : vector<1x1x450xf32> to vector<1x450xf32>
    %cst_149 = arith.constant dense<0.000000e+00> : vector<2x450xf32>
    %282 = tpu.matmul %277, %279, %cst_149 {dimension_numbers = #tpu.dot_dimension_numbers<[1], [0], [0], [1], [0, 0, 1, 1], [], []>} : vector<2x150xf32>, vector<150x450xf32>, vector<2x450xf32> -> vector<2x450xf32>
    %283 = vector.broadcast %281 : vector<1x450xf32> to vector<2x450xf32>
    %284 = arith.addf %282, %283 : vector<2x450xf32>
    %285 = vector.extract_strided_slice %276 {offsets = [0, 0], sizes = [2, 150], strides = [1, 1]} : vector<2x450xf32> to vector<2x150xf32>
    %286 = vector.extract_strided_slice %284 {offsets = [0, 0], sizes = [2, 150], strides = [1, 1]} : vector<2x450xf32> to vector<2x150xf32>
    %287 = arith.addf %285, %286 : vector<2x150xf32>
    %288 = arith.negf %287 : vector<2x150xf32>
    %289 = math.exp %288 : vector<2x150xf32>
    %cst_150 = arith.constant 1.000000e+00 : f32
    %290 = vector.broadcast %cst_150 : f32 to vector<2x150xf32>
    %291 = arith.addf %290, %289 : vector<2x150xf32>
    %292 = arith.divf %290, %291 : vector<2x150xf32>
    %293 = vector.extract_strided_slice %276 {offsets = [0, 150], sizes = [2, 150], strides = [1, 1]} : vector<2x450xf32> to vector<2x150xf32>
    %294 = vector.extract_strided_slice %284 {offsets = [0, 150], sizes = [2, 150], strides = [1, 1]} : vector<2x450xf32> to vector<2x150xf32>
    %295 = arith.addf %293, %294 : vector<2x150xf32>
    %296 = arith.negf %295 : vector<2x150xf32>
    %297 = math.exp %296 : vector<2x150xf32>
    %cst_151 = arith.constant 1.000000e+00 : f32
    %298 = vector.broadcast %cst_151 : f32 to vector<2x150xf32>
    %299 = arith.addf %298, %297 : vector<2x150xf32>
    %300 = arith.divf %298, %299 : vector<2x150xf32>
    %301 = vector.extract_strided_slice %276 {offsets = [0, 300], sizes = [2, 150], strides = [1, 1]} : vector<2x450xf32> to vector<2x150xf32>
    %302 = vector.extract_strided_slice %284 {offsets = [0, 300], sizes = [2, 150], strides = [1, 1]} : vector<2x450xf32> to vector<2x150xf32>
    %303 = arith.mulf %292, %302 : vector<2x150xf32>
    %304 = arith.addf %301, %303 : vector<2x150xf32>
    %305 = math.tanh %304 : vector<2x150xf32>
    %cst_152 = arith.constant 1.000000e+00 : f32
    %306 = vector.broadcast %cst_152 : f32 to vector<2x150xf32>
    %307 = arith.subf %306, %300 : vector<2x150xf32>
    %308 = arith.mulf %307, %305 : vector<2x150xf32>
    %309 = arith.mulf %300, %277 : vector<2x150xf32>
    %310 = arith.addf %308, %309 : vector<2x150xf32>
    %c0_153 = arith.constant 0 : index
    %c0_154 = arith.constant 0 : index
    %311 = vector.load %arg19[%c0_153, %c0_154] : memref<2x150xf32, #tpu.memory_space<vmem>>, vector<2x150xf32>
    tpu.vector_store %arg19[%c0_153, %c0_154], %310 {strides = array<i32>} : memref<2x150xf32, #tpu.memory_space<vmem>>, vector<2x150xf32>,
    %c0_155 = arith.constant 0 : index
    %312 = arith.index_cast %c6_i32 : i32 to index
    %c0_156 = arith.constant 0 : index
    %c0_157 = arith.constant 0 : index
    %313 = vector.load %arg18[%c0_155, %312, %c0_156, %c0_157] : memref<1x8x2x150xf32, #tpu.memory_space<vmem>>, vector<1x1x2x150xf32>
    %314 = vector.shape_cast %313 : vector<1x1x2x150xf32> to vector<2x150xf32>
    %315 = vector.shape_cast %310 : vector<2x150xf32> to vector<1x1x2x150xf32>
    tpu.vector_store %arg18[%c0_155, %312, %c0_156, %c0_157], %315 {strides = array<i32>} : memref<1x8x2x150xf32, #tpu.memory_space<vmem>>, vector<1x1x2x150xf32>,
    %c7_i32 = arith.constant 7 : i32
    %c2_i32_158 = arith.constant 2 : i32
    %316 = arith.muli %c7_i32, %c2_i32_158 : i32
    %317 = arith.index_cast %316 : i32 to index
    %c0_159 = arith.constant 0 : index
    %318 = vector.load %arg20[%317, %c0_159] : memref<16x450xf32, #tpu.memory_space<vmem>>, vector<2x450xf32>
    %c0_160 = arith.constant 0 : index
    %c0_161 = arith.constant 0 : index
    %319 = vector.load %arg19[%c0_160, %c0_161] : memref<2x150xf32, #tpu.memory_space<vmem>>, vector<2x150xf32>
    %c0_162 = arith.constant 0 : index
    %c0_163 = arith.constant 0 : index
    %c0_164 = arith.constant 0 : index
    %320 = vector.load %arg4[%c0_162, %c0_163, %c0_164] : memref<1x150x450xf32, #tpu.memory_space<vmem>>, vector<1x150x450xf32>
    %321 = vector.shape_cast %320 : vector<1x150x450xf32> to vector<150x450xf32>
    %c0_165 = arith.constant 0 : index
    %c0_166 = arith.constant 0 : index
    %c0_167 = arith.constant 0 : index
    %322 = vector.load %arg6[%c0_165, %c0_166, %c0_167] : memref<1x1x450xf32, #tpu.memory_space<vmem>>, vector<1x1x450xf32>
    %323 = vector.shape_cast %322 : vector<1x1x450xf32> to vector<1x450xf32>
    %cst_168 = arith.constant dense<0.000000e+00> : vector<2x450xf32>
    %324 = tpu.matmul %319, %321, %cst_168 {dimension_numbers = #tpu.dot_dimension_numbers<[1], [0], [0], [1], [0, 0, 1, 1], [], []>} : vector<2x150xf32>, vector<150x450xf32>, vector<2x450xf32> -> vector<2x450xf32>
    %325 = vector.broadcast %323 : vector<1x450xf32> to vector<2x450xf32>
    %326 = arith.addf %324, %325 : vector<2x450xf32>
    %327 = vector.extract_strided_slice %318 {offsets = [0, 0], sizes = [2, 150], strides = [1, 1]} : vector<2x450xf32> to vector<2x150xf32>
    %328 = vector.extract_strided_slice %326 {offsets = [0, 0], sizes = [2, 150], strides = [1, 1]} : vector<2x450xf32> to vector<2x150xf32>
    %329 = arith.addf %327, %328 : vector<2x150xf32>
    %330 = arith.negf %329 : vector<2x150xf32>
    %331 = math.exp %330 : vector<2x150xf32>
    %cst_169 = arith.constant 1.000000e+00 : f32
    %332 = vector.broadcast %cst_169 : f32 to vector<2x150xf32>
    %333 = arith.addf %332, %331 : vector<2x150xf32>
    %334 = arith.divf %332, %333 : vector<2x150xf32>
    %335 = vector.extract_strided_slice %318 {offsets = [0, 150], sizes = [2, 150], strides = [1, 1]} : vector<2x450xf32> to vector<2x150xf32>
    %336 = vector.extract_strided_slice %326 {offsets = [0, 150], sizes = [2, 150], strides = [1, 1]} : vector<2x450xf32> to vector<2x150xf32>
    %337 = arith.addf %335, %336 : vector<2x150xf32>
    %338 = arith.negf %337 : vector<2x150xf32>
    %339 = math.exp %338 : vector<2x150xf32>
    %cst_170 = arith.constant 1.000000e+00 : f32
    %340 = vector.broadcast %cst_170 : f32 to vector<2x150xf32>
    %341 = arith.addf %340, %339 : vector<2x150xf32>
    %342 = arith.divf %340, %341 : vector<2x150xf32>
    %343 = vector.extract_strided_slice %318 {offsets = [0, 300], sizes = [2, 150], strides = [1, 1]} : vector<2x450xf32> to vector<2x150xf32>
    %344 = vector.extract_strided_slice %326 {offsets = [0, 300], sizes = [2, 150], strides = [1, 1]} : vector<2x450xf32> to vector<2x150xf32>
    %345 = arith.mulf %334, %344 : vector<2x150xf32>
    %346 = arith.addf %343, %345 : vector<2x150xf32>
    %347 = math.tanh %346 : vector<2x150xf32>
    %cst_171 = arith.constant 1.000000e+00 : f32
    %348 = vector.broadcast %cst_171 : f32 to vector<2x150xf32>
    %349 = arith.subf %348, %342 : vector<2x150xf32>
    %350 = arith.mulf %349, %347 : vector<2x150xf32>
    %351 = arith.mulf %342, %319 : vector<2x150xf32>
    %352 = arith.addf %350, %351 : vector<2x150xf32>
    %c0_172 = arith.constant 0 : index
    %c0_173 = arith.constant 0 : index
    %353 = vector.load %arg19[%c0_172, %c0_173] : memref<2x150xf32, #tpu.memory_space<vmem>>, vector<2x150xf32>
    tpu.vector_store %arg19[%c0_172, %c0_173], %352 {strides = array<i32>} : memref<2x150xf32, #tpu.memory_space<vmem>>, vector<2x150xf32>,
    %c0_174 = arith.constant 0 : index
    %354 = arith.index_cast %c7_i32 : i32 to index
    %c0_175 = arith.constant 0 : index
    %c0_176 = arith.constant 0 : index
    %355 = vector.load %arg18[%c0_174, %354, %c0_175, %c0_176] : memref<1x8x2x150xf32, #tpu.memory_space<vmem>>, vector<1x1x2x150xf32>
    %356 = vector.shape_cast %355 : vector<1x1x2x150xf32> to vector<2x150xf32>
    %357 = vector.shape_cast %352 : vector<2x150xf32> to vector<1x1x2x150xf32>
    tpu.vector_store %arg18[%c0_174, %354, %c0_175, %c0_176], %357 {strides = array<i32>} : memref<1x8x2x150xf32, #tpu.memory_space<vmem>>, vector<1x1x2x150xf32>,
    %c8_i32 = arith.constant 8 : i32
    %c0_i32_177 = arith.constant 0 : i32
    %c2_i32_178 = arith.constant 2 : i32
    %358 = arith.muli %c0_i32_177, %c2_i32_178 : i32
    %359 = arith.index_cast %358 : i32 to index
    %c0_179 = arith.constant 0 : index
    %360 = vector.load %arg21[%359, %c0_179] : memref<12x450xf32, #tpu.memory_space<vmem>>, vector<2x450xf32>
    %c0_180 = arith.constant 0 : index
    %c0_181 = arith.constant 0 : index
    %361 = vector.load %arg19[%c0_180, %c0_181] : memref<2x150xf32, #tpu.memory_space<vmem>>, vector<2x150xf32>
    %c0_182 = arith.constant 0 : index
    %c0_183 = arith.constant 0 : index
    %c0_184 = arith.constant 0 : index
    %362 = vector.load %arg8[%c0_182, %c0_183, %c0_184] : memref<1x150x450xf32, #tpu.memory_space<vmem>>, vector<1x150x450xf32>
    %363 = vector.shape_cast %362 : vector<1x150x450xf32> to vector<150x450xf32>
    %c0_185 = arith.constant 0 : index
    %c0_186 = arith.constant 0 : index
    %c0_187 = arith.constant 0 : index
    %364 = vector.load %arg10[%c0_185, %c0_186, %c0_187] : memref<1x1x450xf32, #tpu.memory_space<vmem>>, vector<1x1x450xf32>
    %365 = vector.shape_cast %364 : vector<1x1x450xf32> to vector<1x450xf32>
    %cst_188 = arith.constant dense<0.000000e+00> : vector<2x450xf32>
    %366 = tpu.matmul %361, %363, %cst_188 {dimension_numbers = #tpu.dot_dimension_numbers<[1], [0], [0], [1], [0, 0, 1, 1], [], []>} : vector<2x150xf32>, vector<150x450xf32>, vector<2x450xf32> -> vector<2x450xf32>
    %367 = vector.broadcast %365 : vector<1x450xf32> to vector<2x450xf32>
    %368 = arith.addf %366, %367 : vector<2x450xf32>
    %369 = vector.extract_strided_slice %360 {offsets = [0, 0], sizes = [2, 150], strides = [1, 1]} : vector<2x450xf32> to vector<2x150xf32>
    %370 = vector.extract_strided_slice %368 {offsets = [0, 0], sizes = [2, 150], strides = [1, 1]} : vector<2x450xf32> to vector<2x150xf32>
    %371 = arith.addf %369, %370 : vector<2x150xf32>
    %372 = arith.negf %371 : vector<2x150xf32>
    %373 = math.exp %372 : vector<2x150xf32>
    %cst_189 = arith.constant 1.000000e+00 : f32
    %374 = vector.broadcast %cst_189 : f32 to vector<2x150xf32>
    %375 = arith.addf %374, %373 : vector<2x150xf32>
    %376 = arith.divf %374, %375 : vector<2x150xf32>
    %377 = vector.extract_strided_slice %360 {offsets = [0, 150], sizes = [2, 150], strides = [1, 1]} : vector<2x450xf32> to vector<2x150xf32>
    %378 = vector.extract_strided_slice %368 {offsets = [0, 150], sizes = [2, 150], strides = [1, 1]} : vector<2x450xf32> to vector<2x150xf32>
    %379 = arith.addf %377, %378 : vector<2x150xf32>
    %380 = arith.negf %379 : vector<2x150xf32>
    %381 = math.exp %380 : vector<2x150xf32>
    %cst_190 = arith.constant 1.000000e+00 : f32
    %382 = vector.broadcast %cst_190 : f32 to vector<2x150xf32>
    %383 = arith.addf %382, %381 : vector<2x150xf32>
    %384 = arith.divf %382, %383 : vector<2x150xf32>
    %385 = vector.extract_strided_slice %360 {offsets = [0, 300], sizes = [2, 150], strides = [1, 1]} : vector<2x450xf32> to vector<2x150xf32>
    %386 = vector.extract_strided_slice %368 {offsets = [0, 300], sizes = [2, 150], strides = [1, 1]} : vector<2x450xf32> to vector<2x150xf32>
    %387 = arith.mulf %376, %386 : vector<2x150xf32>
    %388 = arith.addf %385, %387 : vector<2x150xf32>
    %389 = math.tanh %388 : vector<2x150xf32>
    %cst_191 = arith.constant 1.000000e+00 : f32
    %390 = vector.broadcast %cst_191 : f32 to vector<2x150xf32>
    %391 = arith.subf %390, %384 : vector<2x150xf32>
    %392 = arith.mulf %391, %389 : vector<2x150xf32>
    %393 = arith.mulf %384, %361 : vector<2x150xf32>
    %394 = arith.addf %392, %393 : vector<2x150xf32>
    %c0_192 = arith.constant 0 : index
    %c0_193 = arith.constant 0 : index
    %395 = vector.load %arg19[%c0_192, %c0_193] : memref<2x150xf32, #tpu.memory_space<vmem>>, vector<2x150xf32>
    tpu.vector_store %arg19[%c0_192, %c0_193], %394 {strides = array<i32>} : memref<2x150xf32, #tpu.memory_space<vmem>>, vector<2x150xf32>,
    %396 = arith.index_cast %c0_i32_177 : i32 to index
    %c0_194 = arith.constant 0 : index
    %c0_195 = arith.constant 0 : index
    %397 = vector.load %arg22[%396, %c0_194, %c0_195] : memref<6x2x150xf32, #tpu.memory_space<vmem>>, vector<1x2x150xf32>
    %398 = vector.shape_cast %397 : vector<1x2x150xf32> to vector<2x150xf32>
    %399 = vector.shape_cast %394 : vector<2x150xf32> to vector<1x2x150xf32>
    tpu.vector_store %arg22[%396, %c0_194, %c0_195], %399 {strides = array<i32>} : memref<6x2x150xf32, #tpu.memory_space<vmem>>, vector<1x2x150xf32>,
    %c1_i32_196 = arith.constant 1 : i32
    %c2_i32_197 = arith.constant 2 : i32
    %400 = arith.muli %c1_i32_196, %c2_i32_197 : i32
    %401 = arith.index_cast %400 : i32 to index
    %c0_198 = arith.constant 0 : index
    %402 = vector.load %arg21[%401, %c0_198] : memref<12x450xf32, #tpu.memory_space<vmem>>, vector<2x450xf32>
    %c0_199 = arith.constant 0 : index
    %c0_200 = arith.constant 0 : index
    %403 = vector.load %arg19[%c0_199, %c0_200] : memref<2x150xf32, #tpu.memory_space<vmem>>, vector<2x150xf32>
    %c0_201 = arith.constant 0 : index
    %c0_202 = arith.constant 0 : index
    %c0_203 = arith.constant 0 : index
    %404 = vector.load %arg8[%c0_201, %c0_202, %c0_203] : memref<1x150x450xf32, #tpu.memory_space<vmem>>, vector<1x150x450xf32>
    %405 = vector.shape_cast %404 : vector<1x150x450xf32> to vector<150x450xf32>
    %c0_204 = arith.constant 0 : index
    %c0_205 = arith.constant 0 : index
    %c0_206 = arith.constant 0 : index
    %406 = vector.load %arg10[%c0_204, %c0_205, %c0_206] : memref<1x1x450xf32, #tpu.memory_space<vmem>>, vector<1x1x450xf32>
    %407 = vector.shape_cast %406 : vector<1x1x450xf32> to vector<1x450xf32>
    %cst_207 = arith.constant dense<0.000000e+00> : vector<2x450xf32>
    %408 = tpu.matmul %403, %405, %cst_207 {dimension_numbers = #tpu.dot_dimension_numbers<[1], [0], [0], [1], [0, 0, 1, 1], [], []>} : vector<2x150xf32>, vector<150x450xf32>, vector<2x450xf32> -> vector<2x450xf32>
    %409 = vector.broadcast %407 : vector<1x450xf32> to vector<2x450xf32>
    %410 = arith.addf %408, %409 : vector<2x450xf32>
    %411 = vector.extract_strided_slice %402 {offsets = [0, 0], sizes = [2, 150], strides = [1, 1]} : vector<2x450xf32> to vector<2x150xf32>
    %412 = vector.extract_strided_slice %410 {offsets = [0, 0], sizes = [2, 150], strides = [1, 1]} : vector<2x450xf32> to vector<2x150xf32>
    %413 = arith.addf %411, %412 : vector<2x150xf32>
    %414 = arith.negf %413 : vector<2x150xf32>
    %415 = math.exp %414 : vector<2x150xf32>
    %cst_208 = arith.constant 1.000000e+00 : f32
    %416 = vector.broadcast %cst_208 : f32 to vector<2x150xf32>
    %417 = arith.addf %416, %415 : vector<2x150xf32>
    %418 = arith.divf %416, %417 : vector<2x150xf32>
    %419 = vector.extract_strided_slice %402 {offsets = [0, 150], sizes = [2, 150], strides = [1, 1]} : vector<2x450xf32> to vector<2x150xf32>
    %420 = vector.extract_strided_slice %410 {offsets = [0, 150], sizes = [2, 150], strides = [1, 1]} : vector<2x450xf32> to vector<2x150xf32>
    %421 = arith.addf %419, %420 : vector<2x150xf32>
    %422 = arith.negf %421 : vector<2x150xf32>
    %423 = math.exp %422 : vector<2x150xf32>
    %cst_209 = arith.constant 1.000000e+00 : f32
    %424 = vector.broadcast %cst_209 : f32 to vector<2x150xf32>
    %425 = arith.addf %424, %423 : vector<2x150xf32>
    %426 = arith.divf %424, %425 : vector<2x150xf32>
    %427 = vector.extract_strided_slice %402 {offsets = [0, 300], sizes = [2, 150], strides = [1, 1]} : vector<2x450xf32> to vector<2x150xf32>
    %428 = vector.extract_strided_slice %410 {offsets = [0, 300], sizes = [2, 150], strides = [1, 1]} : vector<2x450xf32> to vector<2x150xf32>
    %429 = arith.mulf %418, %428 : vector<2x150xf32>
    %430 = arith.addf %427, %429 : vector<2x150xf32>
    %431 = math.tanh %430 : vector<2x150xf32>
    %cst_210 = arith.constant 1.000000e+00 : f32
    %432 = vector.broadcast %cst_210 : f32 to vector<2x150xf32>
    %433 = arith.subf %432, %426 : vector<2x150xf32>
    %434 = arith.mulf %433, %431 : vector<2x150xf32>
    %435 = arith.mulf %426, %403 : vector<2x150xf32>
    %436 = arith.addf %434, %435 : vector<2x150xf32>
    %c0_211 = arith.constant 0 : index
    %c0_212 = arith.constant 0 : index
    %437 = vector.load %arg19[%c0_211, %c0_212] : memref<2x150xf32, #tpu.memory_space<vmem>>, vector<2x150xf32>
    tpu.vector_store %arg19[%c0_211, %c0_212], %436 {strides = array<i32>} : memref<2x150xf32, #tpu.memory_space<vmem>>, vector<2x150xf32>,
    %438 = arith.index_cast %c1_i32_196 : i32 to index
    %c0_213 = arith.constant 0 : index
    %c0_214 = arith.constant 0 : index
    %439 = vector.load %arg22[%438, %c0_213, %c0_214] : memref<6x2x150xf32, #tpu.memory_space<vmem>>, vector<1x2x150xf32>
    %440 = vector.shape_cast %439 : vector<1x2x150xf32> to vector<2x150xf32>
    %441 = vector.shape_cast %436 : vector<2x150xf32> to vector<1x2x150xf32>
    tpu.vector_store %arg22[%438, %c0_213, %c0_214], %441 {strides = array<i32>} : memref<6x2x150xf32, #tpu.memory_space<vmem>>, vector<1x2x150xf32>,
    %c2_i32_215 = arith.constant 2 : i32
    %c2_i32_216 = arith.constant 2 : i32
    %442 = arith.muli %c2_i32_215, %c2_i32_216 : i32
    %443 = arith.index_cast %442 : i32 to index
    %c0_217 = arith.constant 0 : index
    %444 = vector.load %arg21[%443, %c0_217] : memref<12x450xf32, #tpu.memory_space<vmem>>, vector<2x450xf32>
    %c0_218 = arith.constant 0 : index
    %c0_219 = arith.constant 0 : index
    %445 = vector.load %arg19[%c0_218, %c0_219] : memref<2x150xf32, #tpu.memory_space<vmem>>, vector<2x150xf32>
    %c0_220 = arith.constant 0 : index
    %c0_221 = arith.constant 0 : index
    %c0_222 = arith.constant 0 : index
    %446 = vector.load %arg8[%c0_220, %c0_221, %c0_222] : memref<1x150x450xf32, #tpu.memory_space<vmem>>, vector<1x150x450xf32>
    %447 = vector.shape_cast %446 : vector<1x150x450xf32> to vector<150x450xf32>
    %c0_223 = arith.constant 0 : index
    %c0_224 = arith.constant 0 : index
    %c0_225 = arith.constant 0 : index
    %448 = vector.load %arg10[%c0_223, %c0_224, %c0_225] : memref<1x1x450xf32, #tpu.memory_space<vmem>>, vector<1x1x450xf32>
    %449 = vector.shape_cast %448 : vector<1x1x450xf32> to vector<1x450xf32>
    %cst_226 = arith.constant dense<0.000000e+00> : vector<2x450xf32>
    %450 = tpu.matmul %445, %447, %cst_226 {dimension_numbers = #tpu.dot_dimension_numbers<[1], [0], [0], [1], [0, 0, 1, 1], [], []>} : vector<2x150xf32>, vector<150x450xf32>, vector<2x450xf32> -> vector<2x450xf32>
    %451 = vector.broadcast %449 : vector<1x450xf32> to vector<2x450xf32>
    %452 = arith.addf %450, %451 : vector<2x450xf32>
    %453 = vector.extract_strided_slice %444 {offsets = [0, 0], sizes = [2, 150], strides = [1, 1]} : vector<2x450xf32> to vector<2x150xf32>
    %454 = vector.extract_strided_slice %452 {offsets = [0, 0], sizes = [2, 150], strides = [1, 1]} : vector<2x450xf32> to vector<2x150xf32>
    %455 = arith.addf %453, %454 : vector<2x150xf32>
    %456 = arith.negf %455 : vector<2x150xf32>
    %457 = math.exp %456 : vector<2x150xf32>
    %cst_227 = arith.constant 1.000000e+00 : f32
    %458 = vector.broadcast %cst_227 : f32 to vector<2x150xf32>
    %459 = arith.addf %458, %457 : vector<2x150xf32>
    %460 = arith.divf %458, %459 : vector<2x150xf32>
    %461 = vector.extract_strided_slice %444 {offsets = [0, 150], sizes = [2, 150], strides = [1, 1]} : vector<2x450xf32> to vector<2x150xf32>
    %462 = vector.extract_strided_slice %452 {offsets = [0, 150], sizes = [2, 150], strides = [1, 1]} : vector<2x450xf32> to vector<2x150xf32>
    %463 = arith.addf %461, %462 : vector<2x150xf32>
    %464 = arith.negf %463 : vector<2x150xf32>
    %465 = math.exp %464 : vector<2x150xf32>
    %cst_228 = arith.constant 1.000000e+00 : f32
    %466 = vector.broadcast %cst_228 : f32 to vector<2x150xf32>
    %467 = arith.addf %466, %465 : vector<2x150xf32>
    %468 = arith.divf %466, %467 : vector<2x150xf32>
    %469 = vector.extract_strided_slice %444 {offsets = [0, 300], sizes = [2, 150], strides = [1, 1]} : vector<2x450xf32> to vector<2x150xf32>
    %470 = vector.extract_strided_slice %452 {offsets = [0, 300], sizes = [2, 150], strides = [1, 1]} : vector<2x450xf32> to vector<2x150xf32>
    %471 = arith.mulf %460, %470 : vector<2x150xf32>
    %472 = arith.addf %469, %471 : vector<2x150xf32>
    %473 = math.tanh %472 : vector<2x150xf32>
    %cst_229 = arith.constant 1.000000e+00 : f32
    %474 = vector.broadcast %cst_229 : f32 to vector<2x150xf32>
    %475 = arith.subf %474, %468 : vector<2x150xf32>
    %476 = arith.mulf %475, %473 : vector<2x150xf32>
    %477 = arith.mulf %468, %445 : vector<2x150xf32>
    %478 = arith.addf %476, %477 : vector<2x150xf32>
    %c0_230 = arith.constant 0 : index
    %c0_231 = arith.constant 0 : index
    %479 = vector.load %arg19[%c0_230, %c0_231] : memref<2x150xf32, #tpu.memory_space<vmem>>, vector<2x150xf32>
    tpu.vector_store %arg19[%c0_230, %c0_231], %478 {strides = array<i32>} : memref<2x150xf32, #tpu.memory_space<vmem>>, vector<2x150xf32>,
    %480 = arith.index_cast %c2_i32_215 : i32 to index
    %c0_232 = arith.constant 0 : index
    %c0_233 = arith.constant 0 : index
    %481 = vector.load %arg22[%480, %c0_232, %c0_233] : memref<6x2x150xf32, #tpu.memory_space<vmem>>, vector<1x2x150xf32>
    %482 = vector.shape_cast %481 : vector<1x2x150xf32> to vector<2x150xf32>
    %483 = vector.shape_cast %478 : vector<2x150xf32> to vector<1x2x150xf32>
    tpu.vector_store %arg22[%480, %c0_232, %c0_233], %483 {strides = array<i32>} : memref<6x2x150xf32, #tpu.memory_space<vmem>>, vector<1x2x150xf32>,
    %c3_i32_234 = arith.constant 3 : i32
    %c2_i32_235 = arith.constant 2 : i32
    %484 = arith.muli %c3_i32_234, %c2_i32_235 : i32
    %485 = arith.index_cast %484 : i32 to index
    %c0_236 = arith.constant 0 : index
    %486 = vector.load %arg21[%485, %c0_236] : memref<12x450xf32, #tpu.memory_space<vmem>>, vector<2x450xf32>
    %c0_237 = arith.constant 0 : index
    %c0_238 = arith.constant 0 : index
    %487 = vector.load %arg19[%c0_237, %c0_238] : memref<2x150xf32, #tpu.memory_space<vmem>>, vector<2x150xf32>
    %c0_239 = arith.constant 0 : index
    %c0_240 = arith.constant 0 : index
    %c0_241 = arith.constant 0 : index
    %488 = vector.load %arg8[%c0_239, %c0_240, %c0_241] : memref<1x150x450xf32, #tpu.memory_space<vmem>>, vector<1x150x450xf32>
    %489 = vector.shape_cast %488 : vector<1x150x450xf32> to vector<150x450xf32>
    %c0_242 = arith.constant 0 : index
    %c0_243 = arith.constant 0 : index
    %c0_244 = arith.constant 0 : index
    %490 = vector.load %arg10[%c0_242, %c0_243, %c0_244] : memref<1x1x450xf32, #tpu.memory_space<vmem>>, vector<1x1x450xf32>
    %491 = vector.shape_cast %490 : vector<1x1x450xf32> to vector<1x450xf32>
    %cst_245 = arith.constant dense<0.000000e+00> : vector<2x450xf32>
    %492 = tpu.matmul %487, %489, %cst_245 {dimension_numbers = #tpu.dot_dimension_numbers<[1], [0], [0], [1], [0, 0, 1, 1], [], []>} : vector<2x150xf32>, vector<150x450xf32>, vector<2x450xf32> -> vector<2x450xf32>
    %493 = vector.broadcast %491 : vector<1x450xf32> to vector<2x450xf32>
    %494 = arith.addf %492, %493 : vector<2x450xf32>
    %495 = vector.extract_strided_slice %486 {offsets = [0, 0], sizes = [2, 150], strides = [1, 1]} : vector<2x450xf32> to vector<2x150xf32>
    %496 = vector.extract_strided_slice %494 {offsets = [0, 0], sizes = [2, 150], strides = [1, 1]} : vector<2x450xf32> to vector<2x150xf32>
    %497 = arith.addf %495, %496 : vector<2x150xf32>
    %498 = arith.negf %497 : vector<2x150xf32>
    %499 = math.exp %498 : vector<2x150xf32>
    %cst_246 = arith.constant 1.000000e+00 : f32
    %500 = vector.broadcast %cst_246 : f32 to vector<2x150xf32>
    %501 = arith.addf %500, %499 : vector<2x150xf32>
    %502 = arith.divf %500, %501 : vector<2x150xf32>
    %503 = vector.extract_strided_slice %486 {offsets = [0, 150], sizes = [2, 150], strides = [1, 1]} : vector<2x450xf32> to vector<2x150xf32>
    %504 = vector.extract_strided_slice %494 {offsets = [0, 150], sizes = [2, 150], strides = [1, 1]} : vector<2x450xf32> to vector<2x150xf32>
    %505 = arith.addf %503, %504 : vector<2x150xf32>
    %506 = arith.negf %505 : vector<2x150xf32>
    %507 = math.exp %506 : vector<2x150xf32>
    %cst_247 = arith.constant 1.000000e+00 : f32
    %508 = vector.broadcast %cst_247 : f32 to vector<2x150xf32>
    %509 = arith.addf %508, %507 : vector<2x150xf32>
    %510 = arith.divf %508, %509 : vector<2x150xf32>
    %511 = vector.extract_strided_slice %486 {offsets = [0, 300], sizes = [2, 150], strides = [1, 1]} : vector<2x450xf32> to vector<2x150xf32>
    %512 = vector.extract_strided_slice %494 {offsets = [0, 300], sizes = [2, 150], strides = [1, 1]} : vector<2x450xf32> to vector<2x150xf32>
    %513 = arith.mulf %502, %512 : vector<2x150xf32>
    %514 = arith.addf %511, %513 : vector<2x150xf32>
    %515 = math.tanh %514 : vector<2x150xf32>
    %cst_248 = arith.constant 1.000000e+00 : f32
    %516 = vector.broadcast %cst_248 : f32 to vector<2x150xf32>
    %517 = arith.subf %516, %510 : vector<2x150xf32>
    %518 = arith.mulf %517, %515 : vector<2x150xf32>
    %519 = arith.mulf %510, %487 : vector<2x150xf32>
    %520 = arith.addf %518, %519 : vector<2x150xf32>
    %c0_249 = arith.constant 0 : index
    %c0_250 = arith.constant 0 : index
    %521 = vector.load %arg19[%c0_249, %c0_250] : memref<2x150xf32, #tpu.memory_space<vmem>>, vector<2x150xf32>
    tpu.vector_store %arg19[%c0_249, %c0_250], %520 {strides = array<i32>} : memref<2x150xf32, #tpu.memory_space<vmem>>, vector<2x150xf32>,
    %522 = arith.index_cast %c3_i32_234 : i32 to index
    %c0_251 = arith.constant 0 : index
    %c0_252 = arith.constant 0 : index
    %523 = vector.load %arg22[%522, %c0_251, %c0_252] : memref<6x2x150xf32, #tpu.memory_space<vmem>>, vector<1x2x150xf32>
    %524 = vector.shape_cast %523 : vector<1x2x150xf32> to vector<2x150xf32>
    %525 = vector.shape_cast %520 : vector<2x150xf32> to vector<1x2x150xf32>
    tpu.vector_store %arg22[%522, %c0_251, %c0_252], %525 {strides = array<i32>} : memref<6x2x150xf32, #tpu.memory_space<vmem>>, vector<1x2x150xf32>,
    %c4_i32_253 = arith.constant 4 : i32
    %c2_i32_254 = arith.constant 2 : i32
    %526 = arith.muli %c4_i32_253, %c2_i32_254 : i32
    %527 = arith.index_cast %526 : i32 to index
    %c0_255 = arith.constant 0 : index
    %528 = vector.load %arg21[%527, %c0_255] : memref<12x450xf32, #tpu.memory_space<vmem>>, vector<2x450xf32>
    %c0_256 = arith.constant 0 : index
    %c0_257 = arith.constant 0 : index
    %529 = vector.load %arg19[%c0_256, %c0_257] : memref<2x150xf32, #tpu.memory_space<vmem>>, vector<2x150xf32>
    %c0_258 = arith.constant 0 : index
    %c0_259 = arith.constant 0 : index
    %c0_260 = arith.constant 0 : index
    %530 = vector.load %arg8[%c0_258, %c0_259, %c0_260] : memref<1x150x450xf32, #tpu.memory_space<vmem>>, vector<1x150x450xf32>
    %531 = vector.shape_cast %530 : vector<1x150x450xf32> to vector<150x450xf32>
    %c0_261 = arith.constant 0 : index
    %c0_262 = arith.constant 0 : index
    %c0_263 = arith.constant 0 : index
    %532 = vector.load %arg10[%c0_261, %c0_262, %c0_263] : memref<1x1x450xf32, #tpu.memory_space<vmem>>, vector<1x1x450xf32>
    %533 = vector.shape_cast %532 : vector<1x1x450xf32> to vector<1x450xf32>
    %cst_264 = arith.constant dense<0.000000e+00> : vector<2x450xf32>
    %534 = tpu.matmul %529, %531, %cst_264 {dimension_numbers = #tpu.dot_dimension_numbers<[1], [0], [0], [1], [0, 0, 1, 1], [], []>} : vector<2x150xf32>, vector<150x450xf32>, vector<2x450xf32> -> vector<2x450xf32>
    %535 = vector.broadcast %533 : vector<1x450xf32> to vector<2x450xf32>
    %536 = arith.addf %534, %535 : vector<2x450xf32>
    %537 = vector.extract_strided_slice %528 {offsets = [0, 0], sizes = [2, 150], strides = [1, 1]} : vector<2x450xf32> to vector<2x150xf32>
    %538 = vector.extract_strided_slice %536 {offsets = [0, 0], sizes = [2, 150], strides = [1, 1]} : vector<2x450xf32> to vector<2x150xf32>
    %539 = arith.addf %537, %538 : vector<2x150xf32>
    %540 = arith.negf %539 : vector<2x150xf32>
    %541 = math.exp %540 : vector<2x150xf32>
    %cst_265 = arith.constant 1.000000e+00 : f32
    %542 = vector.broadcast %cst_265 : f32 to vector<2x150xf32>
    %543 = arith.addf %542, %541 : vector<2x150xf32>
    %544 = arith.divf %542, %543 : vector<2x150xf32>
    %545 = vector.extract_strided_slice %528 {offsets = [0, 150], sizes = [2, 150], strides = [1, 1]} : vector<2x450xf32> to vector<2x150xf32>
    %546 = vector.extract_strided_slice %536 {offsets = [0, 150], sizes = [2, 150], strides = [1, 1]} : vector<2x450xf32> to vector<2x150xf32>
    %547 = arith.addf %545, %546 : vector<2x150xf32>
    %548 = arith.negf %547 : vector<2x150xf32>
    %549 = math.exp %548 : vector<2x150xf32>
    %cst_266 = arith.constant 1.000000e+00 : f32
    %550 = vector.broadcast %cst_266 : f32 to vector<2x150xf32>
    %551 = arith.addf %550, %549 : vector<2x150xf32>
    %552 = arith.divf %550, %551 : vector<2x150xf32>
    %553 = vector.extract_strided_slice %528 {offsets = [0, 300], sizes = [2, 150], strides = [1, 1]} : vector<2x450xf32> to vector<2x150xf32>
    %554 = vector.extract_strided_slice %536 {offsets = [0, 300], sizes = [2, 150], strides = [1, 1]} : vector<2x450xf32> to vector<2x150xf32>
    %555 = arith.mulf %544, %554 : vector<2x150xf32>
    %556 = arith.addf %553, %555 : vector<2x150xf32>
    %557 = math.tanh %556 : vector<2x150xf32>
    %cst_267 = arith.constant 1.000000e+00 : f32
    %558 = vector.broadcast %cst_267 : f32 to vector<2x150xf32>
    %559 = arith.subf %558, %552 : vector<2x150xf32>
    %560 = arith.mulf %559, %557 : vector<2x150xf32>
    %561 = arith.mulf %552, %529 : vector<2x150xf32>
    %562 = arith.addf %560, %561 : vector<2x150xf32>
    %c0_268 = arith.constant 0 : index
    %c0_269 = arith.constant 0 : index
    %563 = vector.load %arg19[%c0_268, %c0_269] : memref<2x150xf32, #tpu.memory_space<vmem>>, vector<2x150xf32>
    tpu.vector_store %arg19[%c0_268, %c0_269], %562 {strides = array<i32>} : memref<2x150xf32, #tpu.memory_space<vmem>>, vector<2x150xf32>,
    %564 = arith.index_cast %c4_i32_253 : i32 to index
    %c0_270 = arith.constant 0 : index
    %c0_271 = arith.constant 0 : index
    %565 = vector.load %arg22[%564, %c0_270, %c0_271] : memref<6x2x150xf32, #tpu.memory_space<vmem>>, vector<1x2x150xf32>
    %566 = vector.shape_cast %565 : vector<1x2x150xf32> to vector<2x150xf32>
    %567 = vector.shape_cast %562 : vector<2x150xf32> to vector<1x2x150xf32>
    tpu.vector_store %arg22[%564, %c0_270, %c0_271], %567 {strides = array<i32>} : memref<6x2x150xf32, #tpu.memory_space<vmem>>, vector<1x2x150xf32>,
    %c5_i32_272 = arith.constant 5 : i32
    %c2_i32_273 = arith.constant 2 : i32
    %568 = arith.muli %c5_i32_272, %c2_i32_273 : i32
    %569 = arith.index_cast %568 : i32 to index
    %c0_274 = arith.constant 0 : index
    %570 = vector.load %arg21[%569, %c0_274] : memref<12x450xf32, #tpu.memory_space<vmem>>, vector<2x450xf32>
    %c0_275 = arith.constant 0 : index
    %c0_276 = arith.constant 0 : index
    %571 = vector.load %arg19[%c0_275, %c0_276] : memref<2x150xf32, #tpu.memory_space<vmem>>, vector<2x150xf32>
    %c0_277 = arith.constant 0 : index
    %c0_278 = arith.constant 0 : index
    %c0_279 = arith.constant 0 : index
    %572 = vector.load %arg8[%c0_277, %c0_278, %c0_279] : memref<1x150x450xf32, #tpu.memory_space<vmem>>, vector<1x150x450xf32>
    %573 = vector.shape_cast %572 : vector<1x150x450xf32> to vector<150x450xf32>
    %c0_280 = arith.constant 0 : index
    %c0_281 = arith.constant 0 : index
    %c0_282 = arith.constant 0 : index
    %574 = vector.load %arg10[%c0_280, %c0_281, %c0_282] : memref<1x1x450xf32, #tpu.memory_space<vmem>>, vector<1x1x450xf32>
    %575 = vector.shape_cast %574 : vector<1x1x450xf32> to vector<1x450xf32>
    %cst_283 = arith.constant dense<0.000000e+00> : vector<2x450xf32>
    %576 = tpu.matmul %571, %573, %cst_283 {dimension_numbers = #tpu.dot_dimension_numbers<[1], [0], [0], [1], [0, 0, 1, 1], [], []>} : vector<2x150xf32>, vector<150x450xf32>, vector<2x450xf32> -> vector<2x450xf32>
    %577 = vector.broadcast %575 : vector<1x450xf32> to vector<2x450xf32>
    %578 = arith.addf %576, %577 : vector<2x450xf32>
    %579 = vector.extract_strided_slice %570 {offsets = [0, 0], sizes = [2, 150], strides = [1, 1]} : vector<2x450xf32> to vector<2x150xf32>
    %580 = vector.extract_strided_slice %578 {offsets = [0, 0], sizes = [2, 150], strides = [1, 1]} : vector<2x450xf32> to vector<2x150xf32>
    %581 = arith.addf %579, %580 : vector<2x150xf32>
    %582 = arith.negf %581 : vector<2x150xf32>
    %583 = math.exp %582 : vector<2x150xf32>
    %cst_284 = arith.constant 1.000000e+00 : f32
    %584 = vector.broadcast %cst_284 : f32 to vector<2x150xf32>
    %585 = arith.addf %584, %583 : vector<2x150xf32>
    %586 = arith.divf %584, %585 : vector<2x150xf32>
    %587 = vector.extract_strided_slice %570 {offsets = [0, 150], sizes = [2, 150], strides = [1, 1]} : vector<2x450xf32> to vector<2x150xf32>
    %588 = vector.extract_strided_slice %578 {offsets = [0, 150], sizes = [2, 150], strides = [1, 1]} : vector<2x450xf32> to vector<2x150xf32>
    %589 = arith.addf %587, %588 : vector<2x150xf32>
    %590 = arith.negf %589 : vector<2x150xf32>
    %591 = math.exp %590 : vector<2x150xf32>
    %cst_285 = arith.constant 1.000000e+00 : f32
    %592 = vector.broadcast %cst_285 : f32 to vector<2x150xf32>
    %593 = arith.addf %592, %591 : vector<2x150xf32>
    %594 = arith.divf %592, %593 : vector<2x150xf32>
    %595 = vector.extract_strided_slice %570 {offsets = [0, 300], sizes = [2, 150], strides = [1, 1]} : vector<2x450xf32> to vector<2x150xf32>
    %596 = vector.extract_strided_slice %578 {offsets = [0, 300], sizes = [2, 150], strides = [1, 1]} : vector<2x450xf32> to vector<2x150xf32>
    %597 = arith.mulf %586, %596 : vector<2x150xf32>
    %598 = arith.addf %595, %597 : vector<2x150xf32>
    %599 = math.tanh %598 : vector<2x150xf32>
    %cst_286 = arith.constant 1.000000e+00 : f32
    %600 = vector.broadcast %cst_286 : f32 to vector<2x150xf32>
    %601 = arith.subf %600, %594 : vector<2x150xf32>
    %602 = arith.mulf %601, %599 : vector<2x150xf32>
    %603 = arith.mulf %594, %571 : vector<2x150xf32>
    %604 = arith.addf %602, %603 : vector<2x150xf32>
    %c0_287 = arith.constant 0 : index
    %c0_288 = arith.constant 0 : index
    %605 = vector.load %arg19[%c0_287, %c0_288] : memref<2x150xf32, #tpu.memory_space<vmem>>, vector<2x150xf32>
    tpu.vector_store %arg19[%c0_287, %c0_288], %604 {strides = array<i32>} : memref<2x150xf32, #tpu.memory_space<vmem>>, vector<2x150xf32>,
    %606 = arith.index_cast %c5_i32_272 : i32 to index
    %c0_289 = arith.constant 0 : index
    %c0_290 = arith.constant 0 : index
    %607 = vector.load %arg22[%606, %c0_289, %c0_290] : memref<6x2x150xf32, #tpu.memory_space<vmem>>, vector<1x2x150xf32>
    %608 = vector.shape_cast %607 : vector<1x2x150xf32> to vector<2x150xf32>
    %609 = vector.shape_cast %604 : vector<2x150xf32> to vector<1x2x150xf32>
    tpu.vector_store %arg22[%606, %c0_289, %c0_290], %609 {strides = array<i32>} : memref<6x2x150xf32, #tpu.memory_space<vmem>>, vector<1x2x150xf32>,
    %c6_i32_291 = arith.constant 6 : i32
    %c0_292 = arith.constant 0 : index
    %c0_293 = arith.constant 0 : index
    %c0_294 = arith.constant 0 : index
    %610 = vector.load %arg22[%c0_292, %c0_293, %c0_294] : memref<6x2x150xf32, #tpu.memory_space<vmem>>, vector<6x1x150xf32>
    %611 = vector.shape_cast %610 : vector<6x1x150xf32> to vector<6x150xf32>
    %c0_295 = arith.constant 0 : index
    %c0_296 = arith.constant 0 : index
    %c0_297 = arith.constant 0 : index
    %c0_298 = arith.constant 0 : index
    %612 = vector.load %arg18[%c0_295, %c0_296, %c0_297, %c0_298] : memref<1x8x2x150xf32, #tpu.memory_space<vmem>>, vector<1x8x1x150xf32>
    %613 = vector.shape_cast %612 : vector<1x8x1x150xf32> to vector<8x150xf32>
    %cst_299 = arith.constant dense<0.000000e+00> : vector<6x8xf32>
    %614 = tpu.matmul %611, %613, %cst_299 {dimension_numbers = #tpu.dot_dimension_numbers<[1], [1], [0], [0], [0, 0, 1, 0], [], []>} : vector<6x150xf32>, vector<8x150xf32>, vector<6x8xf32> -> vector<6x8xf32>
    %cst_300 = arith.constant dense<0xFF800000> : vector<6xf32>
    %615 = vector.multi_reduction <maximumf>, %614, %cst_300 [1] : vector<6x8xf32> to vector<6xf32>
    %cst_301 = arith.constant 0xFF800000 : f32
    %616 = vector.broadcast %cst_301 : f32 to vector<6xf32>
    %617 = arith.maximumf %616, %615 : vector<6xf32>
    %618 = vector.shape_cast %617 : vector<6xf32> to vector<6x1xf32>
    %619 = vector.broadcast %618 : vector<6x1xf32> to vector<6x8xf32>
    %620 = arith.subf %614, %619 : vector<6x8xf32>
    %621 = math.exp %620 : vector<6x8xf32>
    %cst_302 = arith.constant dense<0.000000e+00> : vector<6xf32>
    %622 = vector.multi_reduction <add>, %621, %cst_302 [1] : vector<6x8xf32> to vector<6xf32>
    %623 = vector.shape_cast %622 : vector<6xf32> to vector<6x1xf32>
    %624 = vector.broadcast %623 : vector<6x1xf32> to vector<6x8xf32>
    %625 = arith.divf %621, %624 : vector<6x8xf32>
    %cst_303 = arith.constant dense<0.000000e+00> : vector<6x150xf32>
    %626 = tpu.matmul %625, %613, %cst_303 {dimension_numbers = #tpu.dot_dimension_numbers<[1], [0], [0], [1], [0, 0, 1, 1], [], []>} : vector<6x8xf32>, vector<8x150xf32>, vector<6x150xf32> -> vector<6x150xf32>
    %c0_304 = arith.constant 0 : index
    %c0_305 = arith.constant 0 : index
    %c0_306 = arith.constant 0 : index
    %627 = vector.load %arg11[%c0_304, %c0_305, %c0_306] : memref<1x150x150xf32, #tpu.memory_space<vmem>>, vector<1x150x150xf32>
    %628 = vector.shape_cast %627 : vector<1x150x150xf32> to vector<150x150xf32>
    %cst_307 = arith.constant dense<0.000000e+00> : vector<6x150xf32>
    %629 = tpu.matmul %611, %628, %cst_307 {dimension_numbers = #tpu.dot_dimension_numbers<[1], [0], [0], [1], [0, 0, 1, 1], [], []>} : vector<6x150xf32>, vector<150x150xf32>, vector<6x150xf32> -> vector<6x150xf32>
    %c0_308 = arith.constant 0 : index
    %c0_309 = arith.constant 0 : index
    %c0_310 = arith.constant 0 : index
    %630 = vector.load %arg12[%c0_308, %c0_309, %c0_310] : memref<1x150x150xf32, #tpu.memory_space<vmem>>, vector<1x150x150xf32>
    %631 = vector.shape_cast %630 : vector<1x150x150xf32> to vector<150x150xf32>
    %cst_311 = arith.constant dense<0.000000e+00> : vector<6x150xf32>
    %632 = tpu.matmul %626, %631, %cst_311 {dimension_numbers = #tpu.dot_dimension_numbers<[1], [0], [0], [1], [0, 0, 1, 1], [], []>} : vector<6x150xf32>, vector<150x150xf32>, vector<6x150xf32> -> vector<6x150xf32>
    %633 = arith.addf %629, %632 : vector<6x150xf32>
    %c0_312 = arith.constant 0 : index
    %c0_313 = arith.constant 0 : index
    %c0_314 = arith.constant 0 : index
    %634 = vector.load %arg13[%c0_312, %c0_313, %c0_314] : memref<1x1x150xf32, #tpu.memory_space<vmem>>, vector<1x1x150xf32>
    %635 = vector.shape_cast %634 : vector<1x1x150xf32> to vector<1x150xf32>
    %636 = vector.broadcast %635 : vector<1x150xf32> to vector<6x150xf32>
    %637 = arith.addf %633, %636 : vector<6x150xf32>
    %638 = math.tanh %637 : vector<6x150xf32>
    %c0_315 = arith.constant 0 : index
    %c0_316 = arith.constant 0 : index
    %c0_317 = arith.constant 0 : index
    %639 = vector.load %arg14[%c0_315, %c0_316, %c0_317] : memref<1x150x32xf32, #tpu.memory_space<vmem>>, vector<1x150x32xf32>
    %640 = vector.shape_cast %639 : vector<1x150x32xf32> to vector<150x32xf32>
    %cst_318 = arith.constant dense<0.000000e+00> : vector<6x32xf32>
    %641 = tpu.matmul %638, %640, %cst_318 {dimension_numbers = #tpu.dot_dimension_numbers<[1], [0], [0], [1], [0, 0, 1, 1], [], []>} : vector<6x150xf32>, vector<150x32xf32>, vector<6x32xf32> -> vector<6x32xf32>
    %c0_319 = arith.constant 0 : index
    %c0_320 = arith.constant 0 : index
    %c0_321 = arith.constant 0 : index
    %642 = vector.load %arg15[%c0_319, %c0_320, %c0_321] : memref<1x1x32xf32, #tpu.memory_space<vmem>>, vector<1x1x32xf32>
    %643 = vector.shape_cast %642 : vector<1x1x32xf32> to vector<1x32xf32>
    %644 = vector.broadcast %643 : vector<1x32xf32> to vector<6x32xf32>
    %645 = arith.addf %641, %644 : vector<6x32xf32>
    %c0_322 = arith.constant 0 : index
    %c0_323 = arith.constant 0 : index
    %c0_324 = arith.constant 0 : index
    %c0_325 = arith.constant 0 : index
    %646 = vector.load %arg17[%c0_322, %c0_323, %c0_324, %c0_325] : memref<1x2x6x150xf32, #tpu.memory_space<vmem>>, vector<1x1x6x150xf32>
    %647 = vector.shape_cast %646 : vector<1x1x6x150xf32> to vector<6x150xf32>
    %648 = vector.shape_cast %637 : vector<6x150xf32> to vector<1x1x6x150xf32>
    tpu.vector_store %arg17[%c0_322, %c0_323, %c0_324, %c0_325], %648 {strides = array<i32>} : memref<1x2x6x150xf32, #tpu.memory_space<vmem>>, vector<1x1x6x150xf32>,
    %c0_326 = arith.constant 0 : index
    %c0_327 = arith.constant 0 : index
    %c0_328 = arith.constant 0 : index
    %c0_329 = arith.constant 0 : index
    %649 = vector.load %arg16[%c0_326, %c0_327, %c0_328, %c0_329] : memref<1x2x6x32xf32, #tpu.memory_space<vmem>>, vector<1x1x6x32xf32>
    %650 = vector.shape_cast %649 : vector<1x1x6x32xf32> to vector<6x32xf32>
    %651 = vector.shape_cast %645 : vector<6x32xf32> to vector<1x1x6x32xf32>
    tpu.vector_store %arg16[%c0_326, %c0_327, %c0_328, %c0_329], %651 {strides = array<i32>} : memref<1x2x6x32xf32, #tpu.memory_space<vmem>>, vector<1x1x6x32xf32>,
    %c0_330 = arith.constant 0 : index
    %c1 = arith.constant 1 : index
    %c0_331 = arith.constant 0 : index
    %652 = vector.load %arg22[%c0_330, %c1, %c0_331] : memref<6x2x150xf32, #tpu.memory_space<vmem>>, vector<6x1x150xf32>
    %653 = vector.shape_cast %652 : vector<6x1x150xf32> to vector<6x150xf32>
    %c0_332 = arith.constant 0 : index
    %c0_333 = arith.constant 0 : index
    %c1_334 = arith.constant 1 : index
    %c0_335 = arith.constant 0 : index
    %654 = vector.load %arg18[%c0_332, %c0_333, %c1_334, %c0_335] : memref<1x8x2x150xf32, #tpu.memory_space<vmem>>, vector<1x8x1x150xf32>
    %655 = vector.shape_cast %654 : vector<1x8x1x150xf32> to vector<8x150xf32>
    %cst_336 = arith.constant dense<0.000000e+00> : vector<6x8xf32>
    %656 = tpu.matmul %653, %655, %cst_336 {dimension_numbers = #tpu.dot_dimension_numbers<[1], [1], [0], [0], [0, 0, 1, 0], [], []>} : vector<6x150xf32>, vector<8x150xf32>, vector<6x8xf32> -> vector<6x8xf32>
    %cst_337 = arith.constant dense<0xFF800000> : vector<6xf32>
    %657 = vector.multi_reduction <maximumf>, %656, %cst_337 [1] : vector<6x8xf32> to vector<6xf32>
    %cst_338 = arith.constant 0xFF800000 : f32
    %658 = vector.broadcast %cst_338 : f32 to vector<6xf32>
    %659 = arith.maximumf %658, %657 : vector<6xf32>
    %660 = vector.shape_cast %659 : vector<6xf32> to vector<6x1xf32>
    %661 = vector.broadcast %660 : vector<6x1xf32> to vector<6x8xf32>
    %662 = arith.subf %656, %661 : vector<6x8xf32>
    %663 = math.exp %662 : vector<6x8xf32>
    %cst_339 = arith.constant dense<0.000000e+00> : vector<6xf32>
    %664 = vector.multi_reduction <add>, %663, %cst_339 [1] : vector<6x8xf32> to vector<6xf32>
    %665 = vector.shape_cast %664 : vector<6xf32> to vector<6x1xf32>
    %666 = vector.broadcast %665 : vector<6x1xf32> to vector<6x8xf32>
    %667 = arith.divf %663, %666 : vector<6x8xf32>
    %cst_340 = arith.constant dense<0.000000e+00> : vector<6x150xf32>
    %668 = tpu.matmul %667, %655, %cst_340 {dimension_numbers = #tpu.dot_dimension_numbers<[1], [0], [0], [1], [0, 0, 1, 1], [], []>} : vector<6x8xf32>, vector<8x150xf32>, vector<6x150xf32> -> vector<6x150xf32>
    %c0_341 = arith.constant 0 : index
    %c0_342 = arith.constant 0 : index
    %c0_343 = arith.constant 0 : index
    %669 = vector.load %arg11[%c0_341, %c0_342, %c0_343] : memref<1x150x150xf32, #tpu.memory_space<vmem>>, vector<1x150x150xf32>
    %670 = vector.shape_cast %669 : vector<1x150x150xf32> to vector<150x150xf32>
    %cst_344 = arith.constant dense<0.000000e+00> : vector<6x150xf32>
    %671 = tpu.matmul %653, %670, %cst_344 {dimension_numbers = #tpu.dot_dimension_numbers<[1], [0], [0], [1], [0, 0, 1, 1], [], []>} : vector<6x150xf32>, vector<150x150xf32>, vector<6x150xf32> -> vector<6x150xf32>
    %c0_345 = arith.constant 0 : index
    %c0_346 = arith.constant 0 : index
    %c0_347 = arith.constant 0 : index
    %672 = vector.load %arg12[%c0_345, %c0_346, %c0_347] : memref<1x150x150xf32, #tpu.memory_space<vmem>>, vector<1x150x150xf32>
    %673 = vector.shape_cast %672 : vector<1x150x150xf32> to vector<150x150xf32>
    %cst_348 = arith.constant dense<0.000000e+00> : vector<6x150xf32>
    %674 = tpu.matmul %668, %673, %cst_348 {dimension_numbers = #tpu.dot_dimension_numbers<[1], [0], [0], [1], [0, 0, 1, 1], [], []>} : vector<6x150xf32>, vector<150x150xf32>, vector<6x150xf32> -> vector<6x150xf32>
    %675 = arith.addf %671, %674 : vector<6x150xf32>
    %c0_349 = arith.constant 0 : index
    %c0_350 = arith.constant 0 : index
    %c0_351 = arith.constant 0 : index
    %676 = vector.load %arg13[%c0_349, %c0_350, %c0_351] : memref<1x1x150xf32, #tpu.memory_space<vmem>>, vector<1x1x150xf32>
    %677 = vector.shape_cast %676 : vector<1x1x150xf32> to vector<1x150xf32>
    %678 = vector.broadcast %677 : vector<1x150xf32> to vector<6x150xf32>
    %679 = arith.addf %675, %678 : vector<6x150xf32>
    %680 = math.tanh %679 : vector<6x150xf32>
    %c0_352 = arith.constant 0 : index
    %c0_353 = arith.constant 0 : index
    %c0_354 = arith.constant 0 : index
    %681 = vector.load %arg14[%c0_352, %c0_353, %c0_354] : memref<1x150x32xf32, #tpu.memory_space<vmem>>, vector<1x150x32xf32>
    %682 = vector.shape_cast %681 : vector<1x150x32xf32> to vector<150x32xf32>
    %cst_355 = arith.constant dense<0.000000e+00> : vector<6x32xf32>
    %683 = tpu.matmul %680, %682, %cst_355 {dimension_numbers = #tpu.dot_dimension_numbers<[1], [0], [0], [1], [0, 0, 1, 1], [], []>} : vector<6x150xf32>, vector<150x32xf32>, vector<6x32xf32> -> vector<6x32xf32>
    %c0_356 = arith.constant 0 : index
    %c0_357 = arith.constant 0 : index
    %c0_358 = arith.constant 0 : index
    %684 = vector.load %arg15[%c0_356, %c0_357, %c0_358] : memref<1x1x32xf32, #tpu.memory_space<vmem>>, vector<1x1x32xf32>
    %685 = vector.shape_cast %684 : vector<1x1x32xf32> to vector<1x32xf32>
    %686 = vector.broadcast %685 : vector<1x32xf32> to vector<6x32xf32>
    %687 = arith.addf %683, %686 : vector<6x32xf32>
    %c0_359 = arith.constant 0 : index
    %c1_360 = arith.constant 1 : index
    %c0_361 = arith.constant 0 : index
    %c0_362 = arith.constant 0 : index
    %688 = vector.load %arg17[%c0_359, %c1_360, %c0_361, %c0_362] : memref<1x2x6x150xf32, #tpu.memory_space<vmem>>, vector<1x1x6x150xf32>
    %689 = vector.shape_cast %688 : vector<1x1x6x150xf32> to vector<6x150xf32>
    %690 = vector.shape_cast %679 : vector<6x150xf32> to vector<1x1x6x150xf32>
    tpu.vector_store %arg17[%c0_359, %c1_360, %c0_361, %c0_362], %690 {strides = array<i32>} : memref<1x2x6x150xf32, #tpu.memory_space<vmem>>, vector<1x1x6x150xf32>,
    %c0_363 = arith.constant 0 : index
    %c1_364 = arith.constant 1 : index
    %c0_365 = arith.constant 0 : index
    %c0_366 = arith.constant 0 : index
    %691 = vector.load %arg16[%c0_363, %c1_364, %c0_365, %c0_366] : memref<1x2x6x32xf32, #tpu.memory_space<vmem>>, vector<1x1x6x32xf32>
    %692 = vector.shape_cast %691 : vector<1x1x6x32xf32> to vector<6x32xf32>
    %693 = vector.shape_cast %687 : vector<6x32xf32> to vector<1x1x6x32xf32>
    tpu.vector_store %arg16[%c0_363, %c1_364, %c0_365, %c0_366], %693 {strides = array<i32>} : memref<1x2x6x32xf32, #tpu.memory_space<vmem>>, vector<1x1x6x32xf32>,
    return
  }
  func.func @transform_0(%arg0: i32) -> (i32, i32, i32) {
    %c0_i32 = arith.constant 0 : i32
    %c0_i32_0 = arith.constant 0 : i32
    %c0_i32_1 = arith.constant 0 : i32
    return %arg0, %c0_i32, %c0_i32_0 : i32, i32, i32
  }
  func.func @transform_1(%arg0: i32) -> (i32, i32, i32) {
    %c0_i32 = arith.constant 0 : i32
    %c0_i32_0 = arith.constant 0 : i32
    %c0_i32_1 = arith.constant 0 : i32
    return %arg0, %c0_i32, %c0_i32_0 : i32, i32, i32
  }
  func.func @transform_2(%arg0: i32) -> (i32, i32, i32) {
    %c0_i32 = arith.constant 0 : i32
    %c0_i32_0 = arith.constant 0 : i32
    %c0_i32_1 = arith.constant 0 : i32
    return %arg0, %c0_i32, %c0_i32_0 : i32, i32, i32
  }
  func.func @transform_3(%arg0: i32) -> (i32, i32, i32) {
    %c0_i32 = arith.constant 0 : i32
    %c0_i32_0 = arith.constant 0 : i32
    %c0_i32_1 = arith.constant 0 : i32
    return %arg0, %c0_i32, %c0_i32_0 : i32, i32, i32
  }
  func.func @transform_4(%arg0: i32) -> (i32, i32, i32) {
    %c0_i32 = arith.constant 0 : i32
    %c0_i32_0 = arith.constant 0 : i32
    %c0_i32_1 = arith.constant 0 : i32
    return %arg0, %c0_i32, %c0_i32_0 : i32, i32, i32
  }
  func.func @transform_5(%arg0: i32) -> (i32, i32, i32) {
    %c0_i32 = arith.constant 0 : i32
    %c0_i32_0 = arith.constant 0 : i32
    %c0_i32_1 = arith.constant 0 : i32
    return %arg0, %c0_i32, %c0_i32_0 : i32, i32, i32
  }
  func.func @transform_6(%arg0: i32) -> (i32, i32, i32) {
    %c0_i32 = arith.constant 0 : i32
    %c0_i32_0 = arith.constant 0 : i32
    %c0_i32_1 = arith.constant 0 : i32
    return %arg0, %c0_i32, %c0_i32_0 : i32, i32, i32
  }
  func.func @transform_7(%arg0: i32) -> (i32, i32, i32) {
    %c0_i32 = arith.constant 0 : i32
    %c0_i32_0 = arith.constant 0 : i32
    %c0_i32_1 = arith.constant 0 : i32
    return %arg0, %c0_i32, %c0_i32_0 : i32, i32, i32
  }
  func.func @transform_8(%arg0: i32) -> (i32, i32, i32) {
    %c0_i32 = arith.constant 0 : i32
    %c0_i32_0 = arith.constant 0 : i32
    %c0_i32_1 = arith.constant 0 : i32
    return %arg0, %c0_i32, %c0_i32_0 : i32, i32, i32
  }
  func.func @transform_9(%arg0: i32) -> (i32, i32, i32) {
    %c0_i32 = arith.constant 0 : i32
    %c0_i32_0 = arith.constant 0 : i32
    %c0_i32_1 = arith.constant 0 : i32
    return %arg0, %c0_i32, %c0_i32_0 : i32, i32, i32
  }
  func.func @transform_10(%arg0: i32) -> (i32, i32, i32) {
    %c0_i32 = arith.constant 0 : i32
    %c0_i32_0 = arith.constant 0 : i32
    %c0_i32_1 = arith.constant 0 : i32
    return %arg0, %c0_i32, %c0_i32_0 : i32, i32, i32
  }
  func.func @transform_11(%arg0: i32) -> (i32, i32, i32) {
    %c0_i32 = arith.constant 0 : i32
    %c0_i32_0 = arith.constant 0 : i32
    %c0_i32_1 = arith.constant 0 : i32
    return %arg0, %c0_i32, %c0_i32_0 : i32, i32, i32
  }
  func.func @transform_12(%arg0: i32) -> (i32, i32, i32) {
    %c0_i32 = arith.constant 0 : i32
    %c0_i32_0 = arith.constant 0 : i32
    %c0_i32_1 = arith.constant 0 : i32
    return %arg0, %c0_i32, %c0_i32_0 : i32, i32, i32
  }
  func.func @transform_13(%arg0: i32) -> (i32, i32, i32) {
    %c0_i32 = arith.constant 0 : i32
    %c0_i32_0 = arith.constant 0 : i32
    %c0_i32_1 = arith.constant 0 : i32
    return %arg0, %c0_i32, %c0_i32_0 : i32, i32, i32
  }
  func.func @transform_14(%arg0: i32) -> (i32, i32, i32) {
    %c0_i32 = arith.constant 0 : i32
    %c0_i32_0 = arith.constant 0 : i32
    %c0_i32_1 = arith.constant 0 : i32
    return %arg0, %c0_i32, %c0_i32_0 : i32, i32, i32
  }
  func.func @transform_15(%arg0: i32) -> (i32, i32, i32, i32) {
    %c0_i32 = arith.constant 0 : i32
    %c0_i32_0 = arith.constant 0 : i32
    %c0_i32_1 = arith.constant 0 : i32
    %c0_i32_2 = arith.constant 0 : i32
    return %arg0, %c0_i32, %c0_i32_0, %c0_i32_1 : i32, i32, i32, i32
  }
  func.func @transform_16(%arg0: i32) -> (i32, i32, i32, i32) {
    %c0_i32 = arith.constant 0 : i32
    %c0_i32_0 = arith.constant 0 : i32
    %c0_i32_1 = arith.constant 0 : i32
    %c0_i32_2 = arith.constant 0 : i32
    return %arg0, %c0_i32, %c0_i32_0, %c0_i32_1 : i32, i32, i32, i32
  }
  func.func @transform_17(%arg0: i32) -> (i32, i32, i32, i32) {
    %c0_i32 = arith.constant 0 : i32
    %c0_i32_0 = arith.constant 0 : i32
    %c0_i32_1 = arith.constant 0 : i32
    %c0_i32_2 = arith.constant 0 : i32
    return %arg0, %c0_i32, %c0_i32_0, %c0_i32_1 : i32, i32, i32, i32
  }
}

</mosaic_0001>

<llo_original>
// kernel: gen_forward.1
$region0: #{gen_forward.1}
  #allocation0 [shape = 'u32[]', space=smem, size = 0x4, offset = 0x4, fixed_abs, tag = 'smem constant byte address 0x4 - core index']
  #allocation1 [shape = 'u32[144,128]{1,0:T(1,128)}', space=vmem, size = 0x12000, scoped, tag = 'internal scratch']
  #allocation2 [shape = 'f32[2,150]{1,0:T(2,128)}', space=vmem, size = 0x800, scoped, tag = 'scratch operand']
  #allocation3 [shape = 'f32[16,450]{1,0:T(8,128)}', space=vmem, size = 0x8000, scoped, tag = 'scratch operand']
  #allocation4 [shape = 'f32[12,450]{1,0:T(8,128)}', space=vmem, size = 0x8000, scoped, tag = 'scratch operand']
  #allocation5 [shape = 'f32[6,2,150]{2,1,0:T(2,128)}', space=vmem, size = 0x3000, scoped, tag = 'scratch operand']
  %s0 = inlined_call_operand.vmem [shape: f32[2,16,200], index: 0, kind: input, shape index: {}]
  %s1 = inlined_call_operand.vmem [shape: f32[2,12,200], index: 1, kind: input, shape index: {}]
  %s2 = inlined_call_operand.vmem [shape: f32[2,200,450], index: 2, kind: input, shape index: {}]
  %s3 = inlined_call_operand.vmem [shape: f32[2,150,450], index: 3, kind: input, shape index: {}]
  %s4 = inlined_call_operand.vmem [shape: f32[2,1,450], index: 4, kind: input, shape index: {}]
  %s5 = inlined_call_operand.vmem [shape: f32[2,1,450], index: 5, kind: input, shape index: {}]
  %s6 = inlined_call_operand.vmem [shape: f32[2,200,450], index: 6, kind: input, shape index: {}]
  %s7 = inlined_call_operand.vmem [shape: f32[2,150,450], index: 7, kind: input, shape index: {}]
  %s8 = inlined_call_operand.vmem [shape: f32[2,1,450], index: 8, kind: input, shape index: {}]
  %s9 = inlined_call_operand.vmem [shape: f32[2,1,450], index: 9, kind: input, shape index: {}]
  %s10 = inlined_call_operand.vmem [shape: f32[2,150,150], index: 10, kind: input, shape index: {}]
  %s11 = inlined_call_operand.vmem [shape: f32[2,150,150], index: 11, kind: input, shape index: {}]
  %s12 = inlined_call_operand.vmem [shape: f32[2,1,150], index: 12, kind: input, shape index: {}]
  %s13 = inlined_call_operand.vmem [shape: f32[2,150,32], index: 13, kind: input, shape index: {}]
  %s14 = inlined_call_operand.vmem [shape: f32[2,1,32], index: 14, kind: input, shape index: {}]
  %s15 = inlined_call_operand.vmem [shape: f32[2,2,6,32], index: 15, kind: output, shape index: {0}]
  %s16 = inlined_call_operand.vmem [shape: f32[2,2,6,150], index: 16, kind: output, shape index: {1}]
  %s17 = inlined_call_operand.vmem [shape: f32[2,8,2,150], index: 17, kind: output, shape index: {2}]
  %18 = xla_tuple %s15, %s16, %s17
  %s19 = sld [smem:[#allocation0]]
  $region109: #{gen_forward.1} parent=0
    _
  %s21 = ssub.s32 1, %s19
  %s22 = scalar_select 0, %s21, %s19
  loop: start=0, step=1, limit=4
  $region2: #{gen_forward.1} parent=0 // loop_pre_header
    _
  $region3: #{gen_forward.1} parent=0 // loop_header
    %s24 = sphi 0, %s28
    %p25 = scmp.ge.s32.totalorder %s24, 4
    %s34 = sphi 0, %s36
    %s37 = sphi 0, %s34
    %s38 = sphi 0, %s37
    %s54 = sphi 0, %s38
    %s60 = sphi 0, %s62
    %s63 = sphi 0, %s60
    %s64 = sphi 0, %s63
    %s80 = sphi 0, %s64
    %s86 = sphi 0, %s88
    %s89 = sphi 0, %s86
    %s90 = sphi 0, %s89
    %s106 = sphi 0, %s90
    %s112 = sphi 0, %s114
    %s115 = sphi 0, %s112
    %s116 = sphi 0, %s115
    %s132 = sphi 0, %s116
    %s138 = sphi 0, %s140
    %s141 = sphi 0, %s138
    %s142 = sphi 0, %s141
    %s158 = sphi 0, %s142
    %s164 = sphi 0, %s166
    %s167 = sphi 0, %s164
    %s168 = sphi 0, %s167
    %s184 = sphi 0, %s168
    %s190 = sphi 0, %s192
    %s193 = sphi 0, %s190
    %s194 = sphi 0, %s193
    %s210 = sphi 0, %s194
    %s216 = sphi 0, %s218
    %s219 = sphi 0, %s216
    %s220 = sphi 0, %s219
    %s236 = sphi 0, %s220
    %s242 = sphi 0, %s244
    %s245 = sphi 0, %s242
    %s246 = sphi 0, %s245
    %s262 = sphi 0, %s246
    %s268 = sphi 0, %s270
    %s271 = sphi 0, %s268
    %s272 = sphi 0, %s271
    %s288 = sphi 0, %s272
    %s294 = sphi 0, %s296
    %s297 = sphi 0, %s294
    %s298 = sphi 0, %s297
    %s314 = sphi 0, %s298
    %s320 = sphi 0, %s322
    %s323 = sphi 0, %s320
    %s324 = sphi 0, %s323
    %s340 = sphi 0, %s324
    %s346 = sphi 0, %s348
    %s349 = sphi 0, %s346
    %s350 = sphi 0, %s349
    %s366 = sphi 0, %s350
    %s372 = sphi 0, %s374
    %s375 = sphi 0, %s372
    %s376 = sphi 0, %s375
    %s392 = sphi 0, %s376
    %s398 = sphi 0, %s400
    %s401 = sphi 0, %s398
    %s402 = sphi 0, %s401
    %s418 = sphi 0, %s402
    %s424 = sphi 0, %s426
    %s427 = sphi 0, %s424
    %s428 = sphi 0, %s427
    %s444 = sphi 0, %s428
    %s450 = sphi 0, %s452
    %s453 = sphi 0, %s450
    %s454 = sphi 0, %s453
    %s470 = sphi 0, %s454
    %s476 = sphi 0, %s478
    %s479 = sphi 0, %s476
    %s480 = sphi 0, %s479
    %s496 = sphi 0, %s480
  $region4: #{gen_forward.1} parent=0 // loop_header_branch
    %27 = sbr.rel (%p25) target = $region8
  $region5: #{gen_forward.1} parent=0 // loop_body
    %s29 = ssub.s32 %s24, 1
    %s30 = ssub.s32 %s24, 2
    %s31 = sadd.s32 %s24, 1
    %s32 = ssub.s32 %s24, %s31
    %p33 = scmp.eq.s32.totalorder %s32, 0
    %s35 = sadd.s32 %s34, 1
    %s36 = scalar_select %p33, %s34, %s35
    %p39 = pneg %p33
    %p40 = scmp.eq.s32.totalorder %s24, 1
    %p41 = por %p39, %p40
    %p42 = scmp.ne.s32.totalorder %s34, %s37
    %p43 = scmp.eq.s32.totalorder %s24, 0
    %p44 = por %p42, %p43
    %p45 = scmp.ne.s32.totalorder %s34, %s37
    %p46 = scmp.eq.s32.totalorder %s29, 1
    %p47 = por %p45, %p46
    %p48 = scmp.ne.s32.totalorder %s37, %s38
    %p49 = scmp.eq.s32.totalorder %s29, 0
    %p50 = por %p48, %p49
    %p51 = scmp.ne.s32.totalorder %s37, %s38
    %p52 = scmp.eq.s32.totalorder %s30, 1
    %p53 = por %p51, %p52
    %p55 = scmp.ne.s32.totalorder %s38, %s54
    %p56 = scmp.eq.s32.totalorder %s30, 0
    %p57 = por %p55, %p56
    %s58 = ssub.s32 %s24, %s31
    %p59 = scmp.eq.s32.totalorder %s58, 0
    %s61 = sadd.s32 %s60, 1
    %s62 = scalar_select %p59, %s60, %s61
    %p65 = pneg %p59
    %p66 = scmp.eq.s32.totalorder %s24, 1
    %p67 = por %p65, %p66
    %p68 = scmp.ne.s32.totalorder %s60, %s63
    %p69 = scmp.eq.s32.totalorder %s24, 0
    %p70 = por %p68, %p69
    %p71 = scmp.ne.s32.totalorder %s60, %s63
    %p72 = scmp.eq.s32.totalorder %s29, 1
    %p73 = por %p71, %p72
    %p74 = scmp.ne.s32.totalorder %s63, %s64
    %p75 = scmp.eq.s32.totalorder %s29, 0
    %p76 = por %p74, %p75
    %p77 = scmp.ne.s32.totalorder %s63, %s64
    %p78 = scmp.eq.s32.totalorder %s30, 1
    %p79 = por %p77, %p78
    %p81 = scmp.ne.s32.totalorder %s64, %s80
    %p82 = scmp.eq.s32.totalorder %s30, 0
    %p83 = por %p81, %p82
    %s84 = ssub.s32 %s24, %s31
    %p85 = scmp.eq.s32.totalorder %s84, 0
    %s87 = sadd.s32 %s86, 1
    %s88 = scalar_select %p85, %s86, %s87
    %p91 = pneg %p85
    %p92 = scmp.eq.s32.totalorder %s24, 1
    %p93 = por %p91, %p92
    %p94 = scmp.ne.s32.totalorder %s86, %s89
    %p95 = scmp.eq.s32.totalorder %s24, 0
    %p96 = por %p94, %p95
    %p97 = scmp.ne.s32.totalorder %s86, %s89
    %p98 = scmp.eq.s32.totalorder %s29, 1
    %p99 = por %p97, %p98
    %p100 = scmp.ne.s32.totalorder %s89, %s90
    %p101 = scmp.eq.s32.totalorder %s29, 0
    %p102 = por %p100, %p101
    %p103 = scmp.ne.s32.totalorder %s89, %s90
    %p104 = scmp.eq.s32.totalorder %s30, 1
    %p105 = por %p103, %p104
    %p107 = scmp.ne.s32.totalorder %s90, %s106
    %p108 = scmp.eq.s32.totalorder %s30, 0
    %p109 = por %p107, %p108
    %s110 = ssub.s32 %s24, %s31
    %p111 = scmp.eq.s32.totalorder %s110, 0
    %s113 = sadd.s32 %s112, 1
    %s114 = scalar_select %p111, %s112, %s113
    %p117 = pneg %p111
    %p118 = scmp.eq.s32.totalorder %s24, 1
    %p119 = por %p117, %p118
    %p120 = scmp.ne.s32.totalorder %s112, %s115
    %p121 = scmp.eq.s32.totalorder %s24, 0
    %p122 = por %p120, %p121
    %p123 = scmp.ne.s32.totalorder %s112, %s115
    %p124 = scmp.eq.s32.totalorder %s29, 1
    %p125 = por %p123, %p124
    %p126 = scmp.ne.s32.totalorder %s115, %s116
    %p127 = scmp.eq.s32.totalorder %s29, 0
    %p128 = por %p126, %p127
    %p129 = scmp.ne.s32.totalorder %s115, %s116
    %p130 = scmp.eq.s32.totalorder %s30, 1
    %p131 = por %p129, %p130
    %p133 = scmp.ne.s32.totalorder %s116, %s132
    %p134 = scmp.eq.s32.totalorder %s30, 0
    %p135 = por %p133, %p134
    %s136 = ssub.s32 %s24, %s31
    %p137 = scmp.eq.s32.totalorder %s136, 0
    %s139 = sadd.s32 %s138, 1
    %s140 = scalar_select %p137, %s138, %s139
    %p143 = pneg %p137
    %p144 = scmp.eq.s32.totalorder %s24, 1
    %p145 = por %p143, %p144
    %p146 = scmp.ne.s32.totalorder %s138, %s141
    %p147 = scmp.eq.s32.totalorder %s24, 0
    %p148 = por %p146, %p147
    %p149 = scmp.ne.s32.totalorder %s138, %s141
    %p150 = scmp.eq.s32.totalorder %s29, 1
    %p151 = por %p149, %p150
    %p152 = scmp.ne.s32.totalorder %s141, %s142
    %p153 = scmp.eq.s32.totalorder %s29, 0
    %p154 = por %p152, %p153
    %p155 = scmp.ne.s32.totalorder %s141, %s142
    %p156 = scmp.eq.s32.totalorder %s30, 1
    %p157 = por %p155, %p156
    %p159 = scmp.ne.s32.totalorder %s142, %s158
    %p160 = scmp.eq.s32.totalorder %s30, 0
    %p161 = por %p159, %p160
    %s162 = ssub.s32 %s24, %s31
    %p163 = scmp.eq.s32.totalorder %s162, 0
    %s165 = sadd.s32 %s164, 1
    %s166 = scalar_select %p163, %s164, %s165
    %p169 = pneg %p163
    %p170 = scmp.eq.s32.totalorder %s24, 1
    %p171 = por %p169, %p170
    %p172 = scmp.ne.s32.totalorder %s164, %s167
    %p173 = scmp.eq.s32.totalorder %s24, 0
    %p174 = por %p172, %p173
    %p175 = scmp.ne.s32.totalorder %s164, %s167
    %p176 = scmp.eq.s32.totalorder %s29, 1
    %p177 = por %p175, %p176
    %p178 = scmp.ne.s32.totalorder %s167, %s168
    %p179 = scmp.eq.s32.totalorder %s29, 0
    %p180 = por %p178, %p179
    %p181 = scmp.ne.s32.totalorder %s167, %s168
    %p182 = scmp.eq.s32.totalorder %s30, 1
    %p183 = por %p181, %p182
    %p185 = scmp.ne.s32.totalorder %s168, %s184
    %p186 = scmp.eq.s32.totalorder %s30, 0
    %p187 = por %p185, %p186
    %s188 = ssub.s32 %s24, %s31
    %p189 = scmp.eq.s32.totalorder %s188, 0
    %s191 = sadd.s32 %s190, 1
    %s192 = scalar_select %p189, %s190, %s191
    %p195 = pneg %p189
    %p196 = scmp.eq.s32.totalorder %s24, 1
    %p197 = por %p195, %p196
    %p198 = scmp.ne.s32.totalorder %s190, %s193
    %p199 = scmp.eq.s32.totalorder %s24, 0
    %p200 = por %p198, %p199
    %p201 = scmp.ne.s32.totalorder %s190, %s193
    %p202 = scmp.eq.s32.totalorder %s29, 1
    %p203 = por %p201, %p202
    %p204 = scmp.ne.s32.totalorder %s193, %s194
    %p205 = scmp.eq.s32.totalorder %s29, 0
    %p206 = por %p204, %p205
    %p207 = scmp.ne.s32.totalorder %s193, %s194
    %p208 = scmp.eq.s32.totalorder %s30, 1
    %p209 = por %p207, %p208
    %p211 = scmp.ne.s32.totalorder %s194, %s210
    %p212 = scmp.eq.s32.totalorder %s30, 0
    %p213 = por %p211, %p212
    %s214 = ssub.s32 %s24, %s31
    %p215 = scmp.eq.s32.totalorder %s214, 0
    %s217 = sadd.s32 %s216, 1
    %s218 = scalar_select %p215, %s216, %s217
    %p221 = pneg %p215
    %p222 = scmp.eq.s32.totalorder %s24, 1
    %p223 = por %p221, %p222
    %p224 = scmp.ne.s32.totalorder %s216, %s219
    %p225 = scmp.eq.s32.totalorder %s24, 0
    %p226 = por %p224, %p225
    %p227 = scmp.ne.s32.totalorder %s216, %s219
    %p228 = scmp.eq.s32.totalorder %s29, 1
    %p229 = por %p227, %p228
    %p230 = scmp.ne.s32.totalorder %s219, %s220
    %p231 = scmp.eq.s32.totalorder %s29, 0
    %p232 = por %p230, %p231
    %p233 = scmp.ne.s32.totalorder %s219, %s220
    %p234 = scmp.eq.s32.totalorder %s30, 1
    %p235 = por %p233, %p234
    %p237 = scmp.ne.s32.totalorder %s220, %s236
    %p238 = scmp.eq.s32.totalorder %s30, 0
    %p239 = por %p237, %p238
    %s240 = ssub.s32 %s24, %s31
    %p241 = scmp.eq.s32.totalorder %s240, 0
    %s243 = sadd.s32 %s242, 1
    %s244 = scalar_select %p241, %s242, %s243
    %p247 = pneg %p241
    %p248 = scmp.eq.s32.totalorder %s24, 1
    %p249 = por %p247, %p248
    %p250 = scmp.ne.s32.totalorder %s242, %s245
    %p251 = scmp.eq.s32.totalorder %s24, 0
    %p252 = por %p250, %p251
    %p253 = scmp.ne.s32.totalorder %s242, %s245
    %p254 = scmp.eq.s32.totalorder %s29, 1
    %p255 = por %p253, %p254
    %p256 = scmp.ne.s32.totalorder %s245, %s246
    %p257 = scmp.eq.s32.totalorder %s29, 0
    %p258 = por %p256, %p257
    %p259 = scmp.ne.s32.totalorder %s245, %s246
    %p260 = scmp.eq.s32.totalorder %s30, 1
    %p261 = por %p259, %p260
    %p263 = scmp.ne.s32.totalorder %s246, %s262
    %p264 = scmp.eq.s32.totalorder %s30, 0
    %p265 = por %p263, %p264
    %s266 = ssub.s32 %s24, %s31
    %p267 = scmp.eq.s32.totalorder %s266, 0
    %s269 = sadd.s32 %s268, 1
    %s270 = scalar_select %p267, %s268, %s269
    %p273 = pneg %p267
    %p274 = scmp.eq.s32.totalorder %s24, 1
    %p275 = por %p273, %p274
    %p276 = scmp.ne.s32.totalorder %s268, %s271
    %p277 = scmp.eq.s32.totalorder %s24, 0
    %p278 = por %p276, %p277
    %p279 = scmp.ne.s32.totalorder %s268, %s271
    %p280 = scmp.eq.s32.totalorder %s29, 1
    %p281 = por %p279, %p280
    %p282 = scmp.ne.s32.totalorder %s271, %s272
    %p283 = scmp.eq.s32.totalorder %s29, 0
    %p284 = por %p282, %p283
    %p285 = scmp.ne.s32.totalorder %s271, %s272
    %p286 = scmp.eq.s32.totalorder %s30, 1
    %p287 = por %p285, %p286
    %p289 = scmp.ne.s32.totalorder %s272, %s288
    %p290 = scmp.eq.s32.totalorder %s30, 0
    %p291 = por %p289, %p290
    %s292 = ssub.s32 %s24, %s31
    %p293 = scmp.eq.s32.totalorder %s292, 0
    %s295 = sadd.s32 %s294, 1
    %s296 = scalar_select %p293, %s294, %s295
    %p299 = pneg %p293
    %p300 = scmp.eq.s32.totalorder %s24, 1
    %p301 = por %p299, %p300
    %p302 = scmp.ne.s32.totalorder %s294, %s297
    %p303 = scmp.eq.s32.totalorder %s24, 0
    %p304 = por %p302, %p303
    %p305 = scmp.ne.s32.totalorder %s294, %s297
    %p306 = scmp.eq.s32.totalorder %s29, 1
    %p307 = por %p305, %p306
    %p308 = scmp.ne.s32.totalorder %s297, %s298
    %p309 = scmp.eq.s32.totalorder %s29, 0
    %p310 = por %p308, %p309
    %p311 = scmp.ne.s32.totalorder %s297, %s298
    %p312 = scmp.eq.s32.totalorder %s30, 1
    %p313 = por %p311, %p312
    %p315 = scmp.ne.s32.totalorder %s298, %s314
    %p316 = scmp.eq.s32.totalorder %s30, 0
    %p317 = por %p315, %p316
    %s318 = ssub.s32 %s24, %s31
    %p319 = scmp.eq.s32.totalorder %s318, 0
    %s321 = sadd.s32 %s320, 1
    %s322 = scalar_select %p319, %s320, %s321
    %p325 = pneg %p319
    %p326 = scmp.eq.s32.totalorder %s24, 1
    %p327 = por %p325, %p326
    %p328 = scmp.ne.s32.totalorder %s320, %s323
    %p329 = scmp.eq.s32.totalorder %s24, 0
    %p330 = por %p328, %p329
    %p331 = scmp.ne.s32.totalorder %s320, %s323
    %p332 = scmp.eq.s32.totalorder %s29, 1
    %p333 = por %p331, %p332
    %p334 = scmp.ne.s32.totalorder %s323, %s324
    %p335 = scmp.eq.s32.totalorder %s29, 0
    %p336 = por %p334, %p335
    %p337 = scmp.ne.s32.totalorder %s323, %s324
    %p338 = scmp.eq.s32.totalorder %s30, 1
    %p339 = por %p337, %p338
    %p341 = scmp.ne.s32.totalorder %s324, %s340
    %p342 = scmp.eq.s32.totalorder %s30, 0
    %p343 = por %p341, %p342
    %s344 = ssub.s32 %s24, %s31
    %p345 = scmp.eq.s32.totalorder %s344, 0
    %s347 = sadd.s32 %s346, 1
    %s348 = scalar_select %p345, %s346, %s347
    %p351 = pneg %p345
    %p352 = scmp.eq.s32.totalorder %s24, 1
    %p353 = por %p351, %p352
    %p354 = scmp.ne.s32.totalorder %s346, %s349
    %p355 = scmp.eq.s32.totalorder %s24, 0
    %p356 = por %p354, %p355
    %p357 = scmp.ne.s32.totalorder %s346, %s349
    %p358 = scmp.eq.s32.totalorder %s29, 1
    %p359 = por %p357, %p358
    %p360 = scmp.ne.s32.totalorder %s349, %s350
    %p361 = scmp.eq.s32.totalorder %s29, 0
    %p362 = por %p360, %p361
    %p363 = scmp.ne.s32.totalorder %s349, %s350
    %p364 = scmp.eq.s32.totalorder %s30, 1
    %p365 = por %p363, %p364
    %p367 = scmp.ne.s32.totalorder %s350, %s366
    %p368 = scmp.eq.s32.totalorder %s30, 0
    %p369 = por %p367, %p368
    %s370 = ssub.s32 %s24, %s31
    %p371 = scmp.eq.s32.totalorder %s370, 0
    %s373 = sadd.s32 %s372, 1
    %s374 = scalar_select %p371, %s372, %s373
    %p377 = pneg %p371
    %p378 = scmp.eq.s32.totalorder %s24, 1
    %p379 = por %p377, %p378
    %p380 = scmp.ne.s32.totalorder %s372, %s375
    %p381 = scmp.eq.s32.totalorder %s24, 0
    %p382 = por %p380, %p381
    %p383 = scmp.ne.s32.totalorder %s372, %s375
    %p384 = scmp.eq.s32.totalorder %s29, 1
    %p385 = por %p383, %p384
    %p386 = scmp.ne.s32.totalorder %s375, %s376
    %p387 = scmp.eq.s32.totalorder %s29, 0
    %p388 = por %p386, %p387
    %p389 = scmp.ne.s32.totalorder %s375, %s376
    %p390 = scmp.eq.s32.totalorder %s30, 1
    %p391 = por %p389, %p390
    %p393 = scmp.ne.s32.totalorder %s376, %s392
    %p394 = scmp.eq.s32.totalorder %s30, 0
    %p395 = por %p393, %p394
    %s396 = ssub.s32 %s24, %s31
    %p397 = scmp.eq.s32.totalorder %s396, 0
    %s399 = sadd.s32 %s398, 1
    %s400 = scalar_select %p397, %s398, %s399
    %p403 = pneg %p397
    %p404 = scmp.eq.s32.totalorder %s24, 1
    %p405 = por %p403, %p404
    %p406 = scmp.ne.s32.totalorder %s398, %s401
    %p407 = scmp.eq.s32.totalorder %s24, 0
    %p408 = por %p406, %p407
    %p409 = scmp.ne.s32.totalorder %s398, %s401
    %p410 = scmp.eq.s32.totalorder %s29, 1
    %p411 = por %p409, %p410
    %p412 = scmp.ne.s32.totalorder %s401, %s402
    %p413 = scmp.eq.s32.totalorder %s29, 0
    %p414 = por %p412, %p413
    %p415 = scmp.ne.s32.totalorder %s401, %s402
    %p416 = scmp.eq.s32.totalorder %s30, 1
    %p417 = por %p415, %p416
    %p419 = scmp.ne.s32.totalorder %s402, %s418
    %p420 = scmp.eq.s32.totalorder %s30, 0
    %p421 = por %p419, %p420
    %s422 = ssub.s32 %s24, %s31
    %p423 = scmp.eq.s32.totalorder %s422, 0
    %s425 = sadd.s32 %s424, 1
    %s426 = scalar_select %p423, %s424, %s425
    %p429 = pneg %p423
    %p430 = scmp.eq.s32.totalorder %s24, 1
    %p431 = por %p429, %p430
    %p432 = scmp.ne.s32.totalorder %s424, %s427
    %p433 = scmp.eq.s32.totalorder %s24, 0
    %p434 = por %p432, %p433
    %p435 = scmp.ne.s32.totalorder %s424, %s427
    %p436 = scmp.eq.s32.totalorder %s29, 1
    %p437 = por %p435, %p436
    %p438 = scmp.ne.s32.totalorder %s427, %s428
    %p439 = scmp.eq.s32.totalorder %s29, 0
    %p440 = por %p438, %p439
    %p441 = scmp.ne.s32.totalorder %s427, %s428
    %p442 = scmp.eq.s32.totalorder %s30, 1
    %p443 = por %p441, %p442
    %p445 = scmp.ne.s32.totalorder %s428, %s444
    %p446 = scmp.eq.s32.totalorder %s30, 0
    %p447 = por %p445, %p446
    %s448 = ssub.s32 %s24, %s31
    %p449 = scmp.eq.s32.totalorder %s448, 0
    %s451 = sadd.s32 %s450, 1
    %s452 = scalar_select %p449, %s450, %s451
    %p455 = pneg %p449
    %p456 = scmp.eq.s32.totalorder %s24, 1
    %p457 = por %p455, %p456
    %p458 = scmp.ne.s32.totalorder %s450, %s453
    %p459 = scmp.eq.s32.totalorder %s24, 0
    %p460 = por %p458, %p459
    %p461 = scmp.ne.s32.totalorder %s450, %s453
    %p462 = scmp.eq.s32.totalorder %s29, 1
    %p463 = por %p461, %p462
    %p464 = scmp.ne.s32.totalorder %s453, %s454
    %p465 = scmp.eq.s32.totalorder %s29, 0
    %p466 = por %p464, %p465
    %p467 = scmp.ne.s32.totalorder %s453, %s454
    %p468 = scmp.eq.s32.totalorder %s30, 1
    %p469 = por %p467, %p468
    %p471 = scmp.ne.s32.totalorder %s454, %s470
    %p472 = scmp.eq.s32.totalorder %s30, 0
    %p473 = por %p471, %p472
    %s474 = ssub.s32 %s24, %s31
    %p475 = scmp.eq.s32.totalorder %s474, 0
    %s477 = sadd.s32 %s476, 1
    %s478 = scalar_select %p475, %s476, %s477
    %p481 = pneg %p475
    %p482 = scmp.eq.s32.totalorder %s24, 1
    %p483 = por %p481, %p482
    %p484 = scmp.ne.s32.totalorder %s476, %s479
    %p485 = scmp.eq.s32.totalorder %s24, 0
    %p486 = por %p484, %p485
    %p487 = scmp.ne.s32.totalorder %s476, %s479
    %p488 = scmp.eq.s32.totalorder %s29, 1
    %p489 = por %p487, %p488
    %p490 = scmp.ne.s32.totalorder %s479, %s480
    %p491 = scmp.eq.s32.totalorder %s29, 0
    %p492 = por %p490, %p491
    %p493 = scmp.ne.s32.totalorder %s479, %s480
    %p494 = scmp.eq.s32.totalorder %s30, 1
    %p495 = por %p493, %p494
    %p497 = scmp.ne.s32.totalorder %s480, %s496
    %p498 = scmp.eq.s32.totalorder %s30, 0
    %p499 = por %p497, %p498
    %p500 = scmp.le.s32.totalorder 1, %s24
    %p501 = scmp.lt.s32.totalorder %s24, 3
    %p502 = pnand %p500, %p501
    %p503 = pneg %p502
    // Predicated region
    $region9: #{gen_forward.1} parent=5 // pred_check
      _
    $region10: #{gen_forward.1} parent=5 // pred_check_branch
      %505 = sbr.rel (%p502) target = $region12
    $region11: #{gen_forward.1} parent=5 // pred_region
      %s506 = ssub.s32 %s24, 1
    $region12: #{gen_forward.1} parent=5 // pred_fallthru
      _
    %p507 = scmp.lt.s32.totalorder %s24, 2
    // Predicated region
    $region13: #{gen_forward.1} parent=5 // pred_check
      %p508 = pneg %p507
    $region14: #{gen_forward.1} parent=5 // pred_check_branch
      %510 = sbr.rel (%p508) target = $region16
    $region15: #{gen_forward.1} parent=5 // pred_region
      // Predicated region
      $region17: #{gen_forward.1} parent=15 // pred_check
        %p511 = pneg %p44
      $region18: #{gen_forward.1} parent=15 // pred_check_branch
        %513 = sbr.rel (%p511) target = $region20
      $region19: #{gen_forward.1} parent=15 // pred_region
        %p514 = scmp.lt.s32.totalorder %s24, 1
        %s515 = scalar_select %p514, %s24, 1
        %s516 = smul.addr %s515, 4
        %s517 = smul.addr %s516, 8
        %s518 = scalar_lea.vmem %s0, %s517
      $region20: #{gen_forward.1} parent=15 // pred_fallthru
        _
      // Predicated region
      $region21: #{gen_forward.1} parent=15 // pred_check
        %p519 = pneg %p70
      $region22: #{gen_forward.1} parent=15 // pred_check_branch
        %521 = sbr.rel (%p519) target = $region24
      $region23: #{gen_forward.1} parent=15 // pred_region
        %p522 = scmp.lt.s32.totalorder %s24, 1
        %s523 = scalar_select %p522, %s24, 1
        %s524 = smul.addr %s523, 4
        %s525 = smul.addr %s524, 8
        %s526 = scalar_lea.vmem %s1, %s525
      $region24: #{gen_forward.1} parent=15 // pred_fallthru
        _
      // Predicated region
      $region25: #{gen_forward.1} parent=15 // pred_check
        %p527 = pneg %p96
      $region26: #{gen_forward.1} parent=15 // pred_check_branch
        %529 = sbr.rel (%p527) target = $region28
      $region27: #{gen_forward.1} parent=15 // pred_region
        %p530 = scmp.lt.s32.totalorder %s24, 1
        %s531 = scalar_select %p530, %s24, 1
        %s532 = smul.addr %s531, 100
        %s533 = smul.addr %s532, 8
        %s534 = scalar_lea.vmem %s2, %s533
      $region28: #{gen_forward.1} parent=15 // pred_fallthru
        _
      // Predicated region
      $region29: #{gen_forward.1} parent=15 // pred_check
        %p535 = pneg %p122
      $region30: #{gen_forward.1} parent=15 // pred_check_branch
        %537 = sbr.rel (%p535) target = $region32
      $region31: #{gen_forward.1} parent=15 // pred_region
        %p538 = scmp.lt.s32.totalorder %s24, 1
        %s539 = scalar_select %p538, %s24, 1
        %s540 = smul.addr %s539, 76
        %s541 = smul.addr %s540, 8
        %s542 = scalar_lea.vmem %s3, %s541
      $region32: #{gen_forward.1} parent=15 // pred_fallthru
        _
      // Predicated region
      $region33: #{gen_forward.1} parent=15 // pred_check
        %p543 = pneg %p148
      $region34: #{gen_forward.1} parent=15 // pred_check_branch
        %545 = sbr.rel (%p543) target = $region36
      $region35: #{gen_forward.1} parent=15 // pred_region
        %p546 = scmp.lt.s32.totalorder %s24, 1
        %s547 = scalar_select %p546, %s24, 1
        %s548 = smul.addr %s547, 4
        %s549 = scalar_lea.vmem %s4, %s548
      $region36: #{gen_forward.1} parent=15 // pred_fallthru
        _
      // Predicated region
      $region37: #{gen_forward.1} parent=15 // pred_check
        %p550 = pneg %p174
      $region38: #{gen_forward.1} parent=15 // pred_check_branch
        %552 = sbr.rel (%p550) target = $region40
      $region39: #{gen_forward.1} parent=15 // pred_region
        %p553 = scmp.lt.s32.totalorder %s24, 1
        %s554 = scalar_select %p553, %s24, 1
        %s555 = smul.addr %s554, 4
        %s556 = scalar_lea.vmem %s5, %s555
      $region40: #{gen_forward.1} parent=15 // pred_fallthru
        _
      // Predicated region
      $region41: #{gen_forward.1} parent=15 // pred_check
        %p557 = pneg %p200
      $region42: #{gen_forward.1} parent=15 // pred_check_branch
        %559 = sbr.rel (%p557) target = $region44
      $region43: #{gen_forward.1} parent=15 // pred_region
        %p560 = scmp.lt.s32.totalorder %s24, 1
        %s561 = scalar_select %p560, %s24, 1
        %s562 = smul.addr %s561, 100
        %s563 = smul.addr %s562, 8
        %s564 = scalar_lea.vmem %s6, %s563
      $region44: #{gen_forward.1} parent=15 // pred_fallthru
        _
      // Predicated region
      $region45: #{gen_forward.1} parent=15 // pred_check
        %p565 = pneg %p226
      $region46: #{gen_forward.1} parent=15 // pred_check_branch
        %567 = sbr.rel (%p565) target = $region48
      $region47: #{gen_forward.1} parent=15 // pred_region
        %p568 = scmp.lt.s32.totalorder %s24, 1
        %s569 = scalar_select %p568, %s24, 1
        %s570 = smul.addr %s569, 76
        %s571 = smul.addr %s570, 8
        %s572 = scalar_lea.vmem %s7, %s571
      $region48: #{gen_forward.1} parent=15 // pred_fallthru
        _
      // Predicated region
      $region49: #{gen_forward.1} parent=15 // pred_check
        %p573 = pneg %p252
      $region50: #{gen_forward.1} parent=15 // pred_check_branch
        %575 = sbr.rel (%p573) target = $region52
      $region51: #{gen_forward.1} parent=15 // pred_region
        %p576 = scmp.lt.s32.totalorder %s24, 1
        %s577 = scalar_select %p576, %s24, 1
        %s578 = smul.addr %s577, 4
        %s579 = scalar_lea.vmem %s8, %s578
      $region52: #{gen_forward.1} parent=15 // pred_fallthru
        _
      // Predicated region
      $region53: #{gen_forward.1} parent=15 // pred_check
        %p580 = pneg %p278
      $region54: #{gen_forward.1} parent=15 // pred_check_branch
        %582 = sbr.rel (%p580) target = $region56
      $region55: #{gen_forward.1} parent=15 // pred_region
        %p583 = scmp.lt.s32.totalorder %s24, 1
        %s584 = scalar_select %p583, %s24, 1
        %s585 = smul.addr %s584, 4
        %s586 = scalar_lea.vmem %s9, %s585
      $region56: #{gen_forward.1} parent=15 // pred_fallthru
        _
      // Predicated region
      $region57: #{gen_forward.1} parent=15 // pred_check
        %p587 = pneg %p304
      $region58: #{gen_forward.1} parent=15 // pred_check_branch
        %589 = sbr.rel (%p587) target = $region60
      $region59: #{gen_forward.1} parent=15 // pred_region
        %p590 = scmp.lt.s32.totalorder %s24, 1
        %s591 = scalar_select %p590, %s24, 1
        %s592 = smul.addr %s591, 38
        %s593 = smul.addr %s592, 8
        %s594 = scalar_lea.vmem %s10, %s593
      $region60: #{gen_forward.1} parent=15 // pred_fallthru
        _
      // Predicated region
      $region61: #{gen_forward.1} parent=15 // pred_check
        %p595 = pneg %p330
      $region62: #{gen_forward.1} parent=15 // pred_check_branch
        %597 = sbr.rel (%p595) target = $region64
      $region63: #{gen_forward.1} parent=15 // pred_region
        %p598 = scmp.lt.s32.totalorder %s24, 1
        %s599 = scalar_select %p598, %s24, 1
        %s600 = smul.addr %s599, 38
        %s601 = smul.addr %s600, 8
        %s602 = scalar_lea.vmem %s11, %s601
      $region64: #{gen_forward.1} parent=15 // pred_fallthru
        _
      // Predicated region
      $region65: #{gen_forward.1} parent=15 // pred_check
        %p603 = pneg %p356
      $region66: #{gen_forward.1} parent=15 // pred_check_branch
        %605 = sbr.rel (%p603) target = $region68
      $region67: #{gen_forward.1} parent=15 // pred_region
        %p606 = scmp.lt.s32.totalorder %s24, 1
        %s607 = scalar_select %p606, %s24, 1
        %s608 = smul.addr %s607, 2
        %s609 = scalar_lea.vmem %s12, %s608
      $region68: #{gen_forward.1} parent=15 // pred_fallthru
        _
      // Predicated region
      $region69: #{gen_forward.1} parent=15 // pred_check
        %p610 = pneg %p382
      $region70: #{gen_forward.1} parent=15 // pred_check_branch
        %612 = sbr.rel (%p610) target = $region72
      $region71: #{gen_forward.1} parent=15 // pred_region
        %p613 = scmp.lt.s32.totalorder %s24, 1
        %s614 = scalar_select %p613, %s24, 1
        %s615 = smul.addr %s614, 19
        %s616 = smul.addr %s615, 8
        %s617 = scalar_lea.vmem %s13, %s616
      $region72: #{gen_forward.1} parent=15 // pred_fallthru
        _
      // Predicated region
      $region73: #{gen_forward.1} parent=15 // pred_check
        %p618 = pneg %p408
      $region74: #{gen_forward.1} parent=15 // pred_check_branch
        %620 = sbr.rel (%p618) target = $region76
      $region75: #{gen_forward.1} parent=15 // pred_region
        %p621 = scmp.lt.s32.totalorder %s24, 1
        %s622 = scalar_select %p621, %s24, 1
        %s623 = scalar_lea.vmem %s14, %s622
      $region76: #{gen_forward.1} parent=15 // pred_fallthru
        _
    $region16: #{gen_forward.1} parent=5 // pred_fallthru
      _
    %p624 = scmp.le.s32.totalorder 1, %s24
    %p625 = scmp.lt.s32.totalorder %s24, 3
    %p626 = pnand %p624, %p625
    %p627 = pneg %p626
    // Predicated region
    $region77: #{gen_forward.1} parent=5 // pred_check
      _
    $region78: #{gen_forward.1} parent=5 // pred_check_branch
      %629 = sbr.rel (%p626) target = $region80
    $region79: #{gen_forward.1} parent=5 // pred_region
      %s630 = ssub.s32 %s24, 1
      %p631 = scmp.lt.s32.totalorder %s29, 1
      %s632 = scalar_select %p631, %s29, 1
      %s633 = smul.addr %s632, 4
      %s634 = smul.addr %s633, 8
      %s635 = scalar_lea.vmem %s0, %s634
      %p636 = pneg %p50
      %p637 = pneg %p47
      %p638 = scmp.lt.s32.totalorder %s29, 1
      %s639 = scalar_select %p638, %s29, 1
      %s640 = smul.addr %s639, 4
      %s641 = smul.addr %s640, 8
      %s642 = scalar_lea.vmem %s1, %s641
      %p643 = pneg %p76
      %p644 = pneg %p73
      %p645 = scmp.lt.s32.totalorder %s29, 1
      %s646 = scalar_select %p645, %s29, 1
      %s647 = smul.addr %s646, 100
      %s648 = smul.addr %s647, 8
      %s649 = scalar_lea.vmem %s2, %s648
      %p650 = pneg %p102
      %p651 = pneg %p99
      %p652 = scmp.lt.s32.totalorder %s29, 1
      %s653 = scalar_select %p652, %s29, 1
      %s654 = smul.addr %s653, 76
      %s655 = smul.addr %s654, 8
      %s656 = scalar_lea.vmem %s3, %s655
      %p657 = pneg %p128
      %p658 = pneg %p125
      %p659 = scmp.lt.s32.totalorder %s29, 1
      %s660 = scalar_select %p659, %s29, 1
      %s661 = smul.addr %s660, 4
      %s662 = scalar_lea.vmem %s4, %s661
      %p663 = pneg %p154
      %p664 = pneg %p151
      %p665 = scmp.lt.s32.totalorder %s29, 1
      %s666 = scalar_select %p665, %s29, 1
      %s667 = smul.addr %s666, 4
      %s668 = scalar_lea.vmem %s5, %s667
      %p669 = pneg %p180
      %p670 = pneg %p177
      %p671 = scmp.lt.s32.totalorder %s29, 1
      %s672 = scalar_select %p671, %s29, 1
      %s673 = smul.addr %s672, 100
      %s674 = smul.addr %s673, 8
      %s675 = scalar_lea.vmem %s6, %s674
      %p676 = pneg %p206
      %p677 = pneg %p203
      %p678 = scmp.lt.s32.totalorder %s29, 1
      %s679 = scalar_select %p678, %s29, 1
      %s680 = smul.addr %s679, 76
      %s681 = smul.addr %s680, 8
      %s682 = scalar_lea.vmem %s7, %s681
      %p683 = pneg %p232
      %p684 = pneg %p229
      %p685 = scmp.lt.s32.totalorder %s29, 1
      %s686 = scalar_select %p685, %s29, 1
      %s687 = smul.addr %s686, 4
      %s688 = scalar_lea.vmem %s8, %s687
      %p689 = pneg %p258
      %p690 = pneg %p255
      %p691 = scmp.lt.s32.totalorder %s29, 1
      %s692 = scalar_select %p691, %s29, 1
      %s693 = smul.addr %s692, 4
      %s694 = scalar_lea.vmem %s9, %s693
      %p695 = pneg %p284
      %p696 = pneg %p281
      %p697 = scmp.lt.s32.totalorder %s29, 1
      %s698 = scalar_select %p697, %s29, 1
      %s699 = smul.addr %s698, 38
      %s700 = smul.addr %s699, 8
      %s701 = scalar_lea.vmem %s10, %s700
      %p702 = pneg %p310
      %p703 = pneg %p307
      %p704 = scmp.lt.s32.totalorder %s29, 1
      %s705 = scalar_select %p704, %s29, 1
      %s706 = smul.addr %s705, 38
      %s707 = smul.addr %s706, 8
      %s708 = scalar_lea.vmem %s11, %s707
      %p709 = pneg %p336
      %p710 = pneg %p333
      %p711 = scmp.lt.s32.totalorder %s29, 1
      %s712 = scalar_select %p711, %s29, 1
      %s713 = smul.addr %s712, 2
      %s714 = scalar_lea.vmem %s12, %s713
      %p715 = pneg %p362
      %p716 = pneg %p359
      %p717 = scmp.lt.s32.totalorder %s29, 1
      %s718 = scalar_select %p717, %s29, 1
      %s719 = smul.addr %s718, 19
      %s720 = smul.addr %s719, 8
      %s721 = scalar_lea.vmem %s13, %s720
      %p722 = pneg %p388
      %p723 = pneg %p385
      %p724 = scmp.lt.s32.totalorder %s29, 1
      %s725 = scalar_select %p724, %s29, 1
      %s726 = scalar_lea.vmem %s14, %s725
      %p727 = pneg %p414
      %p728 = pneg %p411
      %p729 = pneg %p440
      %p730 = pneg %p437
      %p731 = scmp.lt.s32.totalorder %s29, 1
      %s732 = scalar_select %p731, %s29, 1
      %s733 = smul.addr %s732, 2
      %s734 = smul.addr %s733, 8
      %s735 = scalar_lea.vmem %s15, %s734
      %p736 = pneg %p466
      %p737 = pneg %p463
      %p738 = scmp.lt.s32.totalorder %s29, 1
      %s739 = scalar_select %p738, %s29, 1
      %s740 = smul.addr %s739, 4
      %s741 = smul.addr %s740, 8
      %s742 = scalar_lea.vmem %s16, %s741
      %p743 = pneg %p492
      %p744 = pneg %p489
      %p745 = scmp.lt.s32.totalorder %s29, 1
      %s746 = scalar_select %p745, %s29, 1
      %s747 = smul.addr %s746, 16
      %s748 = smul.addr %s747, 2
      %s749 = scalar_lea.vmem %s17, %s748
      %p750 = scmp.lt.s32.totalorder %s29, 1
      %s751 = scalar_select %p750, %s29, 1
      %s752 = smul.addr %s751, 4
      %s753 = smul.addr %s752, 8
      %s754 = scalar_lea.vmem %s0, %s753
      %p755 = scmp.lt.s32.totalorder %s29, 1
      %s756 = scalar_select %p755, %s29, 1
      %s757 = smul.addr %s756, 4
      %s758 = smul.addr %s757, 8
      %s759 = scalar_lea.vmem %s1, %s758
      %p760 = scmp.lt.s32.totalorder %s29, 1
      %s761 = scalar_select %p760, %s29, 1
      %s762 = smul.addr %s761, 100
      %s763 = smul.addr %s762, 8
      %s764 = scalar_lea.vmem %s2, %s763
      %p765 = scmp.lt.s32.totalorder %s29, 1
      %s766 = scalar_select %p765, %s29, 1
      %s767 = smul.addr %s766, 76
      %s768 = smul.addr %s767, 8
      %s769 = scalar_lea.vmem %s3, %s768
      %p770 = scmp.lt.s32.totalorder %s29, 1
      %s771 = scalar_select %p770, %s29, 1
      %s772 = smul.addr %s771, 4
      %s773 = scalar_lea.vmem %s4, %s772
      %p774 = scmp.lt.s32.totalorder %s29, 1
      %s775 = scalar_select %p774, %s29, 1
      %s776 = smul.addr %s775, 4
      %s777 = scalar_lea.vmem %s5, %s776
      %p778 = scmp.lt.s32.totalorder %s29, 1
      %s779 = scalar_select %p778, %s29, 1
      %s780 = smul.addr %s779, 100
      %s781 = smul.addr %s780, 8
      %s782 = scalar_lea.vmem %s6, %s781
      %p783 = scmp.lt.s32.totalorder %s29, 1
      %s784 = scalar_select %p783, %s29, 1
      %s785 = smul.addr %s784, 76
      %s786 = smul.addr %s785, 8
      %s787 = scalar_lea.vmem %s7, %s786
      %p788 = scmp.lt.s32.totalorder %s29, 1
      %s789 = scalar_select %p788, %s29, 1
      %s790 = smul.addr %s789, 4
      %s791 = scalar_lea.vmem %s8, %s790
      %p792 = scmp.lt.s32.totalorder %s29, 1
      %s793 = scalar_select %p792, %s29, 1
      %s794 = smul.addr %s793, 4
      %s795 = scalar_lea.vmem %s9, %s794
      %p796 = scmp.lt.s32.totalorder %s29, 1
      %s797 = scalar_select %p796, %s29, 1
      %s798 = smul.addr %s797, 38
      %s799 = smul.addr %s798, 8
      %s800 = scalar_lea.vmem %s10, %s799
      %p801 = scmp.lt.s32.totalorder %s29, 1
      %s802 = scalar_select %p801, %s29, 1
      %s803 = smul.addr %s802, 38
      %s804 = smul.addr %s803, 8
      %s805 = scalar_lea.vmem %s11, %s804
      %p806 = scmp.lt.s32.totalorder %s29, 1
      %s807 = scalar_select %p806, %s29, 1
      %s808 = smul.addr %s807, 2
      %s809 = scalar_lea.vmem %s12, %s808
      %p810 = scmp.lt.s32.totalorder %s29, 1
      %s811 = scalar_select %p810, %s29, 1
      %s812 = smul.addr %s811, 19
      %s813 = smul.addr %s812, 8
      %s814 = scalar_lea.vmem %s13, %s813
      %p815 = scmp.lt.s32.totalorder %s29, 1
      %s816 = scalar_select %p815, %s29, 1
      %s817 = scalar_lea.vmem %s14, %s816
      %p818 = scmp.lt.s32.totalorder %s29, 1
      %s819 = scalar_select %p818, %s29, 1
      %s820 = smul.addr %s819, 2
      %s821 = smul.addr %s820, 8
      %s822 = scalar_lea.vmem %s15, %s821
      %p823 = scmp.lt.s32.totalorder %s29, 1
      %s824 = scalar_select %p823, %s29, 1
      %s825 = smul.addr %s824, 4
      %s826 = smul.addr %s825, 8
      %s827 = scalar_lea.vmem %s16, %s826
      %p828 = scmp.lt.s32.totalorder %s29, 1
      %s829 = scalar_select %p828, %s29, 1
      %s830 = smul.addr %s829, 16
      %s831 = smul.addr %s830, 2
      %s832 = scalar_lea.vmem %s17, %s831
      %v833 = vld [vmem:[%s754] sm:$0xff]
      %v834 = vld [vmem:[%s754 + $0x8] sm:$0xff]
      %v835 = vld [vmem:[%s754 + $0x10] sm:$0xff]
      %v836 = vld [vmem:[%s754 + $0x18] sm:$0xff]
      %v837 = vld [vmem:[%s764] sm:$0xff]
      %v838 = vld [vmem:[%s764 + $0x8] sm:$0xff]
      %v839 = vld [vmem:[%s764 + $0x10] sm:$0xff]
      %v840 = vld [vmem:[%s764 + $0x18] sm:$0xff]
      %v841 = vld [vmem:[%s764 + $0x20] sm:$0xff]
      %v842 = vld [vmem:[%s764 + $0x28] sm:$0xff]
      %v843 = vld [vmem:[%s764 + $0x30] sm:$0xff]
      %v844 = vld [vmem:[%s764 + $0x38] sm:$0xff]
      %v845 = vld [vmem:[%s764 + $0x40] sm:$0xff]
      %v846 = vld [vmem:[%s764 + $0x48] sm:$0xff]
      %v847 = vld [vmem:[%s764 + $0x50] sm:$0xff]
      %v848 = vld [vmem:[%s764 + $0x58] sm:$0xff]
      %v849 = vld [vmem:[%s764 + $0x60] sm:$0xff]
      %v850 = vld [vmem:[%s764 + $0x68] sm:$0xff]
      %v851 = vld [vmem:[%s764 + $0x70] sm:$0xff]
      %v852 = vld [vmem:[%s764 + $0x78] sm:$0xff]
      %v853 = vld [vmem:[%s764 + $0x80] sm:$0xff]
      %v854 = vld [vmem:[%s764 + $0x88] sm:$0xff]
      %v855 = vld [vmem:[%s764 + $0x90] sm:$0xff]
      %v856 = vld [vmem:[%s764 + $0x98] sm:$0xff]
      %v857 = vld [vmem:[%s764 + $0xa0] sm:$0xff]
      %v858 = vld [vmem:[%s764 + $0xa8] sm:$0xff]
      %v859 = vld [vmem:[%s764 + $0xb0] sm:$0xff]
      %v860 = vld [vmem:[%s764 + $0xb8] sm:$0xff]
      %v861 = vld [vmem:[%s764 + $0xc0] sm:$0xff]
      %v862 = vld [vmem:[%s764 + $0xc8] sm:$0xff]
      %v863 = vld [vmem:[%s764 + $0xd0] sm:$0xff]
      %v864 = vld [vmem:[%s764 + $0xd8] sm:$0xff]
      %v865 = vld [vmem:[%s764 + $0xe0] sm:$0xff]
      %v866 = vld [vmem:[%s764 + $0xe8] sm:$0xff]
      %v867 = vld [vmem:[%s764 + $0xf0] sm:$0xff]
      %v868 = vld [vmem:[%s764 + $0xf8] sm:$0xff]
      %v869 = vld [vmem:[%s764 + $0x100] sm:$0xff]
      %v870 = vld [vmem:[%s764 + $0x108] sm:$0xff]
      %v871 = vld [vmem:[%s764 + $0x110] sm:$0xff]
      %v872 = vld [vmem:[%s764 + $0x118] sm:$0xff]
      %v873 = vld [vmem:[%s764 + $0x120] sm:$0xff]
      %v874 = vld [vmem:[%s764 + $0x128] sm:$0xff]
      %v875 = vld [vmem:[%s764 + $0x130] sm:$0xff]
      %v876 = vld [vmem:[%s764 + $0x138] sm:$0xff]
      %v877 = vld [vmem:[%s764 + $0x140] sm:$0xff]
      %v878 = vld [vmem:[%s764 + $0x148] sm:$0xff]
      %v879 = vld [vmem:[%s764 + $0x150] sm:$0xff]
      %v880 = vld [vmem:[%s764 + $0x158] sm:$0xff]
      %v881 = vld [vmem:[%s764 + $0x160] sm:$0xff]
      %v882 = vld [vmem:[%s764 + $0x168] sm:$0xff]
      %v883 = vld [vmem:[%s764 + $0x170] sm:$0xff]
      %v884 = vld [vmem:[%s764 + $0x178] sm:$0xff]
      %v885 = vld [vmem:[%s764 + $0x180] sm:$0xff]
      %v886 = vld [vmem:[%s764 + $0x188] sm:$0xff]
      %v887 = vld [vmem:[%s764 + $0x190] sm:$0xff]
      %v888 = vld [vmem:[%s764 + $0x198] sm:$0xff]
      %v889 = vld [vmem:[%s764 + $0x1a0] sm:$0xff]
      %v890 = vld [vmem:[%s764 + $0x1a8] sm:$0xff]
      %v891 = vld [vmem:[%s764 + $0x1b0] sm:$0xff]
      %v892 = vld [vmem:[%s764 + $0x1b8] sm:$0xff]
      %v893 = vld [vmem:[%s764 + $0x1c0] sm:$0xff]
      %v894 = vld [vmem:[%s764 + $0x1c8] sm:$0xff]
      %v895 = vld [vmem:[%s764 + $0x1d0] sm:$0xff]
      %v896 = vld [vmem:[%s764 + $0x1d8] sm:$0xff]
      %v897 = vld [vmem:[%s764 + $0x1e0] sm:$0xff]
      %v898 = vld [vmem:[%s764 + $0x1e8] sm:$0xff]
      %v899 = vld [vmem:[%s764 + $0x1f0] sm:$0xff]
      %v900 = vld [vmem:[%s764 + $0x1f8] sm:$0xff]
      %v901 = vld [vmem:[%s764 + $0x200] sm:$0xff]
      %v902 = vld [vmem:[%s764 + $0x208] sm:$0xff]
      %v903 = vld [vmem:[%s764 + $0x210] sm:$0xff]
      %v904 = vld [vmem:[%s764 + $0x218] sm:$0xff]
      %v905 = vld [vmem:[%s764 + $0x220] sm:$0xff]
      %v906 = vld [vmem:[%s764 + $0x228] sm:$0xff]
      %v907 = vld [vmem:[%s764 + $0x230] sm:$0xff]
      %v908 = vld [vmem:[%s764 + $0x238] sm:$0xff]
      %v909 = vld [vmem:[%s764 + $0x240] sm:$0xff]
      %v910 = vld [vmem:[%s764 + $0x248] sm:$0xff]
      %v911 = vld [vmem:[%s764 + $0x250] sm:$0xff]
      %v912 = vld [vmem:[%s764 + $0x258] sm:$0xff]
      %v913 = vld [vmem:[%s764 + $0x260] sm:$0xff]
      %v914 = vld [vmem:[%s764 + $0x268] sm:$0xff]
      %v915 = vld [vmem:[%s764 + $0x270] sm:$0xff]
      %v916 = vld [vmem:[%s764 + $0x278] sm:$0xff]
      %v917 = vld [vmem:[%s764 + $0x280] sm:$0xff]
      %v918 = vld [vmem:[%s764 + $0x288] sm:$0xff]
      %v919 = vld [vmem:[%s764 + $0x290] sm:$0xff]
      %v920 = vld [vmem:[%s764 + $0x298] sm:$0xff]
      %v921 = vld [vmem:[%s764 + $0x2a0] sm:$0xff]
      %v922 = vld [vmem:[%s764 + $0x2a8] sm:$0xff]
      %v923 = vld [vmem:[%s764 + $0x2b0] sm:$0xff]
      %v924 = vld [vmem:[%s764 + $0x2b8] sm:$0xff]
      %v925 = vld [vmem:[%s764 + $0x2c0] sm:$0xff]
      %v926 = vld [vmem:[%s764 + $0x2c8] sm:$0xff]
      %v927 = vld [vmem:[%s764 + $0x2d0] sm:$0xff]
      %v928 = vld [vmem:[%s764 + $0x2d8] sm:$0xff]
      %v929 = vld [vmem:[%s764 + $0x2e0] sm:$0xff]
      %v930 = vld [vmem:[%s764 + $0x2e8] sm:$0xff]
      %v931 = vld [vmem:[%s764 + $0x2f0] sm:$0xff]
      %v932 = vld [vmem:[%s764 + $0x2f8] sm:$0xff]
      %v933 = vld [vmem:[%s764 + $0x300] sm:$0xff]
      %v934 = vld [vmem:[%s764 + $0x308] sm:$0xff]
      %v935 = vld [vmem:[%s764 + $0x310] sm:$0xff]
      %v936 = vld [vmem:[%s764 + $0x318] sm:$0xff]
      %v937 = vld [vmem:[%s773] sm:$0xf]
      %v939 = vlaneseq
      %v940 = vshrl.u32 %v939, 7
      %v941 = vsub.s32 0, %v940
      %v942 = vrot.slane %v937, %v941
      %v943 = vlaneseq
      %v944 = vshrl.u32 %v943, 7
      %v945 = vsub.s32 1, %v944
      %v946 = vrot.slane %v937, %v945
      %v947 = vlaneseq
      %v948 = vshrl.u32 %v947, 7
      %v949 = vsub.s32 2, %v948
      %v950 = vrot.slane %v937, %v949
      %v951 = vlaneseq
      %v952 = vshrl.u32 %v951, 7
      %v953 = vsub.s32 3, %v952
      %v954 = vrot.slane %v937, %v953
      %vm959 = vcmask 588800
      %v961 = vsel %vm959, %v834, 0
      %v964 = vsel %vm959, %v836, 0
      %966 = vmatprep.subr.mxu0 %v838
      %967 = vmatpush1.msra.mxu0 %v837
      %968 = vmatprep.subr.mxu0 %v842
      %969 = vmatpush1.msra.mxu0 %v841
      %970 = vmatprep.subr.mxu0 %v846
      %971 = vmatpush1.msra.mxu0 %v845
      %972 = vmatprep.subr.mxu0 %v850
      %973 = vmatpush1.msra.mxu0 %v849
      %974 = vmatprep.subr.mxu0 %v854
      %975 = vmatpush1.msra.mxu0 %v853
      %976 = vmatprep.subr.mxu0 %v858
      %977 = vmatpush1.msra.mxu0 %v857
      %978 = vmatprep.subr.mxu0 %v862
      %979 = vmatpush1.msra.mxu0 %v861
      %980 = vmatprep.subr.mxu0 %v866
      %981 = vmatpush1.msra.mxu0 %v865
      %982 = vmatprep.subr.mxu0 %v870
      %983 = vmatpush1.msra.mxu0 %v869
      %984 = vmatprep.subr.mxu0 %v874
      %985 = vmatpush1.msra.mxu0 %v873
      %986 = vmatprep.subr.mxu0 %v878
      %987 = vmatpush1.msra.mxu0 %v877
      %988 = vmatprep.subr.mxu0 %v882
      %989 = vmatpush1.msra.mxu0 %v881
      %990 = vmatprep.subr.mxu0 %v886
      %991 = vmatpush1.msra.mxu0 %v885
      %992 = vmatprep.subr.mxu0 %v890
      %993 = vmatpush1.msra.mxu0 %v889
      %994 = vmatprep.subr.mxu0 %v894
      %995 = vmatpush1.msra.mxu0 %v893
      %996 = vmatprep.subr.mxu0 %v898
      %997 = vmatpush1.msra.mxu0 %v897
      %998 = vmatprep.subr.mxu0 %v902
      %999 = vmatpush1.msra.mxu0 %v901
      %1000 = vmatprep.subr.mxu0 %v906
      %1001 = vmatpush1.msra.mxu0 %v905
      %1002 = vmatprep.subr.mxu0 %v910
      %1003 = vmatpush1.msra.mxu0 %v909
      %1004 = vmatprep.subr.mxu0 %v914
      %1005 = vmatpush1.msra.mxu0 %v913
      %1006 = vmatprep.subr.mxu0 %v918
      %1007 = vmatpush1.msra.mxu0 %v917
      %1008 = vmatprep.subr.mxu0 %v922
      %1009 = vmatpush1.msra.mxu0 %v921
      %1010 = vmatprep.subr.mxu0 %v926
      %1011 = vmatpush1.msra.mxu0 %v925
      %1012 = vmatprep.subr.mxu0 %v930
      %1013 = vmatpush1.msra.mxu0 %v929
      %1014 = vmatprep.subr.mxu0 %v934
      %1015 = vmatpush1.msra.mxu0 %v933
      %1016 = vmatprep.subr.mxu0 0.0
      %1017 = vmatpush1.msra.mxu0 0.0
      %1018 = vmatprep.subr.mxu0 0.0
      %1019 = vmatpush1.msra.mxu0 0.0
      %1020 = vmatprep.subr.mxu0 0.0
      %1021 = vmatpush1.msra.mxu0 0.0
      %1022 = vmatprep.subr.mxu0 0.0
      %1023 = vmatpush1.msra.mxu0 0.0
      %1024 = vmatprep.subr.mxu0 0.0
      %1025 = vmatpush1.msra.mxu0 0.0
      %1026 = vmatprep.subr.mxu0 0.0
      %1027 = vmatpush1.msra.mxu0 0.0
      %1028 = vmatprep.subr.mxu0 0.0
      %1029 = vmatpush1.msra.mxu0 0.0
      %1030 = vmatprep.mubr.f32.mxu0 %v961
      %1031 = vmatmul.mubr.f32.gmra.mrb[0].mxu0 %v833
      %v1032 = vpop.f32.mrb[0].mxu0
      %v1033 = vadd.f32 %v942, %v1032
      %v1034 = vpop.f32.mrb[0].mxu0
      %v1035 = vadd.f32 %v946, %v1034
      %1036 = vmatprep.mubr.f32.mxu0 %v964
      %1037 = vmatmul.mubr.f32.gmra.mrb[0].mxu0 %v835
      %v1038 = vpop.f32.mrb[0].mxu0
      %v1039 = vadd.f32 %v942, %v1038
      %v1040 = vpop.f32.mrb[0].mxu0
      %v1041 = vadd.f32 %v946, %v1040
      %1042 = vdwg.mxu0
      %1043 = vmatprep.subr.mxu0 %v840
      %1044 = vmatpush1.msra.mxu0 %v839
      %1045 = vmatprep.subr.mxu0 %v844
      %1046 = vmatpush1.msra.mxu0 %v843
      %1047 = vmatprep.subr.mxu0 %v848
      %1048 = vmatpush1.msra.mxu0 %v847
      %1049 = vmatprep.subr.mxu0 %v852
      %1050 = vmatpush1.msra.mxu0 %v851
      %1051 = vmatprep.subr.mxu0 %v856
      %1052 = vmatpush1.msra.mxu0 %v855
      %1053 = vmatprep.subr.mxu0 %v860
      %1054 = vmatpush1.msra.mxu0 %v859
      %1055 = vmatprep.subr.mxu0 %v864
      %1056 = vmatpush1.msra.mxu0 %v863
      %1057 = vmatprep.subr.mxu0 %v868
      %1058 = vmatpush1.msra.mxu0 %v867
      %1059 = vmatprep.subr.mxu0 %v872
      %1060 = vmatpush1.msra.mxu0 %v871
      %1061 = vmatprep.subr.mxu0 %v876
      %1062 = vmatpush1.msra.mxu0 %v875
      %1063 = vmatprep.subr.mxu0 %v880
      %1064 = vmatpush1.msra.mxu0 %v879
      %1065 = vmatprep.subr.mxu0 %v884
      %1066 = vmatpush1.msra.mxu0 %v883
      %1067 = vmatprep.subr.mxu0 %v888
      %1068 = vmatpush1.msra.mxu0 %v887
      %1069 = vmatprep.subr.mxu0 %v892
      %1070 = vmatpush1.msra.mxu0 %v891
      %1071 = vmatprep.subr.mxu0 %v896
      %1072 = vmatpush1.msra.mxu0 %v895
      %1073 = vmatprep.subr.mxu0 %v900
      %1074 = vmatpush1.msra.mxu0 %v899
      %1075 = vmatprep.subr.mxu0 %v904
      %1076 = vmatpush1.msra.mxu0 %v903
      %1077 = vmatprep.subr.mxu0 %v908
      %1078 = vmatpush1.msra.mxu0 %v907
      %1079 = vmatprep.subr.mxu0 %v912
      %1080 = vmatpush1.msra.mxu0 %v911
      %1081 = vmatprep.subr.mxu0 %v916
      %1082 = vmatpush1.msra.mxu0 %v915
      %1083 = vmatprep.subr.mxu0 %v920
      %1084 = vmatpush1.msra.mxu0 %v919
      %1085 = vmatprep.subr.mxu0 %v924
      %1086 = vmatpush1.msra.mxu0 %v923
      %1087 = vmatprep.subr.mxu0 %v928
      %1088 = vmatpush1.msra.mxu0 %v927
      %1089 = vmatprep.subr.mxu0 %v932
      %1090 = vmatpush1.msra.mxu0 %v931
      %1091 = vmatprep.subr.mxu0 %v936
      %1092 = vmatpush1.msra.mxu0 %v935
      %1093 = vmatprep.subr.mxu0 0.0
      %1094 = vmatpush1.msra.mxu0 0.0
      %1095 = vmatprep.subr.mxu0 0.0
      %1096 = vmatpush1.msra.mxu0 0.0
      %1097 = vmatprep.subr.mxu0 0.0
      %1098 = vmatpush1.msra.mxu0 0.0
      %1099 = vmatprep.subr.mxu0 0.0
      %1100 = vmatpush1.msra.mxu0 0.0
      %1101 = vmatprep.subr.mxu0 0.0
      %1102 = vmatpush1.msra.mxu0 0.0
      %1103 = vmatprep.subr.mxu0 0.0
      %1104 = vmatpush1.msra.mxu0 0.0
      %1105 = vmatprep.subr.mxu0 0.0
      %1106 = vmatpush1.msra.mxu0 0.0
      %1107 = vmatprep.mubr.f32.mxu0 %v961
      %1108 = vmatmul.mubr.f32.gmra.mrb[0].mxu0 %v833
      %v1109 = vpop.f32.mrb[0].mxu0
      %v1110 = vadd.f32 %v950, %v1109
      %v1111 = vpop.f32.mrb[0].mxu0
      %v1112 = vadd.f32 %v954, %v1111
      %1113 = vmatprep.mubr.f32.mxu0 %v964
      %1114 = vmatmul.mubr.f32.gmra.mrb[0].mxu0 %v835
      %v1115 = vpop.f32.mrb[0].mxu0
      %v1116 = vadd.f32 %v950, %v1115
      %v1117 = vpop.f32.mrb[0].mxu0
      %v1118 = vadd.f32 %v954, %v1117
      %1119 = vdwg.mxu0
      %1120 = vst [vmem:[#allocation3] sm:$0xff] %v1033
      %1121 = vst [vmem:[#allocation3 + $0x8] sm:$0xff] %v1035
      %1122 = vst [vmem:[#allocation3 + $0x10] sm:$0xff] %v1110
      %vm1123 = vcmask 539648
      %1124 = vst.msk [vmem:[#allocation3 + $0x18] sm:$0xff] %vm1123, %v1112
      %1125 = vst [vmem:[#allocation3 + $0x20] sm:$0xff] %v1039
      %1126 = vst [vmem:[#allocation3 + $0x28] sm:$0xff] %v1041
      %1127 = vst [vmem:[#allocation3 + $0x30] sm:$0xff] %v1116
      %1128 = vst.msk [vmem:[#allocation3 + $0x38] sm:$0xff] %vm1123, %v1118
      %v1129 = vld [vmem:[%s759] sm:$0xff]
      %v1130 = vld [vmem:[%s759 + $0x8] sm:$0xff]
      %v1131 = vld [vmem:[%s759 + $0x10] sm:$0xf]
      %v1132 = vld [vmem:[%s759 + $0x18] sm:$0xf]
      %v1133 = vld [vmem:[%s782] sm:$0xff]
      %v1134 = vld [vmem:[%s782 + $0x8] sm:$0xff]
      %v1135 = vld [vmem:[%s782 + $0x10] sm:$0xff]
      %v1136 = vld [vmem:[%s782 + $0x18] sm:$0xff]
      %v1137 = vld [vmem:[%s782 + $0x20] sm:$0xff]
      %v1138 = vld [vmem:[%s782 + $0x28] sm:$0xff]
      %v1139 = vld [vmem:[%s782 + $0x30] sm:$0xff]
      %v1140 = vld [vmem:[%s782 + $0x38] sm:$0xff]
      %v1141 = vld [vmem:[%s782 + $0x40] sm:$0xff]
      %v1142 = vld [vmem:[%s782 + $0x48] sm:$0xff]
      %v1143 = vld [vmem:[%s782 + $0x50] sm:$0xff]
      %v1144 = vld [vmem:[%s782 + $0x58] sm:$0xff]
      %v1145 = vld [vmem:[%s782 + $0x60] sm:$0xff]
      %v1146 = vld [vmem:[%s782 + $0x68] sm:$0xff]
      %v1147 = vld [vmem:[%s782 + $0x70] sm:$0xff]
      %v1148 = vld [vmem:[%s782 + $0x78] sm:$0xff]
      %v1149 = vld [vmem:[%s782 + $0x80] sm:$0xff]
      %v1150 = vld [vmem:[%s782 + $0x88] sm:$0xff]
      %v1151 = vld [vmem:[%s782 + $0x90] sm:$0xff]
      %v1152 = vld [vmem:[%s782 + $0x98] sm:$0xff]
      %v1153 = vld [vmem:[%s782 + $0xa0] sm:$0xff]
      %v1154 = vld [vmem:[%s782 + $0xa8] sm:$0xff]
      %v1155 = vld [vmem:[%s782 + $0xb0] sm:$0xff]
      %v1156 = vld [vmem:[%s782 + $0xb8] sm:$0xff]
      %v1157 = vld [vmem:[%s782 + $0xc0] sm:$0xff]
      %v1158 = vld [vmem:[%s782 + $0xc8] sm:$0xff]
      %v1159 = vld [vmem:[%s782 + $0xd0] sm:$0xff]
      %v1160 = vld [vmem:[%s782 + $0xd8] sm:$0xff]
      %v1161 = vld [vmem:[%s782 + $0xe0] sm:$0xff]
      %v1162 = vld [vmem:[%s782 + $0xe8] sm:$0xff]
      %v1163 = vld [vmem:[%s782 + $0xf0] sm:$0xff]
      %v1164 = vld [vmem:[%s782 + $0xf8] sm:$0xff]
      %v1165 = vld [vmem:[%s782 + $0x100] sm:$0xff]
      %v1166 = vld [vmem:[%s782 + $0x108] sm:$0xff]
      %v1167 = vld [vmem:[%s782 + $0x110] sm:$0xff]
      %v1168 = vld [vmem:[%s782 + $0x118] sm:$0xff]
      %v1169 = vld [vmem:[%s782 + $0x120] sm:$0xff]
      %v1170 = vld [vmem:[%s782 + $0x128] sm:$0xff]
      %v1171 = vld [vmem:[%s782 + $0x130] sm:$0xff]
      %v1172 = vld [vmem:[%s782 + $0x138] sm:$0xff]
      %v1173 = vld [vmem:[%s782 + $0x140] sm:$0xff]
      %v1174 = vld [vmem:[%s782 + $0x148] sm:$0xff]
      %v1175 = vld [vmem:[%s782 + $0x150] sm:$0xff]
      %v1176 = vld [vmem:[%s782 + $0x158] sm:$0xff]
      %v1177 = vld [vmem:[%s782 + $0x160] sm:$0xff]
      %v1178 = vld [vmem:[%s782 + $0x168] sm:$0xff]
      %v1179 = vld [vmem:[%s782 + $0x170] sm:$0xff]
      %v1180 = vld [vmem:[%s782 + $0x178] sm:$0xff]
      %v1181 = vld [vmem:[%s782 + $0x180] sm:$0xff]
      %v1182 = vld [vmem:[%s782 + $0x188] sm:$0xff]
      %v1183 = vld [vmem:[%s782 + $0x190] sm:$0xff]
      %v1184 = vld [vmem:[%s782 + $0x198] sm:$0xff]
      %v1185 = vld [vmem:[%s782 + $0x1a0] sm:$0xff]
      %v1186 = vld [vmem:[%s782 + $0x1a8] sm:$0xff]
      %v1187 = vld [vmem:[%s782 + $0x1b0] sm:$0xff]
      %v1188 = vld [vmem:[%s782 + $0x1b8] sm:$0xff]
      %v1189 = vld [vmem:[%s782 + $0x1c0] sm:$0xff]
      %v1190 = vld [vmem:[%s782 + $0x1c8] sm:$0xff]
      %v1191 = vld [vmem:[%s782 + $0x1d0] sm:$0xff]
      %v1192 = vld [vmem:[%s782 + $0x1d8] sm:$0xff]
      %v1193 = vld [vmem:[%s782 + $0x1e0] sm:$0xff]
      %v1194 = vld [vmem:[%s782 + $0x1e8] sm:$0xff]
      %v1195 = vld [vmem:[%s782 + $0x1f0] sm:$0xff]
      %v1196 = vld [vmem:[%s782 + $0x1f8] sm:$0xff]
      %v1197 = vld [vmem:[%s782 + $0x200] sm:$0xff]
      %v1198 = vld [vmem:[%s782 + $0x208] sm:$0xff]
      %v1199 = vld [vmem:[%s782 + $0x210] sm:$0xff]
      %v1200 = vld [vmem:[%s782 + $0x218] sm:$0xff]
      %v1201 = vld [vmem:[%s782 + $0x220] sm:$0xff]
      %v1202 = vld [vmem:[%s782 + $0x228] sm:$0xff]
      %v1203 = vld [vmem:[%s782 + $0x230] sm:$0xff]
      %v1204 = vld [vmem:[%s782 + $0x238] sm:$0xff]
      %v1205 = vld [vmem:[%s782 + $0x240] sm:$0xff]
      %v1206 = vld [vmem:[%s782 + $0x248] sm:$0xff]
      %v1207 = vld [vmem:[%s782 + $0x250] sm:$0xff]
      %v1208 = vld [vmem:[%s782 + $0x258] sm:$0xff]
      %v1209 = vld [vmem:[%s782 + $0x260] sm:$0xff]
      %v1210 = vld [vmem:[%s782 + $0x268] sm:$0xff]
      %v1211 = vld [vmem:[%s782 + $0x270] sm:$0xff]
      %v1212 = vld [vmem:[%s782 + $0x278] sm:$0xff]
      %v1213 = vld [vmem:[%s782 + $0x280] sm:$0xff]
      %v1214 = vld [vmem:[%s782 + $0x288] sm:$0xff]
      %v1215 = vld [vmem:[%s782 + $0x290] sm:$0xff]
      %v1216 = vld [vmem:[%s782 + $0x298] sm:$0xff]
      %v1217 = vld [vmem:[%s782 + $0x2a0] sm:$0xff]
      %v1218 = vld [vmem:[%s782 + $0x2a8] sm:$0xff]
      %v1219 = vld [vmem:[%s782 + $0x2b0] sm:$0xff]
      %v1220 = vld [vmem:[%s782 + $0x2b8] sm:$0xff]
      %v1221 = vld [vmem:[%s782 + $0x2c0] sm:$0xff]
      %v1222 = vld [vmem:[%s782 + $0x2c8] sm:$0xff]
      %v1223 = vld [vmem:[%s782 + $0x2d0] sm:$0xff]
      %v1224 = vld [vmem:[%s782 + $0x2d8] sm:$0xff]
      %v1225 = vld [vmem:[%s782 + $0x2e0] sm:$0xff]
      %v1226 = vld [vmem:[%s782 + $0x2e8] sm:$0xff]
      %v1227 = vld [vmem:[%s782 + $0x2f0] sm:$0xff]
      %v1228 = vld [vmem:[%s782 + $0x2f8] sm:$0xff]
      %v1229 = vld [vmem:[%s782 + $0x300] sm:$0xff]
      %v1230 = vld [vmem:[%s782 + $0x308] sm:$0xff]
      %v1231 = vld [vmem:[%s782 + $0x310] sm:$0xff]
      %v1232 = vld [vmem:[%s782 + $0x318] sm:$0xff]
      %v1233 = vld [vmem:[%s791] sm:$0xf]
      %v1235 = vlaneseq
      %v1236 = vshrl.u32 %v1235, 7
      %v1237 = vsub.s32 0, %v1236
      %v1238 = vrot.slane %v1233, %v1237
      %v1239 = vlaneseq
      %v1240 = vshrl.u32 %v1239, 7
      %v1241 = vsub.s32 1, %v1240
      %v1242 = vrot.slane %v1233, %v1241
      %v1243 = vlaneseq
      %v1244 = vshrl.u32 %v1243, 7
      %v1245 = vsub.s32 2, %v1244
      %v1246 = vrot.slane %v1233, %v1245
      %v1247 = vlaneseq
      %v1248 = vshrl.u32 %v1247, 7
      %v1249 = vsub.s32 3, %v1248
      %v1250 = vrot.slane %v1233, %v1249
      %v1256 = vsel %vm959, %v1130, 0
      %v1259 = vsel %vm959, %v1132, 0
      %1261 = vmatprep.subr.mxu0 %v1134
      %1262 = vmatpush1.msra.mxu0 %v1133
      %1263 = vmatprep.subr.mxu0 %v1138
      %1264 = vmatpush1.msra.mxu0 %v1137
      %1265 = vmatprep.subr.mxu0 %v1142
      %1266 = vmatpush1.msra.mxu0 %v1141
      %1267 = vmatprep.subr.mxu0 %v1146
      %1268 = vmatpush1.msra.mxu0 %v1145
      %1269 = vmatprep.subr.mxu0 %v1150
      %1270 = vmatpush1.msra.mxu0 %v1149
      %1271 = vmatprep.subr.mxu0 %v1154
      %1272 = vmatpush1.msra.mxu0 %v1153
      %1273 = vmatprep.subr.mxu0 %v1158
      %1274 = vmatpush1.msra.mxu0 %v1157
      %1275 = vmatprep.subr.mxu0 %v1162
      %1276 = vmatpush1.msra.mxu0 %v1161
      %1277 = vmatprep.subr.mxu0 %v1166
      %1278 = vmatpush1.msra.mxu0 %v1165
      %1279 = vmatprep.subr.mxu0 %v1170
      %1280 = vmatpush1.msra.mxu0 %v1169
      %1281 = vmatprep.subr.mxu0 %v1174
      %1282 = vmatpush1.msra.mxu0 %v1173
      %1283 = vmatprep.subr.mxu0 %v1178
      %1284 = vmatpush1.msra.mxu0 %v1177
      %1285 = vmatprep.subr.mxu0 %v1182
      %1286 = vmatpush1.msra.mxu0 %v1181
      %1287 = vmatprep.subr.mxu0 %v1186
      %1288 = vmatpush1.msra.mxu0 %v1185
      %1289 = vmatprep.subr.mxu0 %v1190
      %1290 = vmatpush1.msra.mxu0 %v1189
      %1291 = vmatprep.subr.mxu0 %v1194
      %1292 = vmatpush1.msra.mxu0 %v1193
      %1293 = vmatprep.subr.mxu0 %v1198
      %1294 = vmatpush1.msra.mxu0 %v1197
      %1295 = vmatprep.subr.mxu0 %v1202
      %1296 = vmatpush1.msra.mxu0 %v1201
      %1297 = vmatprep.subr.mxu0 %v1206
      %1298 = vmatpush1.msra.mxu0 %v1205
      %1299 = vmatprep.subr.mxu0 %v1210
      %1300 = vmatpush1.msra.mxu0 %v1209
      %1301 = vmatprep.subr.mxu0 %v1214
      %1302 = vmatpush1.msra.mxu0 %v1213
      %1303 = vmatprep.subr.mxu0 %v1218
      %1304 = vmatpush1.msra.mxu0 %v1217
      %1305 = vmatprep.subr.mxu0 %v1222
      %1306 = vmatpush1.msra.mxu0 %v1221
      %1307 = vmatprep.subr.mxu0 %v1226
      %1308 = vmatpush1.msra.mxu0 %v1225
      %1309 = vmatprep.subr.mxu0 %v1230
      %1310 = vmatpush1.msra.mxu0 %v1229
      %1311 = vmatprep.subr.mxu0 0.0
      %1312 = vmatpush1.msra.mxu0 0.0
      %1313 = vmatprep.subr.mxu0 0.0
      %1314 = vmatpush1.msra.mxu0 0.0
      %1315 = vmatprep.subr.mxu0 0.0
      %1316 = vmatpush1.msra.mxu0 0.0
      %1317 = vmatprep.subr.mxu0 0.0
      %1318 = vmatpush1.msra.mxu0 0.0
      %1319 = vmatprep.subr.mxu0 0.0
      %1320 = vmatpush1.msra.mxu0 0.0
      %1321 = vmatprep.subr.mxu0 0.0
      %1322 = vmatpush1.msra.mxu0 0.0
      %1323 = vmatprep.subr.mxu0 0.0
      %1324 = vmatpush1.msra.mxu0 0.0
      %1325 = vmatprep.mubr.f32.mxu0 %v1256
      %1326 = vmatmul.mubr.f32.gmra.mrb[0].mxu0 %v1129
      %v1327 = vpop.f32.mrb[0].mxu0
      %v1328 = vadd.f32 %v1238, %v1327
      %v1329 = vpop.f32.mrb[0].mxu0
      %v1330 = vadd.f32 %v1242, %v1329
      %1331 = vmatprep.mubr.f32.mxu0 %v1259
      %1332 = vmatmul.mubr.f32.gmra.mrb[0].mxu0 %v1131
      %v1333 = vpop.f32.mrb[0].mxu0
      %v1334 = vadd.f32 %v1238, %v1333
      %v1335 = vpop.f32.mrb[0].mxu0
      %v1336 = vadd.f32 %v1242, %v1335
      %1337 = vdwg.mxu0
      %1338 = vmatprep.subr.mxu0 %v1136
      %1339 = vmatpush1.msra.mxu0 %v1135
      %1340 = vmatprep.subr.mxu0 %v1140
      %1341 = vmatpush1.msra.mxu0 %v1139
      %1342 = vmatprep.subr.mxu0 %v1144
      %1343 = vmatpush1.msra.mxu0 %v1143
      %1344 = vmatprep.subr.mxu0 %v1148
      %1345 = vmatpush1.msra.mxu0 %v1147
      %1346 = vmatprep.subr.mxu0 %v1152
      %1347 = vmatpush1.msra.mxu0 %v1151
      %1348 = vmatprep.subr.mxu0 %v1156
      %1349 = vmatpush1.msra.mxu0 %v1155
      %1350 = vmatprep.subr.mxu0 %v1160
      %1351 = vmatpush1.msra.mxu0 %v1159
      %1352 = vmatprep.subr.mxu0 %v1164
      %1353 = vmatpush1.msra.mxu0 %v1163
      %1354 = vmatprep.subr.mxu0 %v1168
      %1355 = vmatpush1.msra.mxu0 %v1167
      %1356 = vmatprep.subr.mxu0 %v1172
      %1357 = vmatpush1.msra.mxu0 %v1171
      %1358 = vmatprep.subr.mxu0 %v1176
      %1359 = vmatpush1.msra.mxu0 %v1175
      %1360 = vmatprep.subr.mxu0 %v1180
      %1361 = vmatpush1.msra.mxu0 %v1179
      %1362 = vmatprep.subr.mxu0 %v1184
      %1363 = vmatpush1.msra.mxu0 %v1183
      %1364 = vmatprep.subr.mxu0 %v1188
      %1365 = vmatpush1.msra.mxu0 %v1187
      %1366 = vmatprep.subr.mxu0 %v1192
      %1367 = vmatpush1.msra.mxu0 %v1191
      %1368 = vmatprep.subr.mxu0 %v1196
      %1369 = vmatpush1.msra.mxu0 %v1195
      %1370 = vmatprep.subr.mxu0 %v1200
      %1371 = vmatpush1.msra.mxu0 %v1199
      %1372 = vmatprep.subr.mxu0 %v1204
      %1373 = vmatpush1.msra.mxu0 %v1203
      %1374 = vmatprep.subr.mxu0 %v1208
      %1375 = vmatpush1.msra.mxu0 %v1207
      %1376 = vmatprep.subr.mxu0 %v1212
      %1377 = vmatpush1.msra.mxu0 %v1211
      %1378 = vmatprep.subr.mxu0 %v1216
      %1379 = vmatpush1.msra.mxu0 %v1215
      %1380 = vmatprep.subr.mxu0 %v1220
      %1381 = vmatpush1.msra.mxu0 %v1219
      %1382 = vmatprep.subr.mxu0 %v1224
      %1383 = vmatpush1.msra.mxu0 %v1223
      %1384 = vmatprep.subr.mxu0 %v1228
      %1385 = vmatpush1.msra.mxu0 %v1227
      %1386 = vmatprep.subr.mxu0 %v1232
      %1387 = vmatpush1.msra.mxu0 %v1231
      %1388 = vmatprep.subr.mxu0 0.0
      %1389 = vmatpush1.msra.mxu0 0.0
      %1390 = vmatprep.subr.mxu0 0.0
      %1391 = vmatpush1.msra.mxu0 0.0
      %1392 = vmatprep.subr.mxu0 0.0
      %1393 = vmatpush1.msra.mxu0 0.0
      %1394 = vmatprep.subr.mxu0 0.0
      %1395 = vmatpush1.msra.mxu0 0.0
      %1396 = vmatprep.subr.mxu0 0.0
      %1397 = vmatpush1.msra.mxu0 0.0
      %1398 = vmatprep.subr.mxu0 0.0
      %1399 = vmatpush1.msra.mxu0 0.0
      %1400 = vmatprep.subr.mxu0 0.0
      %1401 = vmatpush1.msra.mxu0 0.0
      %1402 = vmatprep.mubr.f32.mxu0 %v1256
      %1403 = vmatmul.mubr.f32.gmra.mrb[0].mxu0 %v1129
      %v1404 = vpop.f32.mrb[0].mxu0
      %v1405 = vadd.f32 %v1246, %v1404
      %v1406 = vpop.f32.mrb[0].mxu0
      %v1407 = vadd.f32 %v1250, %v1406
      %1408 = vmatprep.mubr.f32.mxu0 %v1259
      %1409 = vmatmul.mubr.f32.gmra.mrb[0].mxu0 %v1131
      %v1410 = vpop.f32.mrb[0].mxu0
      %v1411 = vadd.f32 %v1246, %v1410
      %v1412 = vpop.f32.mrb[0].mxu0
      %v1413 = vadd.f32 %v1250, %v1412
      %1414 = vdwg.mxu0
      %1415 = vst [vmem:[#allocation4] sm:$0xff] %v1328
      %1416 = vst [vmem:[#allocation4 + $0x8] sm:$0xff] %v1330
      %1417 = vst [vmem:[#allocation4 + $0x10] sm:$0xff] %v1405
      %1418 = vst.msk [vmem:[#allocation4 + $0x18] sm:$0xff] %vm1123, %v1407
      %1419 = vst [vmem:[#allocation4 + $0x20] sm:$0xf] %v1334
      %1420 = vst [vmem:[#allocation4 + $0x28] sm:$0xf] %v1336
      %1421 = vst [vmem:[#allocation4 + $0x30] sm:$0xf] %v1411
      %vm1422 = vcmask 535552
      %1423 = vst.msk [vmem:[#allocation4 + $0x38] sm:$0xf] %vm1422, %v1413
      %vm1424 = vcmask 1041408
      %vm1425 = vcmask 175106
      %vm1426 = vmor %vm1425, %vm1424
      %1427 = vst.msk [vmem:[#allocation2] sm:$0xf] %vm1426, 0.0
      %v1428 = vld [vmem:[#allocation3] sm:$0x3]
      %v1429 = vld [vmem:[#allocation3 + $0x8] sm:$0x3]
      %v1430 = vld [vmem:[#allocation3 + $0x10] sm:$0x3]
      %v1431 = vld [vmem:[#allocation3 + $0x18] sm:$0x3]
      %v1432 = vld [vmem:[#allocation2] sm:$0xf]
      %v1433 = vld [vmem:[%s769] sm:$0xff]
      %v1434 = vld [vmem:[%s769 + $0x8] sm:$0xff]
      %v1435 = vld [vmem:[%s769 + $0x10] sm:$0xff]
      %v1436 = vld [vmem:[%s769 + $0x18] sm:$0xff]
      %v1437 = vld [vmem:[%s769 + $0x20] sm:$0xff]
      %v1438 = vld [vmem:[%s769 + $0x28] sm:$0xff]
      %v1439 = vld [vmem:[%s769 + $0x30] sm:$0xff]
      %v1440 = vld [vmem:[%s769 + $0x38] sm:$0xff]
      %v1441 = vld [vmem:[%s769 + $0x40] sm:$0xff]
      %v1442 = vld [vmem:[%s769 + $0x48] sm:$0xff]
      %v1443 = vld [vmem:[%s769 + $0x50] sm:$0xff]
      %v1444 = vld [vmem:[%s769 + $0x58] sm:$0xff]
      %v1445 = vld [vmem:[%s769 + $0x60] sm:$0xff]
      %v1446 = vld [vmem:[%s769 + $0x68] sm:$0xff]
      %v1447 = vld [vmem:[%s769 + $0x70] sm:$0xff]
      %v1448 = vld [vmem:[%s769 + $0x78] sm:$0xff]
      %v1449 = vld [vmem:[%s769 + $0x80] sm:$0xff]
      %v1450 = vld [vmem:[%s769 + $0x88] sm:$0xff]
      %v1451 = vld [vmem:[%s769 + $0x90] sm:$0xff]
      %v1452 = vld [vmem:[%s769 + $0x98] sm:$0xff]
      %v1453 = vld [vmem:[%s769 + $0xa0] sm:$0xff]
      %v1454 = vld [vmem:[%s769 + $0xa8] sm:$0xff]
      %v1455 = vld [vmem:[%s769 + $0xb0] sm:$0xff]
      %v1456 = vld [vmem:[%s769 + $0xb8] sm:$0xff]
      %v1457 = vld [vmem:[%s769 + $0xc0] sm:$0xff]
      %v1458 = vld [vmem:[%s769 + $0xc8] sm:$0xff]
      %v1459 = vld [vmem:[%s769 + $0xd0] sm:$0xff]
      %v1460 = vld [vmem:[%s769 + $0xd8] sm:$0xff]
      %v1461 = vld [vmem:[%s769 + $0xe0] sm:$0xff]
      %v1462 = vld [vmem:[%s769 + $0xe8] sm:$0xff]
      %v1463 = vld [vmem:[%s769 + $0xf0] sm:$0xff]
      %v1464 = vld [vmem:[%s769 + $0xf8] sm:$0xff]
      %v1465 = vld [vmem:[%s769 + $0x100] sm:$0xff]
      %v1466 = vld [vmem:[%s769 + $0x108] sm:$0xff]
      %v1467 = vld [vmem:[%s769 + $0x110] sm:$0xff]
      %v1468 = vld [vmem:[%s769 + $0x118] sm:$0xff]
      %v1469 = vld [vmem:[%s769 + $0x120] sm:$0xff]
      %v1470 = vld [vmem:[%s769 + $0x128] sm:$0xff]
      %v1471 = vld [vmem:[%s769 + $0x130] sm:$0xff]
      %v1472 = vld [vmem:[%s769 + $0x138] sm:$0xff]
      %v1473 = vld [vmem:[%s769 + $0x140] sm:$0xff]
      %v1474 = vld [vmem:[%s769 + $0x148] sm:$0xff]
      %v1475 = vld [vmem:[%s769 + $0x150] sm:$0xff]
      %v1476 = vld [vmem:[%s769 + $0x158] sm:$0xff]
      %v1477 = vld [vmem:[%s769 + $0x160] sm:$0xff]
      %v1478 = vld [vmem:[%s769 + $0x168] sm:$0xff]
      %v1479 = vld [vmem:[%s769 + $0x170] sm:$0xff]
      %v1480 = vld [vmem:[%s769 + $0x178] sm:$0xff]
      %v1481 = vld [vmem:[%s769 + $0x180] sm:$0xff]
      %v1482 = vld [vmem:[%s769 + $0x188] sm:$0xff]
      %v1483 = vld [vmem:[%s769 + $0x190] sm:$0xff]
      %v1484 = vld [vmem:[%s769 + $0x198] sm:$0xff]
      %v1485 = vld [vmem:[%s769 + $0x1a0] sm:$0xff]
      %v1486 = vld [vmem:[%s769 + $0x1a8] sm:$0xff]
      %v1487 = vld [vmem:[%s769 + $0x1b0] sm:$0xff]
      %v1488 = vld [vmem:[%s769 + $0x1b8] sm:$0xff]
      %v1489 = vld [vmem:[%s769 + $0x1c0] sm:$0xff]
      %v1490 = vld [vmem:[%s769 + $0x1c8] sm:$0xff]
      %v1491 = vld [vmem:[%s769 + $0x1d0] sm:$0xff]
      %v1492 = vld [vmem:[%s769 + $0x1d8] sm:$0xff]
      %v1493 = vld [vmem:[%s769 + $0x1e0] sm:$0xff]
      %v1494 = vld [vmem:[%s769 + $0x1e8] sm:$0xff]
      %v1495 = vld [vmem:[%s769 + $0x1f0] sm:$0xff]
      %v1496 = vld [vmem:[%s769 + $0x1f8] sm:$0xff]
      %v1497 = vld [vmem:[%s769 + $0x200] sm:$0xff]
      %v1498 = vld [vmem:[%s769 + $0x208] sm:$0xff]
      %v1499 = vld [vmem:[%s769 + $0x210] sm:$0xff]
      %v1500 = vld [vmem:[%s769 + $0x218] sm:$0xff]
      %v1501 = vld [vmem:[%s769 + $0x220] sm:$0xff]
      %v1502 = vld [vmem:[%s769 + $0x228] sm:$0xff]
      %v1503 = vld [vmem:[%s769 + $0x230] sm:$0xff]
      %v1504 = vld [vmem:[%s769 + $0x238] sm:$0xff]
      %v1505 = vld [vmem:[%s769 + $0x240] sm:$0x3f]
      %v1506 = vld [vmem:[%s769 + $0x248] sm:$0x3f]
      %v1507 = vld [vmem:[%s769 + $0x250] sm:$0x3f]
      %v1508 = vld [vmem:[%s769 + $0x258] sm:$0x3f]
      %v1509 = vld [vmem:[%s777] sm:$0xf]
      %v1511 = vlaneseq
      %v1512 = vshrl.u32 %v1511, 7
      %v1513 = vsub.s32 0, %v1512
      %v1514 = vrot.slane %v1509, %v1513
      %v1515 = vlaneseq
      %v1516 = vshrl.u32 %v1515, 7
      %v1517 = vsub.s32 1, %v1516
      %v1518 = vrot.slane %v1509, %v1517
      %v1519 = vlaneseq
      %v1520 = vshrl.u32 %v1519, 7
      %v1521 = vsub.s32 2, %v1520
      %v1522 = vrot.slane %v1509, %v1521
      %v1523 = vlaneseq
      %v1524 = vshrl.u32 %v1523, 7
      %v1525 = vsub.s32 3, %v1524
      %v1526 = vrot.slane %v1509, %v1525
      %v1533 = vunpack.c.l.s4 1983009808
      %v1534 = vunpack.c.0.s8 %v1533
      %v1535 = vlaneseq
      %v1536 = vshrl.u32 %v1535, 7
      %v1537 = vsub.s32 %v1534, %v1536
      %v1538 = vrot.slane %v1432, %v1537
      %v1539 = vcombine.high %v1538, %v1538
      %vm1541 = vcmask 179200
      %v1542 = vsel %vm1541, %v1539, 0
      %vm1544 = vcmask 1045504
      %v1546 = vsel %vm1544, %v1505, 0
      %v1549 = vsel %vm1544, %v1506, 0
      %v1552 = vsel %vm1544, %v1507, 0
      %v1555 = vsel %vm1544, %v1508, 0
      %1557 = vmatprep.subr.mxu0 %v1434
      %1558 = vmatpush1.msra.mxu0 %v1433
      %1559 = vmatprep.subr.mxu0 %v1438
      %1560 = vmatpush1.msra.mxu0 %v1437
      %1561 = vmatprep.subr.mxu0 %v1442
      %1562 = vmatpush1.msra.mxu0 %v1441
      %1563 = vmatprep.subr.mxu0 %v1446
      %1564 = vmatpush1.msra.mxu0 %v1445
      %1565 = vmatprep.subr.mxu0 %v1450
      %1566 = vmatpush1.msra.mxu0 %v1449
      %1567 = vmatprep.subr.mxu0 %v1454
      %1568 = vmatpush1.msra.mxu0 %v1453
      %1569 = vmatprep.subr.mxu0 %v1458
      %1570 = vmatpush1.msra.mxu0 %v1457
      %1571 = vmatprep.subr.mxu0 %v1462
      %1572 = vmatpush1.msra.mxu0 %v1461
      %1573 = vmatprep.subr.mxu0 %v1466
      %1574 = vmatpush1.msra.mxu0 %v1465
      %1575 = vmatprep.subr.mxu0 %v1470
      %1576 = vmatpush1.msra.mxu0 %v1469
      %1577 = vmatprep.subr.mxu0 %v1474
      %1578 = vmatpush1.msra.mxu0 %v1473
      %1579 = vmatprep.subr.mxu0 %v1478
      %1580 = vmatpush1.msra.mxu0 %v1477
      %1581 = vmatprep.subr.mxu0 %v1482
      %1582 = vmatpush1.msra.mxu0 %v1481
      %1583 = vmatprep.subr.mxu0 %v1486
      %1584 = vmatpush1.msra.mxu0 %v1485
      %1585 = vmatprep.subr.mxu0 %v1490
      %1586 = vmatpush1.msra.mxu0 %v1489
      %1587 = vmatprep.subr.mxu0 %v1494
      %1588 = vmatpush1.msra.mxu0 %v1493
      %1589 = vmatprep.subr.mxu0 %v1498
      %1590 = vmatpush1.msra.mxu0 %v1497
      %1591 = vmatprep.subr.mxu0 %v1502
      %1592 = vmatpush1.msra.mxu0 %v1501
      %1593 = vmatprep.subr.mxu0 %v1549
      %1594 = vmatpush1.msra.mxu0 %v1546
      %1595 = vmatprep.subr.mxu0 0.0
      %1596 = vmatpush1.msra.mxu0 0.0
      %1597 = vmatprep.subr.mxu0 0.0
      %1598 = vmatpush1.msra.mxu0 0.0
      %1599 = vmatprep.subr.mxu0 0.0
      %1600 = vmatpush1.msra.mxu0 0.0
      %1601 = vmatprep.subr.mxu0 0.0
      %1602 = vmatpush1.msra.mxu0 0.0
      %1603 = vmatprep.subr.mxu0 0.0
      %1604 = vmatpush1.msra.mxu0 0.0
      %1605 = vmatprep.subr.mxu0 0.0
      %1606 = vmatpush1.msra.mxu0 0.0
      %1607 = vmatprep.subr.mxu0 0.0
      %1608 = vmatpush1.msra.mxu0 0.0
      %1609 = vmatprep.subr.mxu0 0.0
      %1610 = vmatpush1.msra.mxu0 0.0
      %1611 = vmatprep.subr.mxu0 0.0
      %1612 = vmatpush1.msra.mxu0 0.0
      %1613 = vmatprep.subr.mxu0 0.0
      %1614 = vmatpush1.msra.mxu0 0.0
      %1615 = vmatprep.subr.mxu0 0.0
      %1616 = vmatpush1.msra.mxu0 0.0
      %1617 = vmatprep.subr.mxu0 0.0
      %1618 = vmatpush1.msra.mxu0 0.0
      %1619 = vmatprep.subr.mxu0 0.0
      %1620 = vmatpush1.msra.mxu0 0.0
      %1621 = vmatprep.mubr.f32.mxu0 %v1542
      %1622 = vmatmul.mubr.f32.gmra.mrb[0].mxu0 %v1538
      %v1623 = vpop.f32.mrb[0].mxu0
      %v1624 = vadd.f32 %v1514, %v1623
      %v1625 = vpop.f32.mrb[0].mxu0
      %v1626 = vadd.f32 %v1518, %v1625
      %1627 = vdwg.mxu0
      %1628 = vmatprep.subr.mxu0 %v1436
      %1629 = vmatpush1.msra.mxu0 %v1435
      %1630 = vmatprep.subr.mxu0 %v1440
      %1631 = vmatpush1.msra.mxu0 %v1439
      %1632 = vmatprep.subr.mxu0 %v1444
      %1633 = vmatpush1.msra.mxu0 %v1443
      %1634 = vmatprep.subr.mxu0 %v1448
      %1635 = vmatpush1.msra.mxu0 %v1447
      %1636 = vmatprep.subr.mxu0 %v1452
      %1637 = vmatpush1.msra.mxu0 %v1451
      %1638 = vmatprep.subr.mxu0 %v1456
      %1639 = vmatpush1.msra.mxu0 %v1455
      %1640 = vmatprep.subr.mxu0 %v1460
      %1641 = vmatpush1.msra.mxu0 %v1459
      %1642 = vmatprep.subr.mxu0 %v1464
      %1643 = vmatpush1.msra.mxu0 %v1463
      %1644 = vmatprep.subr.mxu0 %v1468
      %1645 = vmatpush1.msra.mxu0 %v1467
      %1646 = vmatprep.subr.mxu0 %v1472
      %1647 = vmatpush1.msra.mxu0 %v1471
      %1648 = vmatprep.subr.mxu0 %v1476
      %1649 = vmatpush1.msra.mxu0 %v1475
      %1650 = vmatprep.subr.mxu0 %v1480
      %1651 = vmatpush1.msra.mxu0 %v1479
      %1652 = vmatprep.subr.mxu0 %v1484
      %1653 = vmatpush1.msra.mxu0 %v1483
      %1654 = vmatprep.subr.mxu0 %v1488
      %1655 = vmatpush1.msra.mxu0 %v1487
      %1656 = vmatprep.subr.mxu0 %v1492
      %1657 = vmatpush1.msra.mxu0 %v1491
      %1658 = vmatprep.subr.mxu0 %v1496
      %1659 = vmatpush1.msra.mxu0 %v1495
      %1660 = vmatprep.subr.mxu0 %v1500
      %1661 = vmatpush1.msra.mxu0 %v1499
      %1662 = vmatprep.subr.mxu0 %v1504
      %1663 = vmatpush1.msra.mxu0 %v1503
      %1664 = vmatprep.subr.mxu0 %v1555
      %1665 = vmatpush1.msra.mxu0 %v1552
      %1666 = vmatprep.subr.mxu0 0.0
      %1667 = vmatpush1.msra.mxu0 0.0
      %1668 = vmatprep.subr.mxu0 0.0
      %1669 = vmatpush1.msra.mxu0 0.0
      %1670 = vmatprep.subr.mxu0 0.0
      %1671 = vmatpush1.msra.mxu0 0.0
      %1672 = vmatprep.subr.mxu0 0.0
      %1673 = vmatpush1.msra.mxu0 0.0
      %1674 = vmatprep.subr.mxu0 0.0
      %1675 = vmatpush1.msra.mxu0 0.0
      %1676 = vmatprep.subr.mxu0 0.0
      %1677 = vmatpush1.msra.mxu0 0.0
      %1678 = vmatprep.subr.mxu0 0.0
      %1679 = vmatpush1.msra.mxu0 0.0
      %1680 = vmatprep.subr.mxu0 0.0
      %1681 = vmatpush1.msra.mxu0 0.0
      %1682 = vmatprep.subr.mxu0 0.0
      %1683 = vmatpush1.msra.mxu0 0.0
      %1684 = vmatprep.subr.mxu0 0.0
      %1685 = vmatpush1.msra.mxu0 0.0
      %1686 = vmatprep.subr.mxu0 0.0
      %1687 = vmatpush1.msra.mxu0 0.0
      %1688 = vmatprep.subr.mxu0 0.0
      %1689 = vmatpush1.msra.mxu0 0.0
      %1690 = vmatprep.subr.mxu0 0.0
      %1691 = vmatpush1.msra.mxu0 0.0
      %1692 = vmatprep.mubr.f32.mxu0 %v1542
      %1693 = vmatmul.mubr.f32.gmra.mrb[0].mxu0 %v1538
      %v1694 = vpop.f32.mrb[0].mxu0
      %v1695 = vadd.f32 %v1522, %v1694
      %v1696 = vpop.f32.mrb[0].mxu0
      %v1697 = vadd.f32 %v1526, %v1696
      %1698 = vdwg.mxu0
      %v1699 = vadd.f32 %v1428, %v1624
      %v1700 = vadd.f32 %v1429, %v1626
      %v1701 = vxor.u32 %v1699, 2147483648
      %v1702 = vxor.u32 %v1700, 2147483648
      %v1703 = vmul.f32 %v1701, 1.442695
      %v1704 = vpow.pop %v1703
      %v1705 = vmul.f32 %v1702, 1.442695
      %v1706 = vpow.pop %v1705
      %v1707 = vadd.f32 %v1704, 1.0
      %v1708 = vadd.f32 %v1706, 1.0
      %v1709 = vrcp.pop %v1707
      %v1710 = vmul.f32 1.0, %v1709
      %v1711 = vrcp.pop %v1708
      %v1712 = vmul.f32 1.0, %v1711
      %v1713 = vadd.f32 %v1430, %v1695
      %v1714 = vxor.u32 %v1713, 2147483648
      %v1715 = vmul.f32 %v1714, 1.442695
      %v1716 = vpow.pop %v1715
      %v1717 = vadd.f32 %v1716, 1.0
      %v1718 = vrcp.pop %v1717
      %v1719 = vmul.f32 1.0, %v1718
      %1722 = vrot.lane.b32.xlu0 %v1695, 84
      %v1723 = vpop.permute.xlu0 %1722
      %1724 = vrot.lane.b32.xlu0 %v1697, 84
      %v1725 = vpop.permute.xlu0 %1724
      %vm1726 = vcmask 687104
      %v1727 = vsel %vm1726, %v1723, %v1725
      %v1730 = vmul.f32 %v1710, %v1727
      %v1731 = vmul.f32 %v1712, %v1725
      %1734 = vrot.lane.b32.xlu0 %v1730, 44
      %v1735 = vpop.permute.xlu0 %1734
      %1736 = vrot.lane.b32.xlu0 %v1731, 44
      %v1737 = vpop.permute.xlu0 %1736
      %vm1738 = vcmask 359424
      %v1739 = vsel %vm1738, %v1735, %v1737
      %v1742 = vadd.f32 %v1430, %v1735
      %v1743 = vadd.f32 %v1431, %v1739
      %v1744 = vtanh.pop %v1742
      %v1745 = vtanh.pop %v1743
      %v1746 = vsub.f32 1.0, %v1712
      %v1747 = vsub.f32 1.0, %v1719
      %1750 = vrot.lane.b32.xlu0 %v1744, 106
      %v1751 = vpop.permute.xlu0 %1750
      %1752 = vrot.lane.b32.xlu0 %v1745, 106
      %v1753 = vpop.permute.xlu0 %1752
      %vm1754 = vcmask 867328
      %v1755 = vsel %vm1754, %v1751, %v1753
      %v1758 = vmul.f32 %v1746, %v1755
      %v1759 = vmul.f32 %v1747, %v1753
      %1760 = vrot.lane.b32.xlu0 %v1538, 22
      %v1761 = vpop.permute.xlu0 %1760
      %1762 = vrot.lane.b32.xlu0 %v1539, 22
      %v1763 = vpop.permute.xlu0 %1762
      %v1764 = vsel %vm1541, %v1761, %v1763
      %v1767 = vmul.f32 %v1712, %v1761
      %v1768 = vmul.f32 %v1719, %v1764
      %v1769 = vadd.f32 %v1758, %v1767
      %v1770 = vadd.f32 %v1759, %v1768
      %v1773 = vcombine.low %v1769, %v1770
      %v1775 = vunpack.c.l.s4 1983009808
      %v1776 = vunpack.c.0.s8 %v1775
      %v1777 = vlaneseq
      %v1778 = vshrl.u32 %v1777, 7
      %v1779 = vsub.s32 %v1776, %v1778
      %v1780 = vrot.slane %v1773, %v1779
      %1781 = vrot.lane.b32.xlu0 %v1780, 106
      %v1782 = vpop.permute.xlu0 %1781
      %v1783 = vrot.slane %v1782, 2
      %v1784 = vsel %vm1754, %v1782, %v1783
      %1786 = vst.msk [vmem:[#allocation2] sm:$0xf] %vm1426, %v1784
      %1787 = vst.msk [vmem:[%s832] sm:$0xf] %vm1426, %v1784
      %v1788 = vld [vmem:[#allocation3] sm:$0xc]
      %v1789 = vld [vmem:[#allocation3 + $0x8] sm:$0xc]
      %v1790 = vld [vmem:[#allocation3 + $0x10] sm:$0xc]
      %v1791 = vld [vmem:[#allocation3 + $0x18] sm:$0xc]
      %v1792 = vld [vmem:[#allocation2] sm:$0xf]
      %v1793 = vld [vmem:[%s769] sm:$0xff]
      %v1794 = vld [vmem:[%s769 + $0x8] sm:$0xff]
      %v1795 = vld [vmem:[%s769 + $0x10] sm:$0xff]
      %v1796 = vld [vmem:[%s769 + $0x18] sm:$0xff]
      %v1797 = vld [vmem:[%s769 + $0x20] sm:$0xff]
      %v1798 = vld [vmem:[%s769 + $0x28] sm:$0xff]
      %v1799 = vld [vmem:[%s769 + $0x30] sm:$0xff]
      %v1800 = vld [vmem:[%s769 + $0x38] sm:$0xff]
      %v1801 = vld [vmem:[%s769 + $0x40] sm:$0xff]
      %v1802 = vld [vmem:[%s769 + $0x48] sm:$0xff]
      %v1803 = vld [vmem:[%s769 + $0x50] sm:$0xff]
      %v1804 = vld [vmem:[%s769 + $0x58] sm:$0xff]
      %v1805 = vld [vmem:[%s769 + $0x60] sm:$0xff]
      %v1806 = vld [vmem:[%s769 + $0x68] sm:$0xff]
      %v1807 = vld [vmem:[%s769 + $0x70] sm:$0xff]
      %v1808 = vld [vmem:[%s769 + $0x78] sm:$0xff]
      %v1809 = vld [vmem:[%s769 + $0x80] sm:$0xff]
      %v1810 = vld [vmem:[%s769 + $0x88] sm:$0xff]
      %v1811 = vld [vmem:[%s769 + $0x90] sm:$0xff]
      %v1812 = vld [vmem:[%s769 + $0x98] sm:$0xff]
      %v1813 = vld [vmem:[%s769 + $0xa0] sm:$0xff]
      %v1814 = vld [vmem:[%s769 + $0xa8] sm:$0xff]
      %v1815 = vld [vmem:[%s769 + $0xb0] sm:$0xff]
      %v1816 = vld [vmem:[%s769 + $0xb8] sm:$0xff]
      %v1817 = vld [vmem:[%s769 + $0xc0] sm:$0xff]
      %v1818 = vld [vmem:[%s769 + $0xc8] sm:$0xff]
      %v1819 = vld [vmem:[%s769 + $0xd0] sm:$0xff]
      %v1820 = vld [vmem:[%s769 + $0xd8] sm:$0xff]
      %v1821 = vld [vmem:[%s769 + $0xe0] sm:$0xff]
      %v1822 = vld [vmem:[%s769 + $0xe8] sm:$0xff]
      %v1823 = vld [vmem:[%s769 + $0xf0] sm:$0xff]
      %v1824 = vld [vmem:[%s769 + $0xf8] sm:$0xff]
      %v1825 = vld [vmem:[%s769 + $0x100] sm:$0xff]
      %v1826 = vld [vmem:[%s769 + $0x108] sm:$0xff]
      %v1827 = vld [vmem:[%s769 + $0x110] sm:$0xff]
      %v1828 = vld [vmem:[%s769 + $0x118] sm:$0xff]
      %v1829 = vld [vmem:[%s769 + $0x120] sm:$0xff]
      %v1830 = vld [vmem:[%s769 + $0x128] sm:$0xff]
      %v1831 = vld [vmem:[%s769 + $0x130] sm:$0xff]
      %v1832 = vld [vmem:[%s769 + $0x138] sm:$0xff]
      %v1833 = vld [vmem:[%s769 + $0x140] sm:$0xff]
      %v1834 = vld [vmem:[%s769 + $0x148] sm:$0xff]
      %v1835 = vld [vmem:[%s769 + $0x150] sm:$0xff]
      %v1836 = vld [vmem:[%s769 + $0x158] sm:$0xff]
      %v1837 = vld [vmem:[%s769 + $0x160] sm:$0xff]
      %v1838 = vld [vmem:[%s769 + $0x168] sm:$0xff]
      %v1839 = vld [vmem:[%s769 + $0x170] sm:$0xff]
      %v1840 = vld [vmem:[%s769 + $0x178] sm:$0xff]
      %v1841 = vld [vmem:[%s769 + $0x180] sm:$0xff]
      %v1842 = vld [vmem:[%s769 + $0x188] sm:$0xff]
      %v1843 = vld [vmem:[%s769 + $0x190] sm:$0xff]
      %v1844 = vld [vmem:[%s769 + $0x198] sm:$0xff]
      %v1845 = vld [vmem:[%s769 + $0x1a0] sm:$0xff]
      %v1846 = vld [vmem:[%s769 + $0x1a8] sm:$0xff]
      %v1847 = vld [vmem:[%s769 + $0x1b0] sm:$0xff]
      %v1848 = vld [vmem:[%s769 + $0x1b8] sm:$0xff]
      %v1849 = vld [vmem:[%s769 + $0x1c0] sm:$0xff]
      %v1850 = vld [vmem:[%s769 + $0x1c8] sm:$0xff]
      %v1851 = vld [vmem:[%s769 + $0x1d0] sm:$0xff]
      %v1852 = vld [vmem:[%s769 + $0x1d8] sm:$0xff]
      %v1853 = vld [vmem:[%s769 + $0x1e0] sm:$0xff]
      %v1854 = vld [vmem:[%s769 + $0x1e8] sm:$0xff]
      %v1855 = vld [vmem:[%s769 + $0x1f0] sm:$0xff]
      %v1856 = vld [vmem:[%s769 + $0x1f8] sm:$0xff]
      %v1857 = vld [vmem:[%s769 + $0x200] sm:$0xff]
      %v1858 = vld [vmem:[%s769 + $0x208] sm:$0xff]
      %v1859 = vld [vmem:[%s769 + $0x210] sm:$0xff]
      %v1860 = vld [vmem:[%s769 + $0x218] sm:$0xff]
      %v1861 = vld [vmem:[%s769 + $0x220] sm:$0xff]
      %v1862 = vld [vmem:[%s769 + $0x228] sm:$0xff]
      %v1863 = vld [vmem:[%s769 + $0x230] sm:$0xff]
      %v1864 = vld [vmem:[%s769 + $0x238] sm:$0xff]
      %v1865 = vld [vmem:[%s769 + $0x240] sm:$0x3f]
      %v1866 = vld [vmem:[%s769 + $0x248] sm:$0x3f]
      %v1867 = vld [vmem:[%s769 + $0x250] sm:$0x3f]
      %v1868 = vld [vmem:[%s769 + $0x258] sm:$0x3f]
      %v1869 = vld [vmem:[%s777] sm:$0xf]
      %v1871 = vlaneseq
      %v1872 = vshrl.u32 %v1871, 7
      %v1873 = vsub.s32 0, %v1872
      %v1874 = vrot.slane %v1869, %v1873
      %v1875 = vlaneseq
      %v1876 = vshrl.u32 %v1875, 7
      %v1877 = vsub.s32 1, %v1876
      %v1878 = vrot.slane %v1869, %v1877
      %v1879 = vlaneseq
      %v1880 = vshrl.u32 %v1879, 7
      %v1881 = vsub.s32 2, %v1880
      %v1882 = vrot.slane %v1869, %v1881
      %v1883 = vlaneseq
      %v1884 = vshrl.u32 %v1883, 7
      %v1885 = vsub.s32 3, %v1884
      %v1886 = vrot.slane %v1869, %v1885
      %v1893 = vunpack.c.l.s4 1983009808
      %v1894 = vunpack.c.0.s8 %v1893
      %v1895 = vlaneseq
      %v1896 = vshrl.u32 %v1895, 7
      %v1897 = vsub.s32 %v1894, %v1896
      %v1898 = vrot.slane %v1792, %v1897
      %v1899 = vcombine.high %v1898, %v1898
      %v1901 = vsel %vm1541, %v1899, 0
      %v1904 = vsel %vm1544, %v1865, 0
      %v1907 = vsel %vm1544, %v1866, 0
      %v1910 = vsel %vm1544, %v1867, 0
      %v1913 = vsel %vm1544, %v1868, 0
      %1915 = vmatprep.subr.mxu0 %v1794
      %1916 = vmatpush1.msra.mxu0 %v1793
      %1917 = vmatprep.subr.mxu0 %v1798
      %1918 = vmatpush1.msra.mxu0 %v1797
      %1919 = vmatprep.subr.mxu0 %v1802
      %1920 = vmatpush1.msra.mxu0 %v1801
      %1921 = vmatprep.subr.mxu0 %v1806
      %1922 = vmatpush1.msra.mxu0 %v1805
      %1923 = vmatprep.subr.mxu0 %v1810
      %1924 = vmatpush1.msra.mxu0 %v1809
      %1925 = vmatprep.subr.mxu0 %v1814
      %1926 = vmatpush1.msra.mxu0 %v1813
      %1927 = vmatprep.subr.mxu0 %v1818
      %1928 = vmatpush1.msra.mxu0 %v1817
      %1929 = vmatprep.subr.mxu0 %v1822
      %1930 = vmatpush1.msra.mxu0 %v1821
      %1931 = vmatprep.subr.mxu0 %v1826
      %1932 = vmatpush1.msra.mxu0 %v1825
      %1933 = vmatprep.subr.mxu0 %v1830
      %1934 = vmatpush1.msra.mxu0 %v1829
      %1935 = vmatprep.subr.mxu0 %v1834
      %1936 = vmatpush1.msra.mxu0 %v1833
      %1937 = vmatprep.subr.mxu0 %v1838
      %1938 = vmatpush1.msra.mxu0 %v1837
      %1939 = vmatprep.subr.mxu0 %v1842
      %1940 = vmatpush1.msra.mxu0 %v1841
      %1941 = vmatprep.subr.mxu0 %v1846
      %1942 = vmatpush1.msra.mxu0 %v1845
      %1943 = vmatprep.subr.mxu0 %v1850
      %1944 = vmatpush1.msra.mxu0 %v1849
      %1945 = vmatprep.subr.mxu0 %v1854
      %1946 = vmatpush1.msra.mxu0 %v1853
      %1947 = vmatprep.subr.mxu0 %v1858
      %1948 = vmatpush1.msra.mxu0 %v1857
      %1949 = vmatprep.subr.mxu0 %v1862
      %1950 = vmatpush1.msra.mxu0 %v1861
      %1951 = vmatprep.subr.mxu0 %v1907
      %1952 = vmatpush1.msra.mxu0 %v1904
      %1953 = vmatprep.subr.mxu0 0.0
      %1954 = vmatpush1.msra.mxu0 0.0
      %1955 = vmatprep.subr.mxu0 0.0
      %1956 = vmatpush1.msra.mxu0 0.0
      %1957 = vmatprep.subr.mxu0 0.0
      %1958 = vmatpush1.msra.mxu0 0.0
      %1959 = vmatprep.subr.mxu0 0.0
      %1960 = vmatpush1.msra.mxu0 0.0
      %1961 = vmatprep.subr.mxu0 0.0
      %1962 = vmatpush1.msra.mxu0 0.0
      %1963 = vmatprep.subr.mxu0 0.0
      %1964 = vmatpush1.msra.mxu0 0.0
      %1965 = vmatprep.subr.mxu0 0.0
      %1966 = vmatpush1.msra.mxu0 0.0
      %1967 = vmatprep.subr.mxu0 0.0
      %1968 = vmatpush1.msra.mxu0 0.0
      %1969 = vmatprep.subr.mxu0 0.0
      %1970 = vmatpush1.msra.mxu0 0.0
      %1971 = vmatprep.subr.mxu0 0.0
      %1972 = vmatpush1.msra.mxu0 0.0
      %1973 = vmatprep.subr.mxu0 0.0
      %1974 = vmatpush1.msra.mxu0 0.0
      %1975 = vmatprep.subr.mxu0 0.0
      %1976 = vmatpush1.msra.mxu0 0.0
      %1977 = vmatprep.subr.mxu0 0.0
      %1978 = vmatpush1.msra.mxu0 0.0
      %1979 = vmatprep.mubr.f32.mxu0 %v1901
      %1980 = vmatmul.mubr.f32.gmra.mrb[0].mxu0 %v1898
      %v1981 = vpop.f32.mrb[0].mxu0
      %v1982 = vadd.f32 %v1874, %v1981
      %v1983 = vpop.f32.mrb[0].mxu0
      %v1984 = vadd.f32 %v1878, %v1983
      %1985 = vdwg.mxu0
      %1986 = vmatprep.subr.mxu0 %v1796
      %1987 = vmatpush1.msra.mxu0 %v1795
      %1988 = vmatprep.subr.mxu0 %v1800
      %1989 = vmatpush1.msra.mxu0 %v1799
      %1990 = vmatprep.subr.mxu0 %v1804
      %1991 = vmatpush1.msra.mxu0 %v1803
      %1992 = vmatprep.subr.mxu0 %v1808
      %1993 = vmatpush1.msra.mxu0 %v1807
      %1994 = vmatprep.subr.mxu0 %v1812
      %1995 = vmatpush1.msra.mxu0 %v1811
      %1996 = vmatprep.subr.mxu0 %v1816
      %1997 = vmatpush1.msra.mxu0 %v1815
      %1998 = vmatprep.subr.mxu0 %v1820
      %1999 = vmatpush1.msra.mxu0 %v1819
      %2000 = vmatprep.subr.mxu0 %v1824
      %2001 = vmatpush1.msra.mxu0 %v1823
      %2002 = vmatprep.subr.mxu0 %v1828
      %2003 = vmatpush1.msra.mxu0 %v1827
      %2004 = vmatprep.subr.mxu0 %v1832
      %2005 = vmatpush1.msra.mxu0 %v1831
      %2006 = vmatprep.subr.mxu0 %v1836
      %2007 = vmatpush1.msra.mxu0 %v1835
      %2008 = vmatprep.subr.mxu0 %v1840
      %2009 = vmatpush1.msra.mxu0 %v1839
      %2010 = vmatprep.subr.mxu0 %v1844
      %2011 = vmatpush1.msra.mxu0 %v1843
      %2012 = vmatprep.subr.mxu0 %v1848
      %2013 = vmatpush1.msra.mxu0 %v1847
      %2014 = vmatprep.subr.mxu0 %v1852
      %2015 = vmatpush1.msra.mxu0 %v1851
      %2016 = vmatprep.subr.mxu0 %v1856
      %2017 = vmatpush1.msra.mxu0 %v1855
      %2018 = vmatprep.subr.mxu0 %v1860
      %2019 = vmatpush1.msra.mxu0 %v1859
      %2020 = vmatprep.subr.mxu0 %v1864
      %2021 = vmatpush1.msra.mxu0 %v1863
      %2022 = vmatprep.subr.mxu0 %v1913
      %2023 = vmatpush1.msra.mxu0 %v1910
      %2024 = vmatprep.subr.mxu0 0.0
      %2025 = vmatpush1.msra.mxu0 0.0
      %2026 = vmatprep.subr.mxu0 0.0
      %2027 = vmatpush1.msra.mxu0 0.0
      %2028 = vmatprep.subr.mxu0 0.0
      %2029 = vmatpush1.msra.mxu0 0.0
      %2030 = vmatprep.subr.mxu0 0.0
      %2031 = vmatpush1.msra.mxu0 0.0
      %2032 = vmatprep.subr.mxu0 0.0
      %2033 = vmatpush1.msra.mxu0 0.0
      %2034 = vmatprep.subr.mxu0 0.0
      %2035 = vmatpush1.msra.mxu0 0.0
      %2036 = vmatprep.subr.mxu0 0.0
      %2037 = vmatpush1.msra.mxu0 0.0
      %2038 = vmatprep.subr.mxu0 0.0
      %2039 = vmatpush1.msra.mxu0 0.0
      %2040 = vmatprep.subr.mxu0 0.0
      %2041 = vmatpush1.msra.mxu0 0.0
      %2042 = vmatprep.subr.mxu0 0.0
      %2043 = vmatpush1.msra.mxu0 0.0
      %2044 = vmatprep.subr.mxu0 0.0
      %2045 = vmatpush1.msra.mxu0 0.0
      %2046 = vmatprep.subr.mxu0 0.0
      %2047 = vmatpush1.msra.mxu0 0.0
      %2048 = vmatprep.subr.mxu0 0.0
      %2049 = vmatpush1.msra.mxu0 0.0
      %2050 = vmatprep.mubr.f32.mxu0 %v1901
      %2051 = vmatmul.mubr.f32.gmra.mrb[0].mxu0 %v1898
      %v2052 = vpop.f32.mrb[0].mxu0
      %v2053 = vadd.f32 %v1882, %v2052
      %v2054 = vpop.f32.mrb[0].mxu0
      %v2055 = vadd.f32 %v1886, %v2054
      %2056 = vdwg.mxu0
      %v2059 = vrot.slane %v1982, 6
      %v2060 = vrot.slane %v1984, 6
      %v2063 = vadd.f32 %v1788, %v2059
      %v2064 = vadd.f32 %v1789, %v2060
      %v2065 = vxor.u32 %v2063, 2147483648
      %v2066 = vxor.u32 %v2064, 2147483648
      %v2067 = vmul.f32 %v2065, 1.442695
      %v2068 = vpow.pop %v2067
      %v2069 = vmul.f32 %v2066, 1.442695
      %v2070 = vpow.pop %v2069
      %v2071 = vadd.f32 %v2068, 1.0
      %v2072 = vadd.f32 %v2070, 1.0
      %v2073 = vrcp.pop %v2071
      %v2074 = vmul.f32 1.0, %v2073
      %v2075 = vrcp.pop %v2072
      %v2076 = vmul.f32 1.0, %v2075
      %v2078 = vrot.slane %v2053, 6
      %v2080 = vadd.f32 %v1790, %v2078
      %v2081 = vxor.u32 %v2080, 2147483648
      %v2082 = vmul.f32 %v2081, 1.442695
      %v2083 = vpow.pop %v2082
      %v2084 = vadd.f32 %v2083, 1.0
      %v2085 = vrcp.pop %v2084
      %v2086 = vmul.f32 1.0, %v2085
      %v2088 = vrot.slane %v2055, 6
      %2089 = vrot.lane.b32.xlu0 %v2078, 84
      %v2090 = vpop.permute.xlu0 %2089
      %2091 = vrot.lane.b32.xlu0 %v2088, 84
      %v2092 = vpop.permute.xlu0 %2091
      %v2093 = vsel %vm1726, %v2090, %v2092
      %v2096 = vmul.f32 %v2074, %v2093
      %v2097 = vmul.f32 %v2076, %v2092
      %2100 = vrot.lane.b32.xlu0 %v2096, 44
      %v2101 = vpop.permute.xlu0 %2100
      %2102 = vrot.lane.b32.xlu0 %v2097, 44
      %v2103 = vpop.permute.xlu0 %2102
      %v2104 = vsel %vm1738, %v2101, %v2103
      %v2107 = vadd.f32 %v1790, %v2101
      %v2108 = vadd.f32 %v1791, %v2104
      %v2109 = vtanh.pop %v2107
      %v2110 = vtanh.pop %v2108
      %v2111 = vsub.f32 1.0, %v2076
      %v2112 = vsub.f32 1.0, %v2086
      %2115 = vrot.lane.b32.xlu0 %v2109, 106
      %v2116 = vpop.permute.xlu0 %2115
      %2117 = vrot.lane.b32.xlu0 %v2110, 106
      %v2118 = vpop.permute.xlu0 %2117
      %v2119 = vsel %vm1754, %v2116, %v2118
      %v2122 = vmul.f32 %v2111, %v2119
      %v2123 = vmul.f32 %v2112, %v2118
      %v2124 = vcombine.low %v1792, %v1792
      %v2126 = vunpack.c.l.s4 1983009808
      %v2127 = vunpack.c.0.s8 %v2126
      %v2128 = vlaneseq
      %v2129 = vshrl.u32 %v2128, 7
      %v2130 = vsub.s32 %v2127, %v2129
      %v2131 = vrot.slane %v2124, %v2130
      %v2132 = vcombine.high %v2131, %v2131
      %2133 = vrot.lane.b32.xlu0 %v2131, 22
      %v2134 = vpop.permute.xlu0 %2133
      %2135 = vrot.lane.b32.xlu0 %v2132, 22
      %v2136 = vpop.permute.xlu0 %2135
      %v2137 = vsel %vm1541, %v2134, %v2136
      %v2140 = vmul.f32 %v2076, %v2134
      %v2141 = vmul.f32 %v2086, %v2137
      %v2142 = vadd.f32 %v2122, %v2140
      %v2143 = vadd.f32 %v2123, %v2141
      %v2146 = vcombine.low %v2142, %v2143
      %v2148 = vunpack.c.l.s4 1983009808
      %v2149 = vunpack.c.0.s8 %v2148
      %v2150 = vlaneseq
      %v2151 = vshrl.u32 %v2150, 7
      %v2152 = vsub.s32 %v2149, %v2151
      %v2153 = vrot.slane %v2146, %v2152
      %v2154 = vcombine.high %v2153, %v2153
      %2155 = vrot.lane.b32.xlu0 %v2154, 106
      %v2156 = vpop.permute.xlu0 %2155
      %v2157 = vrot.slane %v2156, 2
      %v2158 = vsel %vm1754, %v2156, %v2157
      %2160 = vst.msk [vmem:[#allocation2] sm:$0xf] %vm1426, %v2158
      %s2161 = scalar_lea.vmem %s832, 4
      %2162 = vst.msk [vmem:[%s2161] sm:$0xf] %vm1426, %v2158
      %v2163 = vld [vmem:[#allocation3] sm:$0x30]
      %v2164 = vld [vmem:[#allocation3 + $0x8] sm:$0x30]
      %v2165 = vld [vmem:[#allocation3 + $0x10] sm:$0x30]
      %v2166 = vld [vmem:[#allocation3 + $0x18] sm:$0x30]
      %v2167 = vld [vmem:[#allocation2] sm:$0xf]
      %v2168 = vld [vmem:[%s769] sm:$0xff]
      %v2169 = vld [vmem:[%s769 + $0x8] sm:$0xff]
      %v2170 = vld [vmem:[%s769 + $0x10] sm:$0xff]
      %v2171 = vld [vmem:[%s769 + $0x18] sm:$0xff]
      %v2172 = vld [vmem:[%s769 + $0x20] sm:$0xff]
      %v2173 = vld [vmem:[%s769 + $0x28] sm:$0xff]
      %v2174 = vld [vmem:[%s769 + $0x30] sm:$0xff]
      %v2175 = vld [vmem:[%s769 + $0x38] sm:$0xff]
      %v2176 = vld [vmem:[%s769 + $0x40] sm:$0xff]
      %v2177 = vld [vmem:[%s769 + $0x48] sm:$0xff]
      %v2178 = vld [vmem:[%s769 + $0x50] sm:$0xff]
      %v2179 = vld [vmem:[%s769 + $0x58] sm:$0xff]
      %v2180 = vld [vmem:[%s769 + $0x60] sm:$0xff]
      %v2181 = vld [vmem:[%s769 + $0x68] sm:$0xff]
      %v2182 = vld [vmem:[%s769 + $0x70] sm:$0xff]
      %v2183 = vld [vmem:[%s769 + $0x78] sm:$0xff]
      %v2184 = vld [vmem:[%s769 + $0x80] sm:$0xff]
      %v2185 = vld [vmem:[%s769 + $0x88] sm:$0xff]
      %v2186 = vld [vmem:[%s769 + $0x90] sm:$0xff]
      %v2187 = vld [vmem:[%s769 + $0x98] sm:$0xff]
      %v2188 = vld [vmem:[%s769 + $0xa0] sm:$0xff]
      %v2189 = vld [vmem:[%s769 + $0xa8] sm:$0xff]
      %v2190 = vld [vmem:[%s769 + $0xb0] sm:$0xff]
      %v2191 = vld [vmem:[%s769 + $0xb8] sm:$0xff]
      %v2192 = vld [vmem:[%s769 + $0xc0] sm:$0xff]
      %v2193 = vld [vmem:[%s769 + $0xc8] sm:$0xff]
      %v2194 = vld [vmem:[%s769 + $0xd0] sm:$0xff]
      %v2195 = vld [vmem:[%s769 + $0xd8] sm:$0xff]
      %v2196 = vld [vmem:[%s769 + $0xe0] sm:$0xff]
      %v2197 = vld [vmem:[%s769 + $0xe8] sm:$0xff]
      %v2198 = vld [vmem:[%s769 + $0xf0] sm:$0xff]
      %v2199 = vld [vmem:[%s769 + $0xf8] sm:$0xff]
      %v2200 = vld [vmem:[%s769 + $0x100] sm:$0xff]
      %v2201 = vld [vmem:[%s769 + $0x108] sm:$0xff]
      %v2202 = vld [vmem:[%s769 + $0x110] sm:$0xff]
      %v2203 = vld [vmem:[%s769 + $0x118] sm:$0xff]
      %v2204 = vld [vmem:[%s769 + $0x120] sm:$0xff]
      %v2205 = vld [vmem:[%s769 + $0x128] sm:$0xff]
      %v2206 = vld [vmem:[%s769 + $0x130] sm:$0xff]
      %v2207 = vld [vmem:[%s769 + $0x138] sm:$0xff]
      %v2208 = vld [vmem:[%s769 + $0x140] sm:$0xff]
      %v2209 = vld [vmem:[%s769 + $0x148] sm:$0xff]
      %v2210 = vld [vmem:[%s769 + $0x150] sm:$0xff]
      %v2211 = vld [vmem:[%s769 + $0x158] sm:$0xff]
      %v2212 = vld [vmem:[%s769 + $0x160] sm:$0xff]
      %v2213 = vld [vmem:[%s769 + $0x168] sm:$0xff]
      %v2214 = vld [vmem:[%s769 + $0x170] sm:$0xff]
      %v2215 = vld [vmem:[%s769 + $0x178] sm:$0xff]
      %v2216 = vld [vmem:[%s769 + $0x180] sm:$0xff]
      %v2217 = vld [vmem:[%s769 + $0x188] sm:$0xff]
      %v2218 = vld [vmem:[%s769 + $0x190] sm:$0xff]
      %v2219 = vld [vmem:[%s769 + $0x198] sm:$0xff]
      %v2220 = vld [vmem:[%s769 + $0x1a0] sm:$0xff]
      %v2221 = vld [vmem:[%s769 + $0x1a8] sm:$0xff]
      %v2222 = vld [vmem:[%s769 + $0x1b0] sm:$0xff]
      %v2223 = vld [vmem:[%s769 + $0x1b8] sm:$0xff]
      %v2224 = vld [vmem:[%s769 + $0x1c0] sm:$0xff]
      %v2225 = vld [vmem:[%s769 + $0x1c8] sm:$0xff]
      %v2226 = vld [vmem:[%s769 + $0x1d0] sm:$0xff]
      %v2227 = vld [vmem:[%s769 + $0x1d8] sm:$0xff]
      %v2228 = vld [vmem:[%s769 + $0x1e0] sm:$0xff]
      %v2229 = vld [vmem:[%s769 + $0x1e8] sm:$0xff]
      %v2230 = vld [vmem:[%s769 + $0x1f0] sm:$0xff]
      %v2231 = vld [vmem:[%s769 + $0x1f8] sm:$0xff]
      %v2232 = vld [vmem:[%s769 + $0x200] sm:$0xff]
      %v2233 = vld [vmem:[%s769 + $0x208] sm:$0xff]
      %v2234 = vld [vmem:[%s769 + $0x210] sm:$0xff]
      %v2235 = vld [vmem:[%s769 + $0x218] sm:$0xff]
      %v2236 = vld [vmem:[%s769 + $0x220] sm:$0xff]
      %v2237 = vld [vmem:[%s769 + $0x228] sm:$0xff]
      %v2238 = vld [vmem:[%s769 + $0x230] sm:$0xff]
      %v2239 = vld [vmem:[%s769 + $0x238] sm:$0xff]
      %v2240 = vld [vmem:[%s769 + $0x240] sm:$0x3f]
      %v2241 = vld [vmem:[%s769 + $0x248] sm:$0x3f]
      %v2242 = vld [vmem:[%s769 + $0x250] sm:$0x3f]
      %v2243 = vld [vmem:[%s769 + $0x258] sm:$0x3f]
      %v2244 = vld [vmem:[%s777] sm:$0xf]
      %v2246 = vlaneseq
      %v2247 = vshrl.u32 %v2246, 7
      %v2248 = vsub.s32 0, %v2247
      %v2249 = vrot.slane %v2244, %v2248
      %v2250 = vlaneseq
      %v2251 = vshrl.u32 %v2250, 7
      %v2252 = vsub.s32 1, %v2251
      %v2253 = vrot.slane %v2244, %v2252
      %v2254 = vlaneseq
      %v2255 = vshrl.u32 %v2254, 7
      %v2256 = vsub.s32 2, %v2255
      %v2257 = vrot.slane %v2244, %v2256
      %v2258 = vlaneseq
      %v2259 = vshrl.u32 %v2258, 7
      %v2260 = vsub.s32 3, %v2259
      %v2261 = vrot.slane %v2244, %v2260
      %v2268 = vunpack.c.l.s4 1983009808
      %v2269 = vunpack.c.0.s8 %v2268
      %v2270 = vlaneseq
      %v2271 = vshrl.u32 %v2270, 7
      %v2272 = vsub.s32 %v2269, %v2271
      %v2273 = vrot.slane %v2167, %v2272
      %v2274 = vcombine.high %v2273, %v2273
      %v2276 = vsel %vm1541, %v2274, 0
      %v2279 = vsel %vm1544, %v2240, 0
      %v2282 = vsel %vm1544, %v2241, 0
      %v2285 = vsel %vm1544, %v2242, 0
      %v2288 = vsel %vm1544, %v2243, 0
      %2290 = vmatprep.subr.mxu0 %v2169
      %2291 = vmatpush1.msra.mxu0 %v2168
      %2292 = vmatprep.subr.mxu0 %v2173
      %2293 = vmatpush1.msra.mxu0 %v2172
      %2294 = vmatprep.subr.mxu0 %v2177
      %2295 = vmatpush1.msra.mxu0 %v2176
      %2296 = vmatprep.subr.mxu0 %v2181
      %2297 = vmatpush1.msra.mxu0 %v2180
      %2298 = vmatprep.subr.mxu0 %v2185
      %2299 = vmatpush1.msra.mxu0 %v2184
      %2300 = vmatprep.subr.mxu0 %v2189
      %2301 = vmatpush1.msra.mxu0 %v2188
      %2302 = vmatprep.subr.mxu0 %v2193
      %2303 = vmatpush1.msra.mxu0 %v2192
      %2304 = vmatprep.subr.mxu0 %v2197
      %2305 = vmatpush1.msra.mxu0 %v2196
      %2306 = vmatprep.subr.mxu0 %v2201
      %2307 = vmatpush1.msra.mxu0 %v2200
      %2308 = vmatprep.subr.mxu0 %v2205
      %2309 = vmatpush1.msra.mxu0 %v2204
      %2310 = vmatprep.subr.mxu0 %v2209
      %2311 = vmatpush1.msra.mxu0 %v2208
      %2312 = vmatprep.subr.mxu0 %v2213
      %2313 = vmatpush1.msra.mxu0 %v2212
      %2314 = vmatprep.subr.mxu0 %v2217
      %2315 = vmatpush1.msra.mxu0 %v2216
      %2316 = vmatprep.subr.mxu0 %v2221
      %2317 = vmatpush1.msra.mxu0 %v2220
      %2318 = vmatprep.subr.mxu0 %v2225
      %2319 = vmatpush1.msra.mxu0 %v2224
      %2320 = vmatprep.subr.mxu0 %v2229
      %2321 = vmatpush1.msra.mxu0 %v2228
      %2322 = vmatprep.subr.mxu0 %v2233
      %2323 = vmatpush1.msra.mxu0 %v2232
      %2324 = vmatprep.subr.mxu0 %v2237
      %2325 = vmatpush1.msra.mxu0 %v2236
      %2326 = vmatprep.subr.mxu0 %v2282
      %2327 = vmatpush1.msra.mxu0 %v2279
      %2328 = vmatprep.subr.mxu0 0.0
      %2329 = vmatpush1.msra.mxu0 0.0
      %2330 = vmatprep.subr.mxu0 0.0
      %2331 = vmatpush1.msra.mxu0 0.0
      %2332 = vmatprep.subr.mxu0 0.0
      %2333 = vmatpush1.msra.mxu0 0.0
      %2334 = vmatprep.subr.mxu0 0.0
      %2335 = vmatpush1.msra.mxu0 0.0
      %2336 = vmatprep.subr.mxu0 0.0
      %2337 = vmatpush1.msra.mxu0 0.0
      %2338 = vmatprep.subr.mxu0 0.0
      %2339 = vmatpush1.msra.mxu0 0.0
      %2340 = vmatprep.subr.mxu0 0.0
      %2341 = vmatpush1.msra.mxu0 0.0
      %2342 = vmatprep.subr.mxu0 0.0
      %2343 = vmatpush1.msra.mxu0 0.0
      %2344 = vmatprep.subr.mxu0 0.0
      %2345 = vmatpush1.msra.mxu0 0.0
      %2346 = vmatprep.subr.mxu0 0.0
      %2347 = vmatpush1.msra.mxu0 0.0
      %2348 = vmatprep.subr.mxu0 0.0
      %2349 = vmatpush1.msra.mxu0 0.0
      %2350 = vmatprep.subr.mxu0 0.0
      %2351 = vmatpush1.msra.mxu0 0.0
      %2352 = vmatprep.subr.mxu0 0.0
      %2353 = vmatpush1.msra.mxu0 0.0
      %2354 = vmatprep.mubr.f32.mxu0 %v2276
      %2355 = vmatmul.mubr.f32.gmra.mrb[0].mxu0 %v2273
      %v2356 = vpop.f32.mrb[0].mxu0
      %v2357 = vadd.f32 %v2249, %v2356
      %v2358 = vpop.f32.mrb[0].mxu0
      %v2359 = vadd.f32 %v2253, %v2358
      %2360 = vdwg.mxu0
      %2361 = vmatprep.subr.mxu0 %v2171
      %2362 = vmatpush1.msra.mxu0 %v2170
      %2363 = vmatprep.subr.mxu0 %v2175
      %2364 = vmatpush1.msra.mxu0 %v2174
      %2365 = vmatprep.subr.mxu0 %v2179
      %2366 = vmatpush1.msra.mxu0 %v2178
      %2367 = vmatprep.subr.mxu0 %v2183
      %2368 = vmatpush1.msra.mxu0 %v2182
      %2369 = vmatprep.subr.mxu0 %v2187
      %2370 = vmatpush1.msra.mxu0 %v2186
      %2371 = vmatprep.subr.mxu0 %v2191
      %2372 = vmatpush1.msra.mxu0 %v2190
      %2373 = vmatprep.subr.mxu0 %v2195
      %2374 = vmatpush1.msra.mxu0 %v2194
      %2375 = vmatprep.subr.mxu0 %v2199
      %2376 = vmatpush1.msra.mxu0 %v2198
      %2377 = vmatprep.subr.mxu0 %v2203
      %2378 = vmatpush1.msra.mxu0 %v2202
      %2379 = vmatprep.subr.mxu0 %v2207
      %2380 = vmatpush1.msra.mxu0 %v2206
      %2381 = vmatprep.subr.mxu0 %v2211
      %2382 = vmatpush1.msra.mxu0 %v2210
      %2383 = vmatprep.subr.mxu0 %v2215
      %2384 = vmatpush1.msra.mxu0 %v2214
      %2385 = vmatprep.subr.mxu0 %v2219
      %2386 = vmatpush1.msra.mxu0 %v2218
      %2387 = vmatprep.subr.mxu0 %v2223
      %2388 = vmatpush1.msra.mxu0 %v2222
      %2389 = vmatprep.subr.mxu0 %v2227
      %2390 = vmatpush1.msra.mxu0 %v2226
      %2391 = vmatprep.subr.mxu0 %v2231
      %2392 = vmatpush1.msra.mxu0 %v2230
      %2393 = vmatprep.subr.mxu0 %v2235
      %2394 = vmatpush1.msra.mxu0 %v2234
      %2395 = vmatprep.subr.mxu0 %v2239
      %2396 = vmatpush1.msra.mxu0 %v2238
      %2397 = vmatprep.subr.mxu0 %v2288
      %2398 = vmatpush1.msra.mxu0 %v2285
      %2399 = vmatprep.subr.mxu0 0.0
      %2400 = vmatpush1.msra.mxu0 0.0
      %2401 = vmatprep.subr.mxu0 0.0
      %2402 = vmatpush1.msra.mxu0 0.0
      %2403 = vmatprep.subr.mxu0 0.0
      %2404 = vmatpush1.msra.mxu0 0.0
      %2405 = vmatprep.subr.mxu0 0.0
      %2406 = vmatpush1.msra.mxu0 0.0
      %2407 = vmatprep.subr.mxu0 0.0
      %2408 = vmatpush1.msra.mxu0 0.0
      %2409 = vmatprep.subr.mxu0 0.0
      %2410 = vmatpush1.msra.mxu0 0.0
      %2411 = vmatprep.subr.mxu0 0.0
      %2412 = vmatpush1.msra.mxu0 0.0
      %2413 = vmatprep.subr.mxu0 0.0
      %2414 = vmatpush1.msra.mxu0 0.0
      %2415 = vmatprep.subr.mxu0 0.0
      %2416 = vmatpush1.msra.mxu0 0.0
      %2417 = vmatprep.subr.mxu0 0.0
      %2418 = vmatpush1.msra.mxu0 0.0
      %2419 = vmatprep.subr.mxu0 0.0
      %2420 = vmatpush1.msra.mxu0 0.0
      %2421 = vmatprep.subr.mxu0 0.0
      %2422 = vmatpush1.msra.mxu0 0.0
      %2423 = vmatprep.subr.mxu0 0.0
      %2424 = vmatpush1.msra.mxu0 0.0
      %2425 = vmatprep.mubr.f32.mxu0 %v2276
      %2426 = vmatmul.mubr.f32.gmra.mrb[0].mxu0 %v2273
      %v2427 = vpop.f32.mrb[0].mxu0
      %v2428 = vadd.f32 %v2257, %v2427
      %v2429 = vpop.f32.mrb[0].mxu0
      %v2430 = vadd.f32 %v2261, %v2429
      %2431 = vdwg.mxu0
      %v2434 = vrot.slane %v2357, 4
      %v2435 = vrot.slane %v2359, 4
      %v2438 = vadd.f32 %v2163, %v2434
      %v2439 = vadd.f32 %v2164, %v2435
      %v2440 = vxor.u32 %v2438, 2147483648
      %v2441 = vxor.u32 %v2439, 2147483648
      %v2442 = vmul.f32 %v2440, 1.442695
      %v2443 = vpow.pop %v2442
      %v2444 = vmul.f32 %v2441, 1.442695
      %v2445 = vpow.pop %v2444
      %v2446 = vadd.f32 %v2443, 1.0
      %v2447 = vadd.f32 %v2445, 1.0
      %v2448 = vrcp.pop %v2446
      %v2449 = vmul.f32 1.0, %v2448
      %v2450 = vrcp.pop %v2447
      %v2451 = vmul.f32 1.0, %v2450
      %v2453 = vrot.slane %v2428, 4
      %v2455 = vadd.f32 %v2165, %v2453
      %v2456 = vxor.u32 %v2455, 2147483648
      %v2457 = vmul.f32 %v2456, 1.442695
      %v2458 = vpow.pop %v2457
      %v2459 = vadd.f32 %v2458, 1.0
      %v2460 = vrcp.pop %v2459
      %v2461 = vmul.f32 1.0, %v2460
      %v2463 = vrot.slane %v2430, 4
      %2464 = vrot.lane.b32.xlu0 %v2453, 84
      %v2465 = vpop.permute.xlu0 %2464
      %2466 = vrot.lane.b32.xlu0 %v2463, 84
      %v2467 = vpop.permute.xlu0 %2466
      %v2468 = vsel %vm1726, %v2465, %v2467
      %v2471 = vmul.f32 %v2449, %v2468
      %v2472 = vmul.f32 %v2451, %v2467
      %2475 = vrot.lane.b32.xlu0 %v2471, 44
      %v2476 = vpop.permute.xlu0 %2475
      %2477 = vrot.lane.b32.xlu0 %v2472, 44
      %v2478 = vpop.permute.xlu0 %2477
      %v2479 = vsel %vm1738, %v2476, %v2478
      %v2482 = vadd.f32 %v2165, %v2476
      %v2483 = vadd.f32 %v2166, %v2479
      %v2484 = vtanh.pop %v2482
      %v2485 = vtanh.pop %v2483
      %v2486 = vsub.f32 1.0, %v2451
      %v2487 = vsub.f32 1.0, %v2461
      %2490 = vrot.lane.b32.xlu0 %v2484, 106
      %v2491 = vpop.permute.xlu0 %2490
      %2492 = vrot.lane.b32.xlu0 %v2485, 106
      %v2493 = vpop.permute.xlu0 %2492
      %v2494 = vsel %vm1754, %v2491, %v2493
      %v2497 = vmul.f32 %v2486, %v2494
      %v2498 = vmul.f32 %v2487, %v2493
      %v2499 = vcombine.low %v2273, %v2273
      %2500 = vrot.lane.b32.xlu0 %v2499, 22
      %v2501 = vpop.permute.xlu0 %2500
      %2502 = vrot.lane.b32.xlu0 %v2273, 22
      %v2503 = vpop.permute.xlu0 %2502
      %v2504 = vsel %vm1541, %v2501, %v2503
      %v2507 = vmul.f32 %v2451, %v2501
      %v2508 = vmul.f32 %v2461, %v2504
      %v2509 = vadd.f32 %v2497, %v2507
      %v2510 = vadd.f32 %v2498, %v2508
      %v2513 = vcombine.high %v2509, %v2510
      %v2515 = vunpack.c.l.s4 1983009808
      %v2516 = vunpack.c.0.s8 %v2515
      %v2517 = vlaneseq
      %v2518 = vshrl.u32 %v2517, 7
      %v2519 = vsub.s32 %v2516, %v2518
      %v2520 = vrot.slane %v2513, %v2519
      %2521 = vrot.lane.b32.xlu0 %v2520, 106
      %v2522 = vpop.permute.xlu0 %2521
      %v2523 = vrot.slane %v2522, 2
      %v2524 = vsel %vm1754, %v2522, %v2523
      %2526 = vst.msk [vmem:[#allocation2] sm:$0xf] %vm1426, %v2524
      %s2527 = scalar_lea.vmem %s832, 8
      %2528 = vst.msk [vmem:[%s2527] sm:$0xf] %vm1426, %v2524
      %v2529 = vld [vmem:[#allocation3] sm:$0xc0]
      %v2530 = vld [vmem:[#allocation3 + $0x8] sm:$0xc0]
      %v2531 = vld [vmem:[#allocation3 + $0x10] sm:$0xc0]
      %v2532 = vld [vmem:[#allocation3 + $0x18] sm:$0xc0]
      %v2533 = vld [vmem:[#allocation2] sm:$0xf]
      %v2534 = vld [vmem:[%s769] sm:$0xff]
      %v2535 = vld [vmem:[%s769 + $0x8] sm:$0xff]
      %v2536 = vld [vmem:[%s769 + $0x10] sm:$0xff]
      %v2537 = vld [vmem:[%s769 + $0x18] sm:$0xff]
      %v2538 = vld [vmem:[%s769 + $0x20] sm:$0xff]
      %v2539 = vld [vmem:[%s769 + $0x28] sm:$0xff]
      %v2540 = vld [vmem:[%s769 + $0x30] sm:$0xff]
      %v2541 = vld [vmem:[%s769 + $0x38] sm:$0xff]
      %v2542 = vld [vmem:[%s769 + $0x40] sm:$0xff]
      %v2543 = vld [vmem:[%s769 + $0x48] sm:$0xff]
      %v2544 = vld [vmem:[%s769 + $0x50] sm:$0xff]
      %v2545 = vld [vmem:[%s769 + $0x58] sm:$0xff]
      %v2546 = vld [vmem:[%s769 + $0x60] sm:$0xff]
      %v2547 = vld [vmem:[%s769 + $0x68] sm:$0xff]
      %v2548 = vld [vmem:[%s769 + $0x70] sm:$0xff]
      %v2549 = vld [vmem:[%s769 + $0x78] sm:$0xff]
      %v2550 = vld [vmem:[%s769 + $0x80] sm:$0xff]
      %v2551 = vld [vmem:[%s769 + $0x88] sm:$0xff]
      %v2552 = vld [vmem:[%s769 + $0x90] sm:$0xff]
      %v2553 = vld [vmem:[%s769 + $0x98] sm:$0xff]
      %v2554 = vld [vmem:[%s769 + $0xa0] sm:$0xff]
      %v2555 = vld [vmem:[%s769 + $0xa8] sm:$0xff]
      %v2556 = vld [vmem:[%s769 + $0xb0] sm:$0xff]
      %v2557 = vld [vmem:[%s769 + $0xb8] sm:$0xff]
      %v2558 = vld [vmem:[%s769 + $0xc0] sm:$0xff]
      %v2559 = vld [vmem:[%s769 + $0xc8] sm:$0xff]
      %v2560 = vld [vmem:[%s769 + $0xd0] sm:$0xff]
      %v2561 = vld [vmem:[%s769 + $0xd8] sm:$0xff]
      %v2562 = vld [vmem:[%s769 + $0xe0] sm:$0xff]
      %v2563 = vld [vmem:[%s769 + $0xe8] sm:$0xff]
      %v2564 = vld [vmem:[%s769 + $0xf0] sm:$0xff]
      %v2565 = vld [vmem:[%s769 + $0xf8] sm:$0xff]
      %v2566 = vld [vmem:[%s769 + $0x100] sm:$0xff]
      %v2567 = vld [vmem:[%s769 + $0x108] sm:$0xff]
      %v2568 = vld [vmem:[%s769 + $0x110] sm:$0xff]
      %v2569 = vld [vmem:[%s769 + $0x118] sm:$0xff]
      %v2570 = vld [vmem:[%s769 + $0x120] sm:$0xff]
      %v2571 = vld [vmem:[%s769 + $0x128] sm:$0xff]
      %v2572 = vld [vmem:[%s769 + $0x130] sm:$0xff]
      %v2573 = vld [vmem:[%s769 + $0x138] sm:$0xff]
      %v2574 = vld [vmem:[%s769 + $0x140] sm:$0xff]
      %v2575 = vld [vmem:[%s769 + $0x148] sm:$0xff]
      %v2576 = vld [vmem:[%s769 + $0x150] sm:$0xff]
      %v2577 = vld [vmem:[%s769 + $0x158] sm:$0xff]
      %v2578 = vld [vmem:[%s769 + $0x160] sm:$0xff]
      %v2579 = vld [vmem:[%s769 + $0x168] sm:$0xff]
      %v2580 = vld [vmem:[%s769 + $0x170] sm:$0xff]
      %v2581 = vld [vmem:[%s769 + $0x178] sm:$0xff]
      %v2582 = vld [vmem:[%s769 + $0x180] sm:$0xff]
      %v2583 = vld [vmem:[%s769 + $0x188] sm:$0xff]
      %v2584 = vld [vmem:[%s769 + $0x190] sm:$0xff]
      %v2585 = vld [vmem:[%s769 + $0x198] sm:$0xff]
      %v2586 = vld [vmem:[%s769 + $0x1a0] sm:$0xff]
      %v2587 = vld [vmem:[%s769 + $0x1a8] sm:$0xff]
      %v2588 = vld [vmem:[%s769 + $0x1b0] sm:$0xff]
      %v2589 = vld [vmem:[%s769 + $0x1b8] sm:$0xff]
      %v2590 = vld [vmem:[%s769 + $0x1c0] sm:$0xff]
      %v2591 = vld [vmem:[%s769 + $0x1c8] sm:$0xff]
      %v2592 = vld [vmem:[%s769 + $0x1d0] sm:$0xff]
      %v2593 = vld [vmem:[%s769 + $0x1d8] sm:$0xff]
      %v2594 = vld [vmem:[%s769 + $0x1e0] sm:$0xff]
      %v2595 = vld [vmem:[%s769 + $0x1e8] sm:$0xff]
      %v2596 = vld [vmem:[%s769 + $0x1f0] sm:$0xff]
      %v2597 = vld [vmem:[%s769 + $0x1f8] sm:$0xff]
      %v2598 = vld [vmem:[%s769 + $0x200] sm:$0xff]
      %v2599 = vld [vmem:[%s769 + $0x208] sm:$0xff]
      %v2600 = vld [vmem:[%s769 + $0x210] sm:$0xff]
      %v2601 = vld [vmem:[%s769 + $0x218] sm:$0xff]
      %v2602 = vld [vmem:[%s769 + $0x220] sm:$0xff]
      %v2603 = vld [vmem:[%s769 + $0x228] sm:$0xff]
      %v2604 = vld [vmem:[%s769 + $0x230] sm:$0xff]
      %v2605 = vld [vmem:[%s769 + $0x238] sm:$0xff]
      %v2606 = vld [vmem:[%s769 + $0x240] sm:$0x3f]
      %v2607 = vld [vmem:[%s769 + $0x248] sm:$0x3f]
      %v2608 = vld [vmem:[%s769 + $0x250] sm:$0x3f]
      %v2609 = vld [vmem:[%s769 + $0x258] sm:$0x3f]
      %v2610 = vld [vmem:[%s777] sm:$0xf]
      %v2612 = vlaneseq
      %v2613 = vshrl.u32 %v2612, 7
      %v2614 = vsub.s32 0, %v2613
      %v2615 = vrot.slane %v2610, %v2614
      %v2616 = vlaneseq
      %v2617 = vshrl.u32 %v2616, 7
      %v2618 = vsub.s32 1, %v2617
      %v2619 = vrot.slane %v2610, %v2618
      %v2620 = vlaneseq
      %v2621 = vshrl.u32 %v2620, 7
      %v2622 = vsub.s32 2, %v2621
      %v2623 = vrot.slane %v2610, %v2622
      %v2624 = vlaneseq
      %v2625 = vshrl.u32 %v2624, 7
      %v2626 = vsub.s32 3, %v2625
      %v2627 = vrot.slane %v2610, %v2626
      %v2634 = vunpack.c.l.s4 1983009808
      %v2635 = vunpack.c.0.s8 %v2634
      %v2636 = vlaneseq
      %v2637 = vshrl.u32 %v2636, 7
      %v2638 = vsub.s32 %v2635, %v2637
      %v2639 = vrot.slane %v2533, %v2638
      %v2640 = vcombine.high %v2639, %v2639
      %v2642 = vsel %vm1541, %v2640, 0
      %v2645 = vsel %vm1544, %v2606, 0
      %v2648 = vsel %vm1544, %v2607, 0
      %v2651 = vsel %vm1544, %v2608, 0
      %v2654 = vsel %vm1544, %v2609, 0
      %2656 = vmatprep.subr.mxu0 %v2535
      %2657 = vmatpush1.msra.mxu0 %v2534
      %2658 = vmatprep.subr.mxu0 %v2539
      %2659 = vmatpush1.msra.mxu0 %v2538
      %2660 = vmatprep.subr.mxu0 %v2543
      %2661 = vmatpush1.msra.mxu0 %v2542
      %2662 = vmatprep.subr.mxu0 %v2547
      %2663 = vmatpush1.msra.mxu0 %v2546
      %2664 = vmatprep.subr.mxu0 %v2551
      %2665 = vmatpush1.msra.mxu0 %v2550
      %2666 = vmatprep.subr.mxu0 %v2555
      %2667 = vmatpush1.msra.mxu0 %v2554
      %2668 = vmatprep.subr.mxu0 %v2559
      %2669 = vmatpush1.msra.mxu0 %v2558
      %2670 = vmatprep.subr.mxu0 %v2563
      %2671 = vmatpush1.msra.mxu0 %v2562
      %2672 = vmatprep.subr.mxu0 %v2567
      %2673 = vmatpush1.msra.mxu0 %v2566
      %2674 = vmatprep.subr.mxu0 %v2571
      %2675 = vmatpush1.msra.mxu0 %v2570
      %2676 = vmatprep.subr.mxu0 %v2575
      %2677 = vmatpush1.msra.mxu0 %v2574
      %2678 = vmatprep.subr.mxu0 %v2579
      %2679 = vmatpush1.msra.mxu0 %v2578
      %2680 = vmatprep.subr.mxu0 %v2583
      %2681 = vmatpush1.msra.mxu0 %v2582
      %2682 = vmatprep.subr.mxu0 %v2587
      %2683 = vmatpush1.msra.mxu0 %v2586
      %2684 = vmatprep.subr.mxu0 %v2591
      %2685 = vmatpush1.msra.mxu0 %v2590
      %2686 = vmatprep.subr.mxu0 %v2595
      %2687 = vmatpush1.msra.mxu0 %v2594
      %2688 = vmatprep.subr.mxu0 %v2599
      %2689 = vmatpush1.msra.mxu0 %v2598
      %2690 = vmatprep.subr.mxu0 %v2603
      %2691 = vmatpush1.msra.mxu0 %v2602
      %2692 = vmatprep.subr.mxu0 %v2648
      %2693 = vmatpush1.msra.mxu0 %v2645
      %2694 = vmatprep.subr.mxu0 0.0
      %2695 = vmatpush1.msra.mxu0 0.0
      %2696 = vmatprep.subr.mxu0 0.0
      %2697 = vmatpush1.msra.mxu0 0.0
      %2698 = vmatprep.subr.mxu0 0.0
      %2699 = vmatpush1.msra.mxu0 0.0
      %2700 = vmatprep.subr.mxu0 0.0
      %2701 = vmatpush1.msra.mxu0 0.0
      %2702 = vmatprep.subr.mxu0 0.0
      %2703 = vmatpush1.msra.mxu0 0.0
      %2704 = vmatprep.subr.mxu0 0.0
      %2705 = vmatpush1.msra.mxu0 0.0
      %2706 = vmatprep.subr.mxu0 0.0
      %2707 = vmatpush1.msra.mxu0 0.0
      %2708 = vmatprep.subr.mxu0 0.0
      %2709 = vmatpush1.msra.mxu0 0.0
      %2710 = vmatprep.subr.mxu0 0.0
      %2711 = vmatpush1.msra.mxu0 0.0
      %2712 = vmatprep.subr.mxu0 0.0
      %2713 = vmatpush1.msra.mxu0 0.0
      %2714 = vmatprep.subr.mxu0 0.0
      %2715 = vmatpush1.msra.mxu0 0.0
      %2716 = vmatprep.subr.mxu0 0.0
      %2717 = vmatpush1.msra.mxu0 0.0
      %2718 = vmatprep.subr.mxu0 0.0
      %2719 = vmatpush1.msra.mxu0 0.0
      %2720 = vmatprep.mubr.f32.mxu0 %v2642
      %2721 = vmatmul.mubr.f32.gmra.mrb[0].mxu0 %v2639
      %v2722 = vpop.f32.mrb[0].mxu0
      %v2723 = vadd.f32 %v2615, %v2722
      %v2724 = vpop.f32.mrb[0].mxu0
      %v2725 = vadd.f32 %v2619, %v2724
      %2726 = vdwg.mxu0
      %2727 = vmatprep.subr.mxu0 %v2537
      %2728 = vmatpush1.msra.mxu0 %v2536
      %2729 = vmatprep.subr.mxu0 %v2541
      %2730 = vmatpush1.msra.mxu0 %v2540
      %2731 = vmatprep.subr.mxu0 %v2545
      %2732 = vmatpush1.msra.mxu0 %v2544
      %2733 = vmatprep.subr.mxu0 %v2549
      %2734 = vmatpush1.msra.mxu0 %v2548
      %2735 = vmatprep.subr.mxu0 %v2553
      %2736 = vmatpush1.msra.mxu0 %v2552
      %2737 = vmatprep.subr.mxu0 %v2557
      %2738 = vmatpush1.msra.mxu0 %v2556
      %2739 = vmatprep.subr.mxu0 %v2561
      %2740 = vmatpush1.msra.mxu0 %v2560
      %2741 = vmatprep.subr.mxu0 %v2565
      %2742 = vmatpush1.msra.mxu0 %v2564
      %2743 = vmatprep.subr.mxu0 %v2569
      %2744 = vmatpush1.msra.mxu0 %v2568
      %2745 = vmatprep.subr.mxu0 %v2573
      %2746 = vmatpush1.msra.mxu0 %v2572
      %2747 = vmatprep.subr.mxu0 %v2577
      %2748 = vmatpush1.msra.mxu0 %v2576
      %2749 = vmatprep.subr.mxu0 %v2581
      %2750 = vmatpush1.msra.mxu0 %v2580
      %2751 = vmatprep.subr.mxu0 %v2585
      %2752 = vmatpush1.msra.mxu0 %v2584
      %2753 = vmatprep.subr.mxu0 %v2589
      %2754 = vmatpush1.msra.mxu0 %v2588
      %2755 = vmatprep.subr.mxu0 %v2593
      %2756 = vmatpush1.msra.mxu0 %v2592
      %2757 = vmatprep.subr.mxu0 %v2597
      %2758 = vmatpush1.msra.mxu0 %v2596
      %2759 = vmatprep.subr.mxu0 %v2601
      %2760 = vmatpush1.msra.mxu0 %v2600
      %2761 = vmatprep.subr.mxu0 %v2605
      %2762 = vmatpush1.msra.mxu0 %v2604
      %2763 = vmatprep.subr.mxu0 %v2654
      %2764 = vmatpush1.msra.mxu0 %v2651
      %2765 = vmatprep.subr.mxu0 0.0
      %2766 = vmatpush1.msra.mxu0 0.0
      %2767 = vmatprep.subr.mxu0 0.0
      %2768 = vmatpush1.msra.mxu0 0.0
      %2769 = vmatprep.subr.mxu0 0.0
      %2770 = vmatpush1.msra.mxu0 0.0
      %2771 = vmatprep.subr.mxu0 0.0
      %2772 = vmatpush1.msra.mxu0 0.0
      %2773 = vmatprep.subr.mxu0 0.0
      %2774 = vmatpush1.msra.mxu0 0.0
      %2775 = vmatprep.subr.mxu0 0.0
      %2776 = vmatpush1.msra.mxu0 0.0
      %2777 = vmatprep.subr.mxu0 0.0
      %2778 = vmatpush1.msra.mxu0 0.0
      %2779 = vmatprep.subr.mxu0 0.0
      %2780 = vmatpush1.msra.mxu0 0.0
      %2781 = vmatprep.subr.mxu0 0.0
      %2782 = vmatpush1.msra.mxu0 0.0
      %2783 = vmatprep.subr.mxu0 0.0
      %2784 = vmatpush1.msra.mxu0 0.0
      %2785 = vmatprep.subr.mxu0 0.0
      %2786 = vmatpush1.msra.mxu0 0.0
      %2787 = vmatprep.subr.mxu0 0.0
      %2788 = vmatpush1.msra.mxu0 0.0
      %2789 = vmatprep.subr.mxu0 0.0
      %2790 = vmatpush1.msra.mxu0 0.0
      %2791 = vmatprep.mubr.f32.mxu0 %v2642
      %2792 = vmatmul.mubr.f32.gmra.mrb[0].mxu0 %v2639
      %v2793 = vpop.f32.mrb[0].mxu0
      %v2794 = vadd.f32 %v2623, %v2793
      %v2795 = vpop.f32.mrb[0].mxu0
      %v2796 = vadd.f32 %v2627, %v2795
      %2797 = vdwg.mxu0
      %v2800 = vrot.slane %v2723, 2
      %v2801 = vrot.slane %v2725, 2
      %v2804 = vadd.f32 %v2529, %v2800
      %v2805 = vadd.f32 %v2530, %v2801
      %v2806 = vxor.u32 %v2804, 2147483648
      %v2807 = vxor.u32 %v2805, 2147483648
      %v2808 = vmul.f32 %v2806, 1.442695
      %v2809 = vpow.pop %v2808
      %v2810 = vmul.f32 %v2807, 1.442695
      %v2811 = vpow.pop %v2810
      %v2812 = vadd.f32 %v2809, 1.0
      %v2813 = vadd.f32 %v2811, 1.0
      %v2814 = vrcp.pop %v2812
      %v2815 = vmul.f32 1.0, %v2814
      %v2816 = vrcp.pop %v2813
      %v2817 = vmul.f32 1.0, %v2816
      %v2819 = vrot.slane %v2794, 2
      %v2821 = vadd.f32 %v2531, %v2819
      %v2822 = vxor.u32 %v2821, 2147483648
      %v2823 = vmul.f32 %v2822, 1.442695
      %v2824 = vpow.pop %v2823
      %v2825 = vadd.f32 %v2824, 1.0
      %v2826 = vrcp.pop %v2825
      %v2827 = vmul.f32 1.0, %v2826
      %v2829 = vrot.slane %v2796, 2
      %2830 = vrot.lane.b32.xlu0 %v2819, 84
      %v2831 = vpop.permute.xlu0 %2830
      %2832 = vrot.lane.b32.xlu0 %v2829, 84
      %v2833 = vpop.permute.xlu0 %2832
      %v2834 = vsel %vm1726, %v2831, %v2833
      %v2837 = vmul.f32 %v2815, %v2834
      %v2838 = vmul.f32 %v2817, %v2833
      %2841 = vrot.lane.b32.xlu0 %v2837, 44
      %v2842 = vpop.permute.xlu0 %2841
      %2843 = vrot.lane.b32.xlu0 %v2838, 44
      %v2844 = vpop.permute.xlu0 %2843
      %v2845 = vsel %vm1738, %v2842, %v2844
      %v2848 = vadd.f32 %v2531, %v2842
      %v2849 = vadd.f32 %v2532, %v2845
      %v2850 = vtanh.pop %v2848
      %v2851 = vtanh.pop %v2849
      %v2852 = vsub.f32 1.0, %v2817
      %v2853 = vsub.f32 1.0, %v2827
      %2856 = vrot.lane.b32.xlu0 %v2850, 106
      %v2857 = vpop.permute.xlu0 %2856
      %2858 = vrot.lane.b32.xlu0 %v2851, 106
      %v2859 = vpop.permute.xlu0 %2858
      %v2860 = vsel %vm1754, %v2857, %v2859
      %v2863 = vmul.f32 %v2852, %v2860
      %v2864 = vmul.f32 %v2853, %v2859
      %v2865 = vcombine.low %v2533, %v2533
      %v2867 = vunpack.c.l.s4 1983009808
      %v2868 = vunpack.c.0.s8 %v2867
      %v2869 = vlaneseq
      %v2870 = vshrl.u32 %v2869, 7
      %v2871 = vsub.s32 %v2868, %v2870
      %v2872 = vrot.slane %v2865, %v2871
      %v2873 = vcombine.low %v2872, %v2872
      %2874 = vrot.lane.b32.xlu0 %v2873, 22
      %v2875 = vpop.permute.xlu0 %2874
      %2876 = vrot.lane.b32.xlu0 %v2872, 22
      %v2877 = vpop.permute.xlu0 %2876
      %v2878 = vsel %vm1541, %v2875, %v2877
      %v2881 = vmul.f32 %v2817, %v2875
      %v2882 = vmul.f32 %v2827, %v2878
      %v2883 = vadd.f32 %v2863, %v2881
      %v2884 = vadd.f32 %v2864, %v2882
      %v2887 = vcombine.high %v2883, %v2884
      %v2889 = vunpack.c.l.s4 1983009808
      %v2890 = vunpack.c.0.s8 %v2889
      %v2891 = vlaneseq
      %v2892 = vshrl.u32 %v2891, 7
      %v2893 = vsub.s32 %v2890, %v2892
      %v2894 = vrot.slane %v2887, %v2893
      %v2895 = vcombine.high %v2894, %v2894
      %2896 = vrot.lane.b32.xlu0 %v2895, 106
      %v2897 = vpop.permute.xlu0 %2896
      %v2898 = vrot.slane %v2897, 2
      %v2899 = vsel %vm1754, %v2897, %v2898
      %2901 = vst.msk [vmem:[#allocation2] sm:$0xf] %vm1426, %v2899
      %s2902 = scalar_lea.vmem %s832, 12
      %2903 = vst.msk [vmem:[%s2902] sm:$0xf] %vm1426, %v2899
      %v2904 = vld [vmem:[#allocation3 + $0x20] sm:$0x3]
      %v2905 = vld [vmem:[#allocation3 + $0x28] sm:$0x3]
      %v2906 = vld [vmem:[#allocation3 + $0x30] sm:$0x3]
      %v2907 = vld [vmem:[#allocation3 + $0x38] sm:$0x3]
      %v2908 = vld [vmem:[#allocation2] sm:$0xf]
      %v2909 = vld [vmem:[%s769] sm:$0xff]
      %v2910 = vld [vmem:[%s769 + $0x8] sm:$0xff]
      %v2911 = vld [vmem:[%s769 + $0x10] sm:$0xff]
      %v2912 = vld [vmem:[%s769 + $0x18] sm:$0xff]
      %v2913 = vld [vmem:[%s769 + $0x20] sm:$0xff]
      %v2914 = vld [vmem:[%s769 + $0x28] sm:$0xff]
      %v2915 = vld [vmem:[%s769 + $0x30] sm:$0xff]
      %v2916 = vld [vmem:[%s769 + $0x38] sm:$0xff]
      %v2917 = vld [vmem:[%s769 + $0x40] sm:$0xff]
      %v2918 = vld [vmem:[%s769 + $0x48] sm:$0xff]
      %v2919 = vld [vmem:[%s769 + $0x50] sm:$0xff]
      %v2920 = vld [vmem:[%s769 + $0x58] sm:$0xff]
      %v2921 = vld [vmem:[%s769 + $0x60] sm:$0xff]
      %v2922 = vld [vmem:[%s769 + $0x68] sm:$0xff]
      %v2923 = vld [vmem:[%s769 + $0x70] sm:$0xff]
      %v2924 = vld [vmem:[%s769 + $0x78] sm:$0xff]
      %v2925 = vld [vmem:[%s769 + $0x80] sm:$0xff]
      %v2926 = vld [vmem:[%s769 + $0x88] sm:$0xff]
      %v2927 = vld [vmem:[%s769 + $0x90] sm:$0xff]
      %v2928 = vld [vmem:[%s769 + $0x98] sm:$0xff]
      %v2929 = vld [vmem:[%s769 + $0xa0] sm:$0xff]
      %v2930 = vld [vmem:[%s769 + $0xa8] sm:$0xff]
      %v2931 = vld [vmem:[%s769 + $0xb0] sm:$0xff]
      %v2932 = vld [vmem:[%s769 + $0xb8] sm:$0xff]
      %v2933 = vld [vmem:[%s769 + $0xc0] sm:$0xff]
      %v2934 = vld [vmem:[%s769 + $0xc8] sm:$0xff]
      %v2935 = vld [vmem:[%s769 + $0xd0] sm:$0xff]
      %v2936 = vld [vmem:[%s769 + $0xd8] sm:$0xff]
      %v2937 = vld [vmem:[%s769 + $0xe0] sm:$0xff]
      %v2938 = vld [vmem:[%s769 + $0xe8] sm:$0xff]
      %v2939 = vld [vmem:[%s769 + $0xf0] sm:$0xff]
      %v2940 = vld [vmem:[%s769 + $0xf8] sm:$0xff]
      %v2941 = vld [vmem:[%s769 + $0x100] sm:$0xff]
      %v2942 = vld [vmem:[%s769 + $0x108] sm:$0xff]
      %v2943 = vld [vmem:[%s769 + $0x110] sm:$0xff]
      %v2944 = vld [vmem:[%s769 + $0x118] sm:$0xff]
      %v2945 = vld [vmem:[%s769 + $0x120] sm:$0xff]
      %v2946 = vld [vmem:[%s769 + $0x128] sm:$0xff]
      %v2947 = vld [vmem:[%s769 + $0x130] sm:$0xff]
      %v2948 = vld [vmem:[%s769 + $0x138] sm:$0xff]
      %v2949 = vld [vmem:[%s769 + $0x140] sm:$0xff]
      %v2950 = vld [vmem:[%s769 + $0x148] sm:$0xff]
      %v2951 = vld [vmem:[%s769 + $0x150] sm:$0xff]
      %v2952 = vld [vmem:[%s769 + $0x158] sm:$0xff]
      %v2953 = vld [vmem:[%s769 + $0x160] sm:$0xff]
      %v2954 = vld [vmem:[%s769 + $0x168] sm:$0xff]
      %v2955 = vld [vmem:[%s769 + $0x170] sm:$0xff]
      %v2956 = vld [vmem:[%s769 + $0x178] sm:$0xff]
      %v2957 = vld [vmem:[%s769 + $0x180] sm:$0xff]
      %v2958 = vld [vmem:[%s769 + $0x188] sm:$0xff]
      %v2959 = vld [vmem:[%s769 + $0x190] sm:$0xff]
      %v2960 = vld [vmem:[%s769 + $0x198] sm:$0xff]
      %v2961 = vld [vmem:[%s769 + $0x1a0] sm:$0xff]
      %v2962 = vld [vmem:[%s769 + $0x1a8] sm:$0xff]
      %v2963 = vld [vmem:[%s769 + $0x1b0] sm:$0xff]
      %v2964 = vld [vmem:[%s769 + $0x1b8] sm:$0xff]
      %v2965 = vld [vmem:[%s769 + $0x1c0] sm:$0xff]
      %v2966 = vld [vmem:[%s769 + $0x1c8] sm:$0xff]
      %v2967 = vld [vmem:[%s769 + $0x1d0] sm:$0xff]
      %v2968 = vld [vmem:[%s769 + $0x1d8] sm:$0xff]
      %v2969 = vld [vmem:[%s769 + $0x1e0] sm:$0xff]
      %v2970 = vld [vmem:[%s769 + $0x1e8] sm:$0xff]
      %v2971 = vld [vmem:[%s769 + $0x1f0] sm:$0xff]
      %v2972 = vld [vmem:[%s769 + $0x1f8] sm:$0xff]
      %v2973 = vld [vmem:[%s769 + $0x200] sm:$0xff]
      %v2974 = vld [vmem:[%s769 + $0x208] sm:$0xff]
      %v2975 = vld [vmem:[%s769 + $0x210] sm:$0xff]
      %v2976 = vld [vmem:[%s769 + $0x218] sm:$0xff]
      %v2977 = vld [vmem:[%s769 + $0x220] sm:$0xff]
      %v2978 = vld [vmem:[%s769 + $0x228] sm:$0xff]
      %v2979 = vld [vmem:[%s769 + $0x230] sm:$0xff]
      %v2980 = vld [vmem:[%s769 + $0x238] sm:$0xff]
      %v2981 = vld [vmem:[%s769 + $0x240] sm:$0x3f]
      %v2982 = vld [vmem:[%s769 + $0x248] sm:$0x3f]
      %v2983 = vld [vmem:[%s769 + $0x250] sm:$0x3f]
      %v2984 = vld [vmem:[%s769 + $0x258] sm:$0x3f]
      %v2985 = vld [vmem:[%s777] sm:$0xf]
      %v2987 = vlaneseq
      %v2988 = vshrl.u32 %v2987, 7
      %v2989 = vsub.s32 0, %v2988
      %v2990 = vrot.slane %v2985, %v2989
      %v2991 = vlaneseq
      %v2992 = vshrl.u32 %v2991, 7
      %v2993 = vsub.s32 1, %v2992
      %v2994 = vrot.slane %v2985, %v2993
      %v2995 = vlaneseq
      %v2996 = vshrl.u32 %v2995, 7
      %v2997 = vsub.s32 2, %v2996
      %v2998 = vrot.slane %v2985, %v2997
      %v2999 = vlaneseq
      %v3000 = vshrl.u32 %v2999, 7
      %v3001 = vsub.s32 3, %v3000
      %v3002 = vrot.slane %v2985, %v3001
      %v3009 = vunpack.c.l.s4 1983009808
      %v3010 = vunpack.c.0.s8 %v3009
      %v3011 = vlaneseq
      %v3012 = vshrl.u32 %v3011, 7
      %v3013 = vsub.s32 %v3010, %v3012
      %v3014 = vrot.slane %v2908, %v3013
      %v3015 = vcombine.high %v3014, %v3014
      %v3017 = vsel %vm1541, %v3015, 0
      %v3020 = vsel %vm1544, %v2981, 0
      %v3023 = vsel %vm1544, %v2982, 0
      %v3026 = vsel %vm1544, %v2983, 0
      %v3029 = vsel %vm1544, %v2984, 0
      %3031 = vmatprep.subr.mxu0 %v2910
      %3032 = vmatpush1.msra.mxu0 %v2909
      %3033 = vmatprep.subr.mxu0 %v2914
      %3034 = vmatpush1.msra.mxu0 %v2913
      %3035 = vmatprep.subr.mxu0 %v2918
      %3036 = vmatpush1.msra.mxu0 %v2917
      %3037 = vmatprep.subr.mxu0 %v2922
      %3038 = vmatpush1.msra.mxu0 %v2921
      %3039 = vmatprep.subr.mxu0 %v2926
      %3040 = vmatpush1.msra.mxu0 %v2925
      %3041 = vmatprep.subr.mxu0 %v2930
      %3042 = vmatpush1.msra.mxu0 %v2929
      %3043 = vmatprep.subr.mxu0 %v2934
      %3044 = vmatpush1.msra.mxu0 %v2933
      %3045 = vmatprep.subr.mxu0 %v2938
      %3046 = vmatpush1.msra.mxu0 %v2937
      %3047 = vmatprep.subr.mxu0 %v2942
      %3048 = vmatpush1.msra.mxu0 %v2941
      %3049 = vmatprep.subr.mxu0 %v2946
      %3050 = vmatpush1.msra.mxu0 %v2945
      %3051 = vmatprep.subr.mxu0 %v2950
      %3052 = vmatpush1.msra.mxu0 %v2949
      %3053 = vmatprep.subr.mxu0 %v2954
      %3054 = vmatpush1.msra.mxu0 %v2953
      %3055 = vmatprep.subr.mxu0 %v2958
      %3056 = vmatpush1.msra.mxu0 %v2957
      %3057 = vmatprep.subr.mxu0 %v2962
      %3058 = vmatpush1.msra.mxu0 %v2961
      %3059 = vmatprep.subr.mxu0 %v2966
      %3060 = vmatpush1.msra.mxu0 %v2965
      %3061 = vmatprep.subr.mxu0 %v2970
      %3062 = vmatpush1.msra.mxu0 %v2969
      %3063 = vmatprep.subr.mxu0 %v2974
      %3064 = vmatpush1.msra.mxu0 %v2973
      %3065 = vmatprep.subr.mxu0 %v2978
      %3066 = vmatpush1.msra.mxu0 %v2977
      %3067 = vmatprep.subr.mxu0 %v3023
      %3068 = vmatpush1.msra.mxu0 %v3020
      %3069 = vmatprep.subr.mxu0 0.0
      %3070 = vmatpush1.msra.mxu0 0.0
      %3071 = vmatprep.subr.mxu0 0.0
      %3072 = vmatpush1.msra.mxu0 0.0
      %3073 = vmatprep.subr.mxu0 0.0
      %3074 = vmatpush1.msra.mxu0 0.0
      %3075 = vmatprep.subr.mxu0 0.0
      %3076 = vmatpush1.msra.mxu0 0.0
      %3077 = vmatprep.subr.mxu0 0.0
      %3078 = vmatpush1.msra.mxu0 0.0
      %3079 = vmatprep.subr.mxu0 0.0
      %3080 = vmatpush1.msra.mxu0 0.0
      %3081 = vmatprep.subr.mxu0 0.0
      %3082 = vmatpush1.msra.mxu0 0.0
      %3083 = vmatprep.subr.mxu0 0.0
      %3084 = vmatpush1.msra.mxu0 0.0
      %3085 = vmatprep.subr.mxu0 0.0
      %3086 = vmatpush1.msra.mxu0 0.0
      %3087 = vmatprep.subr.mxu0 0.0
      %3088 = vmatpush1.msra.mxu0 0.0
      %3089 = vmatprep.subr.mxu0 0.0
      %3090 = vmatpush1.msra.mxu0 0.0
      %3091 = vmatprep.subr.mxu0 0.0
      %3092 = vmatpush1.msra.mxu0 0.0
      %3093 = vmatprep.subr.mxu0 0.0
      %3094 = vmatpush1.msra.mxu0 0.0
      %3095 = vmatprep.mubr.f32.mxu0 %v3017
      %3096 = vmatmul.mubr.f32.gmra.mrb[0].mxu0 %v3014
      %v3097 = vpop.f32.mrb[0].mxu0
      %v3098 = vadd.f32 %v2990, %v3097
      %v3099 = vpop.f32.mrb[0].mxu0
      %v3100 = vadd.f32 %v2994, %v3099
      %3101 = vdwg.mxu0
      %3102 = vmatprep.subr.mxu0 %v2912
      %3103 = vmatpush1.msra.mxu0 %v2911
      %3104 = vmatprep.subr.mxu0 %v2916
      %3105 = vmatpush1.msra.mxu0 %v2915
      %3106 = vmatprep.subr.mxu0 %v2920
      %3107 = vmatpush1.msra.mxu0 %v2919
      %3108 = vmatprep.subr.mxu0 %v2924
      %3109 = vmatpush1.msra.mxu0 %v2923
      %3110 = vmatprep.subr.mxu0 %v2928
      %3111 = vmatpush1.msra.mxu0 %v2927
      %3112 = vmatprep.subr.mxu0 %v2932
      %3113 = vmatpush1.msra.mxu0 %v2931
      %3114 = vmatprep.subr.mxu0 %v2936
      %3115 = vmatpush1.msra.mxu0 %v2935
      %3116 = vmatprep.subr.mxu0 %v2940
      %3117 = vmatpush1.msra.mxu0 %v2939
      %3118 = vmatprep.subr.mxu0 %v2944
      %3119 = vmatpush1.msra.mxu0 %v2943
      %3120 = vmatprep.subr.mxu0 %v2948
      %3121 = vmatpush1.msra.mxu0 %v2947
      %3122 = vmatprep.subr.mxu0 %v2952
      %3123 = vmatpush1.msra.mxu0 %v2951
      %3124 = vmatprep.subr.mxu0 %v2956
      %3125 = vmatpush1.msra.mxu0 %v2955
      %3126 = vmatprep.subr.mxu0 %v2960
      %3127 = vmatpush1.msra.mxu0 %v2959
      %3128 = vmatprep.subr.mxu0 %v2964
      %3129 = vmatpush1.msra.mxu0 %v2963
      %3130 = vmatprep.subr.mxu0 %v2968
      %3131 = vmatpush1.msra.mxu0 %v2967
      %3132 = vmatprep.subr.mxu0 %v2972
      %3133 = vmatpush1.msra.mxu0 %v2971
      %3134 = vmatprep.subr.mxu0 %v2976
      %3135 = vmatpush1.msra.mxu0 %v2975
      %3136 = vmatprep.subr.mxu0 %v2980
      %3137 = vmatpush1.msra.mxu0 %v2979
      %3138 = vmatprep.subr.mxu0 %v3029
      %3139 = vmatpush1.msra.mxu0 %v3026
      %3140 = vmatprep.subr.mxu0 0.0
      %3141 = vmatpush1.msra.mxu0 0.0
      %3142 = vmatprep.subr.mxu0 0.0
      %3143 = vmatpush1.msra.mxu0 0.0
      %3144 = vmatprep.subr.mxu0 0.0
      %3145 = vmatpush1.msra.mxu0 0.0
      %3146 = vmatprep.subr.mxu0 0.0
      %3147 = vmatpush1.msra.mxu0 0.0
      %3148 = vmatprep.subr.mxu0 0.0
      %3149 = vmatpush1.msra.mxu0 0.0
      %3150 = vmatprep.subr.mxu0 0.0
      %3151 = vmatpush1.msra.mxu0 0.0
      %3152 = vmatprep.subr.mxu0 0.0
      %3153 = vmatpush1.msra.mxu0 0.0
      %3154 = vmatprep.subr.mxu0 0.0
      %3155 = vmatpush1.msra.mxu0 0.0
      %3156 = vmatprep.subr.mxu0 0.0
      %3157 = vmatpush1.msra.mxu0 0.0
      %3158 = vmatprep.subr.mxu0 0.0
      %3159 = vmatpush1.msra.mxu0 0.0
      %3160 = vmatprep.subr.mxu0 0.0
      %3161 = vmatpush1.msra.mxu0 0.0
      %3162 = vmatprep.subr.mxu0 0.0
      %3163 = vmatpush1.msra.mxu0 0.0
      %3164 = vmatprep.subr.mxu0 0.0
      %3165 = vmatpush1.msra.mxu0 0.0
      %3166 = vmatprep.mubr.f32.mxu0 %v3017
      %3167 = vmatmul.mubr.f32.gmra.mrb[0].mxu0 %v3014
      %v3168 = vpop.f32.mrb[0].mxu0
      %v3169 = vadd.f32 %v2998, %v3168
      %v3170 = vpop.f32.mrb[0].mxu0
      %v3171 = vadd.f32 %v3002, %v3170
      %3172 = vdwg.mxu0
      %v3173 = vadd.f32 %v2904, %v3098
      %v3174 = vadd.f32 %v2905, %v3100
      %v3175 = vxor.u32 %v3173, 2147483648
      %v3176 = vxor.u32 %v3174, 2147483648
      %v3177 = vmul.f32 %v3175, 1.442695
      %v3178 = vpow.pop %v3177
      %v3179 = vmul.f32 %v3176, 1.442695
      %v3180 = vpow.pop %v3179
      %v3181 = vadd.f32 %v3178, 1.0
      %v3182 = vadd.f32 %v3180, 1.0
      %v3183 = vrcp.pop %v3181
      %v3184 = vmul.f32 1.0, %v3183
      %v3185 = vrcp.pop %v3182
      %v3186 = vmul.f32 1.0, %v3185
      %v3187 = vadd.f32 %v2906, %v3169
      %v3188 = vxor.u32 %v3187, 2147483648
      %v3189 = vmul.f32 %v3188, 1.442695
      %v3190 = vpow.pop %v3189
      %v3191 = vadd.f32 %v3190, 1.0
      %v3192 = vrcp.pop %v3191
      %v3193 = vmul.f32 1.0, %v3192
      %3196 = vrot.lane.b32.xlu0 %v3169, 84
      %v3197 = vpop.permute.xlu0 %3196
      %3198 = vrot.lane.b32.xlu0 %v3171, 84
      %v3199 = vpop.permute.xlu0 %3198
      %v3200 = vsel %vm1726, %v3197, %v3199
      %v3203 = vmul.f32 %v3184, %v3200
      %v3204 = vmul.f32 %v3186, %v3199
      %3207 = vrot.lane.b32.xlu0 %v3203, 44
      %v3208 = vpop.permute.xlu0 %3207
      %3209 = vrot.lane.b32.xlu0 %v3204, 44
      %v3210 = vpop.permute.xlu0 %3209
      %v3211 = vsel %vm1738, %v3208, %v3210
      %v3214 = vadd.f32 %v2906, %v3208
      %v3215 = vadd.f32 %v2907, %v3211
      %v3216 = vtanh.pop %v3214
      %v3217 = vtanh.pop %v3215
      %v3218 = vsub.f32 1.0, %v3186
      %v3219 = vsub.f32 1.0, %v3193
      %3222 = vrot.lane.b32.xlu0 %v3216, 106
      %v3223 = vpop.permute.xlu0 %3222
      %3224 = vrot.lane.b32.xlu0 %v3217, 106
      %v3225 = vpop.permute.xlu0 %3224
      %v3226 = vsel %vm1754, %v3223, %v3225
      %v3229 = vmul.f32 %v3218, %v3226
      %v3230 = vmul.f32 %v3219, %v3225
      %3231 = vrot.lane.b32.xlu0 %v3014, 22
      %v3232 = vpop.permute.xlu0 %3231
      %3233 = vrot.lane.b32.xlu0 %v3015, 22
      %v3234 = vpop.permute.xlu0 %3233
      %v3235 = vsel %vm1541, %v3232, %v3234
      %v3238 = vmul.f32 %v3186, %v3232
      %v3239 = vmul.f32 %v3193, %v3235
      %v3240 = vadd.f32 %v3229, %v3238
      %v3241 = vadd.f32 %v3230, %v3239
      %v3244 = vcombine.low %v3240, %v3241
      %v3246 = vunpack.c.l.s4 1983009808
      %v3247 = vunpack.c.0.s8 %v3246
      %v3248 = vlaneseq
      %v3249 = vshrl.u32 %v3248, 7
      %v3250 = vsub.s32 %v3247, %v3249
      %v3251 = vrot.slane %v3244, %v3250
      %3252 = vrot.lane.b32.xlu0 %v3251, 106
      %v3253 = vpop.permute.xlu0 %3252
      %v3254 = vrot.slane %v3253, 2
      %v3255 = vsel %vm1754, %v3253, %v3254
      %3257 = vst.msk [vmem:[#allocation2] sm:$0xf] %vm1426, %v3255
      %s3258 = scalar_lea.vmem %s832, 16
      %3259 = vst.msk [vmem:[%s3258] sm:$0xf] %vm1426, %v3255
      %v3260 = vld [vmem:[#allocation3 + $0x20] sm:$0xc]
      %v3261 = vld [vmem:[#allocation3 + $0x28] sm:$0xc]
      %v3262 = vld [vmem:[#allocation3 + $0x30] sm:$0xc]
      %v3263 = vld [vmem:[#allocation3 + $0x38] sm:$0xc]
      %v3264 = vld [vmem:[#allocation2] sm:$0xf]
      %v3265 = vld [vmem:[%s769] sm:$0xff]
      %v3266 = vld [vmem:[%s769 + $0x8] sm:$0xff]
      %v3267 = vld [vmem:[%s769 + $0x10] sm:$0xff]
      %v3268 = vld [vmem:[%s769 + $0x18] sm:$0xff]
      %v3269 = vld [vmem:[%s769 + $0x20] sm:$0xff]
      %v3270 = vld [vmem:[%s769 + $0x28] sm:$0xff]
      %v3271 = vld [vmem:[%s769 + $0x30] sm:$0xff]
      %v3272 = vld [vmem:[%s769 + $0x38] sm:$0xff]
      %v3273 = vld [vmem:[%s769 + $0x40] sm:$0xff]
      %v3274 = vld [vmem:[%s769 + $0x48] sm:$0xff]
      %v3275 = vld [vmem:[%s769 + $0x50] sm:$0xff]
      %v3276 = vld [vmem:[%s769 + $0x58] sm:$0xff]
      %v3277 = vld [vmem:[%s769 + $0x60] sm:$0xff]
      %v3278 = vld [vmem:[%s769 + $0x68] sm:$0xff]
      %v3279 = vld [vmem:[%s769 + $0x70] sm:$0xff]
      %v3280 = vld [vmem:[%s769 + $0x78] sm:$0xff]
      %v3281 = vld [vmem:[%s769 + $0x80] sm:$0xff]
      %v3282 = vld [vmem:[%s769 + $0x88] sm:$0xff]
      %v3283 = vld [vmem:[%s769 + $0x90] sm:$0xff]
      %v3284 = vld [vmem:[%s769 + $0x98] sm:$0xff]
      %v3285 = vld [vmem:[%s769 + $0xa0] sm:$0xff]
      %v3286 = vld [vmem:[%s769 + $0xa8] sm:$0xff]
      %v3287 = vld [vmem:[%s769 + $0xb0] sm:$0xff]
      %v3288 = vld [vmem:[%s769 + $0xb8] sm:$0xff]
      %v3289 = vld [vmem:[%s769 + $0xc0] sm:$0xff]
      %v3290 = vld [vmem:[%s769 + $0xc8] sm:$0xff]
      %v3291 = vld [vmem:[%s769 + $0xd0] sm:$0xff]
      %v3292 = vld [vmem:[%s769 + $0xd8] sm:$0xff]
      %v3293 = vld [vmem:[%s769 + $0xe0] sm:$0xff]
      %v3294 = vld [vmem:[%s769 + $0xe8] sm:$0xff]
      %v3295 = vld [vmem:[%s769 + $0xf0] sm:$0xff]
      %v3296 = vld [vmem:[%s769 + $0xf8] sm:$0xff]
      %v3297 = vld [vmem:[%s769 + $0x100] sm:$0xff]
      %v3298 = vld [vmem:[%s769 + $0x108] sm:$0xff]
      %v3299 = vld [vmem:[%s769 + $0x110] sm:$0xff]
      %v3300 = vld [vmem:[%s769 + $0x118] sm:$0xff]
      %v3301 = vld [vmem:[%s769 + $0x120] sm:$0xff]
      %v3302 = vld [vmem:[%s769 + $0x128] sm:$0xff]
      %v3303 = vld [vmem:[%s769 + $0x130] sm:$0xff]
      %v3304 = vld [vmem:[%s769 + $0x138] sm:$0xff]
      %v3305 = vld [vmem:[%s769 + $0x140] sm:$0xff]
      %v3306 = vld [vmem:[%s769 + $0x148] sm:$0xff]
      %v3307 = vld [vmem:[%s769 + $0x150] sm:$0xff]
      %v3308 = vld [vmem:[%s769 + $0x158] sm:$0xff]
      %v3309 = vld [vmem:[%s769 + $0x160] sm:$0xff]
      %v3310 = vld [vmem:[%s769 + $0x168] sm:$0xff]
      %v3311 = vld [vmem:[%s769 + $0x170] sm:$0xff]
      %v3312 = vld [vmem:[%s769 + $0x178] sm:$0xff]
      %v3313 = vld [vmem:[%s769 + $0x180] sm:$0xff]
      %v3314 = vld [vmem:[%s769 + $0x188] sm:$0xff]
      %v3315 = vld [vmem:[%s769 + $0x190] sm:$0xff]
      %v3316 = vld [vmem:[%s769 + $0x198] sm:$0xff]
      %v3317 = vld [vmem:[%s769 + $0x1a0] sm:$0xff]
      %v3318 = vld [vmem:[%s769 + $0x1a8] sm:$0xff]
      %v3319 = vld [vmem:[%s769 + $0x1b0] sm:$0xff]
      %v3320 = vld [vmem:[%s769 + $0x1b8] sm:$0xff]
      %v3321 = vld [vmem:[%s769 + $0x1c0] sm:$0xff]
      %v3322 = vld [vmem:[%s769 + $0x1c8] sm:$0xff]
      %v3323 = vld [vmem:[%s769 + $0x1d0] sm:$0xff]
      %v3324 = vld [vmem:[%s769 + $0x1d8] sm:$0xff]
      %v3325 = vld [vmem:[%s769 + $0x1e0] sm:$0xff]
      %v3326 = vld [vmem:[%s769 + $0x1e8] sm:$0xff]
      %v3327 = vld [vmem:[%s769 + $0x1f0] sm:$0xff]
      %v3328 = vld [vmem:[%s769 + $0x1f8] sm:$0xff]
      %v3329 = vld [vmem:[%s769 + $0x200] sm:$0xff]
      %v3330 = vld [vmem:[%s769 + $0x208] sm:$0xff]
      %v3331 = vld [vmem:[%s769 + $0x210] sm:$0xff]
      %v3332 = vld [vmem:[%s769 + $0x218] sm:$0xff]
      %v3333 = vld [vmem:[%s769 + $0x220] sm:$0xff]
      %v3334 = vld [vmem:[%s769 + $0x228] sm:$0xff]
      %v3335 = vld [vmem:[%s769 + $0x230] sm:$0xff]
      %v3336 = vld [vmem:[%s769 + $0x238] sm:$0xff]
      %v3337 = vld [vmem:[%s769 + $0x240] sm:$0x3f]
      %v3338 = vld [vmem:[%s769 + $0x248] sm:$0x3f]
      %v3339 = vld [vmem:[%s769 + $0x250] sm:$0x3f]
      %v3340 = vld [vmem:[%s769 + $0x258] sm:$0x3f]
      %v3341 = vld [vmem:[%s777] sm:$0xf]
      %v3343 = vlaneseq
      %v3344 = vshrl.u32 %v3343, 7
      %v3345 = vsub.s32 0, %v3344
      %v3346 = vrot.slane %v3341, %v3345
      %v3347 = vlaneseq
      %v3348 = vshrl.u32 %v3347, 7
      %v3349 = vsub.s32 1, %v3348
      %v3350 = vrot.slane %v3341, %v3349
      %v3351 = vlaneseq
      %v3352 = vshrl.u32 %v3351, 7
      %v3353 = vsub.s32 2, %v3352
      %v3354 = vrot.slane %v3341, %v3353
      %v3355 = vlaneseq
      %v3356 = vshrl.u32 %v3355, 7
      %v3357 = vsub.s32 3, %v3356
      %v3358 = vrot.slane %v3341, %v3357
      %v3365 = vunpack.c.l.s4 1983009808
      %v3366 = vunpack.c.0.s8 %v3365
      %v3367 = vlaneseq
      %v3368 = vshrl.u32 %v3367, 7
      %v3369 = vsub.s32 %v3366, %v3368
      %v3370 = vrot.slane %v3264, %v3369
      %v3371 = vcombine.high %v3370, %v3370
      %v3373 = vsel %vm1541, %v3371, 0
      %v3376 = vsel %vm1544, %v3337, 0
      %v3379 = vsel %vm1544, %v3338, 0
      %v3382 = vsel %vm1544, %v3339, 0
      %v3385 = vsel %vm1544, %v3340, 0
      %3387 = vmatprep.subr.mxu0 %v3266
      %3388 = vmatpush1.msra.mxu0 %v3265
      %3389 = vmatprep.subr.mxu0 %v3270
      %3390 = vmatpush1.msra.mxu0 %v3269
      %3391 = vmatprep.subr.mxu0 %v3274
      %3392 = vmatpush1.msra.mxu0 %v3273
      %3393 = vmatprep.subr.mxu0 %v3278
      %3394 = vmatpush1.msra.mxu0 %v3277
      %3395 = vmatprep.subr.mxu0 %v3282
      %3396 = vmatpush1.msra.mxu0 %v3281
      %3397 = vmatprep.subr.mxu0 %v3286
      %3398 = vmatpush1.msra.mxu0 %v3285
      %3399 = vmatprep.subr.mxu0 %v3290
      %3400 = vmatpush1.msra.mxu0 %v3289
      %3401 = vmatprep.subr.mxu0 %v3294
      %3402 = vmatpush1.msra.mxu0 %v3293
      %3403 = vmatprep.subr.mxu0 %v3298
      %3404 = vmatpush1.msra.mxu0 %v3297
      %3405 = vmatprep.subr.mxu0 %v3302
      %3406 = vmatpush1.msra.mxu0 %v3301
      %3407 = vmatprep.subr.mxu0 %v3306
      %3408 = vmatpush1.msra.mxu0 %v3305
      %3409 = vmatprep.subr.mxu0 %v3310
      %3410 = vmatpush1.msra.mxu0 %v3309
      %3411 = vmatprep.subr.mxu0 %v3314
      %3412 = vmatpush1.msra.mxu0 %v3313
      %3413 = vmatprep.subr.mxu0 %v3318
      %3414 = vmatpush1.msra.mxu0 %v3317
      %3415 = vmatprep.subr.mxu0 %v3322
      %3416 = vmatpush1.msra.mxu0 %v3321
      %3417 = vmatprep.subr.mxu0 %v3326
      %3418 = vmatpush1.msra.mxu0 %v3325
      %3419 = vmatprep.subr.mxu0 %v3330
      %3420 = vmatpush1.msra.mxu0 %v3329
      %3421 = vmatprep.subr.mxu0 %v3334
      %3422 = vmatpush1.msra.mxu0 %v3333
      %3423 = vmatprep.subr.mxu0 %v3379
      %3424 = vmatpush1.msra.mxu0 %v3376
      %3425 = vmatprep.subr.mxu0 0.0
      %3426 = vmatpush1.msra.mxu0 0.0
      %3427 = vmatprep.subr.mxu0 0.0
      %3428 = vmatpush1.msra.mxu0 0.0
      %3429 = vmatprep.subr.mxu0 0.0
      %3430 = vmatpush1.msra.mxu0 0.0
      %3431 = vmatprep.subr.mxu0 0.0
      %3432 = vmatpush1.msra.mxu0 0.0
      %3433 = vmatprep.subr.mxu0 0.0
      %3434 = vmatpush1.msra.mxu0 0.0
      %3435 = vmatprep.subr.mxu0 0.0
      %3436 = vmatpush1.msra.mxu0 0.0
      %3437 = vmatprep.subr.mxu0 0.0
      %3438 = vmatpush1.msra.mxu0 0.0
      %3439 = vmatprep.subr.mxu0 0.0
      %3440 = vmatpush1.msra.mxu0 0.0
      %3441 = vmatprep.subr.mxu0 0.0
      %3442 = vmatpush1.msra.mxu0 0.0
      %3443 = vmatprep.subr.mxu0 0.0
      %3444 = vmatpush1.msra.mxu0 0.0
      %3445 = vmatprep.subr.mxu0 0.0
      %3446 = vmatpush1.msra.mxu0 0.0
      %3447 = vmatprep.subr.mxu0 0.0
      %3448 = vmatpush1.msra.mxu0 0.0
      %3449 = vmatprep.subr.mxu0 0.0
      %3450 = vmatpush1.msra.mxu0 0.0
      %3451 = vmatprep.mubr.f32.mxu0 %v3373
      %3452 = vmatmul.mubr.f32.gmra.mrb[0].mxu0 %v3370
      %v3453 = vpop.f32.mrb[0].mxu0
      %v3454 = vadd.f32 %v3346, %v3453
      %v3455 = vpop.f32.mrb[0].mxu0
      %v3456 = vadd.f32 %v3350, %v3455
      %3457 = vdwg.mxu0
      %3458 = vmatprep.subr.mxu0 %v3268
      %3459 = vmatpush1.msra.mxu0 %v3267
      %3460 = vmatprep.subr.mxu0 %v3272
      %3461 = vmatpush1.msra.mxu0 %v3271
      %3462 = vmatprep.subr.mxu0 %v3276
      %3463 = vmatpush1.msra.mxu0 %v3275
      %3464 = vmatprep.subr.mxu0 %v3280
      %3465 = vmatpush1.msra.mxu0 %v3279
      %3466 = vmatprep.subr.mxu0 %v3284
      %3467 = vmatpush1.msra.mxu0 %v3283
      %3468 = vmatprep.subr.mxu0 %v3288
      %3469 = vmatpush1.msra.mxu0 %v3287
      %3470 = vmatprep.subr.mxu0 %v3292
      %3471 = vmatpush1.msra.mxu0 %v3291
      %3472 = vmatprep.subr.mxu0 %v3296
      %3473 = vmatpush1.msra.mxu0 %v3295
      %3474 = vmatprep.subr.mxu0 %v3300
      %3475 = vmatpush1.msra.mxu0 %v3299
      %3476 = vmatprep.subr.mxu0 %v3304
      %3477 = vmatpush1.msra.mxu0 %v3303
      %3478 = vmatprep.subr.mxu0 %v3308
      %3479 = vmatpush1.msra.mxu0 %v3307
      %3480 = vmatprep.subr.mxu0 %v3312
      %3481 = vmatpush1.msra.mxu0 %v3311
      %3482 = vmatprep.subr.mxu0 %v3316
      %3483 = vmatpush1.msra.mxu0 %v3315
      %3484 = vmatprep.subr.mxu0 %v3320
      %3485 = vmatpush1.msra.mxu0 %v3319
      %3486 = vmatprep.subr.mxu0 %v3324
      %3487 = vmatpush1.msra.mxu0 %v3323
      %3488 = vmatprep.subr.mxu0 %v3328
      %3489 = vmatpush1.msra.mxu0 %v3327
      %3490 = vmatprep.subr.mxu0 %v3332
      %3491 = vmatpush1.msra.mxu0 %v3331
      %3492 = vmatprep.subr.mxu0 %v3336
      %3493 = vmatpush1.msra.mxu0 %v3335
      %3494 = vmatprep.subr.mxu0 %v3385
      %3495 = vmatpush1.msra.mxu0 %v3382
      %3496 = vmatprep.subr.mxu0 0.0
      %3497 = vmatpush1.msra.mxu0 0.0
      %3498 = vmatprep.subr.mxu0 0.0
      %3499 = vmatpush1.msra.mxu0 0.0
      %3500 = vmatprep.subr.mxu0 0.0
      %3501 = vmatpush1.msra.mxu0 0.0
      %3502 = vmatprep.subr.mxu0 0.0
      %3503 = vmatpush1.msra.mxu0 0.0
      %3504 = vmatprep.subr.mxu0 0.0
      %3505 = vmatpush1.msra.mxu0 0.0
      %3506 = vmatprep.subr.mxu0 0.0
      %3507 = vmatpush1.msra.mxu0 0.0
      %3508 = vmatprep.subr.mxu0 0.0
      %3509 = vmatpush1.msra.mxu0 0.0
      %3510 = vmatprep.subr.mxu0 0.0
      %3511 = vmatpush1.msra.mxu0 0.0
      %3512 = vmatprep.subr.mxu0 0.0
      %3513 = vmatpush1.msra.mxu0 0.0
      %3514 = vmatprep.subr.mxu0 0.0
      %3515 = vmatpush1.msra.mxu0 0.0
      %3516 = vmatprep.subr.mxu0 0.0
      %3517 = vmatpush1.msra.mxu0 0.0
      %3518 = vmatprep.subr.mxu0 0.0
      %3519 = vmatpush1.msra.mxu0 0.0
      %3520 = vmatprep.subr.mxu0 0.0
      %3521 = vmatpush1.msra.mxu0 0.0
      %3522 = vmatprep.mubr.f32.mxu0 %v3373
      %3523 = vmatmul.mubr.f32.gmra.mrb[0].mxu0 %v3370
      %v3524 = vpop.f32.mrb[0].mxu0
      %v3525 = vadd.f32 %v3354, %v3524
      %v3526 = vpop.f32.mrb[0].mxu0
      %v3527 = vadd.f32 %v3358, %v3526
      %3528 = vdwg.mxu0
      %v3531 = vrot.slane %v3454, 6
      %v3532 = vrot.slane %v3456, 6
      %v3535 = vadd.f32 %v3260, %v3531
      %v3536 = vadd.f32 %v3261, %v3532
      %v3537 = vxor.u32 %v3535, 2147483648
      %v3538 = vxor.u32 %v3536, 2147483648
      %v3539 = vmul.f32 %v3537, 1.442695
      %v3540 = vpow.pop %v3539
      %v3541 = vmul.f32 %v3538, 1.442695
      %v3542 = vpow.pop %v3541
      %v3543 = vadd.f32 %v3540, 1.0
      %v3544 = vadd.f32 %v3542, 1.0
      %v3545 = vrcp.pop %v3543
      %v3546 = vmul.f32 1.0, %v3545
      %v3547 = vrcp.pop %v3544
      %v3548 = vmul.f32 1.0, %v3547
      %v3550 = vrot.slane %v3525, 6
      %v3552 = vadd.f32 %v3262, %v3550
      %v3553 = vxor.u32 %v3552, 2147483648
      %v3554 = vmul.f32 %v3553, 1.442695
      %v3555 = vpow.pop %v3554
      %v3556 = vadd.f32 %v3555, 1.0
      %v3557 = vrcp.pop %v3556
      %v3558 = vmul.f32 1.0, %v3557
      %v3560 = vrot.slane %v3527, 6
      %3561 = vrot.lane.b32.xlu0 %v3550, 84
      %v3562 = vpop.permute.xlu0 %3561
      %3563 = vrot.lane.b32.xlu0 %v3560, 84
      %v3564 = vpop.permute.xlu0 %3563
      %v3565 = vsel %vm1726, %v3562, %v3564
      %v3568 = vmul.f32 %v3546, %v3565
      %v3569 = vmul.f32 %v3548, %v3564
      %3572 = vrot.lane.b32.xlu0 %v3568, 44
      %v3573 = vpop.permute.xlu0 %3572
      %3574 = vrot.lane.b32.xlu0 %v3569, 44
      %v3575 = vpop.permute.xlu0 %3574
      %v3576 = vsel %vm1738, %v3573, %v3575
      %v3579 = vadd.f32 %v3262, %v3573
      %v3580 = vadd.f32 %v3263, %v3576
      %v3581 = vtanh.pop %v3579
      %v3582 = vtanh.pop %v3580
      %v3583 = vsub.f32 1.0, %v3548
      %v3584 = vsub.f32 1.0, %v3558
      %3587 = vrot.lane.b32.xlu0 %v3581, 106
      %v3588 = vpop.permute.xlu0 %3587
      %3589 = vrot.lane.b32.xlu0 %v3582, 106
      %v3590 = vpop.permute.xlu0 %3589
      %v3591 = vsel %vm1754, %v3588, %v3590
      %v3594 = vmul.f32 %v3583, %v3591
      %v3595 = vmul.f32 %v3584, %v3590
      %v3596 = vcombine.low %v3264, %v3264
      %v3598 = vunpack.c.l.s4 1983009808
      %v3599 = vunpack.c.0.s8 %v3598
      %v3600 = vlaneseq
      %v3601 = vshrl.u32 %v3600, 7
      %v3602 = vsub.s32 %v3599, %v3601
      %v3603 = vrot.slane %v3596, %v3602
      %v3604 = vcombine.high %v3603, %v3603
      %3605 = vrot.lane.b32.xlu0 %v3603, 22
      %v3606 = vpop.permute.xlu0 %3605
      %3607 = vrot.lane.b32.xlu0 %v3604, 22
      %v3608 = vpop.permute.xlu0 %3607
      %v3609 = vsel %vm1541, %v3606, %v3608
      %v3612 = vmul.f32 %v3548, %v3606
      %v3613 = vmul.f32 %v3558, %v3609
      %v3614 = vadd.f32 %v3594, %v3612
      %v3615 = vadd.f32 %v3595, %v3613
      %v3618 = vcombine.low %v3614, %v3615
      %v3620 = vunpack.c.l.s4 1983009808
      %v3621 = vunpack.c.0.s8 %v3620
      %v3622 = vlaneseq
      %v3623 = vshrl.u32 %v3622, 7
      %v3624 = vsub.s32 %v3621, %v3623
      %v3625 = vrot.slane %v3618, %v3624
      %v3626 = vcombine.high %v3625, %v3625
      %3627 = vrot.lane.b32.xlu0 %v3626, 106
      %v3628 = vpop.permute.xlu0 %3627
      %v3629 = vrot.slane %v3628, 2
      %v3630 = vsel %vm1754, %v3628, %v3629
      %3632 = vst.msk [vmem:[#allocation2] sm:$0xf] %vm1426, %v3630
      %s3633 = scalar_lea.vmem %s832, 20
      %3634 = vst.msk [vmem:[%s3633] sm:$0xf] %vm1426, %v3630
      %v3635 = vld [vmem:[#allocation3 + $0x20] sm:$0x30]
      %v3636 = vld [vmem:[#allocation3 + $0x28] sm:$0x30]
      %v3637 = vld [vmem:[#allocation3 + $0x30] sm:$0x30]
      %v3638 = vld [vmem:[#allocation3 + $0x38] sm:$0x30]
      %v3639 = vld [vmem:[#allocation2] sm:$0xf]
      %v3640 = vld [vmem:[%s769] sm:$0xff]
      %v3641 = vld [vmem:[%s769 + $0x8] sm:$0xff]
      %v3642 = vld [vmem:[%s769 + $0x10] sm:$0xff]
      %v3643 = vld [vmem:[%s769 + $0x18] sm:$0xff]
      %v3644 = vld [vmem:[%s769 + $0x20] sm:$0xff]
      %v3645 = vld [vmem:[%s769 + $0x28] sm:$0xff]
      %v3646 = vld [vmem:[%s769 + $0x30] sm:$0xff]
      %v3647 = vld [vmem:[%s769 + $0x38] sm:$0xff]
      %v3648 = vld [vmem:[%s769 + $0x40] sm:$0xff]
      %v3649 = vld [vmem:[%s769 + $0x48] sm:$0xff]
      %v3650 = vld [vmem:[%s769 + $0x50] sm:$0xff]
      %v3651 = vld [vmem:[%s769 + $0x58] sm:$0xff]
      %v3652 = vld [vmem:[%s769 + $0x60] sm:$0xff]
      %v3653 = vld [vmem:[%s769 + $0x68] sm:$0xff]
      %v3654 = vld [vmem:[%s769 + $0x70] sm:$0xff]
      %v3655 = vld [vmem:[%s769 + $0x78] sm:$0xff]
      %v3656 = vld [vmem:[%s769 + $0x80] sm:$0xff]
      %v3657 = vld [vmem:[%s769 + $0x88] sm:$0xff]
      %v3658 = vld [vmem:[%s769 + $0x90] sm:$0xff]
      %v3659 = vld [vmem:[%s769 + $0x98] sm:$0xff]
      %v3660 = vld [vmem:[%s769 + $0xa0] sm:$0xff]
      %v3661 = vld [vmem:[%s769 + $0xa8] sm:$0xff]
      %v3662 = vld [vmem:[%s769 + $0xb0] sm:$0xff]
      %v3663 = vld [vmem:[%s769 + $0xb8] sm:$0xff]
      %v3664 = vld [vmem:[%s769 + $0xc0] sm:$0xff]
      %v3665 = vld [vmem:[%s769 + $0xc8] sm:$0xff]
      %v3666 = vld [vmem:[%s769 + $0xd0] sm:$0xff]
      %v3667 = vld [vmem:[%s769 + $0xd8] sm:$0xff]
      %v3668 = vld [vmem:[%s769 + $0xe0] sm:$0xff]
      %v3669 = vld [vmem:[%s769 + $0xe8] sm:$0xff]
      %v3670 = vld [vmem:[%s769 + $0xf0] sm:$0xff]
      %v3671 = vld [vmem:[%s769 + $0xf8] sm:$0xff]
      %v3672 = vld [vmem:[%s769 + $0x100] sm:$0xff]
      %v3673 = vld [vmem:[%s769 + $0x108] sm:$0xff]
      %v3674 = vld [vmem:[%s769 + $0x110] sm:$0xff]
      %v3675 = vld [vmem:[%s769 + $0x118] sm:$0xff]
      %v3676 = vld [vmem:[%s769 + $0x120] sm:$0xff]
      %v3677 = vld [vmem:[%s769 + $0x128] sm:$0xff]
      %v3678 = vld [vmem:[%s769 + $0x130] sm:$0xff]
      %v3679 = vld [vmem:[%s769 + $0x138] sm:$0xff]
      %v3680 = vld [vmem:[%s769 + $0x140] sm:$0xff]
      %v3681 = vld [vmem:[%s769 + $0x148] sm:$0xff]
      %v3682 = vld [vmem:[%s769 + $0x150] sm:$0xff]
      %v3683 = vld [vmem:[%s769 + $0x158] sm:$0xff]
      %v3684 = vld [vmem:[%s769 + $0x160] sm:$0xff]
      %v3685 = vld [vmem:[%s769 + $0x168] sm:$0xff]
      %v3686 = vld [vmem:[%s769 + $0x170] sm:$0xff]
      %v3687 = vld [vmem:[%s769 + $0x178] sm:$0xff]
      %v3688 = vld [vmem:[%s769 + $0x180] sm:$0xff]
      %v3689 = vld [vmem:[%s769 + $0x188] sm:$0xff]
      %v3690 = vld [vmem:[%s769 + $0x190] sm:$0xff]
      %v3691 = vld [vmem:[%s769 + $0x198] sm:$0xff]
      %v3692 = vld [vmem:[%s769 + $0x1a0] sm:$0xff]
      %v3693 = vld [vmem:[%s769 + $0x1a8] sm:$0xff]
      %v3694 = vld [vmem:[%s769 + $0x1b0] sm:$0xff]
      %v3695 = vld [vmem:[%s769 + $0x1b8] sm:$0xff]
      %v3696 = vld [vmem:[%s769 + $0x1c0] sm:$0xff]
      %v3697 = vld [vmem:[%s769 + $0x1c8] sm:$0xff]
      %v3698 = vld [vmem:[%s769 + $0x1d0] sm:$0xff]
      %v3699 = vld [vmem:[%s769 + $0x1d8] sm:$0xff]
      %v3700 = vld [vmem:[%s769 + $0x1e0] sm:$0xff]
      %v3701 = vld [vmem:[%s769 + $0x1e8] sm:$0xff]
      %v3702 = vld [vmem:[%s769 + $0x1f0] sm:$0xff]
      %v3703 = vld [vmem:[%s769 + $0x1f8] sm:$0xff]
      %v3704 = vld [vmem:[%s769 + $0x200] sm:$0xff]
      %v3705 = vld [vmem:[%s769 + $0x208] sm:$0xff]
      %v3706 = vld [vmem:[%s769 + $0x210] sm:$0xff]
      %v3707 = vld [vmem:[%s769 + $0x218] sm:$0xff]
      %v3708 = vld [vmem:[%s769 + $0x220] sm:$0xff]
      %v3709 = vld [vmem:[%s769 + $0x228] sm:$0xff]
      %v3710 = vld [vmem:[%s769 + $0x230] sm:$0xff]
      %v3711 = vld [vmem:[%s769 + $0x238] sm:$0xff]
      %v3712 = vld [vmem:[%s769 + $0x240] sm:$0x3f]
      %v3713 = vld [vmem:[%s769 + $0x248] sm:$0x3f]
      %v3714 = vld [vmem:[%s769 + $0x250] sm:$0x3f]
      %v3715 = vld [vmem:[%s769 + $0x258] sm:$0x3f]
      %v3716 = vld [vmem:[%s777] sm:$0xf]
      %v3718 = vlaneseq
      %v3719 = vshrl.u32 %v3718, 7
      %v3720 = vsub.s32 0, %v3719
      %v3721 = vrot.slane %v3716, %v3720
      %v3722 = vlaneseq
      %v3723 = vshrl.u32 %v3722, 7
      %v3724 = vsub.s32 1, %v3723
      %v3725 = vrot.slane %v3716, %v3724
      %v3726 = vlaneseq
      %v3727 = vshrl.u32 %v3726, 7
      %v3728 = vsub.s32 2, %v3727
      %v3729 = vrot.slane %v3716, %v3728
      %v3730 = vlaneseq
      %v3731 = vshrl.u32 %v3730, 7
      %v3732 = vsub.s32 3, %v3731
      %v3733 = vrot.slane %v3716, %v3732
      %v3740 = vunpack.c.l.s4 1983009808
      %v3741 = vunpack.c.0.s8 %v3740
      %v3742 = vlaneseq
      %v3743 = vshrl.u32 %v3742, 7
      %v3744 = vsub.s32 %v3741, %v3743
      %v3745 = vrot.slane %v3639, %v3744
      %v3746 = vcombine.high %v3745, %v3745
      %v3748 = vsel %vm1541, %v3746, 0
      %v3751 = vsel %vm1544, %v3712, 0
      %v3754 = vsel %vm1544, %v3713, 0
      %v3757 = vsel %vm1544, %v3714, 0
      %v3760 = vsel %vm1544, %v3715, 0
      %3762 = vmatprep.subr.mxu0 %v3641
      %3763 = vmatpush1.msra.mxu0 %v3640
      %3764 = vmatprep.subr.mxu0 %v3645
      %3765 = vmatpush1.msra.mxu0 %v3644
      %3766 = vmatprep.subr.mxu0 %v3649
      %3767 = vmatpush1.msra.mxu0 %v3648
      %3768 = vmatprep.subr.mxu0 %v3653
      %3769 = vmatpush1.msra.mxu0 %v3652
      %3770 = vmatprep.subr.mxu0 %v3657
      %3771 = vmatpush1.msra.mxu0 %v3656
      %3772 = vmatprep.subr.mxu0 %v3661
      %3773 = vmatpush1.msra.mxu0 %v3660
      %3774 = vmatprep.subr.mxu0 %v3665
      %3775 = vmatpush1.msra.mxu0 %v3664
      %3776 = vmatprep.subr.mxu0 %v3669
      %3777 = vmatpush1.msra.mxu0 %v3668
      %3778 = vmatprep.subr.mxu0 %v3673
      %3779 = vmatpush1.msra.mxu0 %v3672
      %3780 = vmatprep.subr.mxu0 %v3677
      %3781 = vmatpush1.msra.mxu0 %v3676
      %3782 = vmatprep.subr.mxu0 %v3681
      %3783 = vmatpush1.msra.mxu0 %v3680
      %3784 = vmatprep.subr.mxu0 %v3685
      %3785 = vmatpush1.msra.mxu0 %v3684
      %3786 = vmatprep.subr.mxu0 %v3689
      %3787 = vmatpush1.msra.mxu0 %v3688
      %3788 = vmatprep.subr.mxu0 %v3693
      %3789 = vmatpush1.msra.mxu0 %v3692
      %3790 = vmatprep.subr.mxu0 %v3697
      %3791 = vmatpush1.msra.mxu0 %v3696
      %3792 = vmatprep.subr.mxu0 %v3701
      %3793 = vmatpush1.msra.mxu0 %v3700
      %3794 = vmatprep.subr.mxu0 %v3705
      %3795 = vmatpush1.msra.mxu0 %v3704
      %3796 = vmatprep.subr.mxu0 %v3709
      %3797 = vmatpush1.msra.mxu0 %v3708
      %3798 = vmatprep.subr.mxu0 %v3754
      %3799 = vmatpush1.msra.mxu0 %v3751
      %3800 = vmatprep.subr.mxu0 0.0
      %3801 = vmatpush1.msra.mxu0 0.0
      %3802 = vmatprep.subr.mxu0 0.0
      %3803 = vmatpush1.msra.mxu0 0.0
      %3804 = vmatprep.subr.mxu0 0.0
      %3805 = vmatpush1.msra.mxu0 0.0
      %3806 = vmatprep.subr.mxu0 0.0
      %3807 = vmatpush1.msra.mxu0 0.0
      %3808 = vmatprep.subr.mxu0 0.0
      %3809 = vmatpush1.msra.mxu0 0.0
      %3810 = vmatprep.subr.mxu0 0.0
      %3811 = vmatpush1.msra.mxu0 0.0
      %3812 = vmatprep.subr.mxu0 0.0
      %3813 = vmatpush1.msra.mxu0 0.0
      %3814 = vmatprep.subr.mxu0 0.0
      %3815 = vmatpush1.msra.mxu0 0.0
      %3816 = vmatprep.subr.mxu0 0.0
      %3817 = vmatpush1.msra.mxu0 0.0
      %3818 = vmatprep.subr.mxu0 0.0
      %3819 = vmatpush1.msra.mxu0 0.0
      %3820 = vmatprep.subr.mxu0 0.0
      %3821 = vmatpush1.msra.mxu0 0.0
      %3822 = vmatprep.subr.mxu0 0.0
      %3823 = vmatpush1.msra.mxu0 0.0
      %3824 = vmatprep.subr.mxu0 0.0
      %3825 = vmatpush1.msra.mxu0 0.0
      %3826 = vmatprep.mubr.f32.mxu0 %v3748
      %3827 = vmatmul.mubr.f32.gmra.mrb[0].mxu0 %v3745
      %v3828 = vpop.f32.mrb[0].mxu0
      %v3829 = vadd.f32 %v3721, %v3828
      %v3830 = vpop.f32.mrb[0].mxu0
      %v3831 = vadd.f32 %v3725, %v3830
      %3832 = vdwg.mxu0
      %3833 = vmatprep.subr.mxu0 %v3643
      %3834 = vmatpush1.msra.mxu0 %v3642
      %3835 = vmatprep.subr.mxu0 %v3647
      %3836 = vmatpush1.msra.mxu0 %v3646
      %3837 = vmatprep.subr.mxu0 %v3651
      %3838 = vmatpush1.msra.mxu0 %v3650
      %3839 = vmatprep.subr.mxu0 %v3655
      %3840 = vmatpush1.msra.mxu0 %v3654
      %3841 = vmatprep.subr.mxu0 %v3659
      %3842 = vmatpush1.msra.mxu0 %v3658
      %3843 = vmatprep.subr.mxu0 %v3663
      %3844 = vmatpush1.msra.mxu0 %v3662
      %3845 = vmatprep.subr.mxu0 %v3667
      %3846 = vmatpush1.msra.mxu0 %v3666
      %3847 = vmatprep.subr.mxu0 %v3671
      %3848 = vmatpush1.msra.mxu0 %v3670
      %3849 = vmatprep.subr.mxu0 %v3675
      %3850 = vmatpush1.msra.mxu0 %v3674
      %3851 = vmatprep.subr.mxu0 %v3679
      %3852 = vmatpush1.msra.mxu0 %v3678
      %3853 = vmatprep.subr.mxu0 %v3683
      %3854 = vmatpush1.msra.mxu0 %v3682
      %3855 = vmatprep.subr.mxu0 %v3687
      %3856 = vmatpush1.msra.mxu0 %v3686
      %3857 = vmatprep.subr.mxu0 %v3691
      %3858 = vmatpush1.msra.mxu0 %v3690
      %3859 = vmatprep.subr.mxu0 %v3695
      %3860 = vmatpush1.msra.mxu0 %v3694
      %3861 = vmatprep.subr.mxu0 %v3699
      %3862 = vmatpush1.msra.mxu0 %v3698
      %3863 = vmatprep.subr.mxu0 %v3703
      %3864 = vmatpush1.msra.mxu0 %v3702
      %3865 = vmatprep.subr.mxu0 %v3707
      %3866 = vmatpush1.msra.mxu0 %v3706
      %3867 = vmatprep.subr.mxu0 %v3711
      %3868 = vmatpush1.msra.mxu0 %v3710
      %3869 = vmatprep.subr.mxu0 %v3760
      %3870 = vmatpush1.msra.mxu0 %v3757
      %3871 = vmatprep.subr.mxu0 0.0
      %3872 = vmatpush1.msra.mxu0 0.0
      %3873 = vmatprep.subr.mxu0 0.0
      %3874 = vmatpush1.msra.mxu0 0.0
      %3875 = vmatprep.subr.mxu0 0.0
      %3876 = vmatpush1.msra.mxu0 0.0
      %3877 = vmatprep.subr.mxu0 0.0
      %3878 = vmatpush1.msra.mxu0 0.0
      %3879 = vmatprep.subr.mxu0 0.0
      %3880 = vmatpush1.msra.mxu0 0.0
      %3881 = vmatprep.subr.mxu0 0.0
      %3882 = vmatpush1.msra.mxu0 0.0
      %3883 = vmatprep.subr.mxu0 0.0
      %3884 = vmatpush1.msra.mxu0 0.0
      %3885 = vmatprep.subr.mxu0 0.0
      %3886 = vmatpush1.msra.mxu0 0.0
      %3887 = vmatprep.subr.mxu0 0.0
      %3888 = vmatpush1.msra.mxu0 0.0
      %3889 = vmatprep.subr.mxu0 0.0
      %3890 = vmatpush1.msra.mxu0 0.0
      %3891 = vmatprep.subr.mxu0 0.0
      %3892 = vmatpush1.msra.mxu0 0.0
      %3893 = vmatprep.subr.mxu0 0.0
      %3894 = vmatpush1.msra.mxu0 0.0
      %3895 = vmatprep.subr.mxu0 0.0
      %3896 = vmatpush1.msra.mxu0 0.0
      %3897 = vmatprep.mubr.f32.mxu0 %v3748
      %3898 = vmatmul.mubr.f32.gmra.mrb[0].mxu0 %v3745
      %v3899 = vpop.f32.mrb[0].mxu0
      %v3900 = vadd.f32 %v3729, %v3899
      %v3901 = vpop.f32.mrb[0].mxu0
      %v3902 = vadd.f32 %v3733, %v3901
      %3903 = vdwg.mxu0
      %v3906 = vrot.slane %v3829, 4
      %v3907 = vrot.slane %v3831, 4
      %v3910 = vadd.f32 %v3635, %v3906
      %v3911 = vadd.f32 %v3636, %v3907
      %v3912 = vxor.u32 %v3910, 2147483648
      %v3913 = vxor.u32 %v3911, 2147483648
      %v3914 = vmul.f32 %v3912, 1.442695
      %v3915 = vpow.pop %v3914
      %v3916 = vmul.f32 %v3913, 1.442695
      %v3917 = vpow.pop %v3916
      %v3918 = vadd.f32 %v3915, 1.0
      %v3919 = vadd.f32 %v3917, 1.0
      %v3920 = vrcp.pop %v3918
      %v3921 = vmul.f32 1.0, %v3920
      %v3922 = vrcp.pop %v3919
      %v3923 = vmul.f32 1.0, %v3922
      %v3925 = vrot.slane %v3900, 4
      %v3927 = vadd.f32 %v3637, %v3925
      %v3928 = vxor.u32 %v3927, 2147483648
      %v3929 = vmul.f32 %v3928, 1.442695
      %v3930 = vpow.pop %v3929
      %v3931 = vadd.f32 %v3930, 1.0
      %v3932 = vrcp.pop %v3931
      %v3933 = vmul.f32 1.0, %v3932
      %v3935 = vrot.slane %v3902, 4
      %3936 = vrot.lane.b32.xlu0 %v3925, 84
      %v3937 = vpop.permute.xlu0 %3936
      %3938 = vrot.lane.b32.xlu0 %v3935, 84
      %v3939 = vpop.permute.xlu0 %3938
      %v3940 = vsel %vm1726, %v3937, %v3939
      %v3943 = vmul.f32 %v3921, %v3940
      %v3944 = vmul.f32 %v3923, %v3939
      %3947 = vrot.lane.b32.xlu0 %v3943, 44
      %v3948 = vpop.permute.xlu0 %3947
      %3949 = vrot.lane.b32.xlu0 %v3944, 44
      %v3950 = vpop.permute.xlu0 %3949
      %v3951 = vsel %vm1738, %v3948, %v3950
      %v3954 = vadd.f32 %v3637, %v3948
      %v3955 = vadd.f32 %v3638, %v3951
      %v3956 = vtanh.pop %v3954
      %v3957 = vtanh.pop %v3955
      %v3958 = vsub.f32 1.0, %v3923
      %v3959 = vsub.f32 1.0, %v3933
      %3962 = vrot.lane.b32.xlu0 %v3956, 106
      %v3963 = vpop.permute.xlu0 %3962
      %3964 = vrot.lane.b32.xlu0 %v3957, 106
      %v3965 = vpop.permute.xlu0 %3964
      %v3966 = vsel %vm1754, %v3963, %v3965
      %v3969 = vmul.f32 %v3958, %v3966
      %v3970 = vmul.f32 %v3959, %v3965
      %v3971 = vcombine.low %v3745, %v3745
      %3972 = vrot.lane.b32.xlu0 %v3971, 22
      %v3973 = vpop.permute.xlu0 %3972
      %3974 = vrot.lane.b32.xlu0 %v3745, 22
      %v3975 = vpop.permute.xlu0 %3974
      %v3976 = vsel %vm1541, %v3973, %v3975
      %v3979 = vmul.f32 %v3923, %v3973
      %v3980 = vmul.f32 %v3933, %v3976
      %v3981 = vadd.f32 %v3969, %v3979
      %v3982 = vadd.f32 %v3970, %v3980
      %v3985 = vcombine.high %v3981, %v3982
      %v3987 = vunpack.c.l.s4 1983009808
      %v3988 = vunpack.c.0.s8 %v3987
      %v3989 = vlaneseq
      %v3990 = vshrl.u32 %v3989, 7
      %v3991 = vsub.s32 %v3988, %v3990
      %v3992 = vrot.slane %v3985, %v3991
      %3993 = vrot.lane.b32.xlu0 %v3992, 106
      %v3994 = vpop.permute.xlu0 %3993
      %v3995 = vrot.slane %v3994, 2
      %v3996 = vsel %vm1754, %v3994, %v3995
      %3998 = vst.msk [vmem:[#allocation2] sm:$0xf] %vm1426, %v3996
      %s3999 = scalar_lea.vmem %s832, 24
      %4000 = vst.msk [vmem:[%s3999] sm:$0xf] %vm1426, %v3996
      %v4001 = vld [vmem:[#allocation3 + $0x20] sm:$0xc0]
      %v4002 = vld [vmem:[#allocation3 + $0x28] sm:$0xc0]
      %v4003 = vld [vmem:[#allocation3 + $0x30] sm:$0xc0]
      %v4004 = vld [vmem:[#allocation3 + $0x38] sm:$0xc0]
      %v4005 = vld [vmem:[#allocation2] sm:$0xf]
      %v4006 = vld [vmem:[%s769] sm:$0xff]
      %v4007 = vld [vmem:[%s769 + $0x8] sm:$0xff]
      %v4008 = vld [vmem:[%s769 + $0x10] sm:$0xff]
      %v4009 = vld [vmem:[%s769 + $0x18] sm:$0xff]
      %v4010 = vld [vmem:[%s769 + $0x20] sm:$0xff]
      %v4011 = vld [vmem:[%s769 + $0x28] sm:$0xff]
      %v4012 = vld [vmem:[%s769 + $0x30] sm:$0xff]
      %v4013 = vld [vmem:[%s769 + $0x38] sm:$0xff]
      %v4014 = vld [vmem:[%s769 + $0x40] sm:$0xff]
      %v4015 = vld [vmem:[%s769 + $0x48] sm:$0xff]
      %v4016 = vld [vmem:[%s769 + $0x50] sm:$0xff]
      %v4017 = vld [vmem:[%s769 + $0x58] sm:$0xff]
      %v4018 = vld [vmem:[%s769 + $0x60] sm:$0xff]
      %v4019 = vld [vmem:[%s769 + $0x68] sm:$0xff]
      %v4020 = vld [vmem:[%s769 + $0x70] sm:$0xff]
      %v4021 = vld [vmem:[%s769 + $0x78] sm:$0xff]
      %v4022 = vld [vmem:[%s769 + $0x80] sm:$0xff]
      %v4023 = vld [vmem:[%s769 + $0x88] sm:$0xff]
      %v4024 = vld [vmem:[%s769 + $0x90] sm:$0xff]
      %v4025 = vld [vmem:[%s769 + $0x98] sm:$0xff]
      %v4026 = vld [vmem:[%s769 + $0xa0] sm:$0xff]
      %v4027 = vld [vmem:[%s769 + $0xa8] sm:$0xff]
      %v4028 = vld [vmem:[%s769 + $0xb0] sm:$0xff]
      %v4029 = vld [vmem:[%s769 + $0xb8] sm:$0xff]
      %v4030 = vld [vmem:[%s769 + $0xc0] sm:$0xff]
      %v4031 = vld [vmem:[%s769 + $0xc8] sm:$0xff]
      %v4032 = vld [vmem:[%s769 + $0xd0] sm:$0xff]
      %v4033 = vld [vmem:[%s769 + $0xd8] sm:$0xff]
      %v4034 = vld [vmem:[%s769 + $0xe0] sm:$0xff]
      %v4035 = vld [vmem:[%s769 + $0xe8] sm:$0xff]
      %v4036 = vld [vmem:[%s769 + $0xf0] sm:$0xff]
      %v4037 = vld [vmem:[%s769 + $0xf8] sm:$0xff]
      %v4038 = vld [vmem:[%s769 + $0x100] sm:$0xff]
      %v4039 = vld [vmem:[%s769 + $0x108] sm:$0xff]
      %v4040 = vld [vmem:[%s769 + $0x110] sm:$0xff]
      %v4041 = vld [vmem:[%s769 + $0x118] sm:$0xff]
      %v4042 = vld [vmem:[%s769 + $0x120] sm:$0xff]
      %v4043 = vld [vmem:[%s769 + $0x128] sm:$0xff]
      %v4044 = vld [vmem:[%s769 + $0x130] sm:$0xff]
      %v4045 = vld [vmem:[%s769 + $0x138] sm:$0xff]
      %v4046 = vld [vmem:[%s769 + $0x140] sm:$0xff]
      %v4047 = vld [vmem:[%s769 + $0x148] sm:$0xff]
      %v4048 = vld [vmem:[%s769 + $0x150] sm:$0xff]
      %v4049 = vld [vmem:[%s769 + $0x158] sm:$0xff]
      %v4050 = vld [vmem:[%s769 + $0x160] sm:$0xff]
      %v4051 = vld [vmem:[%s769 + $0x168] sm:$0xff]
      %v4052 = vld [vmem:[%s769 + $0x170] sm:$0xff]
      %v4053 = vld [vmem:[%s769 + $0x178] sm:$0xff]
      %v4054 = vld [vmem:[%s769 + $0x180] sm:$0xff]
      %v4055 = vld [vmem:[%s769 + $0x188] sm:$0xff]
      %v4056 = vld [vmem:[%s769 + $0x190] sm:$0xff]
      %v4057 = vld [vmem:[%s769 + $0x198] sm:$0xff]
      %v4058 = vld [vmem:[%s769 + $0x1a0] sm:$0xff]
      %v4059 = vld [vmem:[%s769 + $0x1a8] sm:$0xff]
      %v4060 = vld [vmem:[%s769 + $0x1b0] sm:$0xff]
      %v4061 = vld [vmem:[%s769 + $0x1b8] sm:$0xff]
      %v4062 = vld [vmem:[%s769 + $0x1c0] sm:$0xff]
      %v4063 = vld [vmem:[%s769 + $0x1c8] sm:$0xff]
      %v4064 = vld [vmem:[%s769 + $0x1d0] sm:$0xff]
      %v4065 = vld [vmem:[%s769 + $0x1d8] sm:$0xff]
      %v4066 = vld [vmem:[%s769 + $0x1e0] sm:$0xff]
      %v4067 = vld [vmem:[%s769 + $0x1e8] sm:$0xff]
      %v4068 = vld [vmem:[%s769 + $0x1f0] sm:$0xff]
      %v4069 = vld [vmem:[%s769 + $0x1f8] sm:$0xff]
      %v4070 = vld [vmem:[%s769 + $0x200] sm:$0xff]
      %v4071 = vld [vmem:[%s769 + $0x208] sm:$0xff]
      %v4072 = vld [vmem:[%s769 + $0x210] sm:$0xff]
      %v4073 = vld [vmem:[%s769 + $0x218] sm:$0xff]
      %v4074 = vld [vmem:[%s769 + $0x220] sm:$0xff]
      %v4075 = vld [vmem:[%s769 + $0x228] sm:$0xff]
      %v4076 = vld [vmem:[%s769 + $0x230] sm:$0xff]
      %v4077 = vld [vmem:[%s769 + $0x238] sm:$0xff]
      %v4078 = vld [vmem:[%s769 + $0x240] sm:$0x3f]
      %v4079 = vld [vmem:[%s769 + $0x248] sm:$0x3f]
      %v4080 = vld [vmem:[%s769 + $0x250] sm:$0x3f]
      %v4081 = vld [vmem:[%s769 + $0x258] sm:$0x3f]
      %v4082 = vld [vmem:[%s777] sm:$0xf]
      %v4084 = vlaneseq
      %v4085 = vshrl.u32 %v4084, 7
      %v4086 = vsub.s32 0, %v4085
      %v4087 = vrot.slane %v4082, %v4086
      %v4088 = vlaneseq
      %v4089 = vshrl.u32 %v4088, 7
      %v4090 = vsub.s32 1, %v4089
      %v4091 = vrot.slane %v4082, %v4090
      %v4092 = vlaneseq
      %v4093 = vshrl.u32 %v4092, 7
      %v4094 = vsub.s32 2, %v4093
      %v4095 = vrot.slane %v4082, %v4094
      %v4096 = vlaneseq
      %v4097 = vshrl.u32 %v4096, 7
      %v4098 = vsub.s32 3, %v4097
      %v4099 = vrot.slane %v4082, %v4098
      %v4106 = vunpack.c.l.s4 1983009808
      %v4107 = vunpack.c.0.s8 %v4106
      %v4108 = vlaneseq
      %v4109 = vshrl.u32 %v4108, 7
      %v4110 = vsub.s32 %v4107, %v4109
      %v4111 = vrot.slane %v4005, %v4110
      %v4112 = vcombine.high %v4111, %v4111
      %v4114 = vsel %vm1541, %v4112, 0
      %v4117 = vsel %vm1544, %v4078, 0
      %v4120 = vsel %vm1544, %v4079, 0
      %v4123 = vsel %vm1544, %v4080, 0
      %v4126 = vsel %vm1544, %v4081, 0
      %4128 = vmatprep.subr.mxu0 %v4007
      %4129 = vmatpush1.msra.mxu0 %v4006
      %4130 = vmatprep.subr.mxu0 %v4011
      %4131 = vmatpush1.msra.mxu0 %v4010
      %4132 = vmatprep.subr.mxu0 %v4015
      %4133 = vmatpush1.msra.mxu0 %v4014
      %4134 = vmatprep.subr.mxu0 %v4019
      %4135 = vmatpush1.msra.mxu0 %v4018
      %4136 = vmatprep.subr.mxu0 %v4023
      %4137 = vmatpush1.msra.mxu0 %v4022
      %4138 = vmatprep.subr.mxu0 %v4027
      %4139 = vmatpush1.msra.mxu0 %v4026
      %4140 = vmatprep.subr.mxu0 %v4031
      %4141 = vmatpush1.msra.mxu0 %v4030
      %4142 = vmatprep.subr.mxu0 %v4035
      %4143 = vmatpush1.msra.mxu0 %v4034
      %4144 = vmatprep.subr.mxu0 %v4039
      %4145 = vmatpush1.msra.mxu0 %v4038
      %4146 = vmatprep.subr.mxu0 %v4043
      %4147 = vmatpush1.msra.mxu0 %v4042
      %4148 = vmatprep.subr.mxu0 %v4047
      %4149 = vmatpush1.msra.mxu0 %v4046
      %4150 = vmatprep.subr.mxu0 %v4051
      %4151 = vmatpush1.msra.mxu0 %v4050
      %4152 = vmatprep.subr.mxu0 %v4055
      %4153 = vmatpush1.msra.mxu0 %v4054
      %4154 = vmatprep.subr.mxu0 %v4059
      %4155 = vmatpush1.msra.mxu0 %v4058
      %4156 = vmatprep.subr.mxu0 %v4063
      %4157 = vmatpush1.msra.mxu0 %v4062
      %4158 = vmatprep.subr.mxu0 %v4067
      %4159 = vmatpush1.msra.mxu0 %v4066
      %4160 = vmatprep.subr.mxu0 %v4071
      %4161 = vmatpush1.msra.mxu0 %v4070
      %4162 = vmatprep.subr.mxu0 %v4075
      %4163 = vmatpush1.msra.mxu0 %v4074
      %4164 = vmatprep.subr.mxu0 %v4120
      %4165 = vmatpush1.msra.mxu0 %v4117
      %4166 = vmatprep.subr.mxu0 0.0
      %4167 = vmatpush1.msra.mxu0 0.0
      %4168 = vmatprep.subr.mxu0 0.0
      %4169 = vmatpush1.msra.mxu0 0.0
      %4170 = vmatprep.subr.mxu0 0.0
      %4171 = vmatpush1.msra.mxu0 0.0
      %4172 = vmatprep.subr.mxu0 0.0
      %4173 = vmatpush1.msra.mxu0 0.0
      %4174 = vmatprep.subr.mxu0 0.0
      %4175 = vmatpush1.msra.mxu0 0.0
      %4176 = vmatprep.subr.mxu0 0.0
      %4177 = vmatpush1.msra.mxu0 0.0
      %4178 = vmatprep.subr.mxu0 0.0
      %4179 = vmatpush1.msra.mxu0 0.0
      %4180 = vmatprep.subr.mxu0 0.0
      %4181 = vmatpush1.msra.mxu0 0.0
      %4182 = vmatprep.subr.mxu0 0.0
      %4183 = vmatpush1.msra.mxu0 0.0
      %4184 = vmatprep.subr.mxu0 0.0
      %4185 = vmatpush1.msra.mxu0 0.0
      %4186 = vmatprep.subr.mxu0 0.0
      %4187 = vmatpush1.msra.mxu0 0.0
      %4188 = vmatprep.subr.mxu0 0.0
      %4189 = vmatpush1.msra.mxu0 0.0
      %4190 = vmatprep.subr.mxu0 0.0
      %4191 = vmatpush1.msra.mxu0 0.0
      %4192 = vmatprep.mubr.f32.mxu0 %v4114
      %4193 = vmatmul.mubr.f32.gmra.mrb[0].mxu0 %v4111
      %v4194 = vpop.f32.mrb[0].mxu0
      %v4195 = vadd.f32 %v4087, %v4194
      %v4196 = vpop.f32.mrb[0].mxu0
      %v4197 = vadd.f32 %v4091, %v4196
      %4198 = vdwg.mxu0
      %4199 = vmatprep.subr.mxu0 %v4009
      %4200 = vmatpush1.msra.mxu0 %v4008
      %4201 = vmatprep.subr.mxu0 %v4013
      %4202 = vmatpush1.msra.mxu0 %v4012
      %4203 = vmatprep.subr.mxu0 %v4017
      %4204 = vmatpush1.msra.mxu0 %v4016
      %4205 = vmatprep.subr.mxu0 %v4021
      %4206 = vmatpush1.msra.mxu0 %v4020
      %4207 = vmatprep.subr.mxu0 %v4025
      %4208 = vmatpush1.msra.mxu0 %v4024
      %4209 = vmatprep.subr.mxu0 %v4029
      %4210 = vmatpush1.msra.mxu0 %v4028
      %4211 = vmatprep.subr.mxu0 %v4033
      %4212 = vmatpush1.msra.mxu0 %v4032
      %4213 = vmatprep.subr.mxu0 %v4037
      %4214 = vmatpush1.msra.mxu0 %v4036
      %4215 = vmatprep.subr.mxu0 %v4041
      %4216 = vmatpush1.msra.mxu0 %v4040
      %4217 = vmatprep.subr.mxu0 %v4045
      %4218 = vmatpush1.msra.mxu0 %v4044
      %4219 = vmatprep.subr.mxu0 %v4049
      %4220 = vmatpush1.msra.mxu0 %v4048
      %4221 = vmatprep.subr.mxu0 %v4053
      %4222 = vmatpush1.msra.mxu0 %v4052
      %4223 = vmatprep.subr.mxu0 %v4057
      %4224 = vmatpush1.msra.mxu0 %v4056
      %4225 = vmatprep.subr.mxu0 %v4061
      %4226 = vmatpush1.msra.mxu0 %v4060
      %4227 = vmatprep.subr.mxu0 %v4065
      %4228 = vmatpush1.msra.mxu0 %v4064
      %4229 = vmatprep.subr.mxu0 %v4069
      %4230 = vmatpush1.msra.mxu0 %v4068
      %4231 = vmatprep.subr.mxu0 %v4073
      %4232 = vmatpush1.msra.mxu0 %v4072
      %4233 = vmatprep.subr.mxu0 %v4077
      %4234 = vmatpush1.msra.mxu0 %v4076
      %4235 = vmatprep.subr.mxu0 %v4126
      %4236 = vmatpush1.msra.mxu0 %v4123
      %4237 = vmatprep.subr.mxu0 0.0
      %4238 = vmatpush1.msra.mxu0 0.0
      %4239 = vmatprep.subr.mxu0 0.0
      %4240 = vmatpush1.msra.mxu0 0.0
      %4241 = vmatprep.subr.mxu0 0.0
      %4242 = vmatpush1.msra.mxu0 0.0
      %4243 = vmatprep.subr.mxu0 0.0
      %4244 = vmatpush1.msra.mxu0 0.0
      %4245 = vmatprep.subr.mxu0 0.0
      %4246 = vmatpush1.msra.mxu0 0.0
      %4247 = vmatprep.subr.mxu0 0.0
      %4248 = vmatpush1.msra.mxu0 0.0
      %4249 = vmatprep.subr.mxu0 0.0
      %4250 = vmatpush1.msra.mxu0 0.0
      %4251 = vmatprep.subr.mxu0 0.0
      %4252 = vmatpush1.msra.mxu0 0.0
      %4253 = vmatprep.subr.mxu0 0.0
      %4254 = vmatpush1.msra.mxu0 0.0
      %4255 = vmatprep.subr.mxu0 0.0
      %4256 = vmatpush1.msra.mxu0 0.0
      %4257 = vmatprep.subr.mxu0 0.0
      %4258 = vmatpush1.msra.mxu0 0.0
      %4259 = vmatprep.subr.mxu0 0.0
      %4260 = vmatpush1.msra.mxu0 0.0
      %4261 = vmatprep.subr.mxu0 0.0
      %4262 = vmatpush1.msra.mxu0 0.0
      %4263 = vmatprep.mubr.f32.mxu0 %v4114
      %4264 = vmatmul.mubr.f32.gmra.mrb[0].mxu0 %v4111
      %v4265 = vpop.f32.mrb[0].mxu0
      %v4266 = vadd.f32 %v4095, %v4265
      %v4267 = vpop.f32.mrb[0].mxu0
      %v4268 = vadd.f32 %v4099, %v4267
      %4269 = vdwg.mxu0
      %v4272 = vrot.slane %v4195, 2
      %v4273 = vrot.slane %v4197, 2
      %v4276 = vadd.f32 %v4001, %v4272
      %v4277 = vadd.f32 %v4002, %v4273
      %v4278 = vxor.u32 %v4276, 2147483648
      %v4279 = vxor.u32 %v4277, 2147483648
      %v4280 = vmul.f32 %v4278, 1.442695
      %v4281 = vpow.pop %v4280
      %v4282 = vmul.f32 %v4279, 1.442695
      %v4283 = vpow.pop %v4282
      %v4284 = vadd.f32 %v4281, 1.0
      %v4285 = vadd.f32 %v4283, 1.0
      %v4286 = vrcp.pop %v4284
      %v4287 = vmul.f32 1.0, %v4286
      %v4288 = vrcp.pop %v4285
      %v4289 = vmul.f32 1.0, %v4288
      %v4291 = vrot.slane %v4266, 2
      %v4293 = vadd.f32 %v4003, %v4291
      %v4294 = vxor.u32 %v4293, 2147483648
      %v4295 = vmul.f32 %v4294, 1.442695
      %v4296 = vpow.pop %v4295
      %v4297 = vadd.f32 %v4296, 1.0
      %v4298 = vrcp.pop %v4297
      %v4299 = vmul.f32 1.0, %v4298
      %v4301 = vrot.slane %v4268, 2
      %4302 = vrot.lane.b32.xlu0 %v4291, 84
      %v4303 = vpop.permute.xlu0 %4302
      %4304 = vrot.lane.b32.xlu0 %v4301, 84
      %v4305 = vpop.permute.xlu0 %4304
      %v4306 = vsel %vm1726, %v4303, %v4305
      %v4309 = vmul.f32 %v4287, %v4306
      %v4310 = vmul.f32 %v4289, %v4305
      %4313 = vrot.lane.b32.xlu0 %v4309, 44
      %v4314 = vpop.permute.xlu0 %4313
      %4315 = vrot.lane.b32.xlu0 %v4310, 44
      %v4316 = vpop.permute.xlu0 %4315
      %v4317 = vsel %vm1738, %v4314, %v4316
      %v4320 = vadd.f32 %v4003, %v4314
      %v4321 = vadd.f32 %v4004, %v4317
      %v4322 = vtanh.pop %v4320
      %v4323 = vtanh.pop %v4321
      %v4324 = vsub.f32 1.0, %v4289
      %v4325 = vsub.f32 1.0, %v4299
      %4328 = vrot.lane.b32.xlu0 %v4322, 106
      %v4329 = vpop.permute.xlu0 %4328
      %4330 = vrot.lane.b32.xlu0 %v4323, 106
      %v4331 = vpop.permute.xlu0 %4330
      %v4332 = vsel %vm1754, %v4329, %v4331
      %v4335 = vmul.f32 %v4324, %v4332
      %v4336 = vmul.f32 %v4325, %v4331
      %v4337 = vcombine.low %v4005, %v4005
      %v4339 = vunpack.c.l.s4 1983009808
      %v4340 = vunpack.c.0.s8 %v4339
      %v4341 = vlaneseq
      %v4342 = vshrl.u32 %v4341, 7
      %v4343 = vsub.s32 %v4340, %v4342
      %v4344 = vrot.slane %v4337, %v4343
      %v4345 = vcombine.low %v4344, %v4344
      %4346 = vrot.lane.b32.xlu0 %v4345, 22
      %v4347 = vpop.permute.xlu0 %4346
      %4348 = vrot.lane.b32.xlu0 %v4344, 22
      %v4349 = vpop.permute.xlu0 %4348
      %v4350 = vsel %vm1541, %v4347, %v4349
      %v4353 = vmul.f32 %v4289, %v4347
      %v4354 = vmul.f32 %v4299, %v4350
      %v4355 = vadd.f32 %v4335, %v4353
      %v4356 = vadd.f32 %v4336, %v4354
      %v4359 = vcombine.high %v4355, %v4356
      %v4361 = vunpack.c.l.s4 1983009808
      %v4362 = vunpack.c.0.s8 %v4361
      %v4363 = vlaneseq
      %v4364 = vshrl.u32 %v4363, 7
      %v4365 = vsub.s32 %v4362, %v4364
      %v4366 = vrot.slane %v4359, %v4365
      %v4367 = vcombine.high %v4366, %v4366
      %4368 = vrot.lane.b32.xlu0 %v4367, 106
      %v4369 = vpop.permute.xlu0 %4368
      %v4370 = vrot.slane %v4369, 2
      %v4371 = vsel %vm1754, %v4369, %v4370
      %4373 = vst.msk [vmem:[#allocation2] sm:$0xf] %vm1426, %v4371
      %s4374 = scalar_lea.vmem %s832, 28
      %4375 = vst.msk [vmem:[%s4374] sm:$0xf] %vm1426, %v4371
      %v4376 = vld [vmem:[#allocation4] sm:$0x3]
      %v4377 = vld [vmem:[#allocation4 + $0x8] sm:$0x3]
      %v4378 = vld [vmem:[#allocation4 + $0x10] sm:$0x3]
      %v4379 = vld [vmem:[#allocation4 + $0x18] sm:$0x3]
      %v4380 = vld [vmem:[#allocation2] sm:$0xf]
      %v4381 = vld [vmem:[%s787] sm:$0xff]
      %v4382 = vld [vmem:[%s787 + $0x8] sm:$0xff]
      %v4383 = vld [vmem:[%s787 + $0x10] sm:$0xff]
      %v4384 = vld [vmem:[%s787 + $0x18] sm:$0xff]
      %v4385 = vld [vmem:[%s787 + $0x20] sm:$0xff]
      %v4386 = vld [vmem:[%s787 + $0x28] sm:$0xff]
      %v4387 = vld [vmem:[%s787 + $0x30] sm:$0xff]
      %v4388 = vld [vmem:[%s787 + $0x38] sm:$0xff]
      %v4389 = vld [vmem:[%s787 + $0x40] sm:$0xff]
      %v4390 = vld [vmem:[%s787 + $0x48] sm:$0xff]
      %v4391 = vld [vmem:[%s787 + $0x50] sm:$0xff]
      %v4392 = vld [vmem:[%s787 + $0x58] sm:$0xff]
      %v4393 = vld [vmem:[%s787 + $0x60] sm:$0xff]
      %v4394 = vld [vmem:[%s787 + $0x68] sm:$0xff]
      %v4395 = vld [vmem:[%s787 + $0x70] sm:$0xff]
      %v4396 = vld [vmem:[%s787 + $0x78] sm:$0xff]
      %v4397 = vld [vmem:[%s787 + $0x80] sm:$0xff]
      %v4398 = vld [vmem:[%s787 + $0x88] sm:$0xff]
      %v4399 = vld [vmem:[%s787 + $0x90] sm:$0xff]
      %v4400 = vld [vmem:[%s787 + $0x98] sm:$0xff]
      %v4401 = vld [vmem:[%s787 + $0xa0] sm:$0xff]
      %v4402 = vld [vmem:[%s787 + $0xa8] sm:$0xff]
      %v4403 = vld [vmem:[%s787 + $0xb0] sm:$0xff]
      %v4404 = vld [vmem:[%s787 + $0xb8] sm:$0xff]
      %v4405 = vld [vmem:[%s787 + $0xc0] sm:$0xff]
      %v4406 = vld [vmem:[%s787 + $0xc8] sm:$0xff]
      %v4407 = vld [vmem:[%s787 + $0xd0] sm:$0xff]
      %v4408 = vld [vmem:[%s787 + $0xd8] sm:$0xff]
      %v4409 = vld [vmem:[%s787 + $0xe0] sm:$0xff]
      %v4410 = vld [vmem:[%s787 + $0xe8] sm:$0xff]
      %v4411 = vld [vmem:[%s787 + $0xf0] sm:$0xff]
      %v4412 = vld [vmem:[%s787 + $0xf8] sm:$0xff]
      %v4413 = vld [vmem:[%s787 + $0x100] sm:$0xff]
      %v4414 = vld [vmem:[%s787 + $0x108] sm:$0xff]
      %v4415 = vld [vmem:[%s787 + $0x110] sm:$0xff]
      %v4416 = vld [vmem:[%s787 + $0x118] sm:$0xff]
      %v4417 = vld [vmem:[%s787 + $0x120] sm:$0xff]
      %v4418 = vld [vmem:[%s787 + $0x128] sm:$0xff]
      %v4419 = vld [vmem:[%s787 + $0x130] sm:$0xff]
      %v4420 = vld [vmem:[%s787 + $0x138] sm:$0xff]
      %v4421 = vld [vmem:[%s787 + $0x140] sm:$0xff]
      %v4422 = vld [vmem:[%s787 + $0x148] sm:$0xff]
      %v4423 = vld [vmem:[%s787 + $0x150] sm:$0xff]
      %v4424 = vld [vmem:[%s787 + $0x158] sm:$0xff]
      %v4425 = vld [vmem:[%s787 + $0x160] sm:$0xff]
      %v4426 = vld [vmem:[%s787 + $0x168] sm:$0xff]
      %v4427 = vld [vmem:[%s787 + $0x170] sm:$0xff]
      %v4428 = vld [vmem:[%s787 + $0x178] sm:$0xff]
      %v4429 = vld [vmem:[%s787 + $0x180] sm:$0xff]
      %v4430 = vld [vmem:[%s787 + $0x188] sm:$0xff]
      %v4431 = vld [vmem:[%s787 + $0x190] sm:$0xff]
      %v4432 = vld [vmem:[%s787 + $0x198] sm:$0xff]
      %v4433 = vld [vmem:[%s787 + $0x1a0] sm:$0xff]
      %v4434 = vld [vmem:[%s787 + $0x1a8] sm:$0xff]
      %v4435 = vld [vmem:[%s787 + $0x1b0] sm:$0xff]
      %v4436 = vld [vmem:[%s787 + $0x1b8] sm:$0xff]
      %v4437 = vld [vmem:[%s787 + $0x1c0] sm:$0xff]
      %v4438 = vld [vmem:[%s787 + $0x1c8] sm:$0xff]
      %v4439 = vld [vmem:[%s787 + $0x1d0] sm:$0xff]
      %v4440 = vld [vmem:[%s787 + $0x1d8] sm:$0xff]
      %v4441 = vld [vmem:[%s787 + $0x1e0] sm:$0xff]
      %v4442 = vld [vmem:[%s787 + $0x1e8] sm:$0xff]
      %v4443 = vld [vmem:[%s787 + $0x1f0] sm:$0xff]
      %v4444 = vld [vmem:[%s787 + $0x1f8] sm:$0xff]
      %v4445 = vld [vmem:[%s787 + $0x200] sm:$0xff]
      %v4446 = vld [vmem:[%s787 + $0x208] sm:$0xff]
      %v4447 = vld [vmem:[%s787 + $0x210] sm:$0xff]
      %v4448 = vld [vmem:[%s787 + $0x218] sm:$0xff]
      %v4449 = vld [vmem:[%s787 + $0x220] sm:$0xff]
      %v4450 = vld [vmem:[%s787 + $0x228] sm:$0xff]
      %v4451 = vld [vmem:[%s787 + $0x230] sm:$0xff]
      %v4452 = vld [vmem:[%s787 + $0x238] sm:$0xff]
      %v4453 = vld [vmem:[%s787 + $0x240] sm:$0x3f]
      %v4454 = vld [vmem:[%s787 + $0x248] sm:$0x3f]
      %v4455 = vld [vmem:[%s787 + $0x250] sm:$0x3f]
      %v4456 = vld [vmem:[%s787 + $0x258] sm:$0x3f]
      %v4457 = vld [vmem:[%s795] sm:$0xf]
      %v4459 = vlaneseq
      %v4460 = vshrl.u32 %v4459, 7
      %v4461 = vsub.s32 0, %v4460
      %v4462 = vrot.slane %v4457, %v4461
      %v4463 = vlaneseq
      %v4464 = vshrl.u32 %v4463, 7
      %v4465 = vsub.s32 1, %v4464
      %v4466 = vrot.slane %v4457, %v4465
      %v4467 = vlaneseq
      %v4468 = vshrl.u32 %v4467, 7
      %v4469 = vsub.s32 2, %v4468
      %v4470 = vrot.slane %v4457, %v4469
      %v4471 = vlaneseq
      %v4472 = vshrl.u32 %v4471, 7
      %v4473 = vsub.s32 3, %v4472
      %v4474 = vrot.slane %v4457, %v4473
      %v4481 = vunpack.c.l.s4 1983009808
      %v4482 = vunpack.c.0.s8 %v4481
      %v4483 = vlaneseq
      %v4484 = vshrl.u32 %v4483, 7
      %v4485 = vsub.s32 %v4482, %v4484
      %v4486 = vrot.slane %v4380, %v4485
      %v4487 = vcombine.high %v4486, %v4486
      %v4489 = vsel %vm1541, %v4487, 0
      %v4492 = vsel %vm1544, %v4453, 0
      %v4495 = vsel %vm1544, %v4454, 0
      %v4498 = vsel %vm1544, %v4455, 0
      %v4501 = vsel %vm1544, %v4456, 0
      %4503 = vmatprep.subr.mxu0 %v4382
      %4504 = vmatpush1.msra.mxu0 %v4381
      %4505 = vmatprep.subr.mxu0 %v4386
      %4506 = vmatpush1.msra.mxu0 %v4385
      %4507 = vmatprep.subr.mxu0 %v4390
      %4508 = vmatpush1.msra.mxu0 %v4389
      %4509 = vmatprep.subr.mxu0 %v4394
      %4510 = vmatpush1.msra.mxu0 %v4393
      %4511 = vmatprep.subr.mxu0 %v4398
      %4512 = vmatpush1.msra.mxu0 %v4397
      %4513 = vmatprep.subr.mxu0 %v4402
      %4514 = vmatpush1.msra.mxu0 %v4401
      %4515 = vmatprep.subr.mxu0 %v4406
      %4516 = vmatpush1.msra.mxu0 %v4405
      %4517 = vmatprep.subr.mxu0 %v4410
      %4518 = vmatpush1.msra.mxu0 %v4409
      %4519 = vmatprep.subr.mxu0 %v4414
      %4520 = vmatpush1.msra.mxu0 %v4413
      %4521 = vmatprep.subr.mxu0 %v4418
      %4522 = vmatpush1.msra.mxu0 %v4417
      %4523 = vmatprep.subr.mxu0 %v4422
      %4524 = vmatpush1.msra.mxu0 %v4421
      %4525 = vmatprep.subr.mxu0 %v4426
      %4526 = vmatpush1.msra.mxu0 %v4425
      %4527 = vmatprep.subr.mxu0 %v4430
      %4528 = vmatpush1.msra.mxu0 %v4429
      %4529 = vmatprep.subr.mxu0 %v4434
      %4530 = vmatpush1.msra.mxu0 %v4433
      %4531 = vmatprep.subr.mxu0 %v4438
      %4532 = vmatpush1.msra.mxu0 %v4437
      %4533 = vmatprep.subr.mxu0 %v4442
      %4534 = vmatpush1.msra.mxu0 %v4441
      %4535 = vmatprep.subr.mxu0 %v4446
      %4536 = vmatpush1.msra.mxu0 %v4445
      %4537 = vmatprep.subr.mxu0 %v4450
      %4538 = vmatpush1.msra.mxu0 %v4449
      %4539 = vmatprep.subr.mxu0 %v4495
      %4540 = vmatpush1.msra.mxu0 %v4492
      %4541 = vmatprep.subr.mxu0 0.0
      %4542 = vmatpush1.msra.mxu0 0.0
      %4543 = vmatprep.subr.mxu0 0.0
      %4544 = vmatpush1.msra.mxu0 0.0
      %4545 = vmatprep.subr.mxu0 0.0
      %4546 = vmatpush1.msra.mxu0 0.0
      %4547 = vmatprep.subr.mxu0 0.0
      %4548 = vmatpush1.msra.mxu0 0.0
      %4549 = vmatprep.subr.mxu0 0.0
      %4550 = vmatpush1.msra.mxu0 0.0
      %4551 = vmatprep.subr.mxu0 0.0
      %4552 = vmatpush1.msra.mxu0 0.0
      %4553 = vmatprep.subr.mxu0 0.0
      %4554 = vmatpush1.msra.mxu0 0.0
      %4555 = vmatprep.subr.mxu0 0.0
      %4556 = vmatpush1.msra.mxu0 0.0
      %4557 = vmatprep.subr.mxu0 0.0
      %4558 = vmatpush1.msra.mxu0 0.0
      %4559 = vmatprep.subr.mxu0 0.0
      %4560 = vmatpush1.msra.mxu0 0.0
      %4561 = vmatprep.subr.mxu0 0.0
      %4562 = vmatpush1.msra.mxu0 0.0
      %4563 = vmatprep.subr.mxu0 0.0
      %4564 = vmatpush1.msra.mxu0 0.0
      %4565 = vmatprep.subr.mxu0 0.0
      %4566 = vmatpush1.msra.mxu0 0.0
      %4567 = vmatprep.mubr.f32.mxu0 %v4489
      %4568 = vmatmul.mubr.f32.gmra.mrb[0].mxu0 %v4486
      %v4569 = vpop.f32.mrb[0].mxu0
      %v4570 = vadd.f32 %v4462, %v4569
      %v4571 = vpop.f32.mrb[0].mxu0
      %v4572 = vadd.f32 %v4466, %v4571
      %4573 = vdwg.mxu0
      %4574 = vmatprep.subr.mxu0 %v4384
      %4575 = vmatpush1.msra.mxu0 %v4383
      %4576 = vmatprep.subr.mxu0 %v4388
      %4577 = vmatpush1.msra.mxu0 %v4387
      %4578 = vmatprep.subr.mxu0 %v4392
      %4579 = vmatpush1.msra.mxu0 %v4391
      %4580 = vmatprep.subr.mxu0 %v4396
      %4581 = vmatpush1.msra.mxu0 %v4395
      %4582 = vmatprep.subr.mxu0 %v4400
      %4583 = vmatpush1.msra.mxu0 %v4399
      %4584 = vmatprep.subr.mxu0 %v4404
      %4585 = vmatpush1.msra.mxu0 %v4403
      %4586 = vmatprep.subr.mxu0 %v4408
      %4587 = vmatpush1.msra.mxu0 %v4407
      %4588 = vmatprep.subr.mxu0 %v4412
      %4589 = vmatpush1.msra.mxu0 %v4411
      %4590 = vmatprep.subr.mxu0 %v4416
      %4591 = vmatpush1.msra.mxu0 %v4415
      %4592 = vmatprep.subr.mxu0 %v4420
      %4593 = vmatpush1.msra.mxu0 %v4419
      %4594 = vmatprep.subr.mxu0 %v4424
      %4595 = vmatpush1.msra.mxu0 %v4423
      %4596 = vmatprep.subr.mxu0 %v4428
      %4597 = vmatpush1.msra.mxu0 %v4427
      %4598 = vmatprep.subr.mxu0 %v4432
      %4599 = vmatpush1.msra.mxu0 %v4431
      %4600 = vmatprep.subr.mxu0 %v4436
      %4601 = vmatpush1.msra.mxu0 %v4435
      %4602 = vmatprep.subr.mxu0 %v4440
      %4603 = vmatpush1.msra.mxu0 %v4439
      %4604 = vmatprep.subr.mxu0 %v4444
      %4605 = vmatpush1.msra.mxu0 %v4443
      %4606 = vmatprep.subr.mxu0 %v4448
      %4607 = vmatpush1.msra.mxu0 %v4447
      %4608 = vmatprep.subr.mxu0 %v4452
      %4609 = vmatpush1.msra.mxu0 %v4451
      %4610 = vmatprep.subr.mxu0 %v4501
      %4611 = vmatpush1.msra.mxu0 %v4498
      %4612 = vmatprep.subr.mxu0 0.0
      %4613 = vmatpush1.msra.mxu0 0.0
      %4614 = vmatprep.subr.mxu0 0.0
      %4615 = vmatpush1.msra.mxu0 0.0
      %4616 = vmatprep.subr.mxu0 0.0
      %4617 = vmatpush1.msra.mxu0 0.0
      %4618 = vmatprep.subr.mxu0 0.0
      %4619 = vmatpush1.msra.mxu0 0.0
      %4620 = vmatprep.subr.mxu0 0.0
      %4621 = vmatpush1.msra.mxu0 0.0
      %4622 = vmatprep.subr.mxu0 0.0
      %4623 = vmatpush1.msra.mxu0 0.0
      %4624 = vmatprep.subr.mxu0 0.0
      %4625 = vmatpush1.msra.mxu0 0.0
      %4626 = vmatprep.subr.mxu0 0.0
      %4627 = vmatpush1.msra.mxu0 0.0
      %4628 = vmatprep.subr.mxu0 0.0
      %4629 = vmatpush1.msra.mxu0 0.0
      %4630 = vmatprep.subr.mxu0 0.0
      %4631 = vmatpush1.msra.mxu0 0.0
      %4632 = vmatprep.subr.mxu0 0.0
      %4633 = vmatpush1.msra.mxu0 0.0
      %4634 = vmatprep.subr.mxu0 0.0
      %4635 = vmatpush1.msra.mxu0 0.0
      %4636 = vmatprep.subr.mxu0 0.0
      %4637 = vmatpush1.msra.mxu0 0.0
      %4638 = vmatprep.mubr.f32.mxu0 %v4489
      %4639 = vmatmul.mubr.f32.gmra.mrb[0].mxu0 %v4486
      %v4640 = vpop.f32.mrb[0].mxu0
      %v4641 = vadd.f32 %v4470, %v4640
      %v4642 = vpop.f32.mrb[0].mxu0
      %v4643 = vadd.f32 %v4474, %v4642
      %4644 = vdwg.mxu0
      %v4645 = vadd.f32 %v4376, %v4570
      %v4646 = vadd.f32 %v4377, %v4572
      %v4647 = vxor.u32 %v4645, 2147483648
      %v4648 = vxor.u32 %v4646, 2147483648
      %v4649 = vmul.f32 %v4647, 1.442695
      %v4650 = vpow.pop %v4649
      %v4651 = vmul.f32 %v4648, 1.442695
      %v4652 = vpow.pop %v4651
      %v4653 = vadd.f32 %v4650, 1.0
      %v4654 = vadd.f32 %v4652, 1.0
      %v4655 = vrcp.pop %v4653
      %v4656 = vmul.f32 1.0, %v4655
      %v4657 = vrcp.pop %v4654
      %v4658 = vmul.f32 1.0, %v4657
      %v4659 = vadd.f32 %v4378, %v4641
      %v4660 = vxor.u32 %v4659, 2147483648
      %v4661 = vmul.f32 %v4660, 1.442695
      %v4662 = vpow.pop %v4661
      %v4663 = vadd.f32 %v4662, 1.0
      %v4664 = vrcp.pop %v4663
      %v4665 = vmul.f32 1.0, %v4664
      %4668 = vrot.lane.b32.xlu0 %v4641, 84
      %v4669 = vpop.permute.xlu0 %4668
      %4670 = vrot.lane.b32.xlu0 %v4643, 84
      %v4671 = vpop.permute.xlu0 %4670
      %v4672 = vsel %vm1726, %v4669, %v4671
      %v4675 = vmul.f32 %v4656, %v4672
      %v4676 = vmul.f32 %v4658, %v4671
      %4679 = vrot.lane.b32.xlu0 %v4675, 44
      %v4680 = vpop.permute.xlu0 %4679
      %4681 = vrot.lane.b32.xlu0 %v4676, 44
      %v4682 = vpop.permute.xlu0 %4681
      %v4683 = vsel %vm1738, %v4680, %v4682
      %v4686 = vadd.f32 %v4378, %v4680
      %v4687 = vadd.f32 %v4379, %v4683
      %v4688 = vtanh.pop %v4686
      %v4689 = vtanh.pop %v4687
      %v4690 = vsub.f32 1.0, %v4658
      %v4691 = vsub.f32 1.0, %v4665
      %4694 = vrot.lane.b32.xlu0 %v4688, 106
      %v4695 = vpop.permute.xlu0 %4694
      %4696 = vrot.lane.b32.xlu0 %v4689, 106
      %v4697 = vpop.permute.xlu0 %4696
      %v4698 = vsel %vm1754, %v4695, %v4697
      %v4701 = vmul.f32 %v4690, %v4698
      %v4702 = vmul.f32 %v4691, %v4697
      %4703 = vrot.lane.b32.xlu0 %v4486, 22
      %v4704 = vpop.permute.xlu0 %4703
      %4705 = vrot.lane.b32.xlu0 %v4487, 22
      %v4706 = vpop.permute.xlu0 %4705
      %v4707 = vsel %vm1541, %v4704, %v4706
      %v4710 = vmul.f32 %v4658, %v4704
      %v4711 = vmul.f32 %v4665, %v4707
      %v4712 = vadd.f32 %v4701, %v4710
      %v4713 = vadd.f32 %v4702, %v4711
      %v4716 = vcombine.low %v4712, %v4713
      %v4718 = vunpack.c.l.s4 1983009808
      %v4719 = vunpack.c.0.s8 %v4718
      %v4720 = vlaneseq
      %v4721 = vshrl.u32 %v4720, 7
      %v4722 = vsub.s32 %v4719, %v4721
      %v4723 = vrot.slane %v4716, %v4722
      %4724 = vrot.lane.b32.xlu0 %v4723, 106
      %v4725 = vpop.permute.xlu0 %4724
      %v4726 = vrot.slane %v4725, 2
      %v4727 = vsel %vm1754, %v4725, %v4726
      %4729 = vst.msk [vmem:[#allocation2] sm:$0xf] %vm1426, %v4727
      %4730 = vst.msk [vmem:[#allocation5] sm:$0xf] %vm1426, %v4727
      %v4731 = vld [vmem:[#allocation4] sm:$0xc]
      %v4732 = vld [vmem:[#allocation4 + $0x8] sm:$0xc]
      %v4733 = vld [vmem:[#allocation4 + $0x10] sm:$0xc]
      %v4734 = vld [vmem:[#allocation4 + $0x18] sm:$0xc]
      %v4735 = vld [vmem:[#allocation2] sm:$0xf]
      %v4736 = vld [vmem:[%s787] sm:$0xff]
      %v4737 = vld [vmem:[%s787 + $0x8] sm:$0xff]
      %v4738 = vld [vmem:[%s787 + $0x10] sm:$0xff]
      %v4739 = vld [vmem:[%s787 + $0x18] sm:$0xff]
      %v4740 = vld [vmem:[%s787 + $0x20] sm:$0xff]
      %v4741 = vld [vmem:[%s787 + $0x28] sm:$0xff]
      %v4742 = vld [vmem:[%s787 + $0x30] sm:$0xff]
      %v4743 = vld [vmem:[%s787 + $0x38] sm:$0xff]
      %v4744 = vld [vmem:[%s787 + $0x40] sm:$0xff]
      %v4745 = vld [vmem:[%s787 + $0x48] sm:$0xff]
      %v4746 = vld [vmem:[%s787 + $0x50] sm:$0xff]
      %v4747 = vld [vmem:[%s787 + $0x58] sm:$0xff]
      %v4748 = vld [vmem:[%s787 + $0x60] sm:$0xff]
      %v4749 = vld [vmem:[%s787 + $0x68] sm:$0xff]
      %v4750 = vld [vmem:[%s787 + $0x70] sm:$0xff]
      %v4751 = vld [vmem:[%s787 + $0x78] sm:$0xff]
      %v4752 = vld [vmem:[%s787 + $0x80] sm:$0xff]
      %v4753 = vld [vmem:[%s787 + $0x88] sm:$0xff]
      %v4754 = vld [vmem:[%s787 + $0x90] sm:$0xff]
      %v4755 = vld [vmem:[%s787 + $0x98] sm:$0xff]
      %v4756 = vld [vmem:[%s787 + $0xa0] sm:$0xff]
      %v4757 = vld [vmem:[%s787 + $0xa8] sm:$0xff]
      %v4758 = vld [vmem:[%s787 + $0xb0] sm:$0xff]
      %v4759 = vld [vmem:[%s787 + $0xb8] sm:$0xff]
      %v4760 = vld [vmem:[%s787 + $0xc0] sm:$0xff]
      %v4761 = vld [vmem:[%s787 + $0xc8] sm:$0xff]
      %v4762 = vld [vmem:[%s787 + $0xd0] sm:$0xff]
      %v4763 = vld [vmem:[%s787 + $0xd8] sm:$0xff]
      %v4764 = vld [vmem:[%s787 + $0xe0] sm:$0xff]
      %v4765 = vld [vmem:[%s787 + $0xe8] sm:$0xff]
      %v4766 = vld [vmem:[%s787 + $0xf0] sm:$0xff]
      %v4767 = vld [vmem:[%s787 + $0xf8] sm:$0xff]
      %v4768 = vld [vmem:[%s787 + $0x100] sm:$0xff]
      %v4769 = vld [vmem:[%s787 + $0x108] sm:$0xff]
      %v4770 = vld [vmem:[%s787 + $0x110] sm:$0xff]
      %v4771 = vld [vmem:[%s787 + $0x118] sm:$0xff]
      %v4772 = vld [vmem:[%s787 + $0x120] sm:$0xff]
      %v4773 = vld [vmem:[%s787 + $0x128] sm:$0xff]
      %v4774 = vld [vmem:[%s787 + $0x130] sm:$0xff]
      %v4775 = vld [vmem:[%s787 + $0x138] sm:$0xff]
      %v4776 = vld [vmem:[%s787 + $0x140] sm:$0xff]
      %v4777 = vld [vmem:[%s787 + $0x148] sm:$0xff]
      %v4778 = vld [vmem:[%s787 + $0x150] sm:$0xff]
      %v4779 = vld [vmem:[%s787 + $0x158] sm:$0xff]
      %v4780 = vld [vmem:[%s787 + $0x160] sm:$0xff]
      %v4781 = vld [vmem:[%s787 + $0x168] sm:$0xff]
      %v4782 = vld [vmem:[%s787 + $0x170] sm:$0xff]
      %v4783 = vld [vmem:[%s787 + $0x178] sm:$0xff]
      %v4784 = vld [vmem:[%s787 + $0x180] sm:$0xff]
      %v4785 = vld [vmem:[%s787 + $0x188] sm:$0xff]
      %v4786 = vld [vmem:[%s787 + $0x190] sm:$0xff]
      %v4787 = vld [vmem:[%s787 + $0x198] sm:$0xff]
      %v4788 = vld [vmem:[%s787 + $0x1a0] sm:$0xff]
      %v4789 = vld [vmem:[%s787 + $0x1a8] sm:$0xff]
      %v4790 = vld [vmem:[%s787 + $0x1b0] sm:$0xff]
      %v4791 = vld [vmem:[%s787 + $0x1b8] sm:$0xff]
      %v4792 = vld [vmem:[%s787 + $0x1c0] sm:$0xff]
      %v4793 = vld [vmem:[%s787 + $0x1c8] sm:$0xff]
      %v4794 = vld [vmem:[%s787 + $0x1d0] sm:$0xff]
      %v4795 = vld [vmem:[%s787 + $0x1d8] sm:$0xff]
      %v4796 = vld [vmem:[%s787 + $0x1e0] sm:$0xff]
      %v4797 = vld [vmem:[%s787 + $0x1e8] sm:$0xff]
      %v4798 = vld [vmem:[%s787 + $0x1f0] sm:$0xff]
      %v4799 = vld [vmem:[%s787 + $0x1f8] sm:$0xff]
      %v4800 = vld [vmem:[%s787 + $0x200] sm:$0xff]
      %v4801 = vld [vmem:[%s787 + $0x208] sm:$0xff]
      %v4802 = vld [vmem:[%s787 + $0x210] sm:$0xff]
      %v4803 = vld [vmem:[%s787 + $0x218] sm:$0xff]
      %v4804 = vld [vmem:[%s787 + $0x220] sm:$0xff]
      %v4805 = vld [vmem:[%s787 + $0x228] sm:$0xff]
      %v4806 = vld [vmem:[%s787 + $0x230] sm:$0xff]
      %v4807 = vld [vmem:[%s787 + $0x238] sm:$0xff]
      %v4808 = vld [vmem:[%s787 + $0x240] sm:$0x3f]
      %v4809 = vld [vmem:[%s787 + $0x248] sm:$0x3f]
      %v4810 = vld [vmem:[%s787 + $0x250] sm:$0x3f]
      %v4811 = vld [vmem:[%s787 + $0x258] sm:$0x3f]
      %v4812 = vld [vmem:[%s795] sm:$0xf]
      %v4814 = vlaneseq
      %v4815 = vshrl.u32 %v4814, 7
      %v4816 = vsub.s32 0, %v4815
      %v4817 = vrot.slane %v4812, %v4816
      %v4818 = vlaneseq
      %v4819 = vshrl.u32 %v4818, 7
      %v4820 = vsub.s32 1, %v4819
      %v4821 = vrot.slane %v4812, %v4820
      %v4822 = vlaneseq
      %v4823 = vshrl.u32 %v4822, 7
      %v4824 = vsub.s32 2, %v4823
      %v4825 = vrot.slane %v4812, %v4824
      %v4826 = vlaneseq
      %v4827 = vshrl.u32 %v4826, 7
      %v4828 = vsub.s32 3, %v4827
      %v4829 = vrot.slane %v4812, %v4828
      %v4836 = vunpack.c.l.s4 1983009808
      %v4837 = vunpack.c.0.s8 %v4836
      %v4838 = vlaneseq
      %v4839 = vshrl.u32 %v4838, 7
      %v4840 = vsub.s32 %v4837, %v4839
      %v4841 = vrot.slane %v4735, %v4840
      %v4842 = vcombine.high %v4841, %v4841
      %v4844 = vsel %vm1541, %v4842, 0
      %v4847 = vsel %vm1544, %v4808, 0
      %v4850 = vsel %vm1544, %v4809, 0
      %v4853 = vsel %vm1544, %v4810, 0
      %v4856 = vsel %vm1544, %v4811, 0
      %4858 = vmatprep.subr.mxu0 %v4737
      %4859 = vmatpush1.msra.mxu0 %v4736
      %4860 = vmatprep.subr.mxu0 %v4741
      %4861 = vmatpush1.msra.mxu0 %v4740
      %4862 = vmatprep.subr.mxu0 %v4745
      %4863 = vmatpush1.msra.mxu0 %v4744
      %4864 = vmatprep.subr.mxu0 %v4749
      %4865 = vmatpush1.msra.mxu0 %v4748
      %4866 = vmatprep.subr.mxu0 %v4753
      %4867 = vmatpush1.msra.mxu0 %v4752
      %4868 = vmatprep.subr.mxu0 %v4757
      %4869 = vmatpush1.msra.mxu0 %v4756
      %4870 = vmatprep.subr.mxu0 %v4761
      %4871 = vmatpush1.msra.mxu0 %v4760
      %4872 = vmatprep.subr.mxu0 %v4765
      %4873 = vmatpush1.msra.mxu0 %v4764
      %4874 = vmatprep.subr.mxu0 %v4769
      %4875 = vmatpush1.msra.mxu0 %v4768
      %4876 = vmatprep.subr.mxu0 %v4773
      %4877 = vmatpush1.msra.mxu0 %v4772
      %4878 = vmatprep.subr.mxu0 %v4777
      %4879 = vmatpush1.msra.mxu0 %v4776
      %4880 = vmatprep.subr.mxu0 %v4781
      %4881 = vmatpush1.msra.mxu0 %v4780
      %4882 = vmatprep.subr.mxu0 %v4785
      %4883 = vmatpush1.msra.mxu0 %v4784
      %4884 = vmatprep.subr.mxu0 %v4789
      %4885 = vmatpush1.msra.mxu0 %v4788
      %4886 = vmatprep.subr.mxu0 %v4793
      %4887 = vmatpush1.msra.mxu0 %v4792
      %4888 = vmatprep.subr.mxu0 %v4797
      %4889 = vmatpush1.msra.mxu0 %v4796
      %4890 = vmatprep.subr.mxu0 %v4801
      %4891 = vmatpush1.msra.mxu0 %v4800
      %4892 = vmatprep.subr.mxu0 %v4805
      %4893 = vmatpush1.msra.mxu0 %v4804
      %4894 = vmatprep.subr.mxu0 %v4850
      %4895 = vmatpush1.msra.mxu0 %v4847
      %4896 = vmatprep.subr.mxu0 0.0
      %4897 = vmatpush1.msra.mxu0 0.0
      %4898 = vmatprep.subr.mxu0 0.0
      %4899 = vmatpush1.msra.mxu0 0.0
      %4900 = vmatprep.subr.mxu0 0.0
      %4901 = vmatpush1.msra.mxu0 0.0
      %4902 = vmatprep.subr.mxu0 0.0
      %4903 = vmatpush1.msra.mxu0 0.0
      %4904 = vmatprep.subr.mxu0 0.0
      %4905 = vmatpush1.msra.mxu0 0.0
      %4906 = vmatprep.subr.mxu0 0.0
      %4907 = vmatpush1.msra.mxu0 0.0
      %4908 = vmatprep.subr.mxu0 0.0
      %4909 = vmatpush1.msra.mxu0 0.0
      %4910 = vmatprep.subr.mxu0 0.0
      %4911 = vmatpush1.msra.mxu0 0.0
      %4912 = vmatprep.subr.mxu0 0.0
      %4913 = vmatpush1.msra.mxu0 0.0
      %4914 = vmatprep.subr.mxu0 0.0
      %4915 = vmatpush1.msra.mxu0 0.0
      %4916 = vmatprep.subr.mxu0 0.0
      %4917 = vmatpush1.msra.mxu0 0.0
      %4918 = vmatprep.subr.mxu0 0.0
      %4919 = vmatpush1.msra.mxu0 0.0
      %4920 = vmatprep.subr.mxu0 0.0
      %4921 = vmatpush1.msra.mxu0 0.0
      %4922 = vmatprep.mubr.f32.mxu0 %v4844
      %4923 = vmatmul.mubr.f32.gmra.mrb[0].mxu0 %v4841
      %v4924 = vpop.f32.mrb[0].mxu0
      %v4925 = vadd.f32 %v4817, %v4924
      %v4926 = vpop.f32.mrb[0].mxu0
      %v4927 = vadd.f32 %v4821, %v4926
      %4928 = vdwg.mxu0
      %4929 = vmatprep.subr.mxu0 %v4739
      %4930 = vmatpush1.msra.mxu0 %v4738
      %4931 = vmatprep.subr.mxu0 %v4743
      %4932 = vmatpush1.msra.mxu0 %v4742
      %4933 = vmatprep.subr.mxu0 %v4747
      %4934 = vmatpush1.msra.mxu0 %v4746
      %4935 = vmatprep.subr.mxu0 %v4751
      %4936 = vmatpush1.msra.mxu0 %v4750
      %4937 = vmatprep.subr.mxu0 %v4755
      %4938 = vmatpush1.msra.mxu0 %v4754
      %4939 = vmatprep.subr.mxu0 %v4759
      %4940 = vmatpush1.msra.mxu0 %v4758
      %4941 = vmatprep.subr.mxu0 %v4763
      %4942 = vmatpush1.msra.mxu0 %v4762
      %4943 = vmatprep.subr.mxu0 %v4767
      %4944 = vmatpush1.msra.mxu0 %v4766
      %4945 = vmatprep.subr.mxu0 %v4771
      %4946 = vmatpush1.msra.mxu0 %v4770
      %4947 = vmatprep.subr.mxu0 %v4775
      %4948 = vmatpush1.msra.mxu0 %v4774
      %4949 = vmatprep.subr.mxu0 %v4779
      %4950 = vmatpush1.msra.mxu0 %v4778
      %4951 = vmatprep.subr.mxu0 %v4783
      %4952 = vmatpush1.msra.mxu0 %v4782
      %4953 = vmatprep.subr.mxu0 %v4787
      %4954 = vmatpush1.msra.mxu0 %v4786
      %4955 = vmatprep.subr.mxu0 %v4791
      %4956 = vmatpush1.msra.mxu0 %v4790
      %4957 = vmatprep.subr.mxu0 %v4795
      %4958 = vmatpush1.msra.mxu0 %v4794
      %4959 = vmatprep.subr.mxu0 %v4799
      %4960 = vmatpush1.msra.mxu0 %v4798
      %4961 = vmatprep.subr.mxu0 %v4803
      %4962 = vmatpush1.msra.mxu0 %v4802
      %4963 = vmatprep.subr.mxu0 %v4807
      %4964 = vmatpush1.msra.mxu0 %v4806
      %4965 = vmatprep.subr.mxu0 %v4856
      %4966 = vmatpush1.msra.mxu0 %v4853
      %4967 = vmatprep.subr.mxu0 0.0
      %4968 = vmatpush1.msra.mxu0 0.0
      %4969 = vmatprep.subr.mxu0 0.0
      %4970 = vmatpush1.msra.mxu0 0.0
      %4971 = vmatprep.subr.mxu0 0.0
      %4972 = vmatpush1.msra.mxu0 0.0
      %4973 = vmatprep.subr.mxu0 0.0
      %4974 = vmatpush1.msra.mxu0 0.0
      %4975 = vmatprep.subr.mxu0 0.0
      %4976 = vmatpush1.msra.mxu0 0.0
      %4977 = vmatprep.subr.mxu0 0.0
      %4978 = vmatpush1.msra.mxu0 0.0
      %4979 = vmatprep.subr.mxu0 0.0
      %4980 = vmatpush1.msra.mxu0 0.0
      %4981 = vmatprep.subr.mxu0 0.0
      %4982 = vmatpush1.msra.mxu0 0.0
      %4983 = vmatprep.subr.mxu0 0.0
      %4984 = vmatpush1.msra.mxu0 0.0
      %4985 = vmatprep.subr.mxu0 0.0
      %4986 = vmatpush1.msra.mxu0 0.0
      %4987 = vmatprep.subr.mxu0 0.0
      %4988 = vmatpush1.msra.mxu0 0.0
      %4989 = vmatprep.subr.mxu0 0.0
      %4990 = vmatpush1.msra.mxu0 0.0
      %4991 = vmatprep.subr.mxu0 0.0
      %4992 = vmatpush1.msra.mxu0 0.0
      %4993 = vmatprep.mubr.f32.mxu0 %v4844
      %4994 = vmatmul.mubr.f32.gmra.mrb[0].mxu0 %v4841
      %v4995 = vpop.f32.mrb[0].mxu0
      %v4996 = vadd.f32 %v4825, %v4995
      %v4997 = vpop.f32.mrb[0].mxu0
      %v4998 = vadd.f32 %v4829, %v4997
      %4999 = vdwg.mxu0
      %v5002 = vrot.slane %v4925, 6
      %v5003 = vrot.slane %v4927, 6
      %v5006 = vadd.f32 %v4731, %v5002
      %v5007 = vadd.f32 %v4732, %v5003
      %v5008 = vxor.u32 %v5006, 2147483648
      %v5009 = vxor.u32 %v5007, 2147483648
      %v5010 = vmul.f32 %v5008, 1.442695
      %v5011 = vpow.pop %v5010
      %v5012 = vmul.f32 %v5009, 1.442695
      %v5013 = vpow.pop %v5012
      %v5014 = vadd.f32 %v5011, 1.0
      %v5015 = vadd.f32 %v5013, 1.0
      %v5016 = vrcp.pop %v5014
      %v5017 = vmul.f32 1.0, %v5016
      %v5018 = vrcp.pop %v5015
      %v5019 = vmul.f32 1.0, %v5018
      %v5021 = vrot.slane %v4996, 6
      %v5023 = vadd.f32 %v4733, %v5021
      %v5024 = vxor.u32 %v5023, 2147483648
      %v5025 = vmul.f32 %v5024, 1.442695
      %v5026 = vpow.pop %v5025
      %v5027 = vadd.f32 %v5026, 1.0
      %v5028 = vrcp.pop %v5027
      %v5029 = vmul.f32 1.0, %v5028
      %v5031 = vrot.slane %v4998, 6
      %5032 = vrot.lane.b32.xlu0 %v5021, 84
      %v5033 = vpop.permute.xlu0 %5032
      %5034 = vrot.lane.b32.xlu0 %v5031, 84
      %v5035 = vpop.permute.xlu0 %5034
      %v5036 = vsel %vm1726, %v5033, %v5035
      %v5039 = vmul.f32 %v5017, %v5036
      %v5040 = vmul.f32 %v5019, %v5035
      %5043 = vrot.lane.b32.xlu0 %v5039, 44
      %v5044 = vpop.permute.xlu0 %5043
      %5045 = vrot.lane.b32.xlu0 %v5040, 44
      %v5046 = vpop.permute.xlu0 %5045
      %v5047 = vsel %vm1738, %v5044, %v5046
      %v5050 = vadd.f32 %v4733, %v5044
      %v5051 = vadd.f32 %v4734, %v5047
      %v5052 = vtanh.pop %v5050
      %v5053 = vtanh.pop %v5051
      %v5054 = vsub.f32 1.0, %v5019
      %v5055 = vsub.f32 1.0, %v5029
      %5058 = vrot.lane.b32.xlu0 %v5052, 106
      %v5059 = vpop.permute.xlu0 %5058
      %5060 = vrot.lane.b32.xlu0 %v5053, 106
      %v5061 = vpop.permute.xlu0 %5060
      %v5062 = vsel %vm1754, %v5059, %v5061
      %v5065 = vmul.f32 %v5054, %v5062
      %v5066 = vmul.f32 %v5055, %v5061
      %v5067 = vcombine.low %v4735, %v4735
      %v5069 = vunpack.c.l.s4 1983009808
      %v5070 = vunpack.c.0.s8 %v5069
      %v5071 = vlaneseq
      %v5072 = vshrl.u32 %v5071, 7
      %v5073 = vsub.s32 %v5070, %v5072
      %v5074 = vrot.slane %v5067, %v5073
      %v5075 = vcombine.high %v5074, %v5074
      %5076 = vrot.lane.b32.xlu0 %v5074, 22
      %v5077 = vpop.permute.xlu0 %5076
      %5078 = vrot.lane.b32.xlu0 %v5075, 22
      %v5079 = vpop.permute.xlu0 %5078
      %v5080 = vsel %vm1541, %v5077, %v5079
      %v5083 = vmul.f32 %v5019, %v5077
      %v5084 = vmul.f32 %v5029, %v5080
      %v5085 = vadd.f32 %v5065, %v5083
      %v5086 = vadd.f32 %v5066, %v5084
      %v5089 = vcombine.low %v5085, %v5086
      %v5091 = vunpack.c.l.s4 1983009808
      %v5092 = vunpack.c.0.s8 %v5091
      %v5093 = vlaneseq
      %v5094 = vshrl.u32 %v5093, 7
      %v5095 = vsub.s32 %v5092, %v5094
      %v5096 = vrot.slane %v5089, %v5095
      %v5097 = vcombine.high %v5096, %v5096
      %5098 = vrot.lane.b32.xlu0 %v5097, 106
      %v5099 = vpop.permute.xlu0 %5098
      %v5100 = vrot.slane %v5099, 2
      %v5101 = vsel %vm1754, %v5099, %v5100
      %5103 = vst.msk [vmem:[#allocation2] sm:$0xf] %vm1426, %v5101
      %s5104 = scalar_lea.vmem [#allocation5], 4
      %5105 = vst.msk [vmem:[%s5104] sm:$0xf] %vm1426, %v5101
      %v5106 = vld [vmem:[#allocation4] sm:$0x30]
      %v5107 = vld [vmem:[#allocation4 + $0x8] sm:$0x30]
      %v5108 = vld [vmem:[#allocation4 + $0x10] sm:$0x30]
      %v5109 = vld [vmem:[#allocation4 + $0x18] sm:$0x30]
      %v5110 = vld [vmem:[#allocation2] sm:$0xf]
      %v5111 = vld [vmem:[%s787] sm:$0xff]
      %v5112 = vld [vmem:[%s787 + $0x8] sm:$0xff]
      %v5113 = vld [vmem:[%s787 + $0x10] sm:$0xff]
      %v5114 = vld [vmem:[%s787 + $0x18] sm:$0xff]
      %v5115 = vld [vmem:[%s787 + $0x20] sm:$0xff]
      %v5116 = vld [vmem:[%s787 + $0x28] sm:$0xff]
      %v5117 = vld [vmem:[%s787 + $0x30] sm:$0xff]
      %v5118 = vld [vmem:[%s787 + $0x38] sm:$0xff]
      %v5119 = vld [vmem:[%s787 + $0x40] sm:$0xff]
      %v5120 = vld [vmem:[%s787 + $0x48] sm:$0xff]
      %v5121 = vld [vmem:[%s787 + $0x50] sm:$0xff]
      %v5122 = vld [vmem:[%s787 + $0x58] sm:$0xff]
      %v5123 = vld [vmem:[%s787 + $0x60] sm:$0xff]
      %v5124 = vld [vmem:[%s787 + $0x68] sm:$0xff]
      %v5125 = vld [vmem:[%s787 + $0x70] sm:$0xff]
      %v5126 = vld [vmem:[%s787 + $0x78] sm:$0xff]
      %v5127 = vld [vmem:[%s787 + $0x80] sm:$0xff]
      %v5128 = vld [vmem:[%s787 + $0x88] sm:$0xff]
      %v5129 = vld [vmem:[%s787 + $0x90] sm:$0xff]
      %v5130 = vld [vmem:[%s787 + $0x98] sm:$0xff]
      %v5131 = vld [vmem:[%s787 + $0xa0] sm:$0xff]
      %v5132 = vld [vmem:[%s787 + $0xa8] sm:$0xff]
      %v5133 = vld [vmem:[%s787 + $0xb0] sm:$0xff]
      %v5134 = vld [vmem:[%s787 + $0xb8] sm:$0xff]
      %v5135 = vld [vmem:[%s787 + $0xc0] sm:$0xff]
      %v5136 = vld [vmem:[%s787 + $0xc8] sm:$0xff]
      %v5137 = vld [vmem:[%s787 + $0xd0] sm:$0xff]
      %v5138 = vld [vmem:[%s787 + $0xd8] sm:$0xff]
      %v5139 = vld [vmem:[%s787 + $0xe0] sm:$0xff]
      %v5140 = vld [vmem:[%s787 + $0xe8] sm:$0xff]
      %v5141 = vld [vmem:[%s787 + $0xf0] sm:$0xff]
      %v5142 = vld [vmem:[%s787 + $0xf8] sm:$0xff]
      %v5143 = vld [vmem:[%s787 + $0x100] sm:$0xff]
      %v5144 = vld [vmem:[%s787 + $0x108] sm:$0xff]
      %v5145 = vld [vmem:[%s787 + $0x110] sm:$0xff]
      %v5146 = vld [vmem:[%s787 + $0x118] sm:$0xff]
      %v5147 = vld [vmem:[%s787 + $0x120] sm:$0xff]
      %v5148 = vld [vmem:[%s787 + $0x128] sm:$0xff]
      %v5149 = vld [vmem:[%s787 + $0x130] sm:$0xff]
      %v5150 = vld [vmem:[%s787 + $0x138] sm:$0xff]
      %v5151 = vld [vmem:[%s787 + $0x140] sm:$0xff]
      %v5152 = vld [vmem:[%s787 + $0x148] sm:$0xff]
      %v5153 = vld [vmem:[%s787 + $0x150] sm:$0xff]
      %v5154 = vld [vmem:[%s787 + $0x158] sm:$0xff]
      %v5155 = vld [vmem:[%s787 + $0x160] sm:$0xff]
      %v5156 = vld [vmem:[%s787 + $0x168] sm:$0xff]
      %v5157 = vld [vmem:[%s787 + $0x170] sm:$0xff]
      %v5158 = vld [vmem:[%s787 + $0x178] sm:$0xff]
      %v5159 = vld [vmem:[%s787 + $0x180] sm:$0xff]
      %v5160 = vld [vmem:[%s787 + $0x188] sm:$0xff]
      %v5161 = vld [vmem:[%s787 + $0x190] sm:$0xff]
      %v5162 = vld [vmem:[%s787 + $0x198] sm:$0xff]
      %v5163 = vld [vmem:[%s787 + $0x1a0] sm:$0xff]
      %v5164 = vld [vmem:[%s787 + $0x1a8] sm:$0xff]
      %v5165 = vld [vmem:[%s787 + $0x1b0] sm:$0xff]
      %v5166 = vld [vmem:[%s787 + $0x1b8] sm:$0xff]
      %v5167 = vld [vmem:[%s787 + $0x1c0] sm:$0xff]
      %v5168 = vld [vmem:[%s787 + $0x1c8] sm:$0xff]
      %v5169 = vld [vmem:[%s787 + $0x1d0] sm:$0xff]
      %v5170 = vld [vmem:[%s787 + $0x1d8] sm:$0xff]
      %v5171 = vld [vmem:[%s787 + $0x1e0] sm:$0xff]
      %v5172 = vld [vmem:[%s787 + $0x1e8] sm:$0xff]
      %v5173 = vld [vmem:[%s787 + $0x1f0] sm:$0xff]
      %v5174 = vld [vmem:[%s787 + $0x1f8] sm:$0xff]
      %v5175 = vld [vmem:[%s787 + $0x200] sm:$0xff]
      %v5176 = vld [vmem:[%s787 + $0x208] sm:$0xff]
      %v5177 = vld [vmem:[%s787 + $0x210] sm:$0xff]
      %v5178 = vld [vmem:[%s787 + $0x218] sm:$0xff]
      %v5179 = vld [vmem:[%s787 + $0x220] sm:$0xff]
      %v5180 = vld [vmem:[%s787 + $0x228] sm:$0xff]
      %v5181 = vld [vmem:[%s787 + $0x230] sm:$0xff]
      %v5182 = vld [vmem:[%s787 + $0x238] sm:$0xff]
      %v5183 = vld [vmem:[%s787 + $0x240] sm:$0x3f]
      %v5184 = vld [vmem:[%s787 + $0x248] sm:$0x3f]
      %v5185 = vld [vmem:[%s787 + $0x250] sm:$0x3f]
      %v5186 = vld [vmem:[%s787 + $0x258] sm:$0x3f]
      %v5187 = vld [vmem:[%s795] sm:$0xf]
      %v5189 = vlaneseq
      %v5190 = vshrl.u32 %v5189, 7
      %v5191 = vsub.s32 0, %v5190
      %v5192 = vrot.slane %v5187, %v5191
      %v5193 = vlaneseq
      %v5194 = vshrl.u32 %v5193, 7
      %v5195 = vsub.s32 1, %v5194
      %v5196 = vrot.slane %v5187, %v5195
      %v5197 = vlaneseq
      %v5198 = vshrl.u32 %v5197, 7
      %v5199 = vsub.s32 2, %v5198
      %v5200 = vrot.slane %v5187, %v5199
      %v5201 = vlaneseq
      %v5202 = vshrl.u32 %v5201, 7
      %v5203 = vsub.s32 3, %v5202
      %v5204 = vrot.slane %v5187, %v5203
      %v5211 = vunpack.c.l.s4 1983009808
      %v5212 = vunpack.c.0.s8 %v5211
      %v5213 = vlaneseq
      %v5214 = vshrl.u32 %v5213, 7
      %v5215 = vsub.s32 %v5212, %v5214
      %v5216 = vrot.slane %v5110, %v5215
      %v5217 = vcombine.high %v5216, %v5216
      %v5219 = vsel %vm1541, %v5217, 0
      %v5222 = vsel %vm1544, %v5183, 0
      %v5225 = vsel %vm1544, %v5184, 0
      %v5228 = vsel %vm1544, %v5185, 0
      %v5231 = vsel %vm1544, %v5186, 0
      %5233 = vmatprep.subr.mxu0 %v5112
      %5234 = vmatpush1.msra.mxu0 %v5111
      %5235 = vmatprep.subr.mxu0 %v5116
      %5236 = vmatpush1.msra.mxu0 %v5115
      %5237 = vmatprep.subr.mxu0 %v5120
      %5238 = vmatpush1.msra.mxu0 %v5119
      %5239 = vmatprep.subr.mxu0 %v5124
      %5240 = vmatpush1.msra.mxu0 %v5123
      %5241 = vmatprep.subr.mxu0 %v5128
      %5242 = vmatpush1.msra.mxu0 %v5127
      %5243 = vmatprep.subr.mxu0 %v5132
      %5244 = vmatpush1.msra.mxu0 %v5131
      %5245 = vmatprep.subr.mxu0 %v5136
      %5246 = vmatpush1.msra.mxu0 %v5135
      %5247 = vmatprep.subr.mxu0 %v5140
      %5248 = vmatpush1.msra.mxu0 %v5139
      %5249 = vmatprep.subr.mxu0 %v5144
      %5250 = vmatpush1.msra.mxu0 %v5143
      %5251 = vmatprep.subr.mxu0 %v5148
      %5252 = vmatpush1.msra.mxu0 %v5147
      %5253 = vmatprep.subr.mxu0 %v5152
      %5254 = vmatpush1.msra.mxu0 %v5151
      %5255 = vmatprep.subr.mxu0 %v5156
      %5256 = vmatpush1.msra.mxu0 %v5155
      %5257 = vmatprep.subr.mxu0 %v5160
      %5258 = vmatpush1.msra.mxu0 %v5159
      %5259 = vmatprep.subr.mxu0 %v5164
      %5260 = vmatpush1.msra.mxu0 %v5163
      %5261 = vmatprep.subr.mxu0 %v5168
      %5262 = vmatpush1.msra.mxu0 %v5167
      %5263 = vmatprep.subr.mxu0 %v5172
      %5264 = vmatpush1.msra.mxu0 %v5171
      %5265 = vmatprep.subr.mxu0 %v5176
      %5266 = vmatpush1.msra.mxu0 %v5175
      %5267 = vmatprep.subr.mxu0 %v5180
      %5268 = vmatpush1.msra.mxu0 %v5179
      %5269 = vmatprep.subr.mxu0 %v5225
      %5270 = vmatpush1.msra.mxu0 %v5222
      %5271 = vmatprep.subr.mxu0 0.0
      %5272 = vmatpush1.msra.mxu0 0.0
      %5273 = vmatprep.subr.mxu0 0.0
      %5274 = vmatpush1.msra.mxu0 0.0
      %5275 = vmatprep.subr.mxu0 0.0
      %5276 = vmatpush1.msra.mxu0 0.0
      %5277 = vmatprep.subr.mxu0 0.0
      %5278 = vmatpush1.msra.mxu0 0.0
      %5279 = vmatprep.subr.mxu0 0.0
      %5280 = vmatpush1.msra.mxu0 0.0
      %5281 = vmatprep.subr.mxu0 0.0
      %5282 = vmatpush1.msra.mxu0 0.0
      %5283 = vmatprep.subr.mxu0 0.0
      %5284 = vmatpush1.msra.mxu0 0.0
      %5285 = vmatprep.subr.mxu0 0.0
      %5286 = vmatpush1.msra.mxu0 0.0
      %5287 = vmatprep.subr.mxu0 0.0
      %5288 = vmatpush1.msra.mxu0 0.0
      %5289 = vmatprep.subr.mxu0 0.0
      %5290 = vmatpush1.msra.mxu0 0.0
      %5291 = vmatprep.subr.mxu0 0.0
      %5292 = vmatpush1.msra.mxu0 0.0
      %5293 = vmatprep.subr.mxu0 0.0
      %5294 = vmatpush1.msra.mxu0 0.0
      %5295 = vmatprep.subr.mxu0 0.0
      %5296 = vmatpush1.msra.mxu0 0.0
      %5297 = vmatprep.mubr.f32.mxu0 %v5219
      %5298 = vmatmul.mubr.f32.gmra.mrb[0].mxu0 %v5216
      %v5299 = vpop.f32.mrb[0].mxu0
      %v5300 = vadd.f32 %v5192, %v5299
      %v5301 = vpop.f32.mrb[0].mxu0
      %v5302 = vadd.f32 %v5196, %v5301
      %5303 = vdwg.mxu0
      %5304 = vmatprep.subr.mxu0 %v5114
      %5305 = vmatpush1.msra.mxu0 %v5113
      %5306 = vmatprep.subr.mxu0 %v5118
      %5307 = vmatpush1.msra.mxu0 %v5117
      %5308 = vmatprep.subr.mxu0 %v5122
      %5309 = vmatpush1.msra.mxu0 %v5121
      %5310 = vmatprep.subr.mxu0 %v5126
      %5311 = vmatpush1.msra.mxu0 %v5125
      %5312 = vmatprep.subr.mxu0 %v5130
      %5313 = vmatpush1.msra.mxu0 %v5129
      %5314 = vmatprep.subr.mxu0 %v5134
      %5315 = vmatpush1.msra.mxu0 %v5133
      %5316 = vmatprep.subr.mxu0 %v5138
      %5317 = vmatpush1.msra.mxu0 %v5137
      %5318 = vmatprep.subr.mxu0 %v5142
      %5319 = vmatpush1.msra.mxu0 %v5141
      %5320 = vmatprep.subr.mxu0 %v5146
      %5321 = vmatpush1.msra.mxu0 %v5145
      %5322 = vmatprep.subr.mxu0 %v5150
      %5323 = vmatpush1.msra.mxu0 %v5149
      %5324 = vmatprep.subr.mxu0 %v5154
      %5325 = vmatpush1.msra.mxu0 %v5153
      %5326 = vmatprep.subr.mxu0 %v5158
      %5327 = vmatpush1.msra.mxu0 %v5157
      %5328 = vmatprep.subr.mxu0 %v5162
      %5329 = vmatpush1.msra.mxu0 %v5161
      %5330 = vmatprep.subr.mxu0 %v5166
      %5331 = vmatpush1.msra.mxu0 %v5165
      %5332 = vmatprep.subr.mxu0 %v5170
      %5333 = vmatpush1.msra.mxu0 %v5169
      %5334 = vmatprep.subr.mxu0 %v5174
      %5335 = vmatpush1.msra.mxu0 %v5173
      %5336 = vmatprep.subr.mxu0 %v5178
      %5337 = vmatpush1.msra.mxu0 %v5177
      %5338 = vmatprep.subr.mxu0 %v5182
      %5339 = vmatpush1.msra.mxu0 %v5181
      %5340 = vmatprep.subr.mxu0 %v5231
      %5341 = vmatpush1.msra.mxu0 %v5228
      %5342 = vmatprep.subr.mxu0 0.0
      %5343 = vmatpush1.msra.mxu0 0.0
      %5344 = vmatprep.subr.mxu0 0.0
      %5345 = vmatpush1.msra.mxu0 0.0
      %5346 = vmatprep.subr.mxu0 0.0
      %5347 = vmatpush1.msra.mxu0 0.0
      %5348 = vmatprep.subr.mxu0 0.0
      %5349 = vmatpush1.msra.mxu0 0.0
      %5350 = vmatprep.subr.mxu0 0.0
      %5351 = vmatpush1.msra.mxu0 0.0
      %5352 = vmatprep.subr.mxu0 0.0
      %5353 = vmatpush1.msra.mxu0 0.0
      %5354 = vmatprep.subr.mxu0 0.0
      %5355 = vmatpush1.msra.mxu0 0.0
      %5356 = vmatprep.subr.mxu0 0.0
      %5357 = vmatpush1.msra.mxu0 0.0
      %5358 = vmatprep.subr.mxu0 0.0
      %5359 = vmatpush1.msra.mxu0 0.0
      %5360 = vmatprep.subr.mxu0 0.0
      %5361 = vmatpush1.msra.mxu0 0.0
      %5362 = vmatprep.subr.mxu0 0.0
      %5363 = vmatpush1.msra.mxu0 0.0
      %5364 = vmatprep.subr.mxu0 0.0
      %5365 = vmatpush1.msra.mxu0 0.0
      %5366 = vmatprep.subr.mxu0 0.0
      %5367 = vmatpush1.msra.mxu0 0.0
      %5368 = vmatprep.mubr.f32.mxu0 %v5219
      %5369 = vmatmul.mubr.f32.gmra.mrb[0].mxu0 %v5216
      %v5370 = vpop.f32.mrb[0].mxu0
      %v5371 = vadd.f32 %v5200, %v5370
      %v5372 = vpop.f32.mrb[0].mxu0
      %v5373 = vadd.f32 %v5204, %v5372
      %5374 = vdwg.mxu0
      %v5377 = vrot.slane %v5300, 4
      %v5378 = vrot.slane %v5302, 4
      %v5381 = vadd.f32 %v5106, %v5377
      %v5382 = vadd.f32 %v5107, %v5378
      %v5383 = vxor.u32 %v5381, 2147483648
      %v5384 = vxor.u32 %v5382, 2147483648
      %v5385 = vmul.f32 %v5383, 1.442695
      %v5386 = vpow.pop %v5385
      %v5387 = vmul.f32 %v5384, 1.442695
      %v5388 = vpow.pop %v5387
      %v5389 = vadd.f32 %v5386, 1.0
      %v5390 = vadd.f32 %v5388, 1.0
      %v5391 = vrcp.pop %v5389
      %v5392 = vmul.f32 1.0, %v5391
      %v5393 = vrcp.pop %v5390
      %v5394 = vmul.f32 1.0, %v5393
      %v5396 = vrot.slane %v5371, 4
      %v5398 = vadd.f32 %v5108, %v5396
      %v5399 = vxor.u32 %v5398, 2147483648
      %v5400 = vmul.f32 %v5399, 1.442695
      %v5401 = vpow.pop %v5400
      %v5402 = vadd.f32 %v5401, 1.0
      %v5403 = vrcp.pop %v5402
      %v5404 = vmul.f32 1.0, %v5403
      %v5406 = vrot.slane %v5373, 4
      %5407 = vrot.lane.b32.xlu0 %v5396, 84
      %v5408 = vpop.permute.xlu0 %5407
      %5409 = vrot.lane.b32.xlu0 %v5406, 84
      %v5410 = vpop.permute.xlu0 %5409
      %v5411 = vsel %vm1726, %v5408, %v5410
      %v5414 = vmul.f32 %v5392, %v5411
      %v5415 = vmul.f32 %v5394, %v5410
      %5418 = vrot.lane.b32.xlu0 %v5414, 44
      %v5419 = vpop.permute.xlu0 %5418
      %5420 = vrot.lane.b32.xlu0 %v5415, 44
      %v5421 = vpop.permute.xlu0 %5420
      %v5422 = vsel %vm1738, %v5419, %v5421
      %v5425 = vadd.f32 %v5108, %v5419
      %v5426 = vadd.f32 %v5109, %v5422
      %v5427 = vtanh.pop %v5425
      %v5428 = vtanh.pop %v5426
      %v5429 = vsub.f32 1.0, %v5394
      %v5430 = vsub.f32 1.0, %v5404
      %5433 = vrot.lane.b32.xlu0 %v5427, 106
      %v5434 = vpop.permute.xlu0 %5433
      %5435 = vrot.lane.b32.xlu0 %v5428, 106
      %v5436 = vpop.permute.xlu0 %5435
      %v5437 = vsel %vm1754, %v5434, %v5436
      %v5440 = vmul.f32 %v5429, %v5437
      %v5441 = vmul.f32 %v5430, %v5436
      %v5442 = vcombine.low %v5216, %v5216
      %5443 = vrot.lane.b32.xlu0 %v5442, 22
      %v5444 = vpop.permute.xlu0 %5443
      %5445 = vrot.lane.b32.xlu0 %v5216, 22
      %v5446 = vpop.permute.xlu0 %5445
      %v5447 = vsel %vm1541, %v5444, %v5446
      %v5450 = vmul.f32 %v5394, %v5444
      %v5451 = vmul.f32 %v5404, %v5447
      %v5452 = vadd.f32 %v5440, %v5450
      %v5453 = vadd.f32 %v5441, %v5451
      %v5456 = vcombine.high %v5452, %v5453
      %v5458 = vunpack.c.l.s4 1983009808
      %v5459 = vunpack.c.0.s8 %v5458
      %v5460 = vlaneseq
      %v5461 = vshrl.u32 %v5460, 7
      %v5462 = vsub.s32 %v5459, %v5461
      %v5463 = vrot.slane %v5456, %v5462
      %5464 = vrot.lane.b32.xlu0 %v5463, 106
      %v5465 = vpop.permute.xlu0 %5464
      %v5466 = vrot.slane %v5465, 2
      %v5467 = vsel %vm1754, %v5465, %v5466
      %5469 = vst.msk [vmem:[#allocation2] sm:$0xf] %vm1426, %v5467
      %s5470 = scalar_lea.vmem [#allocation5], 8
      %5471 = vst.msk [vmem:[%s5470] sm:$0xf] %vm1426, %v5467
      %v5472 = vld [vmem:[#allocation4] sm:$0xc0]
      %v5473 = vld [vmem:[#allocation4 + $0x8] sm:$0xc0]
      %v5474 = vld [vmem:[#allocation4 + $0x10] sm:$0xc0]
      %v5475 = vld [vmem:[#allocation4 + $0x18] sm:$0xc0]
      %v5476 = vld [vmem:[#allocation2] sm:$0xf]
      %v5477 = vld [vmem:[%s787] sm:$0xff]
      %v5478 = vld [vmem:[%s787 + $0x8] sm:$0xff]
      %v5479 = vld [vmem:[%s787 + $0x10] sm:$0xff]
      %v5480 = vld [vmem:[%s787 + $0x18] sm:$0xff]
      %v5481 = vld [vmem:[%s787 + $0x20] sm:$0xff]
      %v5482 = vld [vmem:[%s787 + $0x28] sm:$0xff]
      %v5483 = vld [vmem:[%s787 + $0x30] sm:$0xff]
      %v5484 = vld [vmem:[%s787 + $0x38] sm:$0xff]
      %v5485 = vld [vmem:[%s787 + $0x40] sm:$0xff]
      %v5486 = vld [vmem:[%s787 + $0x48] sm:$0xff]
      %v5487 = vld [vmem:[%s787 + $0x50] sm:$0xff]
      %v5488 = vld [vmem:[%s787 + $0x58] sm:$0xff]
      %v5489 = vld [vmem:[%s787 + $0x60] sm:$0xff]
      %v5490 = vld [vmem:[%s787 + $0x68] sm:$0xff]
      %v5491 = vld [vmem:[%s787 + $0x70] sm:$0xff]
      %v5492 = vld [vmem:[%s787 + $0x78] sm:$0xff]
      %v5493 = vld [vmem:[%s787 + $0x80] sm:$0xff]
      %v5494 = vld [vmem:[%s787 + $0x88] sm:$0xff]
      %v5495 = vld [vmem:[%s787 + $0x90] sm:$0xff]
      %v5496 = vld [vmem:[%s787 + $0x98] sm:$0xff]
      %v5497 = vld [vmem:[%s787 + $0xa0] sm:$0xff]
      %v5498 = vld [vmem:[%s787 + $0xa8] sm:$0xff]
      %v5499 = vld [vmem:[%s787 + $0xb0] sm:$0xff]
      %v5500 = vld [vmem:[%s787 + $0xb8] sm:$0xff]
      %v5501 = vld [vmem:[%s787 + $0xc0] sm:$0xff]
      %v5502 = vld [vmem:[%s787 + $0xc8] sm:$0xff]
      %v5503 = vld [vmem:[%s787 + $0xd0] sm:$0xff]
      %v5504 = vld [vmem:[%s787 + $0xd8] sm:$0xff]
      %v5505 = vld [vmem:[%s787 + $0xe0] sm:$0xff]
      %v5506 = vld [vmem:[%s787 + $0xe8] sm:$0xff]
      %v5507 = vld [vmem:[%s787 + $0xf0] sm:$0xff]
      %v5508 = vld [vmem:[%s787 + $0xf8] sm:$0xff]
      %v5509 = vld [vmem:[%s787 + $0x100] sm:$0xff]
      %v5510 = vld [vmem:[%s787 + $0x108] sm:$0xff]
      %v5511 = vld [vmem:[%s787 + $0x110] sm:$0xff]
      %v5512 = vld [vmem:[%s787 + $0x118] sm:$0xff]
      %v5513 = vld [vmem:[%s787 + $0x120] sm:$0xff]
      %v5514 = vld [vmem:[%s787 + $0x128] sm:$0xff]
      %v5515 = vld [vmem:[%s787 + $0x130] sm:$0xff]
      %v5516 = vld [vmem:[%s787 + $0x138] sm:$0xff]
      %v5517 = vld [vmem:[%s787 + $0x140] sm:$0xff]
      %v5518 = vld [vmem:[%s787 + $0x148] sm:$0xff]
      %v5519 = vld [vmem:[%s787 + $0x150] sm:$0xff]
      %v5520 = vld [vmem:[%s787 + $0x158] sm:$0xff]
      %v5521 = vld [vmem:[%s787 + $0x160] sm:$0xff]
      %v5522 = vld [vmem:[%s787 + $0x168] sm:$0xff]
      %v5523 = vld [vmem:[%s787 + $0x170] sm:$0xff]
      %v5524 = vld [vmem:[%s787 + $0x178] sm:$0xff]
      %v5525 = vld [vmem:[%s787 + $0x180] sm:$0xff]
      %v5526 = vld [vmem:[%s787 + $0x188] sm:$0xff]
      %v5527 = vld [vmem:[%s787 + $0x190] sm:$0xff]
      %v5528 = vld [vmem:[%s787 + $0x198] sm:$0xff]
      %v5529 = vld [vmem:[%s787 + $0x1a0] sm:$0xff]
      %v5530 = vld [vmem:[%s787 + $0x1a8] sm:$0xff]
      %v5531 = vld [vmem:[%s787 + $0x1b0] sm:$0xff]
      %v5532 = vld [vmem:[%s787 + $0x1b8] sm:$0xff]
      %v5533 = vld [vmem:[%s787 + $0x1c0] sm:$0xff]
      %v5534 = vld [vmem:[%s787 + $0x1c8] sm:$0xff]
      %v5535 = vld [vmem:[%s787 + $0x1d0] sm:$0xff]
      %v5536 = vld [vmem:[%s787 + $0x1d8] sm:$0xff]
      %v5537 = vld [vmem:[%s787 + $0x1e0] sm:$0xff]
      %v5538 = vld [vmem:[%s787 + $0x1e8] sm:$0xff]
      %v5539 = vld [vmem:[%s787 + $0x1f0] sm:$0xff]
      %v5540 = vld [vmem:[%s787 + $0x1f8] sm:$0xff]
      %v5541 = vld [vmem:[%s787 + $0x200] sm:$0xff]
      %v5542 = vld [vmem:[%s787 + $0x208] sm:$0xff]
      %v5543 = vld [vmem:[%s787 + $0x210] sm:$0xff]
      %v5544 = vld [vmem:[%s787 + $0x218] sm:$0xff]
      %v5545 = vld [vmem:[%s787 + $0x220] sm:$0xff]
      %v5546 = vld [vmem:[%s787 + $0x228] sm:$0xff]
      %v5547 = vld [vmem:[%s787 + $0x230] sm:$0xff]
      %v5548 = vld [vmem:[%s787 + $0x238] sm:$0xff]
      %v5549 = vld [vmem:[%s787 + $0x240] sm:$0x3f]
      %v5550 = vld [vmem:[%s787 + $0x248] sm:$0x3f]
      %v5551 = vld [vmem:[%s787 + $0x250] sm:$0x3f]
      %v5552 = vld [vmem:[%s787 + $0x258] sm:$0x3f]
      %v5553 = vld [vmem:[%s795] sm:$0xf]
      %v5555 = vlaneseq
      %v5556 = vshrl.u32 %v5555, 7
      %v5557 = vsub.s32 0, %v5556
      %v5558 = vrot.slane %v5553, %v5557
      %v5559 = vlaneseq
      %v5560 = vshrl.u32 %v5559, 7
      %v5561 = vsub.s32 1, %v5560
      %v5562 = vrot.slane %v5553, %v5561
      %v5563 = vlaneseq
      %v5564 = vshrl.u32 %v5563, 7
      %v5565 = vsub.s32 2, %v5564
      %v5566 = vrot.slane %v5553, %v5565
      %v5567 = vlaneseq
      %v5568 = vshrl.u32 %v5567, 7
      %v5569 = vsub.s32 3, %v5568
      %v5570 = vrot.slane %v5553, %v5569
      %v5577 = vunpack.c.l.s4 1983009808
      %v5578 = vunpack.c.0.s8 %v5577
      %v5579 = vlaneseq
      %v5580 = vshrl.u32 %v5579, 7
      %v5581 = vsub.s32 %v5578, %v5580
      %v5582 = vrot.slane %v5476, %v5581
      %v5583 = vcombine.high %v5582, %v5582
      %v5585 = vsel %vm1541, %v5583, 0
      %v5588 = vsel %vm1544, %v5549, 0
      %v5591 = vsel %vm1544, %v5550, 0
      %v5594 = vsel %vm1544, %v5551, 0
      %v5597 = vsel %vm1544, %v5552, 0
      %5599 = vmatprep.subr.mxu0 %v5478
      %5600 = vmatpush1.msra.mxu0 %v5477
      %5601 = vmatprep.subr.mxu0 %v5482
      %5602 = vmatpush1.msra.mxu0 %v5481
      %5603 = vmatprep.subr.mxu0 %v5486
      %5604 = vmatpush1.msra.mxu0 %v5485
      %5605 = vmatprep.subr.mxu0 %v5490
      %5606 = vmatpush1.msra.mxu0 %v5489
      %5607 = vmatprep.subr.mxu0 %v5494
      %5608 = vmatpush1.msra.mxu0 %v5493
      %5609 = vmatprep.subr.mxu0 %v5498
      %5610 = vmatpush1.msra.mxu0 %v5497
      %5611 = vmatprep.subr.mxu0 %v5502
      %5612 = vmatpush1.msra.mxu0 %v5501
      %5613 = vmatprep.subr.mxu0 %v5506
      %5614 = vmatpush1.msra.mxu0 %v5505
      %5615 = vmatprep.subr.mxu0 %v5510
      %5616 = vmatpush1.msra.mxu0 %v5509
      %5617 = vmatprep.subr.mxu0 %v5514
      %5618 = vmatpush1.msra.mxu0 %v5513
      %5619 = vmatprep.subr.mxu0 %v5518
      %5620 = vmatpush1.msra.mxu0 %v5517
      %5621 = vmatprep.subr.mxu0 %v5522
      %5622 = vmatpush1.msra.mxu0 %v5521
      %5623 = vmatprep.subr.mxu0 %v5526
      %5624 = vmatpush1.msra.mxu0 %v5525
      %5625 = vmatprep.subr.mxu0 %v5530
      %5626 = vmatpush1.msra.mxu0 %v5529
      %5627 = vmatprep.subr.mxu0 %v5534
      %5628 = vmatpush1.msra.mxu0 %v5533
      %5629 = vmatprep.subr.mxu0 %v5538
      %5630 = vmatpush1.msra.mxu0 %v5537
      %5631 = vmatprep.subr.mxu0 %v5542
      %5632 = vmatpush1.msra.mxu0 %v5541
      %5633 = vmatprep.subr.mxu0 %v5546
      %5634 = vmatpush1.msra.mxu0 %v5545
      %5635 = vmatprep.subr.mxu0 %v5591
      %5636 = vmatpush1.msra.mxu0 %v5588
      %5637 = vmatprep.subr.mxu0 0.0
      %5638 = vmatpush1.msra.mxu0 0.0
      %5639 = vmatprep.subr.mxu0 0.0
      %5640 = vmatpush1.msra.mxu0 0.0
      %5641 = vmatprep.subr.mxu0 0.0
      %5642 = vmatpush1.msra.mxu0 0.0
      %5643 = vmatprep.subr.mxu0 0.0
      %5644 = vmatpush1.msra.mxu0 0.0
      %5645 = vmatprep.subr.mxu0 0.0
      %5646 = vmatpush1.msra.mxu0 0.0
      %5647 = vmatprep.subr.mxu0 0.0
      %5648 = vmatpush1.msra.mxu0 0.0
      %5649 = vmatprep.subr.mxu0 0.0
      %5650 = vmatpush1.msra.mxu0 0.0
      %5651 = vmatprep.subr.mxu0 0.0
      %5652 = vmatpush1.msra.mxu0 0.0
      %5653 = vmatprep.subr.mxu0 0.0
      %5654 = vmatpush1.msra.mxu0 0.0
      %5655 = vmatprep.subr.mxu0 0.0
      %5656 = vmatpush1.msra.mxu0 0.0
      %5657 = vmatprep.subr.mxu0 0.0
      %5658 = vmatpush1.msra.mxu0 0.0
      %5659 = vmatprep.subr.mxu0 0.0
      %5660 = vmatpush1.msra.mxu0 0.0
      %5661 = vmatprep.subr.mxu0 0.0
      %5662 = vmatpush1.msra.mxu0 0.0
      %5663 = vmatprep.mubr.f32.mxu0 %v5585
      %5664 = vmatmul.mubr.f32.gmra.mrb[0].mxu0 %v5582
      %v5665 = vpop.f32.mrb[0].mxu0
      %v5666 = vadd.f32 %v5558, %v5665
      %v5667 = vpop.f32.mrb[0].mxu0
      %v5668 = vadd.f32 %v5562, %v5667
      %5669 = vdwg.mxu0
      %5670 = vmatprep.subr.mxu0 %v5480
      %5671 = vmatpush1.msra.mxu0 %v5479
      %5672 = vmatprep.subr.mxu0 %v5484
      %5673 = vmatpush1.msra.mxu0 %v5483
      %5674 = vmatprep.subr.mxu0 %v5488
      %5675 = vmatpush1.msra.mxu0 %v5487
      %5676 = vmatprep.subr.mxu0 %v5492
      %5677 = vmatpush1.msra.mxu0 %v5491
      %5678 = vmatprep.subr.mxu0 %v5496
      %5679 = vmatpush1.msra.mxu0 %v5495
      %5680 = vmatprep.subr.mxu0 %v5500
      %5681 = vmatpush1.msra.mxu0 %v5499
      %5682 = vmatprep.subr.mxu0 %v5504
      %5683 = vmatpush1.msra.mxu0 %v5503
      %5684 = vmatprep.subr.mxu0 %v5508
      %5685 = vmatpush1.msra.mxu0 %v5507
      %5686 = vmatprep.subr.mxu0 %v5512
      %5687 = vmatpush1.msra.mxu0 %v5511
      %5688 = vmatprep.subr.mxu0 %v5516
      %5689 = vmatpush1.msra.mxu0 %v5515
      %5690 = vmatprep.subr.mxu0 %v5520
      %5691 = vmatpush1.msra.mxu0 %v5519
      %5692 = vmatprep.subr.mxu0 %v5524
      %5693 = vmatpush1.msra.mxu0 %v5523
      %5694 = vmatprep.subr.mxu0 %v5528
      %5695 = vmatpush1.msra.mxu0 %v5527
      %5696 = vmatprep.subr.mxu0 %v5532
      %5697 = vmatpush1.msra.mxu0 %v5531
      %5698 = vmatprep.subr.mxu0 %v5536
      %5699 = vmatpush1.msra.mxu0 %v5535
      %5700 = vmatprep.subr.mxu0 %v5540
      %5701 = vmatpush1.msra.mxu0 %v5539
      %5702 = vmatprep.subr.mxu0 %v5544
      %5703 = vmatpush1.msra.mxu0 %v5543
      %5704 = vmatprep.subr.mxu0 %v5548
      %5705 = vmatpush1.msra.mxu0 %v5547
      %5706 = vmatprep.subr.mxu0 %v5597
      %5707 = vmatpush1.msra.mxu0 %v5594
      %5708 = vmatprep.subr.mxu0 0.0
      %5709 = vmatpush1.msra.mxu0 0.0
      %5710 = vmatprep.subr.mxu0 0.0
      %5711 = vmatpush1.msra.mxu0 0.0
      %5712 = vmatprep.subr.mxu0 0.0
      %5713 = vmatpush1.msra.mxu0 0.0
      %5714 = vmatprep.subr.mxu0 0.0
      %5715 = vmatpush1.msra.mxu0 0.0
      %5716 = vmatprep.subr.mxu0 0.0
      %5717 = vmatpush1.msra.mxu0 0.0
      %5718 = vmatprep.subr.mxu0 0.0
      %5719 = vmatpush1.msra.mxu0 0.0
      %5720 = vmatprep.subr.mxu0 0.0
      %5721 = vmatpush1.msra.mxu0 0.0
      %5722 = vmatprep.subr.mxu0 0.0
      %5723 = vmatpush1.msra.mxu0 0.0
      %5724 = vmatprep.subr.mxu0 0.0
      %5725 = vmatpush1.msra.mxu0 0.0
      %5726 = vmatprep.subr.mxu0 0.0
      %5727 = vmatpush1.msra.mxu0 0.0
      %5728 = vmatprep.subr.mxu0 0.0
      %5729 = vmatpush1.msra.mxu0 0.0
      %5730 = vmatprep.subr.mxu0 0.0
      %5731 = vmatpush1.msra.mxu0 0.0
      %5732 = vmatprep.subr.mxu0 0.0
      %5733 = vmatpush1.msra.mxu0 0.0
      %5734 = vmatprep.mubr.f32.mxu0 %v5585
      %5735 = vmatmul.mubr.f32.gmra.mrb[0].mxu0 %v5582
      %v5736 = vpop.f32.mrb[0].mxu0
      %v5737 = vadd.f32 %v5566, %v5736
      %v5738 = vpop.f32.mrb[0].mxu0
      %v5739 = vadd.f32 %v5570, %v5738
      %5740 = vdwg.mxu0
      %v5743 = vrot.slane %v5666, 2
      %v5744 = vrot.slane %v5668, 2
      %v5747 = vadd.f32 %v5472, %v5743
      %v5748 = vadd.f32 %v5473, %v5744
      %v5749 = vxor.u32 %v5747, 2147483648
      %v5750 = vxor.u32 %v5748, 2147483648
      %v5751 = vmul.f32 %v5749, 1.442695
      %v5752 = vpow.pop %v5751
      %v5753 = vmul.f32 %v5750, 1.442695
      %v5754 = vpow.pop %v5753
      %v5755 = vadd.f32 %v5752, 1.0
      %v5756 = vadd.f32 %v5754, 1.0
      %v5757 = vrcp.pop %v5755
      %v5758 = vmul.f32 1.0, %v5757
      %v5759 = vrcp.pop %v5756
      %v5760 = vmul.f32 1.0, %v5759
      %v5762 = vrot.slane %v5737, 2
      %v5764 = vadd.f32 %v5474, %v5762
      %v5765 = vxor.u32 %v5764, 2147483648
      %v5766 = vmul.f32 %v5765, 1.442695
      %v5767 = vpow.pop %v5766
      %v5768 = vadd.f32 %v5767, 1.0
      %v5769 = vrcp.pop %v5768
      %v5770 = vmul.f32 1.0, %v5769
      %v5772 = vrot.slane %v5739, 2
      %5773 = vrot.lane.b32.xlu0 %v5762, 84
      %v5774 = vpop.permute.xlu0 %5773
      %5775 = vrot.lane.b32.xlu0 %v5772, 84
      %v5776 = vpop.permute.xlu0 %5775
      %v5777 = vsel %vm1726, %v5774, %v5776
      %v5780 = vmul.f32 %v5758, %v5777
      %v5781 = vmul.f32 %v5760, %v5776
      %5784 = vrot.lane.b32.xlu0 %v5780, 44
      %v5785 = vpop.permute.xlu0 %5784
      %5786 = vrot.lane.b32.xlu0 %v5781, 44
      %v5787 = vpop.permute.xlu0 %5786
      %v5788 = vsel %vm1738, %v5785, %v5787
      %v5791 = vadd.f32 %v5474, %v5785
      %v5792 = vadd.f32 %v5475, %v5788
      %v5793 = vtanh.pop %v5791
      %v5794 = vtanh.pop %v5792
      %v5795 = vsub.f32 1.0, %v5760
      %v5796 = vsub.f32 1.0, %v5770
      %5799 = vrot.lane.b32.xlu0 %v5793, 106
      %v5800 = vpop.permute.xlu0 %5799
      %5801 = vrot.lane.b32.xlu0 %v5794, 106
      %v5802 = vpop.permute.xlu0 %5801
      %v5803 = vsel %vm1754, %v5800, %v5802
      %v5806 = vmul.f32 %v5795, %v5803
      %v5807 = vmul.f32 %v5796, %v5802
      %v5808 = vcombine.low %v5476, %v5476
      %v5810 = vunpack.c.l.s4 1983009808
      %v5811 = vunpack.c.0.s8 %v5810
      %v5812 = vlaneseq
      %v5813 = vshrl.u32 %v5812, 7
      %v5814 = vsub.s32 %v5811, %v5813
      %v5815 = vrot.slane %v5808, %v5814
      %v5816 = vcombine.low %v5815, %v5815
      %5817 = vrot.lane.b32.xlu0 %v5816, 22
      %v5818 = vpop.permute.xlu0 %5817
      %5819 = vrot.lane.b32.xlu0 %v5815, 22
      %v5820 = vpop.permute.xlu0 %5819
      %v5821 = vsel %vm1541, %v5818, %v5820
      %v5824 = vmul.f32 %v5760, %v5818
      %v5825 = vmul.f32 %v5770, %v5821
      %v5826 = vadd.f32 %v5806, %v5824
      %v5827 = vadd.f32 %v5807, %v5825
      %v5830 = vcombine.high %v5826, %v5827
      %v5832 = vunpack.c.l.s4 1983009808
      %v5833 = vunpack.c.0.s8 %v5832
      %v5834 = vlaneseq
      %v5835 = vshrl.u32 %v5834, 7
      %v5836 = vsub.s32 %v5833, %v5835
      %v5837 = vrot.slane %v5830, %v5836
      %v5838 = vcombine.high %v5837, %v5837
      %5839 = vrot.lane.b32.xlu0 %v5838, 106
      %v5840 = vpop.permute.xlu0 %5839
      %v5841 = vrot.slane %v5840, 2
      %v5842 = vsel %vm1754, %v5840, %v5841
      %5844 = vst.msk [vmem:[#allocation2] sm:$0xf] %vm1426, %v5842
      %s5845 = scalar_lea.vmem [#allocation5], 12
      %5846 = vst.msk [vmem:[%s5845] sm:$0xf] %vm1426, %v5842
      %v5847 = vld [vmem:[#allocation4 + $0x20] sm:$0x3]
      %v5848 = vld [vmem:[#allocation4 + $0x28] sm:$0x3]
      %v5849 = vld [vmem:[#allocation4 + $0x30] sm:$0x3]
      %v5850 = vld [vmem:[#allocation4 + $0x38] sm:$0x3]
      %v5851 = vld [vmem:[#allocation2] sm:$0xf]
      %v5852 = vld [vmem:[%s787] sm:$0xff]
      %v5853 = vld [vmem:[%s787 + $0x8] sm:$0xff]
      %v5854 = vld [vmem:[%s787 + $0x10] sm:$0xff]
      %v5855 = vld [vmem:[%s787 + $0x18] sm:$0xff]
      %v5856 = vld [vmem:[%s787 + $0x20] sm:$0xff]
      %v5857 = vld [vmem:[%s787 + $0x28] sm:$0xff]
      %v5858 = vld [vmem:[%s787 + $0x30] sm:$0xff]
      %v5859 = vld [vmem:[%s787 + $0x38] sm:$0xff]
      %v5860 = vld [vmem:[%s787 + $0x40] sm:$0xff]
      %v5861 = vld [vmem:[%s787 + $0x48] sm:$0xff]
      %v5862 = vld [vmem:[%s787 + $0x50] sm:$0xff]
      %v5863 = vld [vmem:[%s787 + $0x58] sm:$0xff]
      %v5864 = vld [vmem:[%s787 + $0x60] sm:$0xff]
      %v5865 = vld [vmem:[%s787 + $0x68] sm:$0xff]
      %v5866 = vld [vmem:[%s787 + $0x70] sm:$0xff]
      %v5867 = vld [vmem:[%s787 + $0x78] sm:$0xff]
      %v5868 = vld [vmem:[%s787 + $0x80] sm:$0xff]
      %v5869 = vld [vmem:[%s787 + $0x88] sm:$0xff]
      %v5870 = vld [vmem:[%s787 + $0x90] sm:$0xff]
      %v5871 = vld [vmem:[%s787 + $0x98] sm:$0xff]
      %v5872 = vld [vmem:[%s787 + $0xa0] sm:$0xff]
      %v5873 = vld [vmem:[%s787 + $0xa8] sm:$0xff]
      %v5874 = vld [vmem:[%s787 + $0xb0] sm:$0xff]
      %v5875 = vld [vmem:[%s787 + $0xb8] sm:$0xff]
      %v5876 = vld [vmem:[%s787 + $0xc0] sm:$0xff]
      %v5877 = vld [vmem:[%s787 + $0xc8] sm:$0xff]
      %v5878 = vld [vmem:[%s787 + $0xd0] sm:$0xff]
      %v5879 = vld [vmem:[%s787 + $0xd8] sm:$0xff]
      %v5880 = vld [vmem:[%s787 + $0xe0] sm:$0xff]
      %v5881 = vld [vmem:[%s787 + $0xe8] sm:$0xff]
      %v5882 = vld [vmem:[%s787 + $0xf0] sm:$0xff]
      %v5883 = vld [vmem:[%s787 + $0xf8] sm:$0xff]
      %v5884 = vld [vmem:[%s787 + $0x100] sm:$0xff]
      %v5885 = vld [vmem:[%s787 + $0x108] sm:$0xff]
      %v5886 = vld [vmem:[%s787 + $0x110] sm:$0xff]
      %v5887 = vld [vmem:[%s787 + $0x118] sm:$0xff]
      %v5888 = vld [vmem:[%s787 + $0x120] sm:$0xff]
      %v5889 = vld [vmem:[%s787 + $0x128] sm:$0xff]
      %v5890 = vld [vmem:[%s787 + $0x130] sm:$0xff]
      %v5891 = vld [vmem:[%s787 + $0x138] sm:$0xff]
      %v5892 = vld [vmem:[%s787 + $0x140] sm:$0xff]
      %v5893 = vld [vmem:[%s787 + $0x148] sm:$0xff]
      %v5894 = vld [vmem:[%s787 + $0x150] sm:$0xff]
      %v5895 = vld [vmem:[%s787 + $0x158] sm:$0xff]
      %v5896 = vld [vmem:[%s787 + $0x160] sm:$0xff]
      %v5897 = vld [vmem:[%s787 + $0x168] sm:$0xff]
      %v5898 = vld [vmem:[%s787 + $0x170] sm:$0xff]
      %v5899 = vld [vmem:[%s787 + $0x178] sm:$0xff]
      %v5900 = vld [vmem:[%s787 + $0x180] sm:$0xff]
      %v5901 = vld [vmem:[%s787 + $0x188] sm:$0xff]
      %v5902 = vld [vmem:[%s787 + $0x190] sm:$0xff]
      %v5903 = vld [vmem:[%s787 + $0x198] sm:$0xff]
      %v5904 = vld [vmem:[%s787 + $0x1a0] sm:$0xff]
      %v5905 = vld [vmem:[%s787 + $0x1a8] sm:$0xff]
      %v5906 = vld [vmem:[%s787 + $0x1b0] sm:$0xff]
      %v5907 = vld [vmem:[%s787 + $0x1b8] sm:$0xff]
      %v5908 = vld [vmem:[%s787 + $0x1c0] sm:$0xff]
      %v5909 = vld [vmem:[%s787 + $0x1c8] sm:$0xff]
      %v5910 = vld [vmem:[%s787 + $0x1d0] sm:$0xff]
      %v5911 = vld [vmem:[%s787 + $0x1d8] sm:$0xff]
      %v5912 = vld [vmem:[%s787 + $0x1e0] sm:$0xff]
      %v5913 = vld [vmem:[%s787 + $0x1e8] sm:$0xff]
      %v5914 = vld [vmem:[%s787 + $0x1f0] sm:$0xff]
      %v5915 = vld [vmem:[%s787 + $0x1f8] sm:$0xff]
      %v5916 = vld [vmem:[%s787 + $0x200] sm:$0xff]
      %v5917 = vld [vmem:[%s787 + $0x208] sm:$0xff]
      %v5918 = vld [vmem:[%s787 + $0x210] sm:$0xff]
      %v5919 = vld [vmem:[%s787 + $0x218] sm:$0xff]
      %v5920 = vld [vmem:[%s787 + $0x220] sm:$0xff]
      %v5921 = vld [vmem:[%s787 + $0x228] sm:$0xff]
      %v5922 = vld [vmem:[%s787 + $0x230] sm:$0xff]
      %v5923 = vld [vmem:[%s787 + $0x238] sm:$0xff]
      %v5924 = vld [vmem:[%s787 + $0x240] sm:$0x3f]
      %v5925 = vld [vmem:[%s787 + $0x248] sm:$0x3f]
      %v5926 = vld [vmem:[%s787 + $0x250] sm:$0x3f]
      %v5927 = vld [vmem:[%s787 + $0x258] sm:$0x3f]
      %v5928 = vld [vmem:[%s795] sm:$0xf]
      %v5930 = vlaneseq
      %v5931 = vshrl.u32 %v5930, 7
      %v5932 = vsub.s32 0, %v5931
      %v5933 = vrot.slane %v5928, %v5932
      %v5934 = vlaneseq
      %v5935 = vshrl.u32 %v5934, 7
      %v5936 = vsub.s32 1, %v5935
      %v5937 = vrot.slane %v5928, %v5936
      %v5938 = vlaneseq
      %v5939 = vshrl.u32 %v5938, 7
      %v5940 = vsub.s32 2, %v5939
      %v5941 = vrot.slane %v5928, %v5940
      %v5942 = vlaneseq
      %v5943 = vshrl.u32 %v5942, 7
      %v5944 = vsub.s32 3, %v5943
      %v5945 = vrot.slane %v5928, %v5944
      %v5952 = vunpack.c.l.s4 1983009808
      %v5953 = vunpack.c.0.s8 %v5952
      %v5954 = vlaneseq
      %v5955 = vshrl.u32 %v5954, 7
      %v5956 = vsub.s32 %v5953, %v5955
      %v5957 = vrot.slane %v5851, %v5956
      %v5958 = vcombine.high %v5957, %v5957
      %v5960 = vsel %vm1541, %v5958, 0
      %v5963 = vsel %vm1544, %v5924, 0
      %v5966 = vsel %vm1544, %v5925, 0
      %v5969 = vsel %vm1544, %v5926, 0
      %v5972 = vsel %vm1544, %v5927, 0
      %5974 = vmatprep.subr.mxu0 %v5853
      %5975 = vmatpush1.msra.mxu0 %v5852
      %5976 = vmatprep.subr.mxu0 %v5857
      %5977 = vmatpush1.msra.mxu0 %v5856
      %5978 = vmatprep.subr.mxu0 %v5861
      %5979 = vmatpush1.msra.mxu0 %v5860
      %5980 = vmatprep.subr.mxu0 %v5865
      %5981 = vmatpush1.msra.mxu0 %v5864
      %5982 = vmatprep.subr.mxu0 %v5869
      %5983 = vmatpush1.msra.mxu0 %v5868
      %5984 = vmatprep.subr.mxu0 %v5873
      %5985 = vmatpush1.msra.mxu0 %v5872
      %5986 = vmatprep.subr.mxu0 %v5877
      %5987 = vmatpush1.msra.mxu0 %v5876
      %5988 = vmatprep.subr.mxu0 %v5881
      %5989 = vmatpush1.msra.mxu0 %v5880
      %5990 = vmatprep.subr.mxu0 %v5885
      %5991 = vmatpush1.msra.mxu0 %v5884
      %5992 = vmatprep.subr.mxu0 %v5889
      %5993 = vmatpush1.msra.mxu0 %v5888
      %5994 = vmatprep.subr.mxu0 %v5893
      %5995 = vmatpush1.msra.mxu0 %v5892
      %5996 = vmatprep.subr.mxu0 %v5897
      %5997 = vmatpush1.msra.mxu0 %v5896
      %5998 = vmatprep.subr.mxu0 %v5901
      %5999 = vmatpush1.msra.mxu0 %v5900
      %6000 = vmatprep.subr.mxu0 %v5905
      %6001 = vmatpush1.msra.mxu0 %v5904
      %6002 = vmatprep.subr.mxu0 %v5909
      %6003 = vmatpush1.msra.mxu0 %v5908
      %6004 = vmatprep.subr.mxu0 %v5913
      %6005 = vmatpush1.msra.mxu0 %v5912
      %6006 = vmatprep.subr.mxu0 %v5917
      %6007 = vmatpush1.msra.mxu0 %v5916
      %6008 = vmatprep.subr.mxu0 %v5921
      %6009 = vmatpush1.msra.mxu0 %v5920
      %6010 = vmatprep.subr.mxu0 %v5966
      %6011 = vmatpush1.msra.mxu0 %v5963
      %6012 = vmatprep.subr.mxu0 0.0
      %6013 = vmatpush1.msra.mxu0 0.0
      %6014 = vmatprep.subr.mxu0 0.0
      %6015 = vmatpush1.msra.mxu0 0.0
      %6016 = vmatprep.subr.mxu0 0.0
      %6017 = vmatpush1.msra.mxu0 0.0
      %6018 = vmatprep.subr.mxu0 0.0
      %6019 = vmatpush1.msra.mxu0 0.0
      %6020 = vmatprep.subr.mxu0 0.0
      %6021 = vmatpush1.msra.mxu0 0.0
      %6022 = vmatprep.subr.mxu0 0.0
      %6023 = vmatpush1.msra.mxu0 0.0
      %6024 = vmatprep.subr.mxu0 0.0
      %6025 = vmatpush1.msra.mxu0 0.0
      %6026 = vmatprep.subr.mxu0 0.0
      %6027 = vmatpush1.msra.mxu0 0.0
      %6028 = vmatprep.subr.mxu0 0.0
      %6029 = vmatpush1.msra.mxu0 0.0
      %6030 = vmatprep.subr.mxu0 0.0
      %6031 = vmatpush1.msra.mxu0 0.0
      %6032 = vmatprep.subr.mxu0 0.0
      %6033 = vmatpush1.msra.mxu0 0.0
      %6034 = vmatprep.subr.mxu0 0.0
      %6035 = vmatpush1.msra.mxu0 0.0
      %6036 = vmatprep.subr.mxu0 0.0
      %6037 = vmatpush1.msra.mxu0 0.0
      %6038 = vmatprep.mubr.f32.mxu0 %v5960
      %6039 = vmatmul.mubr.f32.gmra.mrb[0].mxu0 %v5957
      %v6040 = vpop.f32.mrb[0].mxu0
      %v6041 = vadd.f32 %v5933, %v6040
      %v6042 = vpop.f32.mrb[0].mxu0
      %v6043 = vadd.f32 %v5937, %v6042
      %6044 = vdwg.mxu0
      %6045 = vmatprep.subr.mxu0 %v5855
      %6046 = vmatpush1.msra.mxu0 %v5854
      %6047 = vmatprep.subr.mxu0 %v5859
      %6048 = vmatpush1.msra.mxu0 %v5858
      %6049 = vmatprep.subr.mxu0 %v5863
      %6050 = vmatpush1.msra.mxu0 %v5862
      %6051 = vmatprep.subr.mxu0 %v5867
      %6052 = vmatpush1.msra.mxu0 %v5866
      %6053 = vmatprep.subr.mxu0 %v5871
      %6054 = vmatpush1.msra.mxu0 %v5870
      %6055 = vmatprep.subr.mxu0 %v5875
      %6056 = vmatpush1.msra.mxu0 %v5874
      %6057 = vmatprep.subr.mxu0 %v5879
      %6058 = vmatpush1.msra.mxu0 %v5878
      %6059 = vmatprep.subr.mxu0 %v5883
      %6060 = vmatpush1.msra.mxu0 %v5882
      %6061 = vmatprep.subr.mxu0 %v5887
      %6062 = vmatpush1.msra.mxu0 %v5886
      %6063 = vmatprep.subr.mxu0 %v5891
      %6064 = vmatpush1.msra.mxu0 %v5890
      %6065 = vmatprep.subr.mxu0 %v5895
      %6066 = vmatpush1.msra.mxu0 %v5894
      %6067 = vmatprep.subr.mxu0 %v5899
      %6068 = vmatpush1.msra.mxu0 %v5898
      %6069 = vmatprep.subr.mxu0 %v5903
      %6070 = vmatpush1.msra.mxu0 %v5902
      %6071 = vmatprep.subr.mxu0 %v5907
      %6072 = vmatpush1.msra.mxu0 %v5906
      %6073 = vmatprep.subr.mxu0 %v5911
      %6074 = vmatpush1.msra.mxu0 %v5910
      %6075 = vmatprep.subr.mxu0 %v5915
      %6076 = vmatpush1.msra.mxu0 %v5914
      %6077 = vmatprep.subr.mxu0 %v5919
      %6078 = vmatpush1.msra.mxu0 %v5918
      %6079 = vmatprep.subr.mxu0 %v5923
      %6080 = vmatpush1.msra.mxu0 %v5922
      %6081 = vmatprep.subr.mxu0 %v5972
      %6082 = vmatpush1.msra.mxu0 %v5969
      %6083 = vmatprep.subr.mxu0 0.0
      %6084 = vmatpush1.msra.mxu0 0.0
      %6085 = vmatprep.subr.mxu0 0.0
      %6086 = vmatpush1.msra.mxu0 0.0
      %6087 = vmatprep.subr.mxu0 0.0
      %6088 = vmatpush1.msra.mxu0 0.0
      %6089 = vmatprep.subr.mxu0 0.0
      %6090 = vmatpush1.msra.mxu0 0.0
      %6091 = vmatprep.subr.mxu0 0.0
      %6092 = vmatpush1.msra.mxu0 0.0
      %6093 = vmatprep.subr.mxu0 0.0
      %6094 = vmatpush1.msra.mxu0 0.0
      %6095 = vmatprep.subr.mxu0 0.0
      %6096 = vmatpush1.msra.mxu0 0.0
      %6097 = vmatprep.subr.mxu0 0.0
      %6098 = vmatpush1.msra.mxu0 0.0
      %6099 = vmatprep.subr.mxu0 0.0
      %6100 = vmatpush1.msra.mxu0 0.0
      %6101 = vmatprep.subr.mxu0 0.0
      %6102 = vmatpush1.msra.mxu0 0.0
      %6103 = vmatprep.subr.mxu0 0.0
      %6104 = vmatpush1.msra.mxu0 0.0
      %6105 = vmatprep.subr.mxu0 0.0
      %6106 = vmatpush1.msra.mxu0 0.0
      %6107 = vmatprep.subr.mxu0 0.0
      %6108 = vmatpush1.msra.mxu0 0.0
      %6109 = vmatprep.mubr.f32.mxu0 %v5960
      %6110 = vmatmul.mubr.f32.gmra.mrb[0].mxu0 %v5957
      %v6111 = vpop.f32.mrb[0].mxu0
      %v6112 = vadd.f32 %v5941, %v6111
      %v6113 = vpop.f32.mrb[0].mxu0
      %v6114 = vadd.f32 %v5945, %v6113
      %6115 = vdwg.mxu0
      %v6116 = vadd.f32 %v5847, %v6041
      %v6117 = vadd.f32 %v5848, %v6043
      %v6118 = vxor.u32 %v6116, 2147483648
      %v6119 = vxor.u32 %v6117, 2147483648
      %v6120 = vmul.f32 %v6118, 1.442695
      %v6121 = vpow.pop %v6120
      %v6122 = vmul.f32 %v6119, 1.442695
      %v6123 = vpow.pop %v6122
      %v6124 = vadd.f32 %v6121, 1.0
      %v6125 = vadd.f32 %v6123, 1.0
      %v6126 = vrcp.pop %v6124
      %v6127 = vmul.f32 1.0, %v6126
      %v6128 = vrcp.pop %v6125
      %v6129 = vmul.f32 1.0, %v6128
      %v6130 = vadd.f32 %v5849, %v6112
      %v6131 = vxor.u32 %v6130, 2147483648
      %v6132 = vmul.f32 %v6131, 1.442695
      %v6133 = vpow.pop %v6132
      %v6134 = vadd.f32 %v6133, 1.0
      %v6135 = vrcp.pop %v6134
      %v6136 = vmul.f32 1.0, %v6135
      %6139 = vrot.lane.b32.xlu0 %v6112, 84
      %v6140 = vpop.permute.xlu0 %6139
      %6141 = vrot.lane.b32.xlu0 %v6114, 84
      %v6142 = vpop.permute.xlu0 %6141
      %v6143 = vsel %vm1726, %v6140, %v6142
      %v6146 = vmul.f32 %v6127, %v6143
      %v6147 = vmul.f32 %v6129, %v6142
      %6150 = vrot.lane.b32.xlu0 %v6146, 44
      %v6151 = vpop.permute.xlu0 %6150
      %6152 = vrot.lane.b32.xlu0 %v6147, 44
      %v6153 = vpop.permute.xlu0 %6152
      %v6154 = vsel %vm1738, %v6151, %v6153
      %v6157 = vadd.f32 %v5849, %v6151
      %v6158 = vadd.f32 %v5850, %v6154
      %v6159 = vtanh.pop %v6157
      %v6160 = vtanh.pop %v6158
      %v6161 = vsub.f32 1.0, %v6129
      %v6162 = vsub.f32 1.0, %v6136
      %6165 = vrot.lane.b32.xlu0 %v6159, 106
      %v6166 = vpop.permute.xlu0 %6165
      %6167 = vrot.lane.b32.xlu0 %v6160, 106
      %v6168 = vpop.permute.xlu0 %6167
      %v6169 = vsel %vm1754, %v6166, %v6168
      %v6172 = vmul.f32 %v6161, %v6169
      %v6173 = vmul.f32 %v6162, %v6168
      %6174 = vrot.lane.b32.xlu0 %v5957, 22
      %v6175 = vpop.permute.xlu0 %6174
      %6176 = vrot.lane.b32.xlu0 %v5958, 22
      %v6177 = vpop.permute.xlu0 %6176
      %v6178 = vsel %vm1541, %v6175, %v6177
      %v6181 = vmul.f32 %v6129, %v6175
      %v6182 = vmul.f32 %v6136, %v6178
      %v6183 = vadd.f32 %v6172, %v6181
      %v6184 = vadd.f32 %v6173, %v6182
      %v6187 = vcombine.low %v6183, %v6184
      %v6189 = vunpack.c.l.s4 1983009808
      %v6190 = vunpack.c.0.s8 %v6189
      %v6191 = vlaneseq
      %v6192 = vshrl.u32 %v6191, 7
      %v6193 = vsub.s32 %v6190, %v6192
      %v6194 = vrot.slane %v6187, %v6193
      %6195 = vrot.lane.b32.xlu0 %v6194, 106
      %v6196 = vpop.permute.xlu0 %6195
      %v6197 = vrot.slane %v6196, 2
      %v6198 = vsel %vm1754, %v6196, %v6197
      %6200 = vst.msk [vmem:[#allocation2] sm:$0xf] %vm1426, %v6198
      %s6201 = scalar_lea.vmem [#allocation5], 16
      %6202 = vst.msk [vmem:[%s6201] sm:$0xf] %vm1426, %v6198
      %v6203 = vld [vmem:[#allocation4 + $0x20] sm:$0xc]
      %v6204 = vld [vmem:[#allocation4 + $0x28] sm:$0xc]
      %v6205 = vld [vmem:[#allocation4 + $0x30] sm:$0xc]
      %v6206 = vld [vmem:[#allocation4 + $0x38] sm:$0xc]
      %v6207 = vld [vmem:[#allocation2] sm:$0xf]
      %v6208 = vld [vmem:[%s787] sm:$0xff]
      %v6209 = vld [vmem:[%s787 + $0x8] sm:$0xff]
      %v6210 = vld [vmem:[%s787 + $0x10] sm:$0xff]
      %v6211 = vld [vmem:[%s787 + $0x18] sm:$0xff]
      %v6212 = vld [vmem:[%s787 + $0x20] sm:$0xff]
      %v6213 = vld [vmem:[%s787 + $0x28] sm:$0xff]
      %v6214 = vld [vmem:[%s787 + $0x30] sm:$0xff]
      %v6215 = vld [vmem:[%s787 + $0x38] sm:$0xff]
      %v6216 = vld [vmem:[%s787 + $0x40] sm:$0xff]
      %v6217 = vld [vmem:[%s787 + $0x48] sm:$0xff]
      %v6218 = vld [vmem:[%s787 + $0x50] sm:$0xff]
      %v6219 = vld [vmem:[%s787 + $0x58] sm:$0xff]
      %v6220 = vld [vmem:[%s787 + $0x60] sm:$0xff]
      %v6221 = vld [vmem:[%s787 + $0x68] sm:$0xff]
      %v6222 = vld [vmem:[%s787 + $0x70] sm:$0xff]
      %v6223 = vld [vmem:[%s787 + $0x78] sm:$0xff]
      %v6224 = vld [vmem:[%s787 + $0x80] sm:$0xff]
      %v6225 = vld [vmem:[%s787 + $0x88] sm:$0xff]
      %v6226 = vld [vmem:[%s787 + $0x90] sm:$0xff]
      %v6227 = vld [vmem:[%s787 + $0x98] sm:$0xff]
      %v6228 = vld [vmem:[%s787 + $0xa0] sm:$0xff]
      %v6229 = vld [vmem:[%s787 + $0xa8] sm:$0xff]
      %v6230 = vld [vmem:[%s787 + $0xb0] sm:$0xff]
      %v6231 = vld [vmem:[%s787 + $0xb8] sm:$0xff]
      %v6232 = vld [vmem:[%s787 + $0xc0] sm:$0xff]
      %v6233 = vld [vmem:[%s787 + $0xc8] sm:$0xff]
      %v6234 = vld [vmem:[%s787 + $0xd0] sm:$0xff]
      %v6235 = vld [vmem:[%s787 + $0xd8] sm:$0xff]
      %v6236 = vld [vmem:[%s787 + $0xe0] sm:$0xff]
      %v6237 = vld [vmem:[%s787 + $0xe8] sm:$0xff]
      %v6238 = vld [vmem:[%s787 + $0xf0] sm:$0xff]
      %v6239 = vld [vmem:[%s787 + $0xf8] sm:$0xff]
      %v6240 = vld [vmem:[%s787 + $0x100] sm:$0xff]
      %v6241 = vld [vmem:[%s787 + $0x108] sm:$0xff]
      %v6242 = vld [vmem:[%s787 + $0x110] sm:$0xff]
      %v6243 = vld [vmem:[%s787 + $0x118] sm:$0xff]
      %v6244 = vld [vmem:[%s787 + $0x120] sm:$0xff]
      %v6245 = vld [vmem:[%s787 + $0x128] sm:$0xff]
      %v6246 = vld [vmem:[%s787 + $0x130] sm:$0xff]
      %v6247 = vld [vmem:[%s787 + $0x138] sm:$0xff]
      %v6248 = vld [vmem:[%s787 + $0x140] sm:$0xff]
      %v6249 = vld [vmem:[%s787 + $0x148] sm:$0xff]
      %v6250 = vld [vmem:[%s787 + $0x150] sm:$0xff]
      %v6251 = vld [vmem:[%s787 + $0x158] sm:$0xff]
      %v6252 = vld [vmem:[%s787 + $0x160] sm:$0xff]
      %v6253 = vld [vmem:[%s787 + $0x168] sm:$0xff]
      %v6254 = vld [vmem:[%s787 + $0x170] sm:$0xff]
      %v6255 = vld [vmem:[%s787 + $0x178] sm:$0xff]
      %v6256 = vld [vmem:[%s787 + $0x180] sm:$0xff]
      %v6257 = vld [vmem:[%s787 + $0x188] sm:$0xff]
      %v6258 = vld [vmem:[%s787 + $0x190] sm:$0xff]
      %v6259 = vld [vmem:[%s787 + $0x198] sm:$0xff]
      %v6260 = vld [vmem:[%s787 + $0x1a0] sm:$0xff]
      %v6261 = vld [vmem:[%s787 + $0x1a8] sm:$0xff]
      %v6262 = vld [vmem:[%s787 + $0x1b0] sm:$0xff]
      %v6263 = vld [vmem:[%s787 + $0x1b8] sm:$0xff]
      %v6264 = vld [vmem:[%s787 + $0x1c0] sm:$0xff]
      %v6265 = vld [vmem:[%s787 + $0x1c8] sm:$0xff]
      %v6266 = vld [vmem:[%s787 + $0x1d0] sm:$0xff]
      %v6267 = vld [vmem:[%s787 + $0x1d8] sm:$0xff]
      %v6268 = vld [vmem:[%s787 + $0x1e0] sm:$0xff]
      %v6269 = vld [vmem:[%s787 + $0x1e8] sm:$0xff]
      %v6270 = vld [vmem:[%s787 + $0x1f0] sm:$0xff]
      %v6271 = vld [vmem:[%s787 + $0x1f8] sm:$0xff]
      %v6272 = vld [vmem:[%s787 + $0x200] sm:$0xff]
      %v6273 = vld [vmem:[%s787 + $0x208] sm:$0xff]
      %v6274 = vld [vmem:[%s787 + $0x210] sm:$0xff]
      %v6275 = vld [vmem:[%s787 + $0x218] sm:$0xff]
      %v6276 = vld [vmem:[%s787 + $0x220] sm:$0xff]
      %v6277 = vld [vmem:[%s787 + $0x228] sm:$0xff]
      %v6278 = vld [vmem:[%s787 + $0x230] sm:$0xff]
      %v6279 = vld [vmem:[%s787 + $0x238] sm:$0xff]
      %v6280 = vld [vmem:[%s787 + $0x240] sm:$0x3f]
      %v6281 = vld [vmem:[%s787 + $0x248] sm:$0x3f]
      %v6282 = vld [vmem:[%s787 + $0x250] sm:$0x3f]
      %v6283 = vld [vmem:[%s787 + $0x258] sm:$0x3f]
      %v6284 = vld [vmem:[%s795] sm:$0xf]
      %v6286 = vlaneseq
      %v6287 = vshrl.u32 %v6286, 7
      %v6288 = vsub.s32 0, %v6287
      %v6289 = vrot.slane %v6284, %v6288
      %v6290 = vlaneseq
      %v6291 = vshrl.u32 %v6290, 7
      %v6292 = vsub.s32 1, %v6291
      %v6293 = vrot.slane %v6284, %v6292
      %v6294 = vlaneseq
      %v6295 = vshrl.u32 %v6294, 7
      %v6296 = vsub.s32 2, %v6295
      %v6297 = vrot.slane %v6284, %v6296
      %v6298 = vlaneseq
      %v6299 = vshrl.u32 %v6298, 7
      %v6300 = vsub.s32 3, %v6299
      %v6301 = vrot.slane %v6284, %v6300
      %v6308 = vunpack.c.l.s4 1983009808
      %v6309 = vunpack.c.0.s8 %v6308
      %v6310 = vlaneseq
      %v6311 = vshrl.u32 %v6310, 7
      %v6312 = vsub.s32 %v6309, %v6311
      %v6313 = vrot.slane %v6207, %v6312
      %v6314 = vcombine.high %v6313, %v6313
      %v6316 = vsel %vm1541, %v6314, 0
      %v6319 = vsel %vm1544, %v6280, 0
      %v6322 = vsel %vm1544, %v6281, 0
      %v6325 = vsel %vm1544, %v6282, 0
      %v6328 = vsel %vm1544, %v6283, 0
      %6330 = vmatprep.subr.mxu0 %v6209
      %6331 = vmatpush1.msra.mxu0 %v6208
      %6332 = vmatprep.subr.mxu0 %v6213
      %6333 = vmatpush1.msra.mxu0 %v6212
      %6334 = vmatprep.subr.mxu0 %v6217
      %6335 = vmatpush1.msra.mxu0 %v6216
      %6336 = vmatprep.subr.mxu0 %v6221
      %6337 = vmatpush1.msra.mxu0 %v6220
      %6338 = vmatprep.subr.mxu0 %v6225
      %6339 = vmatpush1.msra.mxu0 %v6224
      %6340 = vmatprep.subr.mxu0 %v6229
      %6341 = vmatpush1.msra.mxu0 %v6228
      %6342 = vmatprep.subr.mxu0 %v6233
      %6343 = vmatpush1.msra.mxu0 %v6232
      %6344 = vmatprep.subr.mxu0 %v6237
      %6345 = vmatpush1.msra.mxu0 %v6236
      %6346 = vmatprep.subr.mxu0 %v6241
      %6347 = vmatpush1.msra.mxu0 %v6240
      %6348 = vmatprep.subr.mxu0 %v6245
      %6349 = vmatpush1.msra.mxu0 %v6244
      %6350 = vmatprep.subr.mxu0 %v6249
      %6351 = vmatpush1.msra.mxu0 %v6248
      %6352 = vmatprep.subr.mxu0 %v6253
      %6353 = vmatpush1.msra.mxu0 %v6252
      %6354 = vmatprep.subr.mxu0 %v6257
      %6355 = vmatpush1.msra.mxu0 %v6256
      %6356 = vmatprep.subr.mxu0 %v6261
      %6357 = vmatpush1.msra.mxu0 %v6260
      %6358 = vmatprep.subr.mxu0 %v6265
      %6359 = vmatpush1.msra.mxu0 %v6264
      %6360 = vmatprep.subr.mxu0 %v6269
      %6361 = vmatpush1.msra.mxu0 %v6268
      %6362 = vmatprep.subr.mxu0 %v6273
      %6363 = vmatpush1.msra.mxu0 %v6272
      %6364 = vmatprep.subr.mxu0 %v6277
      %6365 = vmatpush1.msra.mxu0 %v6276
      %6366 = vmatprep.subr.mxu0 %v6322
      %6367 = vmatpush1.msra.mxu0 %v6319
      %6368 = vmatprep.subr.mxu0 0.0
      %6369 = vmatpush1.msra.mxu0 0.0
      %6370 = vmatprep.subr.mxu0 0.0
      %6371 = vmatpush1.msra.mxu0 0.0
      %6372 = vmatprep.subr.mxu0 0.0
      %6373 = vmatpush1.msra.mxu0 0.0
      %6374 = vmatprep.subr.mxu0 0.0
      %6375 = vmatpush1.msra.mxu0 0.0
      %6376 = vmatprep.subr.mxu0 0.0
      %6377 = vmatpush1.msra.mxu0 0.0
      %6378 = vmatprep.subr.mxu0 0.0
      %6379 = vmatpush1.msra.mxu0 0.0
      %6380 = vmatprep.subr.mxu0 0.0
      %6381 = vmatpush1.msra.mxu0 0.0
      %6382 = vmatprep.subr.mxu0 0.0
      %6383 = vmatpush1.msra.mxu0 0.0
      %6384 = vmatprep.subr.mxu0 0.0
      %6385 = vmatpush1.msra.mxu0 0.0
      %6386 = vmatprep.subr.mxu0 0.0
      %6387 = vmatpush1.msra.mxu0 0.0
      %6388 = vmatprep.subr.mxu0 0.0
      %6389 = vmatpush1.msra.mxu0 0.0
      %6390 = vmatprep.subr.mxu0 0.0
      %6391 = vmatpush1.msra.mxu0 0.0
      %6392 = vmatprep.subr.mxu0 0.0
      %6393 = vmatpush1.msra.mxu0 0.0
      %6394 = vmatprep.mubr.f32.mxu0 %v6316
      %6395 = vmatmul.mubr.f32.gmra.mrb[0].mxu0 %v6313
      %v6396 = vpop.f32.mrb[0].mxu0
      %v6397 = vadd.f32 %v6289, %v6396
      %v6398 = vpop.f32.mrb[0].mxu0
      %v6399 = vadd.f32 %v6293, %v6398
      %6400 = vdwg.mxu0
      %6401 = vmatprep.subr.mxu0 %v6211
      %6402 = vmatpush1.msra.mxu0 %v6210
      %6403 = vmatprep.subr.mxu0 %v6215
      %6404 = vmatpush1.msra.mxu0 %v6214
      %6405 = vmatprep.subr.mxu0 %v6219
      %6406 = vmatpush1.msra.mxu0 %v6218
      %6407 = vmatprep.subr.mxu0 %v6223
      %6408 = vmatpush1.msra.mxu0 %v6222
      %6409 = vmatprep.subr.mxu0 %v6227
      %6410 = vmatpush1.msra.mxu0 %v6226
      %6411 = vmatprep.subr.mxu0 %v6231
      %6412 = vmatpush1.msra.mxu0 %v6230
      %6413 = vmatprep.subr.mxu0 %v6235
      %6414 = vmatpush1.msra.mxu0 %v6234
      %6415 = vmatprep.subr.mxu0 %v6239
      %6416 = vmatpush1.msra.mxu0 %v6238
      %6417 = vmatprep.subr.mxu0 %v6243
      %6418 = vmatpush1.msra.mxu0 %v6242
      %6419 = vmatprep.subr.mxu0 %v6247
      %6420 = vmatpush1.msra.mxu0 %v6246
      %6421 = vmatprep.subr.mxu0 %v6251
      %6422 = vmatpush1.msra.mxu0 %v6250
      %6423 = vmatprep.subr.mxu0 %v6255
      %6424 = vmatpush1.msra.mxu0 %v6254
      %6425 = vmatprep.subr.mxu0 %v6259
      %6426 = vmatpush1.msra.mxu0 %v6258
      %6427 = vmatprep.subr.mxu0 %v6263
      %6428 = vmatpush1.msra.mxu0 %v6262
      %6429 = vmatprep.subr.mxu0 %v6267
      %6430 = vmatpush1.msra.mxu0 %v6266
      %6431 = vmatprep.subr.mxu0 %v6271
      %6432 = vmatpush1.msra.mxu0 %v6270
      %6433 = vmatprep.subr.mxu0 %v6275
      %6434 = vmatpush1.msra.mxu0 %v6274
      %6435 = vmatprep.subr.mxu0 %v6279
      %6436 = vmatpush1.msra.mxu0 %v6278
      %6437 = vmatprep.subr.mxu0 %v6328
      %6438 = vmatpush1.msra.mxu0 %v6325
      %6439 = vmatprep.subr.mxu0 0.0
      %6440 = vmatpush1.msra.mxu0 0.0
      %6441 = vmatprep.subr.mxu0 0.0
      %6442 = vmatpush1.msra.mxu0 0.0
      %6443 = vmatprep.subr.mxu0 0.0
      %6444 = vmatpush1.msra.mxu0 0.0
      %6445 = vmatprep.subr.mxu0 0.0
      %6446 = vmatpush1.msra.mxu0 0.0
      %6447 = vmatprep.subr.mxu0 0.0
      %6448 = vmatpush1.msra.mxu0 0.0
      %6449 = vmatprep.subr.mxu0 0.0
      %6450 = vmatpush1.msra.mxu0 0.0
      %6451 = vmatprep.subr.mxu0 0.0
      %6452 = vmatpush1.msra.mxu0 0.0
      %6453 = vmatprep.subr.mxu0 0.0
      %6454 = vmatpush1.msra.mxu0 0.0
      %6455 = vmatprep.subr.mxu0 0.0
      %6456 = vmatpush1.msra.mxu0 0.0
      %6457 = vmatprep.subr.mxu0 0.0
      %6458 = vmatpush1.msra.mxu0 0.0
      %6459 = vmatprep.subr.mxu0 0.0
      %6460 = vmatpush1.msra.mxu0 0.0
      %6461 = vmatprep.subr.mxu0 0.0
      %6462 = vmatpush1.msra.mxu0 0.0
      %6463 = vmatprep.subr.mxu0 0.0
      %6464 = vmatpush1.msra.mxu0 0.0
      %6465 = vmatprep.mubr.f32.mxu0 %v6316
      %6466 = vmatmul.mubr.f32.gmra.mrb[0].mxu0 %v6313
      %v6467 = vpop.f32.mrb[0].mxu0
      %v6468 = vadd.f32 %v6297, %v6467
      %v6469 = vpop.f32.mrb[0].mxu0
      %v6470 = vadd.f32 %v6301, %v6469
      %6471 = vdwg.mxu0
      %v6474 = vrot.slane %v6397, 6
      %v6475 = vrot.slane %v6399, 6
      %v6478 = vadd.f32 %v6203, %v6474
      %v6479 = vadd.f32 %v6204, %v6475
      %v6480 = vxor.u32 %v6478, 2147483648
      %v6481 = vxor.u32 %v6479, 2147483648
      %v6482 = vmul.f32 %v6480, 1.442695
      %v6483 = vpow.pop %v6482
      %v6484 = vmul.f32 %v6481, 1.442695
      %v6485 = vpow.pop %v6484
      %v6486 = vadd.f32 %v6483, 1.0
      %v6487 = vadd.f32 %v6485, 1.0
      %v6488 = vrcp.pop %v6486
      %v6489 = vmul.f32 1.0, %v6488
      %v6490 = vrcp.pop %v6487
      %v6491 = vmul.f32 1.0, %v6490
      %v6493 = vrot.slane %v6468, 6
      %v6495 = vadd.f32 %v6205, %v6493
      %v6496 = vxor.u32 %v6495, 2147483648
      %v6497 = vmul.f32 %v6496, 1.442695
      %v6498 = vpow.pop %v6497
      %v6499 = vadd.f32 %v6498, 1.0
      %v6500 = vrcp.pop %v6499
      %v6501 = vmul.f32 1.0, %v6500
      %v6503 = vrot.slane %v6470, 6
      %6504 = vrot.lane.b32.xlu0 %v6493, 84
      %v6505 = vpop.permute.xlu0 %6504
      %6506 = vrot.lane.b32.xlu0 %v6503, 84
      %v6507 = vpop.permute.xlu0 %6506
      %v6508 = vsel %vm1726, %v6505, %v6507
      %v6511 = vmul.f32 %v6489, %v6508
      %v6512 = vmul.f32 %v6491, %v6507
      %6515 = vrot.lane.b32.xlu0 %v6511, 44
      %v6516 = vpop.permute.xlu0 %6515
      %6517 = vrot.lane.b32.xlu0 %v6512, 44
      %v6518 = vpop.permute.xlu0 %6517
      %v6519 = vsel %vm1738, %v6516, %v6518
      %v6522 = vadd.f32 %v6205, %v6516
      %v6523 = vadd.f32 %v6206, %v6519
      %v6524 = vtanh.pop %v6522
      %v6525 = vtanh.pop %v6523
      %v6526 = vsub.f32 1.0, %v6491
      %v6527 = vsub.f32 1.0, %v6501
      %6530 = vrot.lane.b32.xlu0 %v6524, 106
      %v6531 = vpop.permute.xlu0 %6530
      %6532 = vrot.lane.b32.xlu0 %v6525, 106
      %v6533 = vpop.permute.xlu0 %6532
      %v6534 = vsel %vm1754, %v6531, %v6533
      %v6537 = vmul.f32 %v6526, %v6534
      %v6538 = vmul.f32 %v6527, %v6533
      %v6539 = vcombine.low %v6207, %v6207
      %v6541 = vunpack.c.l.s4 1983009808
      %v6542 = vunpack.c.0.s8 %v6541
      %v6543 = vlaneseq
      %v6544 = vshrl.u32 %v6543, 7
      %v6545 = vsub.s32 %v6542, %v6544
      %v6546 = vrot.slane %v6539, %v6545
      %v6547 = vcombine.high %v6546, %v6546
      %6548 = vrot.lane.b32.xlu0 %v6546, 22
      %v6549 = vpop.permute.xlu0 %6548
      %6550 = vrot.lane.b32.xlu0 %v6547, 22
      %v6551 = vpop.permute.xlu0 %6550
      %v6552 = vsel %vm1541, %v6549, %v6551
      %v6555 = vmul.f32 %v6491, %v6549
      %v6556 = vmul.f32 %v6501, %v6552
      %v6557 = vadd.f32 %v6537, %v6555
      %v6558 = vadd.f32 %v6538, %v6556
      %v6561 = vcombine.low %v6557, %v6558
      %v6563 = vunpack.c.l.s4 1983009808
      %v6564 = vunpack.c.0.s8 %v6563
      %v6565 = vlaneseq
      %v6566 = vshrl.u32 %v6565, 7
      %v6567 = vsub.s32 %v6564, %v6566
      %v6568 = vrot.slane %v6561, %v6567
      %v6569 = vcombine.high %v6568, %v6568
      %6570 = vrot.lane.b32.xlu0 %v6569, 106
      %v6571 = vpop.permute.xlu0 %6570
      %v6572 = vrot.slane %v6571, 2
      %v6573 = vsel %vm1754, %v6571, %v6572
      %6575 = vst.msk [vmem:[#allocation2] sm:$0xf] %vm1426, %v6573
      %s6576 = scalar_lea.vmem [#allocation5], 20
      %6577 = vst.msk [vmem:[%s6576] sm:$0xf] %vm1426, %v6573
      %v6578 = vld [vmem:[#allocation5] ss:$2 sm:$0x3]
      %s6579 = scalar_lea.vmem [#allocation5], 4
      %v6580 = vld [vmem:[%s6579] ss:$2 sm:$0x3]
      %s6581 = scalar_lea.vmem [#allocation5], 8
      %v6582 = vld [vmem:[%s6581] ss:$2 sm:$0x3]
      %s6583 = scalar_lea.vmem [#allocation5], 12
      %v6584 = vld [vmem:[%s6583] ss:$2 sm:$0x3]
      %s6585 = scalar_lea.vmem [#allocation5], 16
      %v6586 = vld [vmem:[%s6585] ss:$2 sm:$0x3]
      %s6587 = scalar_lea.vmem [#allocation5], 20
      %v6588 = vld [vmem:[%s6587] ss:$2 sm:$0x3]
      %v6589 = vld [vmem:[%s832] ss:$2 sm:$0x3]
      %s6590 = scalar_lea.vmem %s832, 4
      %v6591 = vld [vmem:[%s6590] ss:$2 sm:$0x3]
      %s6592 = scalar_lea.vmem %s832, 8
      %v6593 = vld [vmem:[%s6592] ss:$2 sm:$0x3]
      %s6594 = scalar_lea.vmem %s832, 12
      %v6595 = vld [vmem:[%s6594] ss:$2 sm:$0x3]
      %s6596 = scalar_lea.vmem %s832, 16
      %v6597 = vld [vmem:[%s6596] ss:$2 sm:$0x3]
      %s6598 = scalar_lea.vmem %s832, 20
      %v6599 = vld [vmem:[%s6598] ss:$2 sm:$0x3]
      %s6600 = scalar_lea.vmem %s832, 24
      %v6601 = vld [vmem:[%s6600] ss:$2 sm:$0x3]
      %s6602 = scalar_lea.vmem %s832, 28
      %v6603 = vld [vmem:[%s6602] ss:$2 sm:$0x3]
      %v6610 = vcombine.low %v6578, %v6580
      %v6611 = vcombine.low %v6582, %v6584
      %v6612 = vcombine.low %v6586, %v6588
      %v6614 = vunpack.c.l.s4 1966171168
      %v6615 = vunpack.c.0.s8 %v6614
      %v6616 = vlaneseq
      %v6617 = vshrl.u32 %v6616, 7
      %v6618 = vsub.s32 %v6615, %v6617
      %v6619 = vrot.slane %v6610, %v6618
      %v6621 = vunpack.c.l.s4 1966171168
      %v6622 = vunpack.c.0.s8 %v6621
      %v6623 = vlaneseq
      %v6624 = vshrl.u32 %v6623, 7
      %v6625 = vsub.s32 %v6622, %v6624
      %v6626 = vrot.slane %v6611, %v6625
      %v6628 = vunpack.c.l.s4 1966171168
      %v6629 = vunpack.c.0.s8 %v6628
      %v6630 = vlaneseq
      %v6631 = vshrl.u32 %v6630, 7
      %v6632 = vsub.s32 %v6629, %v6631
      %v6633 = vrot.slane %v6612, %v6632
      %v6634 = vcombine.low %v6619, %v6626
      %v6635 = vcombine.high %v6619, %v6626
      %v6636 = vcombine.high %v6633, %v6633
      %v6638 = vunpack.c.l.s4 1966171168
      %v6639 = vunpack.c.0.s8 %v6638
      %v6640 = vlaneseq
      %v6641 = vshrl.u32 %v6640, 7
      %v6642 = vsub.s32 %v6639, %v6641
      %v6643 = vrot.slane %v6634, %v6642
      %v6645 = vunpack.c.l.s4 1966171168
      %v6646 = vunpack.c.0.s8 %v6645
      %v6647 = vlaneseq
      %v6648 = vshrl.u32 %v6647, 7
      %v6649 = vsub.s32 %v6646, %v6648
      %v6650 = vrot.slane %v6635, %v6649
      %v6652 = vunpack.c.l.s4 1966171168
      %v6653 = vunpack.c.0.s8 %v6652
      %v6654 = vlaneseq
      %v6655 = vshrl.u32 %v6654, 7
      %v6656 = vsub.s32 %v6653, %v6655
      %v6657 = vrot.slane %v6633, %v6656
      %v6659 = vunpack.c.l.s4 1966171168
      %v6660 = vunpack.c.0.s8 %v6659
      %v6661 = vlaneseq
      %v6662 = vshrl.u32 %v6661, 7
      %v6663 = vsub.s32 %v6660, %v6662
      %v6664 = vrot.slane %v6636, %v6663
      %v6665 = vcombine.low %v6643, %v6657
      %v6666 = vcombine.low %v6650, %v6664
      %v6676 = vcombine.low %v6589, %v6591
      %v6677 = vcombine.low %v6593, %v6595
      %v6678 = vcombine.low %v6597, %v6599
      %v6679 = vcombine.low %v6601, %v6603
      %v6681 = vunpack.c.l.s4 1966171168
      %v6682 = vunpack.c.0.s8 %v6681
      %v6683 = vlaneseq
      %v6684 = vshrl.u32 %v6683, 7
      %v6685 = vsub.s32 %v6682, %v6684
      %v6686 = vrot.slane %v6676, %v6685
      %v6688 = vunpack.c.l.s4 1966171168
      %v6689 = vunpack.c.0.s8 %v6688
      %v6690 = vlaneseq
      %v6691 = vshrl.u32 %v6690, 7
      %v6692 = vsub.s32 %v6689, %v6691
      %v6693 = vrot.slane %v6677, %v6692
      %v6695 = vunpack.c.l.s4 1966171168
      %v6696 = vunpack.c.0.s8 %v6695
      %v6697 = vlaneseq
      %v6698 = vshrl.u32 %v6697, 7
      %v6699 = vsub.s32 %v6696, %v6698
      %v6700 = vrot.slane %v6678, %v6699
      %v6702 = vunpack.c.l.s4 1966171168
      %v6703 = vunpack.c.0.s8 %v6702
      %v6704 = vlaneseq
      %v6705 = vshrl.u32 %v6704, 7
      %v6706 = vsub.s32 %v6703, %v6705
      %v6707 = vrot.slane %v6679, %v6706
      %v6708 = vcombine.low %v6686, %v6693
      %v6709 = vcombine.high %v6686, %v6693
      %v6710 = vcombine.low %v6700, %v6707
      %v6711 = vcombine.high %v6700, %v6707
      %v6713 = vunpack.c.l.s4 1966171168
      %v6714 = vunpack.c.0.s8 %v6713
      %v6715 = vlaneseq
      %v6716 = vshrl.u32 %v6715, 7
      %v6717 = vsub.s32 %v6714, %v6716
      %v6718 = vrot.slane %v6708, %v6717
      %v6720 = vunpack.c.l.s4 1966171168
      %v6721 = vunpack.c.0.s8 %v6720
      %v6722 = vlaneseq
      %v6723 = vshrl.u32 %v6722, 7
      %v6724 = vsub.s32 %v6721, %v6723
      %v6725 = vrot.slane %v6709, %v6724
      %v6727 = vunpack.c.l.s4 1966171168
      %v6728 = vunpack.c.0.s8 %v6727
      %v6729 = vlaneseq
      %v6730 = vshrl.u32 %v6729, 7
      %v6731 = vsub.s32 %v6728, %v6730
      %v6732 = vrot.slane %v6710, %v6731
      %v6734 = vunpack.c.l.s4 1966171168
      %v6735 = vunpack.c.0.s8 %v6734
      %v6736 = vlaneseq
      %v6737 = vshrl.u32 %v6736, 7
      %v6738 = vsub.s32 %v6735, %v6737
      %v6739 = vrot.slane %v6711, %v6738
      %v6740 = vcombine.low %v6718, %v6732
      %v6741 = vcombine.low %v6725, %v6739
      %v6743 = vsel %vm1541, %v6666, 0
      %v6745 = vsel %vm1541, %v6741, 0
      %6747 = vmatprep.subr.mxu0 %v6745
      %6748 = vmatpush1.xpose.msra.mxu0 %v6740
      %6749 = vmatprep.subr.mxu0 0.0
      %6750 = vmatpush1.xpose.msra.mxu0 0.0
      %6751 = vmatprep.subr.mxu0 0.0
      %6752 = vmatpush1.xpose.msra.mxu0 0.0
      %6753 = vmatprep.subr.mxu0 0.0
      %6754 = vmatpush1.xpose.msra.mxu0 0.0
      %6755 = vmatprep.subr.mxu0 0.0
      %6756 = vmatpush1.xpose.msra.mxu0 0.0
      %6757 = vmatprep.subr.mxu0 0.0
      %6758 = vmatpush1.xpose.msra.mxu0 0.0
      %6759 = vmatprep.subr.mxu0 0.0
      %6760 = vmatpush1.xpose.msra.mxu0 0.0
      %6761 = vmatprep.subr.mxu0 0.0
      %6762 = vmatpush1.xpose.msra.mxu0 0.0
      %6763 = vmatprep.subr.mxu0 0.0
      %6764 = vmatpush1.xpose.msra.mxu0 0.0
      %6765 = vmatprep.subr.mxu0 0.0
      %6766 = vmatpush1.xpose.msra.mxu0 0.0
      %6767 = vmatprep.subr.mxu0 0.0
      %6768 = vmatpush1.xpose.msra.mxu0 0.0
      %6769 = vmatprep.subr.mxu0 0.0
      %6770 = vmatpush1.xpose.msra.mxu0 0.0
      %6771 = vmatprep.subr.mxu0 0.0
      %6772 = vmatpush1.xpose.msra.mxu0 0.0
      %6773 = vmatprep.subr.mxu0 0.0
      %6774 = vmatpush1.xpose.msra.mxu0 0.0
      %6775 = vmatprep.subr.mxu0 0.0
      %6776 = vmatpush1.xpose.msra.mxu0 0.0
      %6777 = vmatprep.subr.mxu0 0.0
      %6778 = vmatpush1.xpose.msra.mxu0 0.0
      %6779 = vmatprep.subr.mxu0 0.0
      %6780 = vmatpush1.xpose.msra.mxu0 0.0
      %6781 = vmatprep.subr.mxu0 0.0
      %6782 = vmatpush1.xpose.msra.mxu0 0.0
      %6783 = vmatprep.subr.mxu0 0.0
      %6784 = vmatpush1.xpose.msra.mxu0 0.0
      %6785 = vmatprep.subr.mxu0 0.0
      %6786 = vmatpush1.xpose.msra.mxu0 0.0
      %6787 = vmatprep.subr.mxu0 0.0
      %6788 = vmatpush1.xpose.msra.mxu0 0.0
      %6789 = vmatprep.subr.mxu0 0.0
      %6790 = vmatpush1.xpose.msra.mxu0 0.0
      %6791 = vmatprep.subr.mxu0 0.0
      %6792 = vmatpush1.xpose.msra.mxu0 0.0
      %6793 = vmatprep.subr.mxu0 0.0
      %6794 = vmatpush1.xpose.msra.mxu0 0.0
      %6795 = vmatprep.subr.mxu0 0.0
      %6796 = vmatpush1.xpose.msra.mxu0 0.0
      %6797 = vmatprep.subr.mxu0 0.0
      %6798 = vmatpush1.xpose.msra.mxu0 0.0
      %6799 = vmatprep.subr.mxu0 0.0
      %6800 = vmatpush1.xpose.msra.mxu0 0.0
      %6801 = vmatprep.subr.mxu0 0.0
      %6802 = vmatpush1.xpose.msra.mxu0 0.0
      %6803 = vmatprep.subr.mxu0 0.0
      %6804 = vmatpush1.xpose.msra.mxu0 0.0
      %6805 = vmatprep.subr.mxu0 0.0
      %6806 = vmatpush1.xpose.msra.mxu0 0.0
      %6807 = vmatprep.subr.mxu0 0.0
      %6808 = vmatpush1.xpose.msra.mxu0 0.0
      %6809 = vmatprep.subr.mxu0 0.0
      %6810 = vmatpush1.xpose.msra.mxu0 0.0
      %6811 = vmatprep.mubr.f32.mxu0 %v6743
      %6812 = vmatmul.mubr.f32.gmra.mrb[0].mxu0 %v6665
      %v6813 = vpop.f32.mrb[0].mxu0
      %v6814 = vadd.f32 0.0, %v6813
      %v6815 = vpop.f32.mrb[0].mxu0
      %6816 = vdwg.mxu0
      %vm6817 = vcmask 62464
      %v6818 = vsel %vm6817, %v6814, -inf
      %6819 = vmax.xlane.f32.xlu0 %v6818
      %v6820 = vpop.xlane.xlu0 %6819
      %v6821 = vsub.f32 %v6814, %v6820
      %v6822 = vmul.f32 %v6821, 1.442695
      %v6823 = vpow.pop %v6822
      %v6824 = vsel %vm6817, %v6823, 0.0
      %6825 = vadd.xlane.f32.xlu0 %v6824
      %v6826 = vpop.xlane.xlu0 %6825
      %v6827 = vrcp.pop %v6826
      %v6828 = vmul.f32 %v6823, %v6827
      %vm6830 = vcmask 64512
      %v6832 = vsel %vm6830, %v6828, 0
      %6834 = vmatprep.subr.mxu0 %v6741
      %6835 = vmatpush1.msra.mxu0 %v6740
      %6836 = vmatprep.subr.mxu0 0.0
      %6837 = vmatpush1.msra.mxu0 0.0
      %6838 = vmatprep.subr.mxu0 0.0
      %6839 = vmatpush1.msra.mxu0 0.0
      %6840 = vmatprep.subr.mxu0 0.0
      %6841 = vmatpush1.msra.mxu0 0.0
      %6842 = vmatprep.subr.mxu0 0.0
      %6843 = vmatpush1.msra.mxu0 0.0
      %6844 = vmatprep.subr.mxu0 0.0
      %6845 = vmatpush1.msra.mxu0 0.0
      %6846 = vmatprep.subr.mxu0 0.0
      %6847 = vmatpush1.msra.mxu0 0.0
      %6848 = vmatprep.subr.mxu0 0.0
      %6849 = vmatpush1.msra.mxu0 0.0
      %6850 = vmatprep.subr.mxu0 0.0
      %6851 = vmatpush1.msra.mxu0 0.0
      %6852 = vmatprep.subr.mxu0 0.0
      %6853 = vmatpush1.msra.mxu0 0.0
      %6854 = vmatprep.subr.mxu0 0.0
      %6855 = vmatpush1.msra.mxu0 0.0
      %6856 = vmatprep.subr.mxu0 0.0
      %6857 = vmatpush1.msra.mxu0 0.0
      %6858 = vmatprep.subr.mxu0 0.0
      %6859 = vmatpush1.msra.mxu0 0.0
      %6860 = vmatprep.subr.mxu0 0.0
      %6861 = vmatpush1.msra.mxu0 0.0
      %6862 = vmatprep.subr.mxu0 0.0
      %6863 = vmatpush1.msra.mxu0 0.0
      %6864 = vmatprep.subr.mxu0 0.0
      %6865 = vmatpush1.msra.mxu0 0.0
      %6866 = vmatprep.subr.mxu0 0.0
      %6867 = vmatpush1.msra.mxu0 0.0
      %6868 = vmatprep.subr.mxu0 0.0
      %6869 = vmatpush1.msra.mxu0 0.0
      %6870 = vmatprep.subr.mxu0 0.0
      %6871 = vmatpush1.msra.mxu0 0.0
      %6872 = vmatprep.subr.mxu0 0.0
      %6873 = vmatpush1.msra.mxu0 0.0
      %6874 = vmatprep.subr.mxu0 0.0
      %6875 = vmatpush1.msra.mxu0 0.0
      %6876 = vmatprep.subr.mxu0 0.0
      %6877 = vmatpush1.msra.mxu0 0.0
      %6878 = vmatprep.subr.mxu0 0.0
      %6879 = vmatpush1.msra.mxu0 0.0
      %6880 = vmatprep.subr.mxu0 0.0
      %6881 = vmatpush1.msra.mxu0 0.0
      %6882 = vmatprep.subr.mxu0 0.0
      %6883 = vmatpush1.msra.mxu0 0.0
      %6884 = vmatprep.subr.mxu0 0.0
      %6885 = vmatpush1.msra.mxu0 0.0
      %6886 = vmatprep.subr.mxu0 0.0
      %6887 = vmatpush1.msra.mxu0 0.0
      %6888 = vmatprep.subr.mxu0 0.0
      %6889 = vmatpush1.msra.mxu0 0.0
      %6890 = vmatprep.subr.mxu0 0.0
      %6891 = vmatpush1.msra.mxu0 0.0
      %6892 = vmatprep.subr.mxu0 0.0
      %6893 = vmatpush1.msra.mxu0 0.0
      %6894 = vmatprep.subr.mxu0 0.0
      %6895 = vmatpush1.msra.mxu0 0.0
      %6896 = vmatprep.subr.mxu0 0.0
      %6897 = vmatpush1.msra.mxu0 0.0
      %6898 = vmatprep.mubr.f32.mxu0 0.0
      %6899 = vmatmul.mubr.f32.gmra.mrb[0].mxu0 %v6832
      %v6900 = vpop.f32.mrb[0].mxu0
      %v6901 = vadd.f32 0.0, %v6900
      %v6902 = vpop.f32.mrb[0].mxu0
      %v6903 = vadd.f32 0.0, %v6902
      %6904 = vdwg.mxu0
      %v6905 = vld [vmem:[%s800] sm:$0xff]
      %v6906 = vld [vmem:[%s800 + $0x8] sm:$0xff]
      %v6907 = vld [vmem:[%s800 + $0x10] sm:$0xff]
      %v6908 = vld [vmem:[%s800 + $0x18] sm:$0xff]
      %v6909 = vld [vmem:[%s800 + $0x20] sm:$0xff]
      %v6910 = vld [vmem:[%s800 + $0x28] sm:$0xff]
      %v6911 = vld [vmem:[%s800 + $0x30] sm:$0xff]
      %v6912 = vld [vmem:[%s800 + $0x38] sm:$0xff]
      %v6913 = vld [vmem:[%s800 + $0x40] sm:$0xff]
      %v6914 = vld [vmem:[%s800 + $0x48] sm:$0xff]
      %v6915 = vld [vmem:[%s800 + $0x50] sm:$0xff]
      %v6916 = vld [vmem:[%s800 + $0x58] sm:$0xff]
      %v6917 = vld [vmem:[%s800 + $0x60] sm:$0xff]
      %v6918 = vld [vmem:[%s800 + $0x68] sm:$0xff]
      %v6919 = vld [vmem:[%s800 + $0x70] sm:$0xff]
      %v6920 = vld [vmem:[%s800 + $0x78] sm:$0xff]
      %v6921 = vld [vmem:[%s800 + $0x80] sm:$0xff]
      %v6922 = vld [vmem:[%s800 + $0x88] sm:$0xff]
      %v6923 = vld [vmem:[%s800 + $0x90] sm:$0xff]
      %v6924 = vld [vmem:[%s800 + $0x98] sm:$0xff]
      %v6925 = vld [vmem:[%s800 + $0xa0] sm:$0xff]
      %v6926 = vld [vmem:[%s800 + $0xa8] sm:$0xff]
      %v6927 = vld [vmem:[%s800 + $0xb0] sm:$0xff]
      %v6928 = vld [vmem:[%s800 + $0xb8] sm:$0xff]
      %v6929 = vld [vmem:[%s800 + $0xc0] sm:$0xff]
      %v6930 = vld [vmem:[%s800 + $0xc8] sm:$0xff]
      %v6931 = vld [vmem:[%s800 + $0xd0] sm:$0xff]
      %v6932 = vld [vmem:[%s800 + $0xd8] sm:$0xff]
      %v6933 = vld [vmem:[%s800 + $0xe0] sm:$0xff]
      %v6934 = vld [vmem:[%s800 + $0xe8] sm:$0xff]
      %v6935 = vld [vmem:[%s800 + $0xf0] sm:$0xff]
      %v6936 = vld [vmem:[%s800 + $0xf8] sm:$0xff]
      %v6937 = vld [vmem:[%s800 + $0x100] sm:$0xff]
      %v6938 = vld [vmem:[%s800 + $0x108] sm:$0xff]
      %v6939 = vld [vmem:[%s800 + $0x110] sm:$0xff]
      %v6940 = vld [vmem:[%s800 + $0x118] sm:$0xff]
      %v6941 = vld [vmem:[%s800 + $0x120] sm:$0x3f]
      %v6942 = vld [vmem:[%s800 + $0x128] sm:$0x3f]
      %v6943 = vld [vmem:[%s805] sm:$0xff]
      %v6944 = vld [vmem:[%s805 + $0x8] sm:$0xff]
      %v6945 = vld [vmem:[%s805 + $0x10] sm:$0xff]
      %v6946 = vld [vmem:[%s805 + $0x18] sm:$0xff]
      %v6947 = vld [vmem:[%s805 + $0x20] sm:$0xff]
      %v6948 = vld [vmem:[%s805 + $0x28] sm:$0xff]
      %v6949 = vld [vmem:[%s805 + $0x30] sm:$0xff]
      %v6950 = vld [vmem:[%s805 + $0x38] sm:$0xff]
      %v6951 = vld [vmem:[%s805 + $0x40] sm:$0xff]
      %v6952 = vld [vmem:[%s805 + $0x48] sm:$0xff]
      %v6953 = vld [vmem:[%s805 + $0x50] sm:$0xff]
      %v6954 = vld [vmem:[%s805 + $0x58] sm:$0xff]
      %v6955 = vld [vmem:[%s805 + $0x60] sm:$0xff]
      %v6956 = vld [vmem:[%s805 + $0x68] sm:$0xff]
      %v6957 = vld [vmem:[%s805 + $0x70] sm:$0xff]
      %v6958 = vld [vmem:[%s805 + $0x78] sm:$0xff]
      %v6959 = vld [vmem:[%s805 + $0x80] sm:$0xff]
      %v6960 = vld [vmem:[%s805 + $0x88] sm:$0xff]
      %v6961 = vld [vmem:[%s805 + $0x90] sm:$0xff]
      %v6962 = vld [vmem:[%s805 + $0x98] sm:$0xff]
      %v6963 = vld [vmem:[%s805 + $0xa0] sm:$0xff]
      %v6964 = vld [vmem:[%s805 + $0xa8] sm:$0xff]
      %v6965 = vld [vmem:[%s805 + $0xb0] sm:$0xff]
      %v6966 = vld [vmem:[%s805 + $0xb8] sm:$0xff]
      %v6967 = vld [vmem:[%s805 + $0xc0] sm:$0xff]
      %v6968 = vld [vmem:[%s805 + $0xc8] sm:$0xff]
      %v6969 = vld [vmem:[%s805 + $0xd0] sm:$0xff]
      %v6970 = vld [vmem:[%s805 + $0xd8] sm:$0xff]
      %v6971 = vld [vmem:[%s805 + $0xe0] sm:$0xff]
      %v6972 = vld [vmem:[%s805 + $0xe8] sm:$0xff]
      %v6973 = vld [vmem:[%s805 + $0xf0] sm:$0xff]
      %v6974 = vld [vmem:[%s805 + $0xf8] sm:$0xff]
      %v6975 = vld [vmem:[%s805 + $0x100] sm:$0xff]
      %v6976 = vld [vmem:[%s805 + $0x108] sm:$0xff]
      %v6977 = vld [vmem:[%s805 + $0x110] sm:$0xff]
      %v6978 = vld [vmem:[%s805 + $0x118] sm:$0xff]
      %v6979 = vld [vmem:[%s805 + $0x120] sm:$0x3f]
      %v6980 = vld [vmem:[%s805 + $0x128] sm:$0x3f]
      %v6982 = vsel %vm1541, %v6903, 0
      %v6985 = vsel %vm1544, %v6979, 0
      %v6988 = vsel %vm1544, %v6980, 0
      %6990 = vmatprep.subr.mxu0 %v6944
      %6991 = vmatpush1.msra.mxu0 %v6943
      %6992 = vmatprep.subr.mxu0 %v6946
      %6993 = vmatpush1.msra.mxu0 %v6945
      %6994 = vmatprep.subr.mxu0 %v6948
      %6995 = vmatpush1.msra.mxu0 %v6947
      %6996 = vmatprep.subr.mxu0 %v6950
      %6997 = vmatpush1.msra.mxu0 %v6949
      %6998 = vmatprep.subr.mxu0 %v6952
      %6999 = vmatpush1.msra.mxu0 %v6951
      %7000 = vmatprep.subr.mxu0 %v6954
      %7001 = vmatpush1.msra.mxu0 %v6953
      %7002 = vmatprep.subr.mxu0 %v6956
      %7003 = vmatpush1.msra.mxu0 %v6955
      %7004 = vmatprep.subr.mxu0 %v6958
      %7005 = vmatpush1.msra.mxu0 %v6957
      %7006 = vmatprep.subr.mxu0 %v6960
      %7007 = vmatpush1.msra.mxu0 %v6959
      %7008 = vmatprep.subr.mxu0 %v6962
      %7009 = vmatpush1.msra.mxu0 %v6961
      %7010 = vmatprep.subr.mxu0 %v6964
      %7011 = vmatpush1.msra.mxu0 %v6963
      %7012 = vmatprep.subr.mxu0 %v6966
      %7013 = vmatpush1.msra.mxu0 %v6965
      %7014 = vmatprep.subr.mxu0 %v6968
      %7015 = vmatpush1.msra.mxu0 %v6967
      %7016 = vmatprep.subr.mxu0 %v6970
      %7017 = vmatpush1.msra.mxu0 %v6969
      %7018 = vmatprep.subr.mxu0 %v6972
      %7019 = vmatpush1.msra.mxu0 %v6971
      %7020 = vmatprep.subr.mxu0 %v6974
      %7021 = vmatpush1.msra.mxu0 %v6973
      %7022 = vmatprep.subr.mxu0 %v6976
      %7023 = vmatpush1.msra.mxu0 %v6975
      %7024 = vmatprep.subr.mxu0 %v6978
      %7025 = vmatpush1.msra.mxu0 %v6977
      %7026 = vmatprep.subr.mxu0 %v6988
      %7027 = vmatpush1.msra.mxu0 %v6985
      %7028 = vmatprep.subr.mxu0 0.0
      %7029 = vmatpush1.msra.mxu0 0.0
      %7030 = vmatprep.subr.mxu0 0.0
      %7031 = vmatpush1.msra.mxu0 0.0
      %7032 = vmatprep.subr.mxu0 0.0
      %7033 = vmatpush1.msra.mxu0 0.0
      %7034 = vmatprep.subr.mxu0 0.0
      %7035 = vmatpush1.msra.mxu0 0.0
      %7036 = vmatprep.subr.mxu0 0.0
      %7037 = vmatpush1.msra.mxu0 0.0
      %7038 = vmatprep.subr.mxu0 0.0
      %7039 = vmatpush1.msra.mxu0 0.0
      %7040 = vmatprep.subr.mxu0 0.0
      %7041 = vmatpush1.msra.mxu0 0.0
      %7042 = vmatprep.subr.mxu0 0.0
      %7043 = vmatpush1.msra.mxu0 0.0
      %7044 = vmatprep.subr.mxu0 0.0
      %7045 = vmatpush1.msra.mxu0 0.0
      %7046 = vmatprep.subr.mxu0 0.0
      %7047 = vmatpush1.msra.mxu0 0.0
      %7048 = vmatprep.subr.mxu0 0.0
      %7049 = vmatpush1.msra.mxu0 0.0
      %7050 = vmatprep.subr.mxu0 0.0
      %7051 = vmatpush1.msra.mxu0 0.0
      %7052 = vmatprep.subr.mxu0 0.0
      %7053 = vmatpush1.msra.mxu0 0.0
      %7054 = vmatprep.mubr.f32.mxu0 %v6982
      %7055 = vmatmul.mubr.f32.gmra.mrb[0].mxu0 %v6901
      %v7056 = vpop.f32.mrb[0].mxu0
      %v7057 = vadd.f32 0.0, %v7056
      %v7058 = vpop.f32.mrb[0].mxu0
      %v7059 = vadd.f32 0.0, %v7058
      %7060 = vdwg.mxu0
      %v7062 = vsel %vm1544, %v6941, 0
      %v7065 = vsel %vm1544, %v6942, 0
      %7067 = vmatprep.subr.mxu0 %v6906
      %7068 = vmatpush1.msra.mxu0 %v6905
      %7069 = vmatprep.subr.mxu0 %v6908
      %7070 = vmatpush1.msra.mxu0 %v6907
      %7071 = vmatprep.subr.mxu0 %v6910
      %7072 = vmatpush1.msra.mxu0 %v6909
      %7073 = vmatprep.subr.mxu0 %v6912
      %7074 = vmatpush1.msra.mxu0 %v6911
      %7075 = vmatprep.subr.mxu0 %v6914
      %7076 = vmatpush1.msra.mxu0 %v6913
      %7077 = vmatprep.subr.mxu0 %v6916
      %7078 = vmatpush1.msra.mxu0 %v6915
      %7079 = vmatprep.subr.mxu0 %v6918
      %7080 = vmatpush1.msra.mxu0 %v6917
      %7081 = vmatprep.subr.mxu0 %v6920
      %7082 = vmatpush1.msra.mxu0 %v6919
      %7083 = vmatprep.subr.mxu0 %v6922
      %7084 = vmatpush1.msra.mxu0 %v6921
      %7085 = vmatprep.subr.mxu0 %v6924
      %7086 = vmatpush1.msra.mxu0 %v6923
      %7087 = vmatprep.subr.mxu0 %v6926
      %7088 = vmatpush1.msra.mxu0 %v6925
      %7089 = vmatprep.subr.mxu0 %v6928
      %7090 = vmatpush1.msra.mxu0 %v6927
      %7091 = vmatprep.subr.mxu0 %v6930
      %7092 = vmatpush1.msra.mxu0 %v6929
      %7093 = vmatprep.subr.mxu0 %v6932
      %7094 = vmatpush1.msra.mxu0 %v6931
      %7095 = vmatprep.subr.mxu0 %v6934
      %7096 = vmatpush1.msra.mxu0 %v6933
      %7097 = vmatprep.subr.mxu0 %v6936
      %7098 = vmatpush1.msra.mxu0 %v6935
      %7099 = vmatprep.subr.mxu0 %v6938
      %7100 = vmatpush1.msra.mxu0 %v6937
      %7101 = vmatprep.subr.mxu0 %v6940
      %7102 = vmatpush1.msra.mxu0 %v6939
      %7103 = vmatprep.subr.mxu0 %v7065
      %7104 = vmatpush1.msra.mxu0 %v7062
      %7105 = vmatprep.subr.mxu0 0.0
      %7106 = vmatpush1.msra.mxu0 0.0
      %7107 = vmatprep.subr.mxu0 0.0
      %7108 = vmatpush1.msra.mxu0 0.0
      %7109 = vmatprep.subr.mxu0 0.0
      %7110 = vmatpush1.msra.mxu0 0.0
      %7111 = vmatprep.subr.mxu0 0.0
      %7112 = vmatpush1.msra.mxu0 0.0
      %7113 = vmatprep.subr.mxu0 0.0
      %7114 = vmatpush1.msra.mxu0 0.0
      %7115 = vmatprep.subr.mxu0 0.0
      %7116 = vmatpush1.msra.mxu0 0.0
      %7117 = vmatprep.subr.mxu0 0.0
      %7118 = vmatpush1.msra.mxu0 0.0
      %7119 = vmatprep.subr.mxu0 0.0
      %7120 = vmatpush1.msra.mxu0 0.0
      %7121 = vmatprep.subr.mxu0 0.0
      %7122 = vmatpush1.msra.mxu0 0.0
      %7123 = vmatprep.subr.mxu0 0.0
      %7124 = vmatpush1.msra.mxu0 0.0
      %7125 = vmatprep.subr.mxu0 0.0
      %7126 = vmatpush1.msra.mxu0 0.0
      %7127 = vmatprep.subr.mxu0 0.0
      %7128 = vmatpush1.msra.mxu0 0.0
      %7129 = vmatprep.subr.mxu0 0.0
      %7130 = vmatpush1.msra.mxu0 0.0
      %7131 = vmatprep.mubr.f32.mxu0 %v6743
      %7132 = vmatmul.mubr.f32.gmra.mrb[0].mxu0 %v6665
      %v7133 = vpop.f32.mrb[0].mxu0
      %v7134 = vadd.f32 %v7057, %v7133
      %v7135 = vpop.f32.mrb[0].mxu0
      %v7136 = vadd.f32 %v7059, %v7135
      %7137 = vdwg.mxu0
      %v7138 = vld [vmem:[%s809] sm:$0x3]
      %v7140 = vlaneseq
      %v7141 = vshrl.u32 %v7140, 7
      %v7142 = vsub.s32 0, %v7141
      %v7143 = vrot.slane %v7138, %v7142
      %v7144 = vlaneseq
      %v7145 = vshrl.u32 %v7144, 7
      %v7146 = vsub.s32 1, %v7145
      %v7147 = vrot.slane %v7138, %v7146
      %v7150 = vadd.f32 %v7134, %v7143
      %v7151 = vadd.f32 %v7136, %v7147
      %v7152 = vtanh.pop %v7150
      %v7153 = vtanh.pop %v7151
      %v7154 = vld [vmem:[%s814] sm:$0xff]
      %v7155 = vld [vmem:[%s814 + $0x8] sm:$0xff]
      %v7156 = vld [vmem:[%s814 + $0x10] sm:$0xff]
      %v7157 = vld [vmem:[%s814 + $0x18] sm:$0xff]
      %v7158 = vld [vmem:[%s814 + $0x20] sm:$0xff]
      %v7159 = vld [vmem:[%s814 + $0x28] sm:$0xff]
      %v7160 = vld [vmem:[%s814 + $0x30] sm:$0xff]
      %v7161 = vld [vmem:[%s814 + $0x38] sm:$0xff]
      %v7162 = vld [vmem:[%s814 + $0x40] sm:$0xff]
      %v7163 = vld [vmem:[%s814 + $0x48] sm:$0xff]
      %v7164 = vld [vmem:[%s814 + $0x50] sm:$0xff]
      %v7165 = vld [vmem:[%s814 + $0x58] sm:$0xff]
      %v7166 = vld [vmem:[%s814 + $0x60] sm:$0xff]
      %v7167 = vld [vmem:[%s814 + $0x68] sm:$0xff]
      %v7168 = vld [vmem:[%s814 + $0x70] sm:$0xff]
      %v7169 = vld [vmem:[%s814 + $0x78] sm:$0xff]
      %v7170 = vld [vmem:[%s814 + $0x80] sm:$0xff]
      %v7171 = vld [vmem:[%s814 + $0x88] sm:$0xff]
      %v7172 = vld [vmem:[%s814 + $0x90] sm:$0x3f]
      %v7173 = vld [vmem:[%s817] sm:$0x1]
      %v7175 = vlaneseq
      %v7176 = vshrl.u32 %v7175, 7
      %v7177 = vsub.s32 0, %v7176
      %v7178 = vrot.slane %v7173, %v7177
      %v7181 = vsel %vm1541, %v7153, 0
      %v7184 = vsel %vm1544, %v7172, 0
      %7186 = vmatprep.subr.mxu0 0.0
      %7187 = vmatpush1.msra.mxu0 %v7154
      %7188 = vmatprep.subr.mxu0 0.0
      %7189 = vmatpush1.msra.mxu0 %v7155
      %7190 = vmatprep.subr.mxu0 0.0
      %7191 = vmatpush1.msra.mxu0 %v7156
      %7192 = vmatprep.subr.mxu0 0.0
      %7193 = vmatpush1.msra.mxu0 %v7157
      %7194 = vmatprep.subr.mxu0 0.0
      %7195 = vmatpush1.msra.mxu0 %v7158
      %7196 = vmatprep.subr.mxu0 0.0
      %7197 = vmatpush1.msra.mxu0 %v7159
      %7198 = vmatprep.subr.mxu0 0.0
      %7199 = vmatpush1.msra.mxu0 %v7160
      %7200 = vmatprep.subr.mxu0 0.0
      %7201 = vmatpush1.msra.mxu0 %v7161
      %7202 = vmatprep.subr.mxu0 0.0
      %7203 = vmatpush1.msra.mxu0 %v7162
      %7204 = vmatprep.subr.mxu0 0.0
      %7205 = vmatpush1.msra.mxu0 %v7163
      %7206 = vmatprep.subr.mxu0 0.0
      %7207 = vmatpush1.msra.mxu0 %v7164
      %7208 = vmatprep.subr.mxu0 0.0
      %7209 = vmatpush1.msra.mxu0 %v7165
      %7210 = vmatprep.subr.mxu0 0.0
      %7211 = vmatpush1.msra.mxu0 %v7166
      %7212 = vmatprep.subr.mxu0 0.0
      %7213 = vmatpush1.msra.mxu0 %v7167
      %7214 = vmatprep.subr.mxu0 0.0
      %7215 = vmatpush1.msra.mxu0 %v7168
      %7216 = vmatprep.subr.mxu0 0.0
      %7217 = vmatpush1.msra.mxu0 %v7169
      %7218 = vmatprep.subr.mxu0 0.0
      %7219 = vmatpush1.msra.mxu0 %v7170
      %7220 = vmatprep.subr.mxu0 0.0
      %7221 = vmatpush1.msra.mxu0 %v7171
      %7222 = vmatprep.subr.mxu0 0.0
      %7223 = vmatpush1.msra.mxu0 %v7184
      %7224 = vmatprep.subr.mxu0 0.0
      %7225 = vmatpush1.msra.mxu0 0.0
      %7226 = vmatprep.subr.mxu0 0.0
      %7227 = vmatpush1.msra.mxu0 0.0
      %7228 = vmatprep.subr.mxu0 0.0
      %7229 = vmatpush1.msra.mxu0 0.0
      %7230 = vmatprep.subr.mxu0 0.0
      %7231 = vmatpush1.msra.mxu0 0.0
      %7232 = vmatprep.subr.mxu0 0.0
      %7233 = vmatpush1.msra.mxu0 0.0
      %7234 = vmatprep.subr.mxu0 0.0
      %7235 = vmatpush1.msra.mxu0 0.0
      %7236 = vmatprep.subr.mxu0 0.0
      %7237 = vmatpush1.msra.mxu0 0.0
      %7238 = vmatprep.subr.mxu0 0.0
      %7239 = vmatpush1.msra.mxu0 0.0
      %7240 = vmatprep.subr.mxu0 0.0
      %7241 = vmatpush1.msra.mxu0 0.0
      %7242 = vmatprep.subr.mxu0 0.0
      %7243 = vmatpush1.msra.mxu0 0.0
      %7244 = vmatprep.subr.mxu0 0.0
      %7245 = vmatpush1.msra.mxu0 0.0
      %7246 = vmatprep.subr.mxu0 0.0
      %7247 = vmatpush1.msra.mxu0 0.0
      %7248 = vmatprep.subr.mxu0 0.0
      %7249 = vmatpush1.msra.mxu0 0.0
      %7250 = vmatprep.mubr.f32.mxu0 %v7181
      %7251 = vmatmul.mubr.f32.gmra.mrb[0].mxu0 %v7152
      %v7252 = vpop.f32.mrb[0].mxu0
      %v7253 = vadd.f32 %v7178, %v7252
      %v7254 = vpop.f32.mrb[0].mxu0
      %7255 = vdwg.mxu0
      %7256 = vst [vmem:[%s827] sm:$0x3f] %v7150
      %vm7257 = vcmask 177152
      %7258 = vst.msk [vmem:[%s827 + $0x8] sm:$0x3f] %vm7257, %v7151
      %vm7259 = vcmask 259072
      %7260 = vst.msk [vmem:[%s822] sm:$0x3f] %vm7259, %v7253
      %s7261 = scalar_lea.vmem [#allocation5], 1
      %v7262 = vld [vmem:[%s7261] ss:$2 sm:$0x3]
      %s7263 = scalar_lea.vmem [#allocation5], 5
      %v7264 = vld [vmem:[%s7263] ss:$2 sm:$0x3]
      %s7265 = scalar_lea.vmem [#allocation5], 9
      %v7266 = vld [vmem:[%s7265] ss:$2 sm:$0x3]
      %s7267 = scalar_lea.vmem [#allocation5], 13
      %v7268 = vld [vmem:[%s7267] ss:$2 sm:$0x3]
      %s7269 = scalar_lea.vmem [#allocation5], 17
      %v7270 = vld [vmem:[%s7269] ss:$2 sm:$0x3]
      %s7271 = scalar_lea.vmem [#allocation5], 21
      %v7272 = vld [vmem:[%s7271] ss:$2 sm:$0x3]
      %s7273 = scalar_lea.vmem %s832, 1
      %v7274 = vld [vmem:[%s7273] ss:$2 sm:$0x3]
      %s7275 = scalar_lea.vmem %s832, 5
      %v7276 = vld [vmem:[%s7275] ss:$2 sm:$0x3]
      %s7277 = scalar_lea.vmem %s832, 9
      %v7278 = vld [vmem:[%s7277] ss:$2 sm:$0x3]
      %s7279 = scalar_lea.vmem %s832, 13
      %v7280 = vld [vmem:[%s7279] ss:$2 sm:$0x3]
      %s7281 = scalar_lea.vmem %s832, 17
      %v7282 = vld [vmem:[%s7281] ss:$2 sm:$0x3]
      %s7283 = scalar_lea.vmem %s832, 21
      %v7284 = vld [vmem:[%s7283] ss:$2 sm:$0x3]
      %s7285 = scalar_lea.vmem %s832, 25
      %v7286 = vld [vmem:[%s7285] ss:$2 sm:$0x3]
      %s7287 = scalar_lea.vmem %s832, 29
      %v7288 = vld [vmem:[%s7287] ss:$2 sm:$0x3]
      %v7295 = vcombine.low %v7262, %v7264
      %v7296 = vcombine.low %v7266, %v7268
      %v7297 = vcombine.low %v7270, %v7272
      %v7299 = vunpack.c.l.s4 1966171168
      %v7300 = vunpack.c.0.s8 %v7299
      %v7301 = vlaneseq
      %v7302 = vshrl.u32 %v7301, 7
      %v7303 = vsub.s32 %v7300, %v7302
      %v7304 = vrot.slane %v7295, %v7303
      %v7306 = vunpack.c.l.s4 1966171168
      %v7307 = vunpack.c.0.s8 %v7306
      %v7308 = vlaneseq
      %v7309 = vshrl.u32 %v7308, 7
      %v7310 = vsub.s32 %v7307, %v7309
      %v7311 = vrot.slane %v7296, %v7310
      %v7313 = vunpack.c.l.s4 1966171168
      %v7314 = vunpack.c.0.s8 %v7313
      %v7315 = vlaneseq
      %v7316 = vshrl.u32 %v7315, 7
      %v7317 = vsub.s32 %v7314, %v7316
      %v7318 = vrot.slane %v7297, %v7317
      %v7319 = vcombine.low %v7304, %v7311
      %v7320 = vcombine.high %v7304, %v7311
      %v7321 = vcombine.high %v7318, %v7318
      %v7323 = vunpack.c.l.s4 1966171168
      %v7324 = vunpack.c.0.s8 %v7323
      %v7325 = vlaneseq
      %v7326 = vshrl.u32 %v7325, 7
      %v7327 = vsub.s32 %v7324, %v7326
      %v7328 = vrot.slane %v7319, %v7327
      %v7330 = vunpack.c.l.s4 1966171168
      %v7331 = vunpack.c.0.s8 %v7330
      %v7332 = vlaneseq
      %v7333 = vshrl.u32 %v7332, 7
      %v7334 = vsub.s32 %v7331, %v7333
      %v7335 = vrot.slane %v7320, %v7334
      %v7337 = vunpack.c.l.s4 1966171168
      %v7338 = vunpack.c.0.s8 %v7337
      %v7339 = vlaneseq
      %v7340 = vshrl.u32 %v7339, 7
      %v7341 = vsub.s32 %v7338, %v7340
      %v7342 = vrot.slane %v7318, %v7341
      %v7344 = vunpack.c.l.s4 1966171168
      %v7345 = vunpack.c.0.s8 %v7344
      %v7346 = vlaneseq
      %v7347 = vshrl.u32 %v7346, 7
      %v7348 = vsub.s32 %v7345, %v7347
      %v7349 = vrot.slane %v7321, %v7348
      %v7350 = vcombine.low %v7328, %v7342
      %v7351 = vcombine.low %v7335, %v7349
      %v7361 = vcombine.low %v7274, %v7276
      %v7362 = vcombine.low %v7278, %v7280
      %v7363 = vcombine.low %v7282, %v7284
      %v7364 = vcombine.low %v7286, %v7288
      %v7366 = vunpack.c.l.s4 1966171168
      %v7367 = vunpack.c.0.s8 %v7366
      %v7368 = vlaneseq
      %v7369 = vshrl.u32 %v7368, 7
      %v7370 = vsub.s32 %v7367, %v7369
      %v7371 = vrot.slane %v7361, %v7370
      %v7373 = vunpack.c.l.s4 1966171168
      %v7374 = vunpack.c.0.s8 %v7373
      %v7375 = vlaneseq
      %v7376 = vshrl.u32 %v7375, 7
      %v7377 = vsub.s32 %v7374, %v7376
      %v7378 = vrot.slane %v7362, %v7377
      %v7380 = vunpack.c.l.s4 1966171168
      %v7381 = vunpack.c.0.s8 %v7380
      %v7382 = vlaneseq
      %v7383 = vshrl.u32 %v7382, 7
      %v7384 = vsub.s32 %v7381, %v7383
      %v7385 = vrot.slane %v7363, %v7384
      %v7387 = vunpack.c.l.s4 1966171168
      %v7388 = vunpack.c.0.s8 %v7387
      %v7389 = vlaneseq
      %v7390 = vshrl.u32 %v7389, 7
      %v7391 = vsub.s32 %v7388, %v7390
      %v7392 = vrot.slane %v7364, %v7391
      %v7393 = vcombine.low %v7371, %v7378
      %v7394 = vcombine.high %v7371, %v7378
      %v7395 = vcombine.low %v7385, %v7392
      %v7396 = vcombine.high %v7385, %v7392
      %v7398 = vunpack.c.l.s4 1966171168
      %v7399 = vunpack.c.0.s8 %v7398
      %v7400 = vlaneseq
      %v7401 = vshrl.u32 %v7400, 7
      %v7402 = vsub.s32 %v7399, %v7401
      %v7403 = vrot.slane %v7393, %v7402
      %v7405 = vunpack.c.l.s4 1966171168
      %v7406 = vunpack.c.0.s8 %v7405
      %v7407 = vlaneseq
      %v7408 = vshrl.u32 %v7407, 7
      %v7409 = vsub.s32 %v7406, %v7408
      %v7410 = vrot.slane %v7394, %v7409
      %v7412 = vunpack.c.l.s4 1966171168
      %v7413 = vunpack.c.0.s8 %v7412
      %v7414 = vlaneseq
      %v7415 = vshrl.u32 %v7414, 7
      %v7416 = vsub.s32 %v7413, %v7415
      %v7417 = vrot.slane %v7395, %v7416
      %v7419 = vunpack.c.l.s4 1966171168
      %v7420 = vunpack.c.0.s8 %v7419
      %v7421 = vlaneseq
      %v7422 = vshrl.u32 %v7421, 7
      %v7423 = vsub.s32 %v7420, %v7422
      %v7424 = vrot.slane %v7396, %v7423
      %v7425 = vcombine.low %v7403, %v7417
      %v7426 = vcombine.low %v7410, %v7424
      %v7428 = vsel %vm1541, %v7351, 0
      %v7430 = vsel %vm1541, %v7426, 0
      %7432 = vmatprep.subr.mxu0 %v7430
      %7433 = vmatpush1.xpose.msra.mxu0 %v7425
      %7434 = vmatprep.subr.mxu0 0.0
      %7435 = vmatpush1.xpose.msra.mxu0 0.0
      %7436 = vmatprep.subr.mxu0 0.0
      %7437 = vmatpush1.xpose.msra.mxu0 0.0
      %7438 = vmatprep.subr.mxu0 0.0
      %7439 = vmatpush1.xpose.msra.mxu0 0.0
      %7440 = vmatprep.subr.mxu0 0.0
      %7441 = vmatpush1.xpose.msra.mxu0 0.0
      %7442 = vmatprep.subr.mxu0 0.0
      %7443 = vmatpush1.xpose.msra.mxu0 0.0
      %7444 = vmatprep.subr.mxu0 0.0
      %7445 = vmatpush1.xpose.msra.mxu0 0.0
      %7446 = vmatprep.subr.mxu0 0.0
      %7447 = vmatpush1.xpose.msra.mxu0 0.0
      %7448 = vmatprep.subr.mxu0 0.0
      %7449 = vmatpush1.xpose.msra.mxu0 0.0
      %7450 = vmatprep.subr.mxu0 0.0
      %7451 = vmatpush1.xpose.msra.mxu0 0.0
      %7452 = vmatprep.subr.mxu0 0.0
      %7453 = vmatpush1.xpose.msra.mxu0 0.0
      %7454 = vmatprep.subr.mxu0 0.0
      %7455 = vmatpush1.xpose.msra.mxu0 0.0
      %7456 = vmatprep.subr.mxu0 0.0
      %7457 = vmatpush1.xpose.msra.mxu0 0.0
      %7458 = vmatprep.subr.mxu0 0.0
      %7459 = vmatpush1.xpose.msra.mxu0 0.0
      %7460 = vmatprep.subr.mxu0 0.0
      %7461 = vmatpush1.xpose.msra.mxu0 0.0
      %7462 = vmatprep.subr.mxu0 0.0
      %7463 = vmatpush1.xpose.msra.mxu0 0.0
      %7464 = vmatprep.subr.mxu0 0.0
      %7465 = vmatpush1.xpose.msra.mxu0 0.0
      %7466 = vmatprep.subr.mxu0 0.0
      %7467 = vmatpush1.xpose.msra.mxu0 0.0
      %7468 = vmatprep.subr.mxu0 0.0
      %7469 = vmatpush1.xpose.msra.mxu0 0.0
      %7470 = vmatprep.subr.mxu0 0.0
      %7471 = vmatpush1.xpose.msra.mxu0 0.0
      %7472 = vmatprep.subr.mxu0 0.0
      %7473 = vmatpush1.xpose.msra.mxu0 0.0
      %7474 = vmatprep.subr.mxu0 0.0
      %7475 = vmatpush1.xpose.msra.mxu0 0.0
      %7476 = vmatprep.subr.mxu0 0.0
      %7477 = vmatpush1.xpose.msra.mxu0 0.0
      %7478 = vmatprep.subr.mxu0 0.0
      %7479 = vmatpush1.xpose.msra.mxu0 0.0
      %7480 = vmatprep.subr.mxu0 0.0
      %7481 = vmatpush1.xpose.msra.mxu0 0.0
      %7482 = vmatprep.subr.mxu0 0.0
      %7483 = vmatpush1.xpose.msra.mxu0 0.0
      %7484 = vmatprep.subr.mxu0 0.0
      %7485 = vmatpush1.xpose.msra.mxu0 0.0
      %7486 = vmatprep.subr.mxu0 0.0
      %7487 = vmatpush1.xpose.msra.mxu0 0.0
      %7488 = vmatprep.subr.mxu0 0.0
      %7489 = vmatpush1.xpose.msra.mxu0 0.0
      %7490 = vmatprep.subr.mxu0 0.0
      %7491 = vmatpush1.xpose.msra.mxu0 0.0
      %7492 = vmatprep.subr.mxu0 0.0
      %7493 = vmatpush1.xpose.msra.mxu0 0.0
      %7494 = vmatprep.subr.mxu0 0.0
      %7495 = vmatpush1.xpose.msra.mxu0 0.0
      %7496 = vmatprep.mubr.f32.mxu0 %v7428
      %7497 = vmatmul.mubr.f32.gmra.mrb[0].mxu0 %v7350
      %v7498 = vpop.f32.mrb[0].mxu0
      %v7499 = vadd.f32 0.0, %v7498
      %v7500 = vpop.f32.mrb[0].mxu0
      %7501 = vdwg.mxu0
      %v7502 = vsel %vm6817, %v7499, -inf
      %7503 = vmax.xlane.f32.xlu0 %v7502
      %v7504 = vpop.xlane.xlu0 %7503
      %v7505 = vsub.f32 %v7499, %v7504
      %v7506 = vmul.f32 %v7505, 1.442695
      %v7507 = vpow.pop %v7506
      %v7508 = vsel %vm6817, %v7507, 0.0
      %7509 = vadd.xlane.f32.xlu0 %v7508
      %v7510 = vpop.xlane.xlu0 %7509
      %v7511 = vrcp.pop %v7510
      %v7512 = vmul.f32 %v7507, %v7511
      %v7515 = vsel %vm6830, %v7512, 0
      %7517 = vmatprep.subr.mxu0 %v7426
      %7518 = vmatpush1.msra.mxu0 %v7425
      %7519 = vmatprep.subr.mxu0 0.0
      %7520 = vmatpush1.msra.mxu0 0.0
      %7521 = vmatprep.subr.mxu0 0.0
      %7522 = vmatpush1.msra.mxu0 0.0
      %7523 = vmatprep.subr.mxu0 0.0
      %7524 = vmatpush1.msra.mxu0 0.0
      %7525 = vmatprep.subr.mxu0 0.0
      %7526 = vmatpush1.msra.mxu0 0.0
      %7527 = vmatprep.subr.mxu0 0.0
      %7528 = vmatpush1.msra.mxu0 0.0
      %7529 = vmatprep.subr.mxu0 0.0
      %7530 = vmatpush1.msra.mxu0 0.0
      %7531 = vmatprep.subr.mxu0 0.0
      %7532 = vmatpush1.msra.mxu0 0.0
      %7533 = vmatprep.subr.mxu0 0.0
      %7534 = vmatpush1.msra.mxu0 0.0
      %7535 = vmatprep.subr.mxu0 0.0
      %7536 = vmatpush1.msra.mxu0 0.0
      %7537 = vmatprep.subr.mxu0 0.0
      %7538 = vmatpush1.msra.mxu0 0.0
      %7539 = vmatprep.subr.mxu0 0.0
      %7540 = vmatpush1.msra.mxu0 0.0
      %7541 = vmatprep.subr.mxu0 0.0
      %7542 = vmatpush1.msra.mxu0 0.0
      %7543 = vmatprep.subr.mxu0 0.0
      %7544 = vmatpush1.msra.mxu0 0.0
      %7545 = vmatprep.subr.mxu0 0.0
      %7546 = vmatpush1.msra.mxu0 0.0
      %7547 = vmatprep.subr.mxu0 0.0
      %7548 = vmatpush1.msra.mxu0 0.0
      %7549 = vmatprep.subr.mxu0 0.0
      %7550 = vmatpush1.msra.mxu0 0.0
      %7551 = vmatprep.subr.mxu0 0.0
      %7552 = vmatpush1.msra.mxu0 0.0
      %7553 = vmatprep.subr.mxu0 0.0
      %7554 = vmatpush1.msra.mxu0 0.0
      %7555 = vmatprep.subr.mxu0 0.0
      %7556 = vmatpush1.msra.mxu0 0.0
      %7557 = vmatprep.subr.mxu0 0.0
      %7558 = vmatpush1.msra.mxu0 0.0
      %7559 = vmatprep.subr.mxu0 0.0
      %7560 = vmatpush1.msra.mxu0 0.0
      %7561 = vmatprep.subr.mxu0 0.0
      %7562 = vmatpush1.msra.mxu0 0.0
      %7563 = vmatprep.subr.mxu0 0.0
      %7564 = vmatpush1.msra.mxu0 0.0
      %7565 = vmatprep.subr.mxu0 0.0
      %7566 = vmatpush1.msra.mxu0 0.0
      %7567 = vmatprep.subr.mxu0 0.0
      %7568 = vmatpush1.msra.mxu0 0.0
      %7569 = vmatprep.subr.mxu0 0.0
      %7570 = vmatpush1.msra.mxu0 0.0
      %7571 = vmatprep.subr.mxu0 0.0
      %7572 = vmatpush1.msra.mxu0 0.0
      %7573 = vmatprep.subr.mxu0 0.0
      %7574 = vmatpush1.msra.mxu0 0.0
      %7575 = vmatprep.subr.mxu0 0.0
      %7576 = vmatpush1.msra.mxu0 0.0
      %7577 = vmatprep.subr.mxu0 0.0
      %7578 = vmatpush1.msra.mxu0 0.0
      %7579 = vmatprep.subr.mxu0 0.0
      %7580 = vmatpush1.msra.mxu0 0.0
      %7581 = vmatprep.mubr.f32.mxu0 0.0
      %7582 = vmatmul.mubr.f32.gmra.mrb[0].mxu0 %v7515
      %v7583 = vpop.f32.mrb[0].mxu0
      %v7584 = vadd.f32 0.0, %v7583
      %v7585 = vpop.f32.mrb[0].mxu0
      %v7586 = vadd.f32 0.0, %v7585
      %7587 = vdwg.mxu0
      %v7588 = vld [vmem:[%s800] sm:$0xff]
      %v7589 = vld [vmem:[%s800 + $0x8] sm:$0xff]
      %v7590 = vld [vmem:[%s800 + $0x10] sm:$0xff]
      %v7591 = vld [vmem:[%s800 + $0x18] sm:$0xff]
      %v7592 = vld [vmem:[%s800 + $0x20] sm:$0xff]
      %v7593 = vld [vmem:[%s800 + $0x28] sm:$0xff]
      %v7594 = vld [vmem:[%s800 + $0x30] sm:$0xff]
      %v7595 = vld [vmem:[%s800 + $0x38] sm:$0xff]
      %v7596 = vld [vmem:[%s800 + $0x40] sm:$0xff]
      %v7597 = vld [vmem:[%s800 + $0x48] sm:$0xff]
      %v7598 = vld [vmem:[%s800 + $0x50] sm:$0xff]
      %v7599 = vld [vmem:[%s800 + $0x58] sm:$0xff]
      %v7600 = vld [vmem:[%s800 + $0x60] sm:$0xff]
      %v7601 = vld [vmem:[%s800 + $0x68] sm:$0xff]
      %v7602 = vld [vmem:[%s800 + $0x70] sm:$0xff]
      %v7603 = vld [vmem:[%s800 + $0x78] sm:$0xff]
      %v7604 = vld [vmem:[%s800 + $0x80] sm:$0xff]
      %v7605 = vld [vmem:[%s800 + $0x88] sm:$0xff]
      %v7606 = vld [vmem:[%s800 + $0x90] sm:$0xff]
      %v7607 = vld [vmem:[%s800 + $0x98] sm:$0xff]
      %v7608 = vld [vmem:[%s800 + $0xa0] sm:$0xff]
      %v7609 = vld [vmem:[%s800 + $0xa8] sm:$0xff]
      %v7610 = vld [vmem:[%s800 + $0xb0] sm:$0xff]
      %v7611 = vld [vmem:[%s800 + $0xb8] sm:$0xff]
      %v7612 = vld [vmem:[%s800 + $0xc0] sm:$0xff]
      %v7613 = vld [vmem:[%s800 + $0xc8] sm:$0xff]
      %v7614 = vld [vmem:[%s800 + $0xd0] sm:$0xff]
      %v7615 = vld [vmem:[%s800 + $0xd8] sm:$0xff]
      %v7616 = vld [vmem:[%s800 + $0xe0] sm:$0xff]
      %v7617 = vld [vmem:[%s800 + $0xe8] sm:$0xff]
      %v7618 = vld [vmem:[%s800 + $0xf0] sm:$0xff]
      %v7619 = vld [vmem:[%s800 + $0xf8] sm:$0xff]
      %v7620 = vld [vmem:[%s800 + $0x100] sm:$0xff]
      %v7621 = vld [vmem:[%s800 + $0x108] sm:$0xff]
      %v7622 = vld [vmem:[%s800 + $0x110] sm:$0xff]
      %v7623 = vld [vmem:[%s800 + $0x118] sm:$0xff]
      %v7624 = vld [vmem:[%s800 + $0x120] sm:$0x3f]
      %v7625 = vld [vmem:[%s800 + $0x128] sm:$0x3f]
      %v7626 = vld [vmem:[%s805] sm:$0xff]
      %v7627 = vld [vmem:[%s805 + $0x8] sm:$0xff]
      %v7628 = vld [vmem:[%s805 + $0x10] sm:$0xff]
      %v7629 = vld [vmem:[%s805 + $0x18] sm:$0xff]
      %v7630 = vld [vmem:[%s805 + $0x20] sm:$0xff]
      %v7631 = vld [vmem:[%s805 + $0x28] sm:$0xff]
      %v7632 = vld [vmem:[%s805 + $0x30] sm:$0xff]
      %v7633 = vld [vmem:[%s805 + $0x38] sm:$0xff]
      %v7634 = vld [vmem:[%s805 + $0x40] sm:$0xff]
      %v7635 = vld [vmem:[%s805 + $0x48] sm:$0xff]
      %v7636 = vld [vmem:[%s805 + $0x50] sm:$0xff]
      %v7637 = vld [vmem:[%s805 + $0x58] sm:$0xff]
      %v7638 = vld [vmem:[%s805 + $0x60] sm:$0xff]
      %v7639 = vld [vmem:[%s805 + $0x68] sm:$0xff]
      %v7640 = vld [vmem:[%s805 + $0x70] sm:$0xff]
      %v7641 = vld [vmem:[%s805 + $0x78] sm:$0xff]
      %v7642 = vld [vmem:[%s805 + $0x80] sm:$0xff]
      %v7643 = vld [vmem:[%s805 + $0x88] sm:$0xff]
      %v7644 = vld [vmem:[%s805 + $0x90] sm:$0xff]
      %v7645 = vld [vmem:[%s805 + $0x98] sm:$0xff]
      %v7646 = vld [vmem:[%s805 + $0xa0] sm:$0xff]
      %v7647 = vld [vmem:[%s805 + $0xa8] sm:$0xff]
      %v7648 = vld [vmem:[%s805 + $0xb0] sm:$0xff]
      %v7649 = vld [vmem:[%s805 + $0xb8] sm:$0xff]
      %v7650 = vld [vmem:[%s805 + $0xc0] sm:$0xff]
      %v7651 = vld [vmem:[%s805 + $0xc8] sm:$0xff]
      %v7652 = vld [vmem:[%s805 + $0xd0] sm:$0xff]
      %v7653 = vld [vmem:[%s805 + $0xd8] sm:$0xff]
      %v7654 = vld [vmem:[%s805 + $0xe0] sm:$0xff]
      %v7655 = vld [vmem:[%s805 + $0xe8] sm:$0xff]
      %v7656 = vld [vmem:[%s805 + $0xf0] sm:$0xff]
      %v7657 = vld [vmem:[%s805 + $0xf8] sm:$0xff]
      %v7658 = vld [vmem:[%s805 + $0x100] sm:$0xff]
      %v7659 = vld [vmem:[%s805 + $0x108] sm:$0xff]
      %v7660 = vld [vmem:[%s805 + $0x110] sm:$0xff]
      %v7661 = vld [vmem:[%s805 + $0x118] sm:$0xff]
      %v7662 = vld [vmem:[%s805 + $0x120] sm:$0x3f]
      %v7663 = vld [vmem:[%s805 + $0x128] sm:$0x3f]
      %v7665 = vsel %vm1541, %v7586, 0
      %v7668 = vsel %vm1544, %v7662, 0
      %v7671 = vsel %vm1544, %v7663, 0
      %7673 = vmatprep.subr.mxu0 %v7627
      %7674 = vmatpush1.msra.mxu0 %v7626
      %7675 = vmatprep.subr.mxu0 %v7629
      %7676 = vmatpush1.msra.mxu0 %v7628
      %7677 = vmatprep.subr.mxu0 %v7631
      %7678 = vmatpush1.msra.mxu0 %v7630
      %7679 = vmatprep.subr.mxu0 %v7633
      %7680 = vmatpush1.msra.mxu0 %v7632
      %7681 = vmatprep.subr.mxu0 %v7635
      %7682 = vmatpush1.msra.mxu0 %v7634
      %7683 = vmatprep.subr.mxu0 %v7637
      %7684 = vmatpush1.msra.mxu0 %v7636
      %7685 = vmatprep.subr.mxu0 %v7639
      %7686 = vmatpush1.msra.mxu0 %v7638
      %7687 = vmatprep.subr.mxu0 %v7641
      %7688 = vmatpush1.msra.mxu0 %v7640
      %7689 = vmatprep.subr.mxu0 %v7643
      %7690 = vmatpush1.msra.mxu0 %v7642
      %7691 = vmatprep.subr.mxu0 %v7645
      %7692 = vmatpush1.msra.mxu0 %v7644
      %7693 = vmatprep.subr.mxu0 %v7647
      %7694 = vmatpush1.msra.mxu0 %v7646
      %7695 = vmatprep.subr.mxu0 %v7649
      %7696 = vmatpush1.msra.mxu0 %v7648
      %7697 = vmatprep.subr.mxu0 %v7651
      %7698 = vmatpush1.msra.mxu0 %v7650
      %7699 = vmatprep.subr.mxu0 %v7653
      %7700 = vmatpush1.msra.mxu0 %v7652
      %7701 = vmatprep.subr.mxu0 %v7655
      %7702 = vmatpush1.msra.mxu0 %v7654
      %7703 = vmatprep.subr.mxu0 %v7657
      %7704 = vmatpush1.msra.mxu0 %v7656
      %7705 = vmatprep.subr.mxu0 %v7659
      %7706 = vmatpush1.msra.mxu0 %v7658
      %7707 = vmatprep.subr.mxu0 %v7661
      %7708 = vmatpush1.msra.mxu0 %v7660
      %7709 = vmatprep.subr.mxu0 %v7671
      %7710 = vmatpush1.msra.mxu0 %v7668
      %7711 = vmatprep.subr.mxu0 0.0
      %7712 = vmatpush1.msra.mxu0 0.0
      %7713 = vmatprep.subr.mxu0 0.0
      %7714 = vmatpush1.msra.mxu0 0.0
      %7715 = vmatprep.subr.mxu0 0.0
      %7716 = vmatpush1.msra.mxu0 0.0
      %7717 = vmatprep.subr.mxu0 0.0
      %7718 = vmatpush1.msra.mxu0 0.0
      %7719 = vmatprep.subr.mxu0 0.0
      %7720 = vmatpush1.msra.mxu0 0.0
      %7721 = vmatprep.subr.mxu0 0.0
      %7722 = vmatpush1.msra.mxu0 0.0
      %7723 = vmatprep.subr.mxu0 0.0
      %7724 = vmatpush1.msra.mxu0 0.0
      %7725 = vmatprep.subr.mxu0 0.0
      %7726 = vmatpush1.msra.mxu0 0.0
      %7727 = vmatprep.subr.mxu0 0.0
      %7728 = vmatpush1.msra.mxu0 0.0
      %7729 = vmatprep.subr.mxu0 0.0
      %7730 = vmatpush1.msra.mxu0 0.0
      %7731 = vmatprep.subr.mxu0 0.0
      %7732 = vmatpush1.msra.mxu0 0.0
      %7733 = vmatprep.subr.mxu0 0.0
      %7734 = vmatpush1.msra.mxu0 0.0
      %7735 = vmatprep.subr.mxu0 0.0
      %7736 = vmatpush1.msra.mxu0 0.0
      %7737 = vmatprep.mubr.f32.mxu0 %v7665
      %7738 = vmatmul.mubr.f32.gmra.mrb[0].mxu0 %v7584
      %v7739 = vpop.f32.mrb[0].mxu0
      %v7740 = vadd.f32 0.0, %v7739
      %v7741 = vpop.f32.mrb[0].mxu0
      %v7742 = vadd.f32 0.0, %v7741
      %7743 = vdwg.mxu0
      %v7745 = vsel %vm1544, %v7624, 0
      %v7748 = vsel %vm1544, %v7625, 0
      %7750 = vmatprep.subr.mxu0 %v7589
      %7751 = vmatpush1.msra.mxu0 %v7588
      %7752 = vmatprep.subr.mxu0 %v7591
      %7753 = vmatpush1.msra.mxu0 %v7590
      %7754 = vmatprep.subr.mxu0 %v7593
      %7755 = vmatpush1.msra.mxu0 %v7592
      %7756 = vmatprep.subr.mxu0 %v7595
      %7757 = vmatpush1.msra.mxu0 %v7594
      %7758 = vmatprep.subr.mxu0 %v7597
      %7759 = vmatpush1.msra.mxu0 %v7596
      %7760 = vmatprep.subr.mxu0 %v7599
      %7761 = vmatpush1.msra.mxu0 %v7598
      %7762 = vmatprep.subr.mxu0 %v7601
      %7763 = vmatpush1.msra.mxu0 %v7600
      %7764 = vmatprep.subr.mxu0 %v7603
      %7765 = vmatpush1.msra.mxu0 %v7602
      %7766 = vmatprep.subr.mxu0 %v7605
      %7767 = vmatpush1.msra.mxu0 %v7604
      %7768 = vmatprep.subr.mxu0 %v7607
      %7769 = vmatpush1.msra.mxu0 %v7606
      %7770 = vmatprep.subr.mxu0 %v7609
      %7771 = vmatpush1.msra.mxu0 %v7608
      %7772 = vmatprep.subr.mxu0 %v7611
      %7773 = vmatpush1.msra.mxu0 %v7610
      %7774 = vmatprep.subr.mxu0 %v7613
      %7775 = vmatpush1.msra.mxu0 %v7612
      %7776 = vmatprep.subr.mxu0 %v7615
      %7777 = vmatpush1.msra.mxu0 %v7614
      %7778 = vmatprep.subr.mxu0 %v7617
      %7779 = vmatpush1.msra.mxu0 %v7616
      %7780 = vmatprep.subr.mxu0 %v7619
      %7781 = vmatpush1.msra.mxu0 %v7618
      %7782 = vmatprep.subr.mxu0 %v7621
      %7783 = vmatpush1.msra.mxu0 %v7620
      %7784 = vmatprep.subr.mxu0 %v7623
      %7785 = vmatpush1.msra.mxu0 %v7622
      %7786 = vmatprep.subr.mxu0 %v7748
      %7787 = vmatpush1.msra.mxu0 %v7745
      %7788 = vmatprep.subr.mxu0 0.0
      %7789 = vmatpush1.msra.mxu0 0.0
      %7790 = vmatprep.subr.mxu0 0.0
      %7791 = vmatpush1.msra.mxu0 0.0
      %7792 = vmatprep.subr.mxu0 0.0
      %7793 = vmatpush1.msra.mxu0 0.0
      %7794 = vmatprep.subr.mxu0 0.0
      %7795 = vmatpush1.msra.mxu0 0.0
      %7796 = vmatprep.subr.mxu0 0.0
      %7797 = vmatpush1.msra.mxu0 0.0
      %7798 = vmatprep.subr.mxu0 0.0
      %7799 = vmatpush1.msra.mxu0 0.0
      %7800 = vmatprep.subr.mxu0 0.0
      %7801 = vmatpush1.msra.mxu0 0.0
      %7802 = vmatprep.subr.mxu0 0.0
      %7803 = vmatpush1.msra.mxu0 0.0
      %7804 = vmatprep.subr.mxu0 0.0
      %7805 = vmatpush1.msra.mxu0 0.0
      %7806 = vmatprep.subr.mxu0 0.0
      %7807 = vmatpush1.msra.mxu0 0.0
      %7808 = vmatprep.subr.mxu0 0.0
      %7809 = vmatpush1.msra.mxu0 0.0
      %7810 = vmatprep.subr.mxu0 0.0
      %7811 = vmatpush1.msra.mxu0 0.0
      %7812 = vmatprep.subr.mxu0 0.0
      %7813 = vmatpush1.msra.mxu0 0.0
      %7814 = vmatprep.mubr.f32.mxu0 %v7428
      %7815 = vmatmul.mubr.f32.gmra.mrb[0].mxu0 %v7350
      %v7816 = vpop.f32.mrb[0].mxu0
      %v7817 = vadd.f32 %v7740, %v7816
      %v7818 = vpop.f32.mrb[0].mxu0
      %v7819 = vadd.f32 %v7742, %v7818
      %7820 = vdwg.mxu0
      %v7821 = vld [vmem:[%s809] sm:$0x3]
      %v7823 = vlaneseq
      %v7824 = vshrl.u32 %v7823, 7
      %v7825 = vsub.s32 0, %v7824
      %v7826 = vrot.slane %v7821, %v7825
      %v7827 = vlaneseq
      %v7828 = vshrl.u32 %v7827, 7
      %v7829 = vsub.s32 1, %v7828
      %v7830 = vrot.slane %v7821, %v7829
      %v7833 = vadd.f32 %v7817, %v7826
      %v7834 = vadd.f32 %v7819, %v7830
      %v7835 = vtanh.pop %v7833
      %v7836 = vtanh.pop %v7834
      %v7837 = vld [vmem:[%s814] sm:$0xff]
      %v7838 = vld [vmem:[%s814 + $0x8] sm:$0xff]
      %v7839 = vld [vmem:[%s814 + $0x10] sm:$0xff]
      %v7840 = vld [vmem:[%s814 + $0x18] sm:$0xff]
      %v7841 = vld [vmem:[%s814 + $0x20] sm:$0xff]
      %v7842 = vld [vmem:[%s814 + $0x28] sm:$0xff]
      %v7843 = vld [vmem:[%s814 + $0x30] sm:$0xff]
      %v7844 = vld [vmem:[%s814 + $0x38] sm:$0xff]
      %v7845 = vld [vmem:[%s814 + $0x40] sm:$0xff]
      %v7846 = vld [vmem:[%s814 + $0x48] sm:$0xff]
      %v7847 = vld [vmem:[%s814 + $0x50] sm:$0xff]
      %v7848 = vld [vmem:[%s814 + $0x58] sm:$0xff]
      %v7849 = vld [vmem:[%s814 + $0x60] sm:$0xff]
      %v7850 = vld [vmem:[%s814 + $0x68] sm:$0xff]
      %v7851 = vld [vmem:[%s814 + $0x70] sm:$0xff]
      %v7852 = vld [vmem:[%s814 + $0x78] sm:$0xff]
      %v7853 = vld [vmem:[%s814 + $0x80] sm:$0xff]
      %v7854 = vld [vmem:[%s814 + $0x88] sm:$0xff]
      %v7855 = vld [vmem:[%s814 + $0x90] sm:$0x3f]
      %v7856 = vld [vmem:[%s817] sm:$0x1]
      %v7858 = vlaneseq
      %v7859 = vshrl.u32 %v7858, 7
      %v7860 = vsub.s32 0, %v7859
      %v7861 = vrot.slane %v7856, %v7860
      %v7864 = vsel %vm1541, %v7836, 0
      %v7867 = vsel %vm1544, %v7855, 0
      %7869 = vmatprep.subr.mxu0 0.0
      %7870 = vmatpush1.msra.mxu0 %v7837
      %7871 = vmatprep.subr.mxu0 0.0
      %7872 = vmatpush1.msra.mxu0 %v7838
      %7873 = vmatprep.subr.mxu0 0.0
      %7874 = vmatpush1.msra.mxu0 %v7839
      %7875 = vmatprep.subr.mxu0 0.0
      %7876 = vmatpush1.msra.mxu0 %v7840
      %7877 = vmatprep.subr.mxu0 0.0
      %7878 = vmatpush1.msra.mxu0 %v7841
      %7879 = vmatprep.subr.mxu0 0.0
      %7880 = vmatpush1.msra.mxu0 %v7842
      %7881 = vmatprep.subr.mxu0 0.0
      %7882 = vmatpush1.msra.mxu0 %v7843
      %7883 = vmatprep.subr.mxu0 0.0
      %7884 = vmatpush1.msra.mxu0 %v7844
      %7885 = vmatprep.subr.mxu0 0.0
      %7886 = vmatpush1.msra.mxu0 %v7845
      %7887 = vmatprep.subr.mxu0 0.0
      %7888 = vmatpush1.msra.mxu0 %v7846
      %7889 = vmatprep.subr.mxu0 0.0
      %7890 = vmatpush1.msra.mxu0 %v7847
      %7891 = vmatprep.subr.mxu0 0.0
      %7892 = vmatpush1.msra.mxu0 %v7848
      %7893 = vmatprep.subr.mxu0 0.0
      %7894 = vmatpush1.msra.mxu0 %v7849
      %7895 = vmatprep.subr.mxu0 0.0
      %7896 = vmatpush1.msra.mxu0 %v7850
      %7897 = vmatprep.subr.mxu0 0.0
      %7898 = vmatpush1.msra.mxu0 %v7851
      %7899 = vmatprep.subr.mxu0 0.0
      %7900 = vmatpush1.msra.mxu0 %v7852
      %7901 = vmatprep.subr.mxu0 0.0
      %7902 = vmatpush1.msra.mxu0 %v7853
      %7903 = vmatprep.subr.mxu0 0.0
      %7904 = vmatpush1.msra.mxu0 %v7854
      %7905 = vmatprep.subr.mxu0 0.0
      %7906 = vmatpush1.msra.mxu0 %v7867
      %7907 = vmatprep.subr.mxu0 0.0
      %7908 = vmatpush1.msra.mxu0 0.0
      %7909 = vmatprep.subr.mxu0 0.0
      %7910 = vmatpush1.msra.mxu0 0.0
      %7911 = vmatprep.subr.mxu0 0.0
      %7912 = vmatpush1.msra.mxu0 0.0
      %7913 = vmatprep.subr.mxu0 0.0
      %7914 = vmatpush1.msra.mxu0 0.0
      %7915 = vmatprep.subr.mxu0 0.0
      %7916 = vmatpush1.msra.mxu0 0.0
      %7917 = vmatprep.subr.mxu0 0.0
      %7918 = vmatpush1.msra.mxu0 0.0
      %7919 = vmatprep.subr.mxu0 0.0
      %7920 = vmatpush1.msra.mxu0 0.0
      %7921 = vmatprep.subr.mxu0 0.0
      %7922 = vmatpush1.msra.mxu0 0.0
      %7923 = vmatprep.subr.mxu0 0.0
      %7924 = vmatpush1.msra.mxu0 0.0
      %7925 = vmatprep.subr.mxu0 0.0
      %7926 = vmatpush1.msra.mxu0 0.0
      %7927 = vmatprep.subr.mxu0 0.0
      %7928 = vmatpush1.msra.mxu0 0.0
      %7929 = vmatprep.subr.mxu0 0.0
      %7930 = vmatpush1.msra.mxu0 0.0
      %7931 = vmatprep.subr.mxu0 0.0
      %7932 = vmatpush1.msra.mxu0 0.0
      %7933 = vmatprep.mubr.f32.mxu0 %v7864
      %7934 = vmatmul.mubr.f32.gmra.mrb[0].mxu0 %v7835
      %v7935 = vpop.f32.mrb[0].mxu0
      %v7936 = vadd.f32 %v7861, %v7935
      %v7937 = vpop.f32.mrb[0].mxu0
      %7938 = vdwg.mxu0
      %s7939 = scalar_lea.vmem %s827, 16
      %7940 = vst [vmem:[%s7939] sm:$0x3f] %v7833
      %7941 = vst.msk [vmem:[%s7939 + $0x8] sm:$0x3f] %vm7257, %v7834
      %s7942 = scalar_lea.vmem %s822, 8
      %7943 = vst.msk [vmem:[%s7942] sm:$0x3f] %vm7259, %v7936
      %p7944 = scmp.lt.s32.totalorder %s29, 1
      %s7945 = scalar_select %p7944, %s29, 1
      %s7946 = smul.addr %s7945, 2
      %s7947 = smul.addr %s7946, 8
      %s7948 = scalar_lea.vmem %s15, %s7947
      %p7949 = scmp.lt.s32.totalorder %s29, 1
      %s7950 = scalar_select %p7949, %s29, 1
      %s7951 = smul.addr %s7950, 4
      %s7952 = smul.addr %s7951, 8
      %s7953 = scalar_lea.vmem %s16, %s7952
      %p7954 = scmp.lt.s32.totalorder %s29, 1
      %s7955 = scalar_select %p7954, %s29, 1
      %s7956 = smul.addr %s7955, 16
      %s7957 = smul.addr %s7956, 2
      %s7958 = scalar_lea.vmem %s17, %s7957
      // Predicated region
      $region81: #{gen_forward.1} parent=79 // pred_check
        %p7959 = pneg %p437
      $region82: #{gen_forward.1} parent=79 // pred_check_branch
        %7961 = sbr.rel (%p7959) target = $region84
      $region83: #{gen_forward.1} parent=79 // pred_region
        _
      $region84: #{gen_forward.1} parent=79 // pred_fallthru
        _
      // Predicated region
      $region85: #{gen_forward.1} parent=79 // pred_check
        %p7962 = pneg %p463
      $region86: #{gen_forward.1} parent=79 // pred_check_branch
        %7964 = sbr.rel (%p7962) target = $region88
      $region87: #{gen_forward.1} parent=79 // pred_region
        _
      $region88: #{gen_forward.1} parent=79 // pred_fallthru
        _
      // Predicated region
      $region89: #{gen_forward.1} parent=79 // pred_check
        %p7965 = pneg %p489
      $region90: #{gen_forward.1} parent=79 // pred_check_branch
        %7967 = sbr.rel (%p7965) target = $region92
      $region91: #{gen_forward.1} parent=79 // pred_region
        _
      $region92: #{gen_forward.1} parent=79 // pred_fallthru
        _
    $region80: #{gen_forward.1} parent=5 // pred_fallthru
      _
    %p7968 = scmp.le.s32.totalorder 2, %s24
    // Predicated region
    $region93: #{gen_forward.1} parent=5 // pred_check
      %p7969 = pneg %p7968
    $region94: #{gen_forward.1} parent=5 // pred_check_branch
      %7971 = sbr.rel (%p7969) target = $region96
    $region95: #{gen_forward.1} parent=5 // pred_region
      %s7972 = ssub.s32 %s24, 2
      // Predicated region
      $region97: #{gen_forward.1} parent=95 // pred_check
        %p7973 = pneg %p443
      $region98: #{gen_forward.1} parent=95 // pred_check_branch
        %7975 = sbr.rel (%p7973) target = $region100
      $region99: #{gen_forward.1} parent=95 // pred_region
        %p7976 = scmp.lt.s32.totalorder %s30, 1
        %s7977 = scalar_select %p7976, %s30, 1
        %s7978 = smul.addr %s7977, 2
        %s7979 = smul.addr %s7978, 8
        %s7980 = scalar_lea.vmem %s15, %s7979
      $region100: #{gen_forward.1} parent=95 // pred_fallthru
        _
      // Predicated region
      $region101: #{gen_forward.1} parent=95 // pred_check
        %p7981 = pneg %p469
      $region102: #{gen_forward.1} parent=95 // pred_check_branch
        %7983 = sbr.rel (%p7981) target = $region104
      $region103: #{gen_forward.1} parent=95 // pred_region
        %p7984 = scmp.lt.s32.totalorder %s30, 1
        %s7985 = scalar_select %p7984, %s30, 1
        %s7986 = smul.addr %s7985, 4
        %s7987 = smul.addr %s7986, 8
        %s7988 = scalar_lea.vmem %s16, %s7987
      $region104: #{gen_forward.1} parent=95 // pred_fallthru
        _
      // Predicated region
      $region105: #{gen_forward.1} parent=95 // pred_check
        %p7989 = pneg %p495
      $region106: #{gen_forward.1} parent=95 // pred_check_branch
        %7991 = sbr.rel (%p7989) target = $region108
      $region107: #{gen_forward.1} parent=95 // pred_region
        %p7992 = scmp.lt.s32.totalorder %s30, 1
        %s7993 = scalar_select %p7992, %s30, 1
        %s7994 = smul.addr %s7993, 16
        %s7995 = smul.addr %s7994, 2
        %s7996 = scalar_lea.vmem %s17, %s7995
      $region108: #{gen_forward.1} parent=95 // pred_fallthru
        _
    $region96: #{gen_forward.1} parent=5 // pred_fallthru
      _
  $region6: #{gen_forward.1} parent=0 // loop_footer
    %s28 = sadd.s32 1, %s24
  $region7: #{gen_forward.1} parent=0 // loop_footer_branch
    %23 = sbr.rel target = $region3
  $region8: #{gen_forward.1} parent=0 // loop_exit
    _

</llo_original>
